<compile_context>
chip_gen: v5e
topology: v5e:2x2
jax: 0.10.0
libtpu: 0.0.40
codegen_flags: <defaults>
</compile_context>

<pallas_src>
import functools

import jax
import jax.numpy as jnp
from jax.experimental import pallas as pl
from jax.experimental.pallas import tpu as pltpu

GEM_P = 3.0
GEM_EPS = 1e-6
STEM_K_PAD = 128   # stem im2col K (9 * cin = 27) zero-padded to a full lane width


# ----------------------------------------------------------------------------
# Fused Pallas kernel: stem conv -> bottleneck residual block -> GeM -> BN neck
# ----------------------------------------------------------------------------
def _fastreid_fused_kernel(p_ref, wstem_ref, bns_ref, w1_ref, bn1_ref,
                           w2_ref, bn2_ref, w3_ref, bn3_ref, bnn_ref,
                           o_ref, patches_ref, *, H, W, gem_eps):
    HW = H * W
    c_mid = w2_ref.shape[-1]

    # --- backbone stem: 3x3 conv (wrapper im2col, K padded to 128, bf16 MXU
    #     operands) fused with folded preprocessing + BN + ReLU (f32 epilogue).
    acc = jnp.dot(p_ref[0], wstem_ref[...], preferred_element_type=jnp.float32)
    y = jnp.maximum(acc * bns_ref[0:1, :] + bns_ref[1:2, :], 0.0)          # (HW, Cout) f32

    # --- bottleneck 1x1 conv + BN + ReLU (bf16 MXU inputs, f32 accum/epilogue)
    z = jnp.dot(y.astype(jnp.bfloat16), w1_ref[...],
                preferred_element_type=jnp.float32)
    z = jnp.maximum(z * bn1_ref[0:1, :] + bn1_ref[1:2, :], 0.0)            # (HW, Cmid) f32

    # --- bottleneck 3x3 conv: in-kernel im2col.  Build a bf16 (HW, 9*Cmid)
    #     patch scratch with XLU rolls of the flattened activation (shift =
    #     (dy-1)*W + (dx-1) rows) plus iota edge masks, then issue ONE
    #     K = 9*Cmid matmul that streams at full MXU depth.  No padded-halo
    #     scratch, no per-step zeroing, no strided window copies.
    hw_idx = jax.lax.broadcasted_iota(jnp.int32, (HW, 1), 0)
    w_idx = hw_idx % W
    for k in range(9):
        dy, dx = divmod(k, 3)
        off = (dy - 1) * W + (dx - 1)            # flattened row offset of this tap
        if off == 0:
            tap = z                              # center tap: no shift, no mask
        else:
            tap = pltpu.roll(z, shift=(-off) % HW, axis=0)   # tap[i] = z[i + off]
            conds = []
            if dy == 0:
                conds.append(hw_idx >= W)        # source row h-1 must be >= 0
            if dy == 2:
                conds.append(hw_idx < HW - W)    # source row h+1 must be <  H
            if dx == 0:
                conds.append(w_idx >= 1)         # source col w-1 must be >= 0
            if dx == 2:
                conds.append(w_idx < W - 1)      # source col w+1 must be <  W
            valid = conds[0]
            for c in conds[1:]:
                valid = valid & c
            tap = jnp.where(valid, tap, 0.0)
        patches_ref[:, k * c_mid:(k + 1) * c_mid] = tap.astype(jnp.bfloat16)

    z = jnp.dot(patches_ref[...], w2_ref[...], preferred_element_type=jnp.float32)
    z = jnp.maximum(z * bn2_ref[0:1, :] + bn2_ref[1:2, :], 0.0)            # (HW, Cmid)

    # --- bottleneck 1x1 conv + BN + residual add (y still resident) + ReLU
    z = jnp.dot(z.astype(jnp.bfloat16), w3_ref[...],
                preferred_element_type=jnp.float32)
    z = jnp.maximum(z * bn3_ref[0:1, :] + bn3_ref[1:2, :] + y, 0.0)        # (HW, Cout)

    # --- EmbeddingHead (eval): GeM pooling (p=3) + bottleneck BatchNorm neck.
    #     Clamp BEFORE the cube so pooled >= eps^3 > 0 and log() is safe.
    zc = jnp.maximum(z, gem_eps)
    pooled = jnp.mean(zc * zc * zc, axis=0, keepdims=True)                 # (1, Cout)
    feat = jnp.exp(jnp.log(pooled) * (1.0 / GEM_P))                        # pooled ** (1/p)
    o_ref[0] = (feat * bnn_ref[0:1, :] + bnn_ref[1:2, :]).astype(o_ref.dtype)


# ----------------------------------------------------------------------------
# Glue: BN folding, preprocessing fold, deterministic parameters
# ----------------------------------------------------------------------------
def fold_bn(gamma, beta, mean, var, eps=1e-5):
    """Eval-mode BatchNorm folded to a stacked (2, C) [scale; shift] array."""
    scale = gamma / jnp.sqrt(var + eps)
    shift = beta - mean * scale
    return jnp.stack([scale, shift], axis=0).astype(jnp.float32)


def _make_bn(key, c, zero_beta=False):
    k1, k2, k3, k4 = jax.random.split(key, 4)
    gamma = 1.0 + 0.1 * jax.random.normal(k1, (c,), jnp.float32)
    beta = jnp.zeros((c,), jnp.float32) if zero_beta else 0.1 * jax.random.normal(k2, (c,), jnp.float32)
    mean = 0.05 * jax.random.normal(k3, (c,), jnp.float32)
    var = jnp.abs(1.0 + 0.1 * jax.random.normal(k4, (c,), jnp.float32))
    return fold_bn(gamma, beta, mean, var)


def init_params(key, cin=3, c_mid=128, c_out=128):
    """Channels raised to 128 so matmul N-dims / outputs are lane-dense."""
    ks = jax.random.split(key, 10)

    def w(k, shape, fan_in):
        return jax.random.normal(k, shape, jnp.float32) * (2.0 / fan_in) ** 0.5

    # ImageNet pixel stats used by fastreid preprocessing (NHWC channel order).
    pix_mean = jnp.array([123.675, 116.28, 103.53], jnp.float32)
    pix_std = jnp.array([58.395, 57.12, 57.375], jnp.float32)

    # Stem conv3x3 (cin -> c_out) with (x - mean)/std folded in:
    #   * each of the 27 weight rows is scaled by 1/std of its input channel,
    #   * the constant -sum(W * mean/std) term is folded into the BN shift,
    #   * the wrapper pads the raw image with pixel_mean so the padded ring maps
    #     to exactly 0 in normalized space ("normalize then zero-pad" semantics).
    w_stem_raw = w(ks[0], (9 * cin, c_out), 9 * cin)
    inv_std_rows = jnp.tile(1.0 / pix_std, 9)[:, None]                 # (27, 1)
    mos_rows = jnp.tile(pix_mean / pix_std, 9)[:, None]                # (27, 1)
    w_stem = jnp.zeros((STEM_K_PAD, c_out), jnp.float32)
    w_stem = w_stem.at[:9 * cin, :].set(w_stem_raw * inv_std_rows)     # K padded to 128
    bias_fold = -(w_stem_raw * mos_rows).sum(axis=0)                   # (c_out,)
    bn_stem = _make_bn(ks[1], c_out)
    bn_stem = bn_stem.at[1, :].add(bn_stem[0, :] * bias_fold)

    return {
        "pix_mean": pix_mean,
        "w_stem": w_stem.astype(jnp.bfloat16),
        "bn_stem": bn_stem,
        # bottleneck block: 1x1 -> 3x3 -> 1x1, all BN+ReLU, + identity (bf16 weights)
        "w1": w(ks[2], (c_out, c_mid), c_out).astype(jnp.bfloat16),
        "bn1": _make_bn(ks[3], c_mid),
        # 3x3 taps flattened to one (9*Cmid, Cmid) slab for a single K=1152 matmul
        "w2": w(ks[4], (9 * c_mid, c_mid), 9 * c_mid).astype(jnp.bfloat16),
        "bn2": _make_bn(ks[5], c_mid),
        "w3": w(ks[6], (c_mid, c_out), c_mid).astype(jnp.bfloat16),
        "bn3": _make_bn(ks[7], c_out),
        # EmbeddingHead bottleneck BN (bias frozen to 0 in fastreid)
        "bn_neck": _make_bn(ks[8], c_out, zero_beta=True),
    }


# ----------------------------------------------------------------------------
# Forward pass (FastReID.forward equivalent, eval mode -> embedding [B, feat_dim])
# ----------------------------------------------------------------------------
def fastreid_forward(x_nchw, params):
    # NCHW (PyTorch) -> NHWC.  Preprocessing is folded into w_stem / bn_stem;
    # pad the raw image with pixel_mean so the conv halo is 0 post-normalization.
    x = jnp.transpose(x_nchw, (0, 2, 3, 1)).astype(jnp.float32)
    B, H, W, cin = x.shape
    HW = H * W

    xm = jnp.broadcast_to(params["pix_mean"], (B, H + 2, W + 2, cin))
    xm = xm.at[:, 1:H + 1, 1:W + 1, :].set(x)
    cols = [xm[:, dy:dy + H, dx:dx + W, :] for dy in range(3) for dx in range(3)]
    patches = jnp.concatenate(cols, axis=-1).reshape(B, HW, 9 * cin)   # tiny for cin=3
    k_pad = params["w_stem"].shape[0]
    patches = jnp.pad(patches, ((0, 0), (0, 0), (0, k_pad - 9 * cin)))
    patches = patches.astype(jnp.bfloat16)                             # lane-dense bf16 stem input

    c_out = params["bn_stem"].shape[-1]
    c_mid = params["bn1"].shape[-1]

    kernel = functools.partial(_fastreid_fused_kernel, H=H, W=W, gem_eps=GEM_EPS)

    out = pl.pallas_call(
        kernel,
        out_shape=jax.ShapeDtypeStruct((B, 1, c_out), jnp.float32),
        grid_spec=pltpu.PrefetchScalarGridSpec(
            num_scalar_prefetch=0,
            grid=(B,),                                                 # one image per grid step
            in_specs=[
                pl.BlockSpec((1, HW, k_pad), lambda b: (b, 0, 0)),     # stem patches (bf16)
                pl.BlockSpec((k_pad, c_out), lambda b: (0, 0)),        # stem weight (resident)
                pl.BlockSpec((2, c_out), lambda b: (0, 0)),            # stem BN [scale;shift]
                pl.BlockSpec((c_out, c_mid), lambda b: (0, 0)),        # w1
                pl.BlockSpec((2, c_mid), lambda b: (0, 0)),            # bn1
                pl.BlockSpec((9 * c_mid, c_mid), lambda b: (0, 0)),    # w2 (flattened 3x3 taps)
                pl.BlockSpec((2, c_mid), lambda b: (0, 0)),            # bn2
                pl.BlockSpec((c_mid, c_out), lambda b: (0, 0)),        # w3
                pl.BlockSpec((2, c_out), lambda b: (0, 0)),            # bn3
                pl.BlockSpec((2, c_out), lambda b: (0, 0)),            # neck BN
            ],
            out_specs=pl.BlockSpec((1, 1, c_out), lambda b: (b, 0, 0)),
            scratch_shapes=[pltpu.VMEM((HW, 9 * c_mid), jnp.bfloat16)],  # im2col patch scratch
        ),
        compiler_params=pltpu.CompilerParams(
            dimension_semantics=("parallel",),   # shards the batch across v7x's 2 TCs
            vmem_limit_bytes=32 * 1024 * 1024,   # explicit; well above the ~3 MiB working set
        ),
    )(patches, params["w_stem"], params["bn_stem"], params["w1"], params["bn1"],
      params["w2"], params["bn2"], params["w3"], params["bn3"], params["bn_neck"])

    return out[:, 0, :]                           # (B, feat_dim)


if __name__ == "__main__":
    key = jax.random.PRNGKey(0)
    kx, kp = jax.random.split(key)

    B, C, H, W = 2, 3, 32, 16          # small stand-in for cfg.INPUT.SIZE_TEST crops
    x = jax.random.uniform(kx, (B, C, H, W), jnp.float32) * 255.0
    params = init_params(kp)

    out = jax.jit(fastreid_forward)(x, params)
    out = jax.block_until_ready(out)

    assert out.shape == (B, 128), out.shape
    assert bool(jnp.all(jnp.isfinite(out)))
    print("KERNEL_OK")
</pallas_src>

<mosaic_0001>
module attributes {stable_mosaic.version = 11 : i64} {
  func.func @_fastreid_fused_kernel(%arg0: i32, %arg1: memref<1x512x128xbf16, #tpu.memory_space<vmem>>, %arg2: memref<128x128xbf16, #tpu.memory_space<vmem>>, %arg3: memref<2x128xf32, #tpu.memory_space<vmem>>, %arg4: memref<128x128xbf16, #tpu.memory_space<vmem>>, %arg5: memref<2x128xf32, #tpu.memory_space<vmem>>, %arg6: memref<1152x128xbf16, #tpu.memory_space<vmem>>, %arg7: memref<2x128xf32, #tpu.memory_space<vmem>>, %arg8: memref<128x128xbf16, #tpu.memory_space<vmem>>, %arg9: memref<2x128xf32, #tpu.memory_space<vmem>>, %arg10: memref<2x128xf32, #tpu.memory_space<vmem>>, %arg11: memref<1x1x128xf32, #tpu.memory_space<vmem>>, %arg12: memref<512x1152xbf16, #tpu.memory_space<vmem>>) attributes {dimension_semantics = [#tpu.dimension_semantics<parallel>], iteration_bounds = array<i64: 2>, scalar_prefetch = 0 : i64, scratch_operands = 1 : i64, tpu.core_type = #tpu.core_type<tc>, window_params = [{transform_indices = @transform_0, window_bounds = array<i64: 1, 512, 128>}, {pipeline_mode = #tpu.pipeline_mode<synchronous>, transform_indices = @transform_1, window_bounds = array<i64: 128, 128>}, {pipeline_mode = #tpu.pipeline_mode<synchronous>, transform_indices = @transform_2, window_bounds = array<i64: 2, 128>}, {pipeline_mode = #tpu.pipeline_mode<synchronous>, transform_indices = @transform_3, window_bounds = array<i64: 128, 128>}, {pipeline_mode = #tpu.pipeline_mode<synchronous>, transform_indices = @transform_4, window_bounds = array<i64: 2, 128>}, {pipeline_mode = #tpu.pipeline_mode<synchronous>, transform_indices = @transform_5, window_bounds = array<i64: 1152, 128>}, {pipeline_mode = #tpu.pipeline_mode<synchronous>, transform_indices = @transform_6, window_bounds = array<i64: 2, 128>}, {pipeline_mode = #tpu.pipeline_mode<synchronous>, transform_indices = @transform_7, window_bounds = array<i64: 128, 128>}, {pipeline_mode = #tpu.pipeline_mode<synchronous>, transform_indices = @transform_8, window_bounds = array<i64: 2, 128>}, {pipeline_mode = #tpu.pipeline_mode<synchronous>, transform_indices = @transform_9, window_bounds = array<i64: 2, 128>}, {transform_indices = @transform_10, window_bounds = array<i64: 1, 1, 128>}]} {
    %c0 = arith.constant 0 : index
    %c0_0 = arith.constant 0 : index
    %c0_1 = arith.constant 0 : index
    %0 = vector.load %arg1[%c0, %c0_0, %c0_1] : memref<1x512x128xbf16, #tpu.memory_space<vmem>>, vector<1x512x128xbf16>
    %1 = vector.shape_cast %0 : vector<1x512x128xbf16> to vector<512x128xbf16>
    %c0_2 = arith.constant 0 : index
    %c0_3 = arith.constant 0 : index
    %2 = vector.load %arg2[%c0_2, %c0_3] : memref<128x128xbf16, #tpu.memory_space<vmem>>, vector<128x128xbf16>
    %cst = arith.constant dense<0.000000e+00> : vector<512x128xf32>
    %3 = tpu.matmul %1, %2, %cst {dimension_numbers = #tpu.dot_dimension_numbers<[1], [0], [0], [1], [0, 0, 1, 1], [], []>} : vector<512x128xbf16>, vector<128x128xbf16>, vector<512x128xf32> -> vector<512x128xf32>
    %c0_4 = arith.constant 0 : index
    %c0_5 = arith.constant 0 : index
    %4 = vector.load %arg3[%c0_4, %c0_5] : memref<2x128xf32, #tpu.memory_space<vmem>>, vector<1x128xf32>
    %5 = vector.broadcast %4 : vector<1x128xf32> to vector<512x128xf32>
    %6 = arith.mulf %3, %5 : vector<512x128xf32>
    %c1 = arith.constant 1 : index
    %c0_6 = arith.constant 0 : index
    %7 = vector.load %arg3[%c1, %c0_6] : memref<2x128xf32, #tpu.memory_space<vmem>>, vector<1x128xf32>
    %8 = vector.broadcast %7 : vector<1x128xf32> to vector<512x128xf32>
    %9 = arith.addf %6, %8 : vector<512x128xf32>
    %cst_7 = arith.constant 0.000000e+00 : f32
    %10 = vector.broadcast %cst_7 : f32 to vector<512x128xf32>
    %11 = arith.maximumf %9, %10 : vector<512x128xf32>
    %12 = arith.truncf %11 : vector<512x128xf32> to vector<512x128xbf16>
    %c0_8 = arith.constant 0 : index
    %c0_9 = arith.constant 0 : index
    %13 = vector.load %arg4[%c0_8, %c0_9] : memref<128x128xbf16, #tpu.memory_space<vmem>>, vector<128x128xbf16>
    %cst_10 = arith.constant dense<0.000000e+00> : vector<512x128xf32>
    %14 = tpu.matmul %12, %13, %cst_10 {dimension_numbers = #tpu.dot_dimension_numbers<[1], [0], [0], [1], [0, 0, 1, 1], [], []>} : vector<512x128xbf16>, vector<128x128xbf16>, vector<512x128xf32> -> vector<512x128xf32>
    %c0_11 = arith.constant 0 : index
    %c0_12 = arith.constant 0 : index
    %15 = vector.load %arg5[%c0_11, %c0_12] : memref<2x128xf32, #tpu.memory_space<vmem>>, vector<1x128xf32>
    %16 = vector.broadcast %15 : vector<1x128xf32> to vector<512x128xf32>
    %17 = arith.mulf %14, %16 : vector<512x128xf32>
    %c1_13 = arith.constant 1 : index
    %c0_14 = arith.constant 0 : index
    %18 = vector.load %arg5[%c1_13, %c0_14] : memref<2x128xf32, #tpu.memory_space<vmem>>, vector<1x128xf32>
    %19 = vector.broadcast %18 : vector<1x128xf32> to vector<512x128xf32>
    %20 = arith.addf %17, %19 : vector<512x128xf32>
    %cst_15 = arith.constant 0.000000e+00 : f32
    %21 = vector.broadcast %cst_15 : f32 to vector<512x128xf32>
    %22 = arith.maximumf %20, %21 : vector<512x128xf32>
    %23 = tpu.iota {dimensions = array<i32: 0>} : vector<512x1xi32>
    %c16_i32 = arith.constant 16 : i32
    %c0_i32 = arith.constant 0 : i32
    %24 = arith.cmpi eq, %c16_i32, %c0_i32 : i32
    %c1_i32 = arith.constant 1 : i32
    %25 = arith.select %24, %c1_i32, %c16_i32 : i32
    %26 = vector.broadcast %25 : i32 to vector<512x1xi32>
    %27 = arith.remsi %23, %26 : vector<512x1xi32>
    %c0_i32_16 = arith.constant 0 : i32
    %28 = vector.broadcast %c0_i32_16 : i32 to vector<512x1xi32>
    %29 = arith.cmpi ne, %27, %28 : vector<512x1xi32>
    %c0_i32_17 = arith.constant 0 : i32
    %30 = vector.broadcast %c0_i32_17 : i32 to vector<512x1xi32>
    %31 = arith.cmpi slt, %27, %30 : vector<512x1xi32>
    %c0_i32_18 = arith.constant 0 : i32
    %32 = arith.cmpi slt, %25, %c0_i32_18 : i32
    %33 = vector.broadcast %32 : i1 to vector<512x1xi1>
    %34 = vector.broadcast %33 : vector<512x1xi1> to vector<512x1xi1>
    %35 = arith.xori %31, %34 : vector<512x1xi1>
    %36 = arith.andi %35, %29 : vector<512x1xi1>
    %37 = vector.broadcast %25 : i32 to vector<512x1xi32>
    %38 = arith.addi %27, %37 : vector<512x1xi32>
    %39 = arith.select %36, %38, %27 : vector<512x1xi1>, vector<512x1xi32>
    %c17_i32 = arith.constant 17 : i32
    %40 = tpu.dynamic_rotate %22 by %c17_i32 dim 0 : vector<512x128xf32>, i32 -> vector<512x128xf32>
    %c16_i32_19 = arith.constant 16 : i32
    %41 = vector.broadcast %c16_i32_19 : i32 to vector<512x1xi32>
    %42 = arith.cmpi sge, %23, %41 : vector<512x1xi32>
    %c1_i32_20 = arith.constant 1 : i32
    %43 = vector.broadcast %c1_i32_20 : i32 to vector<512x1xi32>
    %44 = arith.cmpi sge, %39, %43 : vector<512x1xi32>
    %45 = arith.andi %42, %44 : vector<512x1xi1>
    %cst_21 = arith.constant 0.000000e+00 : f32
    %46 = vector.shape_cast %45 : vector<512x1xi1> to vector<512x1xi1>
    %47 = vector.broadcast %46 : vector<512x1xi1> to vector<512x128xi1>
    %48 = vector.broadcast %cst_21 : f32 to vector<512x128xf32>
    %49 = arith.select %47, %40, %48 : vector<512x128xi1>, vector<512x128xf32>
    %50 = arith.truncf %49 : vector<512x128xf32> to vector<512x128xbf16>
    %c0_22 = arith.constant 0 : index
    %c0_23 = arith.constant 0 : index
    %51 = vector.load %arg12[%c0_22, %c0_23] : memref<512x1152xbf16, #tpu.memory_space<vmem>>, vector<512x128xbf16>
    tpu.vector_store %arg12[%c0_22, %c0_23], %50 {strides = array<i32>} : memref<512x1152xbf16, #tpu.memory_space<vmem>>, vector<512x128xbf16>,
    %c16_i32_24 = arith.constant 16 : i32
    %52 = tpu.dynamic_rotate %22 by %c16_i32_24 dim 0 : vector<512x128xf32>, i32 -> vector<512x128xf32>
    %c16_i32_25 = arith.constant 16 : i32
    %53 = vector.broadcast %c16_i32_25 : i32 to vector<512x1xi32>
    %54 = arith.cmpi sge, %23, %53 : vector<512x1xi32>
    %cst_26 = arith.constant 0.000000e+00 : f32
    %55 = vector.shape_cast %54 : vector<512x1xi1> to vector<512x1xi1>
    %56 = vector.broadcast %55 : vector<512x1xi1> to vector<512x128xi1>
    %57 = vector.broadcast %cst_26 : f32 to vector<512x128xf32>
    %58 = arith.select %56, %52, %57 : vector<512x128xi1>, vector<512x128xf32>
    %59 = arith.truncf %58 : vector<512x128xf32> to vector<512x128xbf16>
    %c0_27 = arith.constant 0 : index
    %c128 = arith.constant 128 : index
    %60 = vector.load %arg12[%c0_27, %c128] : memref<512x1152xbf16, #tpu.memory_space<vmem>>, vector<512x128xbf16>
    tpu.vector_store %arg12[%c0_27, %c128], %59 {strides = array<i32>} : memref<512x1152xbf16, #tpu.memory_space<vmem>>, vector<512x128xbf16>,
    %c15_i32 = arith.constant 15 : i32
    %61 = tpu.dynamic_rotate %22 by %c15_i32 dim 0 : vector<512x128xf32>, i32 -> vector<512x128xf32>
    %c16_i32_28 = arith.constant 16 : i32
    %62 = vector.broadcast %c16_i32_28 : i32 to vector<512x1xi32>
    %63 = arith.cmpi sge, %23, %62 : vector<512x1xi32>
    %c15_i32_29 = arith.constant 15 : i32
    %64 = vector.broadcast %c15_i32_29 : i32 to vector<512x1xi32>
    %65 = arith.cmpi slt, %39, %64 : vector<512x1xi32>
    %66 = arith.andi %63, %65 : vector<512x1xi1>
    %cst_30 = arith.constant 0.000000e+00 : f32
    %67 = vector.shape_cast %66 : vector<512x1xi1> to vector<512x1xi1>
    %68 = vector.broadcast %67 : vector<512x1xi1> to vector<512x128xi1>
    %69 = vector.broadcast %cst_30 : f32 to vector<512x128xf32>
    %70 = arith.select %68, %61, %69 : vector<512x128xi1>, vector<512x128xf32>
    %71 = arith.truncf %70 : vector<512x128xf32> to vector<512x128xbf16>
    %c0_31 = arith.constant 0 : index
    %c256 = arith.constant 256 : index
    %72 = vector.load %arg12[%c0_31, %c256] : memref<512x1152xbf16, #tpu.memory_space<vmem>>, vector<512x128xbf16>
    tpu.vector_store %arg12[%c0_31, %c256], %71 {strides = array<i32>} : memref<512x1152xbf16, #tpu.memory_space<vmem>>, vector<512x128xbf16>,
    %c1_i32_32 = arith.constant 1 : i32
    %73 = tpu.dynamic_rotate %22 by %c1_i32_32 dim 0 : vector<512x128xf32>, i32 -> vector<512x128xf32>
    %c1_i32_33 = arith.constant 1 : i32
    %74 = vector.broadcast %c1_i32_33 : i32 to vector<512x1xi32>
    %75 = arith.cmpi sge, %39, %74 : vector<512x1xi32>
    %cst_34 = arith.constant 0.000000e+00 : f32
    %76 = vector.shape_cast %75 : vector<512x1xi1> to vector<512x1xi1>
    %77 = vector.broadcast %76 : vector<512x1xi1> to vector<512x128xi1>
    %78 = vector.broadcast %cst_34 : f32 to vector<512x128xf32>
    %79 = arith.select %77, %73, %78 : vector<512x128xi1>, vector<512x128xf32>
    %80 = arith.truncf %79 : vector<512x128xf32> to vector<512x128xbf16>
    %c0_35 = arith.constant 0 : index
    %c384 = arith.constant 384 : index
    %81 = vector.load %arg12[%c0_35, %c384] : memref<512x1152xbf16, #tpu.memory_space<vmem>>, vector<512x128xbf16>
    tpu.vector_store %arg12[%c0_35, %c384], %80 {strides = array<i32>} : memref<512x1152xbf16, #tpu.memory_space<vmem>>, vector<512x128xbf16>,
    %82 = arith.truncf %22 : vector<512x128xf32> to vector<512x128xbf16>
    %c0_36 = arith.constant 0 : index
    %c512 = arith.constant 512 : index
    %83 = vector.load %arg12[%c0_36, %c512] : memref<512x1152xbf16, #tpu.memory_space<vmem>>, vector<512x128xbf16>
    tpu.vector_store %arg12[%c0_36, %c512], %82 {strides = array<i32>} : memref<512x1152xbf16, #tpu.memory_space<vmem>>, vector<512x128xbf16>,
    %c511_i32 = arith.constant 511 : i32
    %84 = tpu.dynamic_rotate %22 by %c511_i32 dim 0 : vector<512x128xf32>, i32 -> vector<512x128xf32>
    %c15_i32_37 = arith.constant 15 : i32
    %85 = vector.broadcast %c15_i32_37 : i32 to vector<512x1xi32>
    %86 = arith.cmpi slt, %39, %85 : vector<512x1xi32>
    %cst_38 = arith.constant 0.000000e+00 : f32
    %87 = vector.shape_cast %86 : vector<512x1xi1> to vector<512x1xi1>
    %88 = vector.broadcast %87 : vector<512x1xi1> to vector<512x128xi1>
    %89 = vector.broadcast %cst_38 : f32 to vector<512x128xf32>
    %90 = arith.select %88, %84, %89 : vector<512x128xi1>, vector<512x128xf32>
    %91 = arith.truncf %90 : vector<512x128xf32> to vector<512x128xbf16>
    %c0_39 = arith.constant 0 : index
    %c640 = arith.constant 640 : index
    %92 = vector.load %arg12[%c0_39, %c640] : memref<512x1152xbf16, #tpu.memory_space<vmem>>, vector<512x128xbf16>
    tpu.vector_store %arg12[%c0_39, %c640], %91 {strides = array<i32>} : memref<512x1152xbf16, #tpu.memory_space<vmem>>, vector<512x128xbf16>,
    %c497_i32 = arith.constant 497 : i32
    %93 = tpu.dynamic_rotate %22 by %c497_i32 dim 0 : vector<512x128xf32>, i32 -> vector<512x128xf32>
    %c496_i32 = arith.constant 496 : i32
    %94 = vector.broadcast %c496_i32 : i32 to vector<512x1xi32>
    %95 = arith.cmpi slt, %23, %94 : vector<512x1xi32>
    %c1_i32_40 = arith.constant 1 : i32
    %96 = vector.broadcast %c1_i32_40 : i32 to vector<512x1xi32>
    %97 = arith.cmpi sge, %39, %96 : vector<512x1xi32>
    %98 = arith.andi %95, %97 : vector<512x1xi1>
    %cst_41 = arith.constant 0.000000e+00 : f32
    %99 = vector.shape_cast %98 : vector<512x1xi1> to vector<512x1xi1>
    %100 = vector.broadcast %99 : vector<512x1xi1> to vector<512x128xi1>
    %101 = vector.broadcast %cst_41 : f32 to vector<512x128xf32>
    %102 = arith.select %100, %93, %101 : vector<512x128xi1>, vector<512x128xf32>
    %103 = arith.truncf %102 : vector<512x128xf32> to vector<512x128xbf16>
    %c0_42 = arith.constant 0 : index
    %c768 = arith.constant 768 : index
    %104 = vector.load %arg12[%c0_42, %c768] : memref<512x1152xbf16, #tpu.memory_space<vmem>>, vector<512x128xbf16>
    tpu.vector_store %arg12[%c0_42, %c768], %103 {strides = array<i32>} : memref<512x1152xbf16, #tpu.memory_space<vmem>>, vector<512x128xbf16>,
    %c496_i32_43 = arith.constant 496 : i32
    %105 = tpu.dynamic_rotate %22 by %c496_i32_43 dim 0 : vector<512x128xf32>, i32 -> vector<512x128xf32>
    %c496_i32_44 = arith.constant 496 : i32
    %106 = vector.broadcast %c496_i32_44 : i32 to vector<512x1xi32>
    %107 = arith.cmpi slt, %23, %106 : vector<512x1xi32>
    %cst_45 = arith.constant 0.000000e+00 : f32
    %108 = vector.shape_cast %107 : vector<512x1xi1> to vector<512x1xi1>
    %109 = vector.broadcast %108 : vector<512x1xi1> to vector<512x128xi1>
    %110 = vector.broadcast %cst_45 : f32 to vector<512x128xf32>
    %111 = arith.select %109, %105, %110 : vector<512x128xi1>, vector<512x128xf32>
    %112 = arith.truncf %111 : vector<512x128xf32> to vector<512x128xbf16>
    %c0_46 = arith.constant 0 : index
    %c896 = arith.constant 896 : index
    %113 = vector.load %arg12[%c0_46, %c896] : memref<512x1152xbf16, #tpu.memory_space<vmem>>, vector<512x128xbf16>
    tpu.vector_store %arg12[%c0_46, %c896], %112 {strides = array<i32>} : memref<512x1152xbf16, #tpu.memory_space<vmem>>, vector<512x128xbf16>,
    %c495_i32 = arith.constant 495 : i32
    %114 = tpu.dynamic_rotate %22 by %c495_i32 dim 0 : vector<512x128xf32>, i32 -> vector<512x128xf32>
    %c496_i32_47 = arith.constant 496 : i32
    %115 = vector.broadcast %c496_i32_47 : i32 to vector<512x1xi32>
    %116 = arith.cmpi slt, %23, %115 : vector<512x1xi32>
    %c15_i32_48 = arith.constant 15 : i32
    %117 = vector.broadcast %c15_i32_48 : i32 to vector<512x1xi32>
    %118 = arith.cmpi slt, %39, %117 : vector<512x1xi32>
    %119 = arith.andi %116, %118 : vector<512x1xi1>
    %cst_49 = arith.constant 0.000000e+00 : f32
    %120 = vector.shape_cast %119 : vector<512x1xi1> to vector<512x1xi1>
    %121 = vector.broadcast %120 : vector<512x1xi1> to vector<512x128xi1>
    %122 = vector.broadcast %cst_49 : f32 to vector<512x128xf32>
    %123 = arith.select %121, %114, %122 : vector<512x128xi1>, vector<512x128xf32>
    %124 = arith.truncf %123 : vector<512x128xf32> to vector<512x128xbf16>
    %c0_50 = arith.constant 0 : index
    %c1024 = arith.constant 1024 : index
    %125 = vector.load %arg12[%c0_50, %c1024] : memref<512x1152xbf16, #tpu.memory_space<vmem>>, vector<512x128xbf16>
    tpu.vector_store %arg12[%c0_50, %c1024], %124 {strides = array<i32>} : memref<512x1152xbf16, #tpu.memory_space<vmem>>, vector<512x128xbf16>,
    %c0_51 = arith.constant 0 : index
    %c0_52 = arith.constant 0 : index
    %126 = vector.load %arg12[%c0_51, %c0_52] : memref<512x1152xbf16, #tpu.memory_space<vmem>>, vector<512x1152xbf16>
    %c0_53 = arith.constant 0 : index
    %c0_54 = arith.constant 0 : index
    %127 = vector.load %arg6[%c0_53, %c0_54] : memref<1152x128xbf16, #tpu.memory_space<vmem>>, vector<1152x128xbf16>
    %cst_55 = arith.constant dense<0.000000e+00> : vector<512x128xf32>
    %128 = tpu.matmul %126, %127, %cst_55 {dimension_numbers = #tpu.dot_dimension_numbers<[1], [0], [0], [1], [0, 0, 1, 1], [], []>} : vector<512x1152xbf16>, vector<1152x128xbf16>, vector<512x128xf32> -> vector<512x128xf32>
    %c0_56 = arith.constant 0 : index
    %c0_57 = arith.constant 0 : index
    %129 = vector.load %arg7[%c0_56, %c0_57] : memref<2x128xf32, #tpu.memory_space<vmem>>, vector<1x128xf32>
    %130 = vector.broadcast %129 : vector<1x128xf32> to vector<512x128xf32>
    %131 = arith.mulf %128, %130 : vector<512x128xf32>
    %c1_58 = arith.constant 1 : index
    %c0_59 = arith.constant 0 : index
    %132 = vector.load %arg7[%c1_58, %c0_59] : memref<2x128xf32, #tpu.memory_space<vmem>>, vector<1x128xf32>
    %133 = vector.broadcast %132 : vector<1x128xf32> to vector<512x128xf32>
    %134 = arith.addf %131, %133 : vector<512x128xf32>
    %cst_60 = arith.constant 0.000000e+00 : f32
    %135 = vector.broadcast %cst_60 : f32 to vector<512x128xf32>
    %136 = arith.maximumf %134, %135 : vector<512x128xf32>
    %137 = arith.truncf %136 : vector<512x128xf32> to vector<512x128xbf16>
    %c0_61 = arith.constant 0 : index
    %c0_62 = arith.constant 0 : index
    %138 = vector.load %arg8[%c0_61, %c0_62] : memref<128x128xbf16, #tpu.memory_space<vmem>>, vector<128x128xbf16>
    %cst_63 = arith.constant dense<0.000000e+00> : vector<512x128xf32>
    %139 = tpu.matmul %137, %138, %cst_63 {dimension_numbers = #tpu.dot_dimension_numbers<[1], [0], [0], [1], [0, 0, 1, 1], [], []>} : vector<512x128xbf16>, vector<128x128xbf16>, vector<512x128xf32> -> vector<512x128xf32>
    %c0_64 = arith.constant 0 : index
    %c0_65 = arith.constant 0 : index
    %140 = vector.load %arg9[%c0_64, %c0_65] : memref<2x128xf32, #tpu.memory_space<vmem>>, vector<1x128xf32>
    %141 = vector.broadcast %140 : vector<1x128xf32> to vector<512x128xf32>
    %142 = arith.mulf %139, %141 : vector<512x128xf32>
    %c1_66 = arith.constant 1 : index
    %c0_67 = arith.constant 0 : index
    %143 = vector.load %arg9[%c1_66, %c0_67] : memref<2x128xf32, #tpu.memory_space<vmem>>, vector<1x128xf32>
    %144 = vector.broadcast %143 : vector<1x128xf32> to vector<512x128xf32>
    %145 = arith.addf %142, %144 : vector<512x128xf32>
    %146 = arith.addf %145, %11 : vector<512x128xf32>
    %cst_68 = arith.constant 0.000000e+00 : f32
    %147 = vector.broadcast %cst_68 : f32 to vector<512x128xf32>
    %148 = arith.maximumf %146, %147 : vector<512x128xf32>
    %cst_69 = arith.constant 9.99999997E-7 : f32
    %149 = vector.broadcast %cst_69 : f32 to vector<512x128xf32>
    %150 = arith.maximumf %148, %149 : vector<512x128xf32>
    %151 = arith.mulf %150, %150 : vector<512x128xf32>
    %152 = arith.mulf %151, %150 : vector<512x128xf32>
    %cst_70 = arith.constant dense<0.000000e+00> : vector<128xf32>
    %153 = vector.multi_reduction <add>, %152, %cst_70 [0] : vector<512x128xf32> to vector<128xf32>
    %154 = vector.shape_cast %153 : vector<128xf32> to vector<1x128xf32>
    %cst_71 = arith.constant 5.120000e+02 : f32
    %155 = vector.broadcast %cst_71 : f32 to vector<1x128xf32>
    %156 = arith.divf %154, %155 : vector<1x128xf32>
    %157 = math.log %156 : vector<1x128xf32>
    %cst_72 = arith.constant 0.333333343 : f32
    %158 = vector.broadcast %cst_72 : f32 to vector<1x128xf32>
    %159 = arith.mulf %157, %158 : vector<1x128xf32>
    %160 = math.exp %159 : vector<1x128xf32>
    %c0_73 = arith.constant 0 : index
    %c0_74 = arith.constant 0 : index
    %161 = vector.load %arg10[%c0_73, %c0_74] : memref<2x128xf32, #tpu.memory_space<vmem>>, vector<1x128xf32>
    %162 = arith.mulf %160, %161 : vector<1x128xf32>
    %c1_75 = arith.constant 1 : index
    %c0_76 = arith.constant 0 : index
    %163 = vector.load %arg10[%c1_75, %c0_76] : memref<2x128xf32, #tpu.memory_space<vmem>>, vector<1x128xf32>
    %164 = arith.addf %162, %163 : vector<1x128xf32>
    %c0_77 = arith.constant 0 : index
    %c0_78 = arith.constant 0 : index
    %c0_79 = arith.constant 0 : index
    %165 = vector.load %arg11[%c0_77, %c0_78, %c0_79] : memref<1x1x128xf32, #tpu.memory_space<vmem>>, vector<1x1x128xf32>
    %166 = vector.shape_cast %165 : vector<1x1x128xf32> to vector<1x128xf32>
    %167 = vector.shape_cast %164 : vector<1x128xf32> to vector<1x1x128xf32>
    tpu.vector_store %arg11[%c0_77, %c0_78, %c0_79], %167 {strides = array<i32>} : memref<1x1x128xf32, #tpu.memory_space<vmem>>, vector<1x1x128xf32>,
    return
  }
  func.func @transform_0(%arg0: i32) -> (i32, i32, i32) {
    %c0_i32 = arith.constant 0 : i32
    %c0_i32_0 = arith.constant 0 : i32
    %c0_i32_1 = arith.constant 0 : i32
    return %arg0, %c0_i32, %c0_i32_0 : i32, i32, i32
  }
  func.func @transform_1(%arg0: i32) -> (i32, i32) {
    %c0_i32 = arith.constant 0 : i32
    %c0_i32_0 = arith.constant 0 : i32
    %c0_i32_1 = arith.constant 0 : i32
    return %c0_i32, %c0_i32_0 : i32, i32
  }
  func.func @transform_2(%arg0: i32) -> (i32, i32) {
    %c0_i32 = arith.constant 0 : i32
    %c0_i32_0 = arith.constant 0 : i32
    %c0_i32_1 = arith.constant 0 : i32
    return %c0_i32, %c0_i32_0 : i32, i32
  }
  func.func @transform_3(%arg0: i32) -> (i32, i32) {
    %c0_i32 = arith.constant 0 : i32
    %c0_i32_0 = arith.constant 0 : i32
    %c0_i32_1 = arith.constant 0 : i32
    return %c0_i32, %c0_i32_0 : i32, i32
  }
  func.func @transform_4(%arg0: i32) -> (i32, i32) {
    %c0_i32 = arith.constant 0 : i32
    %c0_i32_0 = arith.constant 0 : i32
    %c0_i32_1 = arith.constant 0 : i32
    return %c0_i32, %c0_i32_0 : i32, i32
  }
  func.func @transform_5(%arg0: i32) -> (i32, i32) {
    %c0_i32 = arith.constant 0 : i32
    %c0_i32_0 = arith.constant 0 : i32
    %c0_i32_1 = arith.constant 0 : i32
    return %c0_i32, %c0_i32_0 : i32, i32
  }
  func.func @transform_6(%arg0: i32) -> (i32, i32) {
    %c0_i32 = arith.constant 0 : i32
    %c0_i32_0 = arith.constant 0 : i32
    %c0_i32_1 = arith.constant 0 : i32
    return %c0_i32, %c0_i32_0 : i32, i32
  }
  func.func @transform_7(%arg0: i32) -> (i32, i32) {
    %c0_i32 = arith.constant 0 : i32
    %c0_i32_0 = arith.constant 0 : i32
    %c0_i32_1 = arith.constant 0 : i32
    return %c0_i32, %c0_i32_0 : i32, i32
  }
  func.func @transform_8(%arg0: i32) -> (i32, i32) {
    %c0_i32 = arith.constant 0 : i32
    %c0_i32_0 = arith.constant 0 : i32
    %c0_i32_1 = arith.constant 0 : i32
    return %c0_i32, %c0_i32_0 : i32, i32
  }
  func.func @transform_9(%arg0: i32) -> (i32, i32) {
    %c0_i32 = arith.constant 0 : i32
    %c0_i32_0 = arith.constant 0 : i32
    %c0_i32_1 = arith.constant 0 : i32
    return %c0_i32, %c0_i32_0 : i32, i32
  }
  func.func @transform_10(%arg0: i32) -> (i32, i32, i32) {
    %c0_i32 = arith.constant 0 : i32
    %c0_i32_0 = arith.constant 0 : i32
    %c0_i32_1 = arith.constant 0 : i32
    return %arg0, %c0_i32, %c0_i32_0 : i32, i32, i32
  }
}

</mosaic_0001>

<llo_original>
// kernel: fastreid_forward.1
$region0: #{fastreid_forward.1}
  #allocation0 [shape = 'u32[]', space=smem, size = 0x4, offset = 0x4, fixed_abs, tag = 'smem constant byte address 0x4 - core index']
  #allocation1 [shape = 'u32[72,128]{1,0:T(1,128)}', space=vmem, size = 0x9000, scoped, tag = 'internal scratch']
  #allocation2 [shape = 'bf16[512,1152]{1,0:T(8,128)(2,1)}', space=vmem, size = 0x120000, scoped, tag = 'scratch operand']
  %s0 = inlined_call_operand.vmem [shape: bf16[2,512,128], index: 0, kind: input, shape index: {}]
  %s1 = inlined_call_operand.vmem [shape: bf16[128,128], index: 1, kind: input, shape index: {}]
  %s2 = inlined_call_operand.vmem [shape: f32[2,128], index: 2, kind: input, shape index: {}]
  %s3 = inlined_call_operand.vmem [shape: bf16[128,128], index: 3, kind: input, shape index: {}]
  %s4 = inlined_call_operand.vmem [shape: f32[2,128], index: 4, kind: input, shape index: {}]
  %s5 = inlined_call_operand.vmem [shape: bf16[1152,128], index: 5, kind: input, shape index: {}]
  %s6 = inlined_call_operand.vmem [shape: f32[2,128], index: 6, kind: input, shape index: {}]
  %s7 = inlined_call_operand.vmem [shape: bf16[128,128], index: 7, kind: input, shape index: {}]
  %s8 = inlined_call_operand.vmem [shape: f32[2,128], index: 8, kind: input, shape index: {}]
  %s9 = inlined_call_operand.vmem [shape: f32[2,128], index: 9, kind: input, shape index: {}]
  %s10 = inlined_call_operand.hbm [shape: f32[2,1,128], index: 10, kind: output, shape index: {}]
  %s11 = sld [smem:[#allocation0]]
  $region73: #{fastreid_forward.1} parent=0
    _
  %s13 = ssub.s32 1, %s11
  %s14 = scalar_select 0, %s13, %s11
  $region1: #{fastreid_forward.1} parent=0
    #allocation3 [shape = 'u8[1024]{0}', space=vmem, size = 0x400, scoped, tag = 'output window, operand 0']
    #allocation4 [shape = 's32[2]{0}', space=sflag, size = 0x8, scoped, tag = 'scoped memory for fastreid_forward.1']
    %15 = vsyncpa [#allocation4], 0
    %s16 = scalar_lea.sflag [#allocation4], 1
    %17 = vsyncpa %s16, 0
    loop: start=0, step=1, limit=4
    $region2: #{fastreid_forward.1} parent=1 // loop_pre_header
      _
    $region3: #{fastreid_forward.1} parent=1 // loop_header
      %s19 = sphi 0, %s23
      %p20 = scmp.ge.s32.totalorder %s19, 4
      %s29 = sphi 0, %s31
      %s32 = sphi 0, %s29
      %s33 = sphi 0, %s32
      %s49 = sphi 0, %s33
      %s53 = sphi 0, %s53
      %s55 = sphi 0, %s53
      %s56 = sphi 0, %s55
      %s70 = sphi 0, %s56
      %s74 = sphi 0, %s74
      %s76 = sphi 0, %s74
      %s77 = sphi 0, %s76
      %s91 = sphi 0, %s77
      %s95 = sphi 0, %s95
      %s97 = sphi 0, %s95
      %s98 = sphi 0, %s97
      %s112 = sphi 0, %s98
      %s116 = sphi 0, %s116
      %s118 = sphi 0, %s116
      %s119 = sphi 0, %s118
      %s133 = sphi 0, %s119
      %s137 = sphi 0, %s137
      %s139 = sphi 0, %s137
      %s140 = sphi 0, %s139
      %s154 = sphi 0, %s140
      %s158 = sphi 0, %s158
      %s160 = sphi 0, %s158
      %s161 = sphi 0, %s160
      %s175 = sphi 0, %s161
      %s179 = sphi 0, %s179
      %s181 = sphi 0, %s179
      %s182 = sphi 0, %s181
      %s196 = sphi 0, %s182
      %s200 = sphi 0, %s200
      %s202 = sphi 0, %s200
      %s203 = sphi 0, %s202
      %s217 = sphi 0, %s203
      %s221 = sphi 0, %s221
      %s223 = sphi 0, %s221
      %s224 = sphi 0, %s223
      %s238 = sphi 0, %s224
      %s244 = sphi 0, %s246
      %s247 = sphi 0, %s244
      %s248 = sphi 0, %s247
      %s264 = sphi 0, %s248
    $region4: #{fastreid_forward.1} parent=1 // loop_header_branch
      %22 = sbr.rel (%p20) target = $region8
    $region5: #{fastreid_forward.1} parent=1 // loop_body
      %s24 = ssub.s32 %s19, 1
      %s25 = ssub.s32 %s19, 2
      %s26 = sadd.s32 %s19, 1
      %s27 = ssub.s32 %s19, %s26
      %p28 = scmp.eq.s32.totalorder %s27, 0
      %s30 = sadd.s32 %s29, 1
      %s31 = scalar_select %p28, %s29, %s30
      %p34 = pneg %p28
      %p35 = scmp.eq.s32.totalorder %s19, 1
      %p36 = por %p34, %p35
      %p37 = scmp.ne.s32.totalorder %s29, %s32
      %p38 = scmp.eq.s32.totalorder %s19, 0
      %p39 = por %p37, %p38
      %p40 = scmp.ne.s32.totalorder %s29, %s32
      %p41 = scmp.eq.s32.totalorder %s24, 1
      %p42 = por %p40, %p41
      %p43 = scmp.ne.s32.totalorder %s32, %s33
      %p44 = scmp.eq.s32.totalorder %s24, 0
      %p45 = por %p43, %p44
      %p46 = scmp.ne.s32.totalorder %s32, %s33
      %p47 = scmp.eq.s32.totalorder %s25, 1
      %p48 = por %p46, %p47
      %p50 = scmp.ne.s32.totalorder %s33, %s49
      %p51 = scmp.eq.s32.totalorder %s25, 0
      %p52 = por %p50, %p51
      %s54 = sadd.s32 %s53, 1
      %p57 = scmp.eq.s32.totalorder %s19, 1
      %p58 = scmp.ne.s32.totalorder %s53, %s55
      %p59 = scmp.eq.s32.totalorder %s19, 0
      %p60 = por %p58, %p59
      %p61 = scmp.ne.s32.totalorder %s53, %s55
      %p62 = scmp.eq.s32.totalorder %s24, 1
      %p63 = por %p61, %p62
      %p64 = scmp.ne.s32.totalorder %s55, %s56
      %p65 = scmp.eq.s32.totalorder %s24, 0
      %p66 = por %p64, %p65
      %p67 = scmp.ne.s32.totalorder %s55, %s56
      %p68 = scmp.eq.s32.totalorder %s25, 1
      %p69 = por %p67, %p68
      %p71 = scmp.ne.s32.totalorder %s56, %s70
      %p72 = scmp.eq.s32.totalorder %s25, 0
      %p73 = por %p71, %p72
      %s75 = sadd.s32 %s74, 1
      %p78 = scmp.eq.s32.totalorder %s19, 1
      %p79 = scmp.ne.s32.totalorder %s74, %s76
      %p80 = scmp.eq.s32.totalorder %s19, 0
      %p81 = por %p79, %p80
      %p82 = scmp.ne.s32.totalorder %s74, %s76
      %p83 = scmp.eq.s32.totalorder %s24, 1
      %p84 = por %p82, %p83
      %p85 = scmp.ne.s32.totalorder %s76, %s77
      %p86 = scmp.eq.s32.totalorder %s24, 0
      %p87 = por %p85, %p86
      %p88 = scmp.ne.s32.totalorder %s76, %s77
      %p89 = scmp.eq.s32.totalorder %s25, 1
      %p90 = por %p88, %p89
      %p92 = scmp.ne.s32.totalorder %s77, %s91
      %p93 = scmp.eq.s32.totalorder %s25, 0
      %p94 = por %p92, %p93
      %s96 = sadd.s32 %s95, 1
      %p99 = scmp.eq.s32.totalorder %s19, 1
      %p100 = scmp.ne.s32.totalorder %s95, %s97
      %p101 = scmp.eq.s32.totalorder %s19, 0
      %p102 = por %p100, %p101
      %p103 = scmp.ne.s32.totalorder %s95, %s97
      %p104 = scmp.eq.s32.totalorder %s24, 1
      %p105 = por %p103, %p104
      %p106 = scmp.ne.s32.totalorder %s97, %s98
      %p107 = scmp.eq.s32.totalorder %s24, 0
      %p108 = por %p106, %p107
      %p109 = scmp.ne.s32.totalorder %s97, %s98
      %p110 = scmp.eq.s32.totalorder %s25, 1
      %p111 = por %p109, %p110
      %p113 = scmp.ne.s32.totalorder %s98, %s112
      %p114 = scmp.eq.s32.totalorder %s25, 0
      %p115 = por %p113, %p114
      %s117 = sadd.s32 %s116, 1
      %p120 = scmp.eq.s32.totalorder %s19, 1
      %p121 = scmp.ne.s32.totalorder %s116, %s118
      %p122 = scmp.eq.s32.totalorder %s19, 0
      %p123 = por %p121, %p122
      %p124 = scmp.ne.s32.totalorder %s116, %s118
      %p125 = scmp.eq.s32.totalorder %s24, 1
      %p126 = por %p124, %p125
      %p127 = scmp.ne.s32.totalorder %s118, %s119
      %p128 = scmp.eq.s32.totalorder %s24, 0
      %p129 = por %p127, %p128
      %p130 = scmp.ne.s32.totalorder %s118, %s119
      %p131 = scmp.eq.s32.totalorder %s25, 1
      %p132 = por %p130, %p131
      %p134 = scmp.ne.s32.totalorder %s119, %s133
      %p135 = scmp.eq.s32.totalorder %s25, 0
      %p136 = por %p134, %p135
      %s138 = sadd.s32 %s137, 1
      %p141 = scmp.eq.s32.totalorder %s19, 1
      %p142 = scmp.ne.s32.totalorder %s137, %s139
      %p143 = scmp.eq.s32.totalorder %s19, 0
      %p144 = por %p142, %p143
      %p145 = scmp.ne.s32.totalorder %s137, %s139
      %p146 = scmp.eq.s32.totalorder %s24, 1
      %p147 = por %p145, %p146
      %p148 = scmp.ne.s32.totalorder %s139, %s140
      %p149 = scmp.eq.s32.totalorder %s24, 0
      %p150 = por %p148, %p149
      %p151 = scmp.ne.s32.totalorder %s139, %s140
      %p152 = scmp.eq.s32.totalorder %s25, 1
      %p153 = por %p151, %p152
      %p155 = scmp.ne.s32.totalorder %s140, %s154
      %p156 = scmp.eq.s32.totalorder %s25, 0
      %p157 = por %p155, %p156
      %s159 = sadd.s32 %s158, 1
      %p162 = scmp.eq.s32.totalorder %s19, 1
      %p163 = scmp.ne.s32.totalorder %s158, %s160
      %p164 = scmp.eq.s32.totalorder %s19, 0
      %p165 = por %p163, %p164
      %p166 = scmp.ne.s32.totalorder %s158, %s160
      %p167 = scmp.eq.s32.totalorder %s24, 1
      %p168 = por %p166, %p167
      %p169 = scmp.ne.s32.totalorder %s160, %s161
      %p170 = scmp.eq.s32.totalorder %s24, 0
      %p171 = por %p169, %p170
      %p172 = scmp.ne.s32.totalorder %s160, %s161
      %p173 = scmp.eq.s32.totalorder %s25, 1
      %p174 = por %p172, %p173
      %p176 = scmp.ne.s32.totalorder %s161, %s175
      %p177 = scmp.eq.s32.totalorder %s25, 0
      %p178 = por %p176, %p177
      %s180 = sadd.s32 %s179, 1
      %p183 = scmp.eq.s32.totalorder %s19, 1
      %p184 = scmp.ne.s32.totalorder %s179, %s181
      %p185 = scmp.eq.s32.totalorder %s19, 0
      %p186 = por %p184, %p185
      %p187 = scmp.ne.s32.totalorder %s179, %s181
      %p188 = scmp.eq.s32.totalorder %s24, 1
      %p189 = por %p187, %p188
      %p190 = scmp.ne.s32.totalorder %s181, %s182
      %p191 = scmp.eq.s32.totalorder %s24, 0
      %p192 = por %p190, %p191
      %p193 = scmp.ne.s32.totalorder %s181, %s182
      %p194 = scmp.eq.s32.totalorder %s25, 1
      %p195 = por %p193, %p194
      %p197 = scmp.ne.s32.totalorder %s182, %s196
      %p198 = scmp.eq.s32.totalorder %s25, 0
      %p199 = por %p197, %p198
      %s201 = sadd.s32 %s200, 1
      %p204 = scmp.eq.s32.totalorder %s19, 1
      %p205 = scmp.ne.s32.totalorder %s200, %s202
      %p206 = scmp.eq.s32.totalorder %s19, 0
      %p207 = por %p205, %p206
      %p208 = scmp.ne.s32.totalorder %s200, %s202
      %p209 = scmp.eq.s32.totalorder %s24, 1
      %p210 = por %p208, %p209
      %p211 = scmp.ne.s32.totalorder %s202, %s203
      %p212 = scmp.eq.s32.totalorder %s24, 0
      %p213 = por %p211, %p212
      %p214 = scmp.ne.s32.totalorder %s202, %s203
      %p215 = scmp.eq.s32.totalorder %s25, 1
      %p216 = por %p214, %p215
      %p218 = scmp.ne.s32.totalorder %s203, %s217
      %p219 = scmp.eq.s32.totalorder %s25, 0
      %p220 = por %p218, %p219
      %s222 = sadd.s32 %s221, 1
      %p225 = scmp.eq.s32.totalorder %s19, 1
      %p226 = scmp.ne.s32.totalorder %s221, %s223
      %p227 = scmp.eq.s32.totalorder %s19, 0
      %p228 = por %p226, %p227
      %p229 = scmp.ne.s32.totalorder %s221, %s223
      %p230 = scmp.eq.s32.totalorder %s24, 1
      %p231 = por %p229, %p230
      %p232 = scmp.ne.s32.totalorder %s223, %s224
      %p233 = scmp.eq.s32.totalorder %s24, 0
      %p234 = por %p232, %p233
      %p235 = scmp.ne.s32.totalorder %s223, %s224
      %p236 = scmp.eq.s32.totalorder %s25, 1
      %p237 = por %p235, %p236
      %p239 = scmp.ne.s32.totalorder %s224, %s238
      %p240 = scmp.eq.s32.totalorder %s25, 0
      %p241 = por %p239, %p240
      %s242 = ssub.s32 %s19, %s26
      %p243 = scmp.eq.s32.totalorder %s242, 0
      %s245 = sadd.s32 %s244, 1
      %s246 = scalar_select %p243, %s244, %s245
      %p249 = pneg %p243
      %p250 = scmp.eq.s32.totalorder %s19, 1
      %p251 = por %p249, %p250
      %p252 = scmp.ne.s32.totalorder %s244, %s247
      %p253 = scmp.eq.s32.totalorder %s19, 0
      %p254 = por %p252, %p253
      %p255 = scmp.ne.s32.totalorder %s244, %s247
      %p256 = scmp.eq.s32.totalorder %s24, 1
      %p257 = por %p255, %p256
      %p258 = scmp.ne.s32.totalorder %s247, %s248
      %p259 = scmp.eq.s32.totalorder %s24, 0
      %p260 = por %p258, %p259
      %p261 = scmp.ne.s32.totalorder %s247, %s248
      %p262 = scmp.eq.s32.totalorder %s25, 1
      %p263 = por %p261, %p262
      %p265 = scmp.ne.s32.totalorder %s248, %s264
      %p266 = scmp.eq.s32.totalorder %s25, 0
      %p267 = por %p265, %p266
      %p268 = scmp.le.s32.totalorder 1, %s19
      %p269 = scmp.lt.s32.totalorder %s19, 3
      %p270 = pnand %p268, %p269
      %p271 = pneg %p270
      // Predicated region
      $region9: #{fastreid_forward.1} parent=5 // pred_check
        _
      $region10: #{fastreid_forward.1} parent=5 // pred_check_branch
        %273 = sbr.rel (%p270) target = $region12
      $region11: #{fastreid_forward.1} parent=5 // pred_region
        %s274 = ssub.s32 %s19, 1
        // Predicated region
        $region13: #{fastreid_forward.1} parent=11 // pred_check
          %p275 = pneg %p66
        $region14: #{fastreid_forward.1} parent=11 // pred_check_branch
          %277 = sbr.rel (%p275) target = $region16
        $region15: #{fastreid_forward.1} parent=11 // pred_region
          _
        $region16: #{fastreid_forward.1} parent=11 // pred_fallthru
          _
        // Predicated region
        $region17: #{fastreid_forward.1} parent=11 // pred_check
          %p278 = pneg %p87
        $region18: #{fastreid_forward.1} parent=11 // pred_check_branch
          %280 = sbr.rel (%p278) target = $region20
        $region19: #{fastreid_forward.1} parent=11 // pred_region
          _
        $region20: #{fastreid_forward.1} parent=11 // pred_fallthru
          _
        // Predicated region
        $region21: #{fastreid_forward.1} parent=11 // pred_check
          %p281 = pneg %p108
        $region22: #{fastreid_forward.1} parent=11 // pred_check_branch
          %283 = sbr.rel (%p281) target = $region24
        $region23: #{fastreid_forward.1} parent=11 // pred_region
          _
        $region24: #{fastreid_forward.1} parent=11 // pred_fallthru
          _
        // Predicated region
        $region25: #{fastreid_forward.1} parent=11 // pred_check
          %p284 = pneg %p129
        $region26: #{fastreid_forward.1} parent=11 // pred_check_branch
          %286 = sbr.rel (%p284) target = $region28
        $region27: #{fastreid_forward.1} parent=11 // pred_region
          _
        $region28: #{fastreid_forward.1} parent=11 // pred_fallthru
          _
        // Predicated region
        $region29: #{fastreid_forward.1} parent=11 // pred_check
          %p287 = pneg %p150
        $region30: #{fastreid_forward.1} parent=11 // pred_check_branch
          %289 = sbr.rel (%p287) target = $region32
        $region31: #{fastreid_forward.1} parent=11 // pred_region
          _
        $region32: #{fastreid_forward.1} parent=11 // pred_fallthru
          _
        // Predicated region
        $region33: #{fastreid_forward.1} parent=11 // pred_check
          %p290 = pneg %p171
        $region34: #{fastreid_forward.1} parent=11 // pred_check_branch
          %292 = sbr.rel (%p290) target = $region36
        $region35: #{fastreid_forward.1} parent=11 // pred_region
          _
        $region36: #{fastreid_forward.1} parent=11 // pred_fallthru
          _
        // Predicated region
        $region37: #{fastreid_forward.1} parent=11 // pred_check
          %p293 = pneg %p192
        $region38: #{fastreid_forward.1} parent=11 // pred_check_branch
          %295 = sbr.rel (%p293) target = $region40
        $region39: #{fastreid_forward.1} parent=11 // pred_region
          _
        $region40: #{fastreid_forward.1} parent=11 // pred_fallthru
          _
        // Predicated region
        $region41: #{fastreid_forward.1} parent=11 // pred_check
          %p296 = pneg %p213
        $region42: #{fastreid_forward.1} parent=11 // pred_check_branch
          %298 = sbr.rel (%p296) target = $region44
        $region43: #{fastreid_forward.1} parent=11 // pred_region
          _
        $region44: #{fastreid_forward.1} parent=11 // pred_fallthru
          _
        // Predicated region
        $region45: #{fastreid_forward.1} parent=11 // pred_check
          %p299 = pneg %p234
        $region46: #{fastreid_forward.1} parent=11 // pred_check_branch
          %301 = sbr.rel (%p299) target = $region48
        $region47: #{fastreid_forward.1} parent=11 // pred_region
          _
        $region48: #{fastreid_forward.1} parent=11 // pred_fallthru
          _
      $region12: #{fastreid_forward.1} parent=5 // pred_fallthru
        _
      %p302 = scmp.lt.s32.totalorder %s19, 2
      // Predicated region
      $region49: #{fastreid_forward.1} parent=5 // pred_check
        %p303 = pneg %p302
      $region50: #{fastreid_forward.1} parent=5 // pred_check_branch
        %305 = sbr.rel (%p303) target = $region52
      $region51: #{fastreid_forward.1} parent=5 // pred_region
        // Predicated region
        $region53: #{fastreid_forward.1} parent=51 // pred_check
          %p306 = pneg %p39
        $region54: #{fastreid_forward.1} parent=51 // pred_check_branch
          %308 = sbr.rel (%p306) target = $region56
        $region55: #{fastreid_forward.1} parent=51 // pred_region
          %p309 = scmp.lt.s32.totalorder %s19, 1
          %s310 = scalar_select %p309, %s19, 1
          %s311 = smul.addr %s310, 64
          %s312 = smul.addr %s311, 4
          %s313 = scalar_lea.vmem %s0, %s312
        $region56: #{fastreid_forward.1} parent=51 // pred_fallthru
          _
      $region52: #{fastreid_forward.1} parent=5 // pred_fallthru
        _
      %p314 = scmp.le.s32.totalorder 1, %s19
      %p315 = scmp.lt.s32.totalorder %s19, 3
      %p316 = pnand %p314, %p315
      %p317 = pneg %p316
      // Predicated region
      $region57: #{fastreid_forward.1} parent=5 // pred_check
        _
      $region58: #{fastreid_forward.1} parent=5 // pred_check_branch
        %319 = sbr.rel (%p316) target = $region60
      $region59: #{fastreid_forward.1} parent=5 // pred_region
        %s320 = ssub.s32 %s19, 1
        %p321 = scmp.lt.s32.totalorder %s24, 1
        %s322 = scalar_select %p321, %s24, 1
        %s323 = smul.addr %s322, 64
        %s324 = smul.addr %s323, 4
        %s325 = scalar_lea.vmem %s0, %s324
        %p326 = pneg %p45
        %p327 = pneg %p42
        %p328 = pneg %p66
        %p329 = pneg %p63
        %p330 = pneg %p87
        %p331 = pneg %p84
        %p332 = pneg %p108
        %p333 = pneg %p105
        %p334 = pneg %p129
        %p335 = pneg %p126
        %p336 = pneg %p150
        %p337 = pneg %p147
        %p338 = pneg %p171
        %p339 = pneg %p168
        %p340 = pneg %p192
        %p341 = pneg %p189
        %p342 = pneg %p213
        %p343 = pneg %p210
        %p344 = pneg %p234
        %p345 = pneg %p231
        %p346 = pneg %p260
        %p347 = pneg %p257
        %s348 = sand.u32 %s247, 1
        %s349 = scalar_lea.sflag [#allocation4], %s348
        %s350 = sand.u32 %s247, 1
        %s351 = scalar_lea.vmem [#allocation3], %s350
        %p352 = scmp.lt.s32.totalorder %s24, 1
        %s353 = scalar_select %p352, %s24, 1
        %s354 = smul.addr %s353, 64
        %s355 = smul.addr %s354, 4
        %s356 = scalar_lea.vmem %s0, %s355
        %v357 = vld [vmem:[%s356] sm:$0xf]
        %v358 = vld [vmem:[%s356 + $0x4] sm:$0xf]
        %v359 = vld [vmem:[%s356 + $0x8] sm:$0xf]
        %v360 = vld [vmem:[%s356 + $0xc] sm:$0xf]
        %v361 = vld [vmem:[%s356 + $0x10] sm:$0xf]
        %v362 = vld [vmem:[%s356 + $0x14] sm:$0xf]
        %v363 = vld [vmem:[%s356 + $0x18] sm:$0xf]
        %v364 = vld [vmem:[%s356 + $0x1c] sm:$0xf]
        %v365 = vld [vmem:[%s356 + $0x20] sm:$0xf]
        %v366 = vld [vmem:[%s356 + $0x24] sm:$0xf]
        %v367 = vld [vmem:[%s356 + $0x28] sm:$0xf]
        %v368 = vld [vmem:[%s356 + $0x2c] sm:$0xf]
        %v369 = vld [vmem:[%s356 + $0x30] sm:$0xf]
        %v370 = vld [vmem:[%s356 + $0x34] sm:$0xf]
        %v371 = vld [vmem:[%s356 + $0x38] sm:$0xf]
        %v372 = vld [vmem:[%s356 + $0x3c] sm:$0xf]
        %v373 = vld [vmem:[%s356 + $0x40] sm:$0xf]
        %v374 = vld [vmem:[%s356 + $0x44] sm:$0xf]
        %v375 = vld [vmem:[%s356 + $0x48] sm:$0xf]
        %v376 = vld [vmem:[%s356 + $0x4c] sm:$0xf]
        %v377 = vld [vmem:[%s356 + $0x50] sm:$0xf]
        %v378 = vld [vmem:[%s356 + $0x54] sm:$0xf]
        %v379 = vld [vmem:[%s356 + $0x58] sm:$0xf]
        %v380 = vld [vmem:[%s356 + $0x5c] sm:$0xf]
        %v381 = vld [vmem:[%s356 + $0x60] sm:$0xf]
        %v382 = vld [vmem:[%s356 + $0x64] sm:$0xf]
        %v383 = vld [vmem:[%s356 + $0x68] sm:$0xf]
        %v384 = vld [vmem:[%s356 + $0x6c] sm:$0xf]
        %v385 = vld [vmem:[%s356 + $0x70] sm:$0xf]
        %v386 = vld [vmem:[%s356 + $0x74] sm:$0xf]
        %v387 = vld [vmem:[%s356 + $0x78] sm:$0xf]
        %v388 = vld [vmem:[%s356 + $0x7c] sm:$0xf]
        %v389 = vld [vmem:[%s356 + $0x80] sm:$0xf]
        %v390 = vld [vmem:[%s356 + $0x84] sm:$0xf]
        %v391 = vld [vmem:[%s356 + $0x88] sm:$0xf]
        %v392 = vld [vmem:[%s356 + $0x8c] sm:$0xf]
        %v393 = vld [vmem:[%s356 + $0x90] sm:$0xf]
        %v394 = vld [vmem:[%s356 + $0x94] sm:$0xf]
        %v395 = vld [vmem:[%s356 + $0x98] sm:$0xf]
        %v396 = vld [vmem:[%s356 + $0x9c] sm:$0xf]
        %v397 = vld [vmem:[%s356 + $0xa0] sm:$0xf]
        %v398 = vld [vmem:[%s356 + $0xa4] sm:$0xf]
        %v399 = vld [vmem:[%s356 + $0xa8] sm:$0xf]
        %v400 = vld [vmem:[%s356 + $0xac] sm:$0xf]
        %v401 = vld [vmem:[%s356 + $0xb0] sm:$0xf]
        %v402 = vld [vmem:[%s356 + $0xb4] sm:$0xf]
        %v403 = vld [vmem:[%s356 + $0xb8] sm:$0xf]
        %v404 = vld [vmem:[%s356 + $0xbc] sm:$0xf]
        %v405 = vld [vmem:[%s356 + $0xc0] sm:$0xf]
        %v406 = vld [vmem:[%s356 + $0xc4] sm:$0xf]
        %v407 = vld [vmem:[%s356 + $0xc8] sm:$0xf]
        %v408 = vld [vmem:[%s356 + $0xcc] sm:$0xf]
        %v409 = vld [vmem:[%s356 + $0xd0] sm:$0xf]
        %v410 = vld [vmem:[%s356 + $0xd4] sm:$0xf]
        %v411 = vld [vmem:[%s356 + $0xd8] sm:$0xf]
        %v412 = vld [vmem:[%s356 + $0xdc] sm:$0xf]
        %v413 = vld [vmem:[%s356 + $0xe0] sm:$0xf]
        %v414 = vld [vmem:[%s356 + $0xe4] sm:$0xf]
        %v415 = vld [vmem:[%s356 + $0xe8] sm:$0xf]
        %v416 = vld [vmem:[%s356 + $0xec] sm:$0xf]
        %v417 = vld [vmem:[%s356 + $0xf0] sm:$0xf]
        %v418 = vld [vmem:[%s356 + $0xf4] sm:$0xf]
        %v419 = vld [vmem:[%s356 + $0xf8] sm:$0xf]
        %v420 = vld [vmem:[%s356 + $0xfc] sm:$0xf]
        %v421 = vld [vmem:[%s1] sm:$0xf]
        %v422 = vld [vmem:[%s1 + $0x4] sm:$0xf]
        %v423 = vld [vmem:[%s1 + $0x8] sm:$0xf]
        %v424 = vld [vmem:[%s1 + $0xc] sm:$0xf]
        %v425 = vld [vmem:[%s1 + $0x10] sm:$0xf]
        %v426 = vld [vmem:[%s1 + $0x14] sm:$0xf]
        %v427 = vld [vmem:[%s1 + $0x18] sm:$0xf]
        %v428 = vld [vmem:[%s1 + $0x1c] sm:$0xf]
        %v429 = vld [vmem:[%s1 + $0x20] sm:$0xf]
        %v430 = vld [vmem:[%s1 + $0x24] sm:$0xf]
        %v431 = vld [vmem:[%s1 + $0x28] sm:$0xf]
        %v432 = vld [vmem:[%s1 + $0x2c] sm:$0xf]
        %v433 = vld [vmem:[%s1 + $0x30] sm:$0xf]
        %v434 = vld [vmem:[%s1 + $0x34] sm:$0xf]
        %v435 = vld [vmem:[%s1 + $0x38] sm:$0xf]
        %v436 = vld [vmem:[%s1 + $0x3c] sm:$0xf]
        %v501 = vunpack.c.l.b16 %v357
        %v502 = vunpack.c.l.b16 %v358
        %v503 = vunpack.c.l.b16 %v359
        %v504 = vunpack.c.l.b16 %v360
        %v505 = vunpack.c.l.b16 %v361
        %v506 = vunpack.c.l.b16 %v362
        %v507 = vunpack.c.l.b16 %v363
        %v508 = vunpack.c.l.b16 %v364
        %v509 = vunpack.c.l.b16 %v365
        %v510 = vunpack.c.l.b16 %v366
        %v511 = vunpack.c.l.b16 %v367
        %v512 = vunpack.c.l.b16 %v368
        %v513 = vunpack.c.l.b16 %v369
        %v514 = vunpack.c.l.b16 %v370
        %v515 = vunpack.c.l.b16 %v371
        %v516 = vunpack.c.l.b16 %v372
        %v517 = vunpack.c.l.b16 %v373
        %v518 = vunpack.c.l.b16 %v374
        %v519 = vunpack.c.l.b16 %v375
        %v520 = vunpack.c.l.b16 %v376
        %v521 = vunpack.c.l.b16 %v377
        %v522 = vunpack.c.l.b16 %v378
        %v523 = vunpack.c.l.b16 %v379
        %v524 = vunpack.c.l.b16 %v380
        %v525 = vunpack.c.l.b16 %v381
        %v526 = vunpack.c.l.b16 %v382
        %v527 = vunpack.c.l.b16 %v383
        %v528 = vunpack.c.l.b16 %v384
        %v529 = vunpack.c.l.b16 %v385
        %v530 = vunpack.c.l.b16 %v386
        %v531 = vunpack.c.l.b16 %v387
        %v532 = vunpack.c.l.b16 %v388
        %v533 = vunpack.c.l.b16 %v389
        %v534 = vunpack.c.l.b16 %v390
        %v535 = vunpack.c.l.b16 %v391
        %v536 = vunpack.c.l.b16 %v392
        %v537 = vunpack.c.l.b16 %v393
        %v538 = vunpack.c.l.b16 %v394
        %v539 = vunpack.c.l.b16 %v395
        %v540 = vunpack.c.l.b16 %v396
        %v541 = vunpack.c.l.b16 %v397
        %v542 = vunpack.c.l.b16 %v398
        %v543 = vunpack.c.l.b16 %v399
        %v544 = vunpack.c.l.b16 %v400
        %v545 = vunpack.c.l.b16 %v401
        %v546 = vunpack.c.l.b16 %v402
        %v547 = vunpack.c.l.b16 %v403
        %v548 = vunpack.c.l.b16 %v404
        %v549 = vunpack.c.l.b16 %v405
        %v550 = vunpack.c.l.b16 %v406
        %v551 = vunpack.c.l.b16 %v407
        %v552 = vunpack.c.l.b16 %v408
        %v553 = vunpack.c.l.b16 %v409
        %v554 = vunpack.c.l.b16 %v410
        %v555 = vunpack.c.l.b16 %v411
        %v556 = vunpack.c.l.b16 %v412
        %v557 = vunpack.c.l.b16 %v413
        %v558 = vunpack.c.l.b16 %v414
        %v559 = vunpack.c.l.b16 %v415
        %v560 = vunpack.c.l.b16 %v416
        %v561 = vunpack.c.l.b16 %v417
        %v562 = vunpack.c.l.b16 %v418
        %v563 = vunpack.c.l.b16 %v419
        %v564 = vunpack.c.l.b16 %v420
        %v565 = vpack.c.b16 %v502, %v501
        %v566 = vpack.c.b16 %v504, %v503
        %v567 = vpack.c.b16 %v506, %v505
        %v568 = vpack.c.b16 %v508, %v507
        %v569 = vpack.c.b16 %v510, %v509
        %v570 = vpack.c.b16 %v512, %v511
        %v571 = vpack.c.b16 %v514, %v513
        %v572 = vpack.c.b16 %v516, %v515
        %v573 = vpack.c.b16 %v518, %v517
        %v574 = vpack.c.b16 %v520, %v519
        %v575 = vpack.c.b16 %v522, %v521
        %v576 = vpack.c.b16 %v524, %v523
        %v577 = vpack.c.b16 %v526, %v525
        %v578 = vpack.c.b16 %v528, %v527
        %v579 = vpack.c.b16 %v530, %v529
        %v580 = vpack.c.b16 %v532, %v531
        %v581 = vpack.c.b16 %v534, %v533
        %v582 = vpack.c.b16 %v536, %v535
        %v583 = vpack.c.b16 %v538, %v537
        %v584 = vpack.c.b16 %v540, %v539
        %v585 = vpack.c.b16 %v542, %v541
        %v586 = vpack.c.b16 %v544, %v543
        %v587 = vpack.c.b16 %v546, %v545
        %v588 = vpack.c.b16 %v548, %v547
        %v589 = vpack.c.b16 %v550, %v549
        %v590 = vpack.c.b16 %v552, %v551
        %v591 = vpack.c.b16 %v554, %v553
        %v592 = vpack.c.b16 %v556, %v555
        %v593 = vpack.c.b16 %v558, %v557
        %v594 = vpack.c.b16 %v560, %v559
        %v595 = vpack.c.b16 %v562, %v561
        %v596 = vpack.c.b16 %v564, %v563
        %v645 = vunpack.c.l.b16 %v421
        %v646 = vunpack.c.l.b16 %v422
        %v647 = vunpack.c.l.b16 %v423
        %v648 = vunpack.c.l.b16 %v424
        %v649 = vunpack.c.l.b16 %v425
        %v650 = vunpack.c.l.b16 %v426
        %v651 = vunpack.c.l.b16 %v427
        %v652 = vunpack.c.l.b16 %v428
        %v653 = vunpack.c.l.b16 %v429
        %v654 = vunpack.c.l.b16 %v430
        %v655 = vunpack.c.l.b16 %v431
        %v656 = vunpack.c.l.b16 %v432
        %v657 = vunpack.c.l.b16 %v433
        %v658 = vunpack.c.l.b16 %v434
        %v659 = vunpack.c.l.b16 %v435
        %v660 = vunpack.c.l.b16 %v436
        %v661 = vpack.c.b16 %v646, %v645
        %v662 = vpack.c.b16 %v648, %v647
        %v663 = vpack.c.b16 %v650, %v649
        %v664 = vpack.c.b16 %v652, %v651
        %v665 = vpack.c.b16 %v654, %v653
        %v666 = vpack.c.b16 %v656, %v655
        %v667 = vpack.c.b16 %v658, %v657
        %v668 = vpack.c.b16 %v660, %v659
        %677 = vmatpush.bf16.msra.mxu0 %v668
        %678 = vmatpush.bf16.msra.mxu0 %v667
        %679 = vmatpush.bf16.msra.mxu0 %v666
        %680 = vmatpush.bf16.msra.mxu0 %v665
        %681 = vmatpush.bf16.msra.mxu0 %v664
        %682 = vmatpush.bf16.msra.mxu0 %v663
        %683 = vmatpush.bf16.msra.mxu0 %v662
        %684 = vmatpush.bf16.msra.mxu0 %v661
        %685 = vmatmul.bf16.gmra.mxu0 %v565
        %v686 = vpop.f32.mrf.mxu0
        %v687 = vadd.f32 0.0, %v686
        %v688 = vpop.f32.mrf.mxu0
        %v689 = vadd.f32 0.0, %v688
        %690 = vmatmul.bf16.gmra.mxu0 %v566
        %v691 = vpop.f32.mrf.mxu0
        %v692 = vadd.f32 0.0, %v691
        %v693 = vpop.f32.mrf.mxu0
        %v694 = vadd.f32 0.0, %v693
        %695 = vmatmul.bf16.gmra.mxu0 %v567
        %v696 = vpop.f32.mrf.mxu0
        %v697 = vadd.f32 0.0, %v696
        %v698 = vpop.f32.mrf.mxu0
        %v699 = vadd.f32 0.0, %v698
        %700 = vmatmul.bf16.gmra.mxu0 %v568
        %v701 = vpop.f32.mrf.mxu0
        %v702 = vadd.f32 0.0, %v701
        %v703 = vpop.f32.mrf.mxu0
        %v704 = vadd.f32 0.0, %v703
        %705 = vmatmul.bf16.gmra.mxu0 %v569
        %v706 = vpop.f32.mrf.mxu0
        %v707 = vadd.f32 0.0, %v706
        %v708 = vpop.f32.mrf.mxu0
        %v709 = vadd.f32 0.0, %v708
        %710 = vmatmul.bf16.gmra.mxu0 %v570
        %v711 = vpop.f32.mrf.mxu0
        %v712 = vadd.f32 0.0, %v711
        %v713 = vpop.f32.mrf.mxu0
        %v714 = vadd.f32 0.0, %v713
        %715 = vmatmul.bf16.gmra.mxu0 %v571
        %v716 = vpop.f32.mrf.mxu0
        %v717 = vadd.f32 0.0, %v716
        %v718 = vpop.f32.mrf.mxu0
        %v719 = vadd.f32 0.0, %v718
        %720 = vmatmul.bf16.gmra.mxu0 %v572
        %v721 = vpop.f32.mrf.mxu0
        %v722 = vadd.f32 0.0, %v721
        %v723 = vpop.f32.mrf.mxu0
        %v724 = vadd.f32 0.0, %v723
        %725 = vmatmul.bf16.gmra.mxu0 %v573
        %v726 = vpop.f32.mrf.mxu0
        %v727 = vadd.f32 0.0, %v726
        %v728 = vpop.f32.mrf.mxu0
        %v729 = vadd.f32 0.0, %v728
        %730 = vmatmul.bf16.gmra.mxu0 %v574
        %v731 = vpop.f32.mrf.mxu0
        %v732 = vadd.f32 0.0, %v731
        %v733 = vpop.f32.mrf.mxu0
        %v734 = vadd.f32 0.0, %v733
        %735 = vmatmul.bf16.gmra.mxu0 %v575
        %v736 = vpop.f32.mrf.mxu0
        %v737 = vadd.f32 0.0, %v736
        %v738 = vpop.f32.mrf.mxu0
        %v739 = vadd.f32 0.0, %v738
        %740 = vmatmul.bf16.gmra.mxu0 %v576
        %v741 = vpop.f32.mrf.mxu0
        %v742 = vadd.f32 0.0, %v741
        %v743 = vpop.f32.mrf.mxu0
        %v744 = vadd.f32 0.0, %v743
        %745 = vmatmul.bf16.gmra.mxu0 %v577
        %v746 = vpop.f32.mrf.mxu0
        %v747 = vadd.f32 0.0, %v746
        %v748 = vpop.f32.mrf.mxu0
        %v749 = vadd.f32 0.0, %v748
        %750 = vmatmul.bf16.gmra.mxu0 %v578
        %v751 = vpop.f32.mrf.mxu0
        %v752 = vadd.f32 0.0, %v751
        %v753 = vpop.f32.mrf.mxu0
        %v754 = vadd.f32 0.0, %v753
        %755 = vmatmul.bf16.gmra.mxu0 %v579
        %v756 = vpop.f32.mrf.mxu0
        %v757 = vadd.f32 0.0, %v756
        %v758 = vpop.f32.mrf.mxu0
        %v759 = vadd.f32 0.0, %v758
        %760 = vmatmul.bf16.gmra.mxu0 %v580
        %v761 = vpop.f32.mrf.mxu0
        %v762 = vadd.f32 0.0, %v761
        %v763 = vpop.f32.mrf.mxu0
        %v764 = vadd.f32 0.0, %v763
        %765 = vmatmul.bf16.gmra.mxu0 %v581
        %v766 = vpop.f32.mrf.mxu0
        %v767 = vadd.f32 0.0, %v766
        %v768 = vpop.f32.mrf.mxu0
        %v769 = vadd.f32 0.0, %v768
        %770 = vmatmul.bf16.gmra.mxu0 %v582
        %v771 = vpop.f32.mrf.mxu0
        %v772 = vadd.f32 0.0, %v771
        %v773 = vpop.f32.mrf.mxu0
        %v774 = vadd.f32 0.0, %v773
        %775 = vmatmul.bf16.gmra.mxu0 %v583
        %v776 = vpop.f32.mrf.mxu0
        %v777 = vadd.f32 0.0, %v776
        %v778 = vpop.f32.mrf.mxu0
        %v779 = vadd.f32 0.0, %v778
        %780 = vmatmul.bf16.gmra.mxu0 %v584
        %v781 = vpop.f32.mrf.mxu0
        %v782 = vadd.f32 0.0, %v781
        %v783 = vpop.f32.mrf.mxu0
        %v784 = vadd.f32 0.0, %v783
        %785 = vmatmul.bf16.gmra.mxu0 %v585
        %v786 = vpop.f32.mrf.mxu0
        %v787 = vadd.f32 0.0, %v786
        %v788 = vpop.f32.mrf.mxu0
        %v789 = vadd.f32 0.0, %v788
        %790 = vmatmul.bf16.gmra.mxu0 %v586
        %v791 = vpop.f32.mrf.mxu0
        %v792 = vadd.f32 0.0, %v791
        %v793 = vpop.f32.mrf.mxu0
        %v794 = vadd.f32 0.0, %v793
        %795 = vmatmul.bf16.gmra.mxu0 %v587
        %v796 = vpop.f32.mrf.mxu0
        %v797 = vadd.f32 0.0, %v796
        %v798 = vpop.f32.mrf.mxu0
        %v799 = vadd.f32 0.0, %v798
        %800 = vmatmul.bf16.gmra.mxu0 %v588
        %v801 = vpop.f32.mrf.mxu0
        %v802 = vadd.f32 0.0, %v801
        %v803 = vpop.f32.mrf.mxu0
        %v804 = vadd.f32 0.0, %v803
        %805 = vmatmul.bf16.gmra.mxu0 %v589
        %v806 = vpop.f32.mrf.mxu0
        %v807 = vadd.f32 0.0, %v806
        %v808 = vpop.f32.mrf.mxu0
        %v809 = vadd.f32 0.0, %v808
        %810 = vmatmul.bf16.gmra.mxu0 %v590
        %v811 = vpop.f32.mrf.mxu0
        %v812 = vadd.f32 0.0, %v811
        %v813 = vpop.f32.mrf.mxu0
        %v814 = vadd.f32 0.0, %v813
        %815 = vmatmul.bf16.gmra.mxu0 %v591
        %v816 = vpop.f32.mrf.mxu0
        %v817 = vadd.f32 0.0, %v816
        %v818 = vpop.f32.mrf.mxu0
        %v819 = vadd.f32 0.0, %v818
        %820 = vmatmul.bf16.gmra.mxu0 %v592
        %v821 = vpop.f32.mrf.mxu0
        %v822 = vadd.f32 0.0, %v821
        %v823 = vpop.f32.mrf.mxu0
        %v824 = vadd.f32 0.0, %v823
        %825 = vmatmul.bf16.gmra.mxu0 %v593
        %v826 = vpop.f32.mrf.mxu0
        %v827 = vadd.f32 0.0, %v826
        %v828 = vpop.f32.mrf.mxu0
        %v829 = vadd.f32 0.0, %v828
        %830 = vmatmul.bf16.gmra.mxu0 %v594
        %v831 = vpop.f32.mrf.mxu0
        %v832 = vadd.f32 0.0, %v831
        %v833 = vpop.f32.mrf.mxu0
        %v834 = vadd.f32 0.0, %v833
        %835 = vmatmul.bf16.gmra.mxu0 %v595
        %v836 = vpop.f32.mrf.mxu0
        %v837 = vadd.f32 0.0, %v836
        %v838 = vpop.f32.mrf.mxu0
        %v839 = vadd.f32 0.0, %v838
        %840 = vmatmul.bf16.gmra.mxu0 %v596
        %v841 = vpop.f32.mrf.mxu0
        %v842 = vadd.f32 0.0, %v841
        %v843 = vpop.f32.mrf.mxu0
        %v844 = vadd.f32 0.0, %v843
        %845 = vdwg.mxu0
        %v846 = vld [vmem:[%s2] sm:$0x1]
        %v847 = vperm.slane %v846, 0
        %v848 = vmul.f32 %v687, %v847
        %v849 = vmul.f32 %v689, %v847
        %v850 = vmul.f32 %v692, %v847
        %v851 = vmul.f32 %v694, %v847
        %v852 = vmul.f32 %v697, %v847
        %v853 = vmul.f32 %v699, %v847
        %v854 = vmul.f32 %v702, %v847
        %v855 = vmul.f32 %v704, %v847
        %v856 = vmul.f32 %v707, %v847
        %v857 = vmul.f32 %v709, %v847
        %v858 = vmul.f32 %v712, %v847
        %v859 = vmul.f32 %v714, %v847
        %v860 = vmul.f32 %v717, %v847
        %v861 = vmul.f32 %v719, %v847
        %v862 = vmul.f32 %v722, %v847
        %v863 = vmul.f32 %v724, %v847
        %v864 = vmul.f32 %v727, %v847
        %v865 = vmul.f32 %v729, %v847
        %v866 = vmul.f32 %v732, %v847
        %v867 = vmul.f32 %v734, %v847
        %v868 = vmul.f32 %v737, %v847
        %v869 = vmul.f32 %v739, %v847
        %v870 = vmul.f32 %v742, %v847
        %v871 = vmul.f32 %v744, %v847
        %v872 = vmul.f32 %v747, %v847
        %v873 = vmul.f32 %v749, %v847
        %v874 = vmul.f32 %v752, %v847
        %v875 = vmul.f32 %v754, %v847
        %v876 = vmul.f32 %v757, %v847
        %v877 = vmul.f32 %v759, %v847
        %v878 = vmul.f32 %v762, %v847
        %v879 = vmul.f32 %v764, %v847
        %v880 = vmul.f32 %v767, %v847
        %v881 = vmul.f32 %v769, %v847
        %v882 = vmul.f32 %v772, %v847
        %v883 = vmul.f32 %v774, %v847
        %v884 = vmul.f32 %v777, %v847
        %v885 = vmul.f32 %v779, %v847
        %v886 = vmul.f32 %v782, %v847
        %v887 = vmul.f32 %v784, %v847
        %v888 = vmul.f32 %v787, %v847
        %v889 = vmul.f32 %v789, %v847
        %v890 = vmul.f32 %v792, %v847
        %v891 = vmul.f32 %v794, %v847
        %v892 = vmul.f32 %v797, %v847
        %v893 = vmul.f32 %v799, %v847
        %v894 = vmul.f32 %v802, %v847
        %v895 = vmul.f32 %v804, %v847
        %v896 = vmul.f32 %v807, %v847
        %v897 = vmul.f32 %v809, %v847
        %v898 = vmul.f32 %v812, %v847
        %v899 = vmul.f32 %v814, %v847
        %v900 = vmul.f32 %v817, %v847
        %v901 = vmul.f32 %v819, %v847
        %v902 = vmul.f32 %v822, %v847
        %v903 = vmul.f32 %v824, %v847
        %v904 = vmul.f32 %v827, %v847
        %v905 = vmul.f32 %v829, %v847
        %v906 = vmul.f32 %v832, %v847
        %v907 = vmul.f32 %v834, %v847
        %v908 = vmul.f32 %v837, %v847
        %v909 = vmul.f32 %v839, %v847
        %v910 = vmul.f32 %v842, %v847
        %v911 = vmul.f32 %v844, %v847
        %v912 = vld [vmem:[%s2 + $0x1] sm:$0x1]
        %v913 = vperm.slane %v912, 0
        %v914 = vadd.f32 %v848, %v913
        %v915 = vadd.f32 %v849, %v913
        %v916 = vadd.f32 %v850, %v913
        %v917 = vadd.f32 %v851, %v913
        %v918 = vadd.f32 %v852, %v913
        %v919 = vadd.f32 %v853, %v913
        %v920 = vadd.f32 %v854, %v913
        %v921 = vadd.f32 %v855, %v913
        %v922 = vadd.f32 %v856, %v913
        %v923 = vadd.f32 %v857, %v913
        %v924 = vadd.f32 %v858, %v913
        %v925 = vadd.f32 %v859, %v913
        %v926 = vadd.f32 %v860, %v913
        %v927 = vadd.f32 %v861, %v913
        %v928 = vadd.f32 %v862, %v913
        %v929 = vadd.f32 %v863, %v913
        %v930 = vadd.f32 %v864, %v913
        %v931 = vadd.f32 %v865, %v913
        %v932 = vadd.f32 %v866, %v913
        %v933 = vadd.f32 %v867, %v913
        %v934 = vadd.f32 %v868, %v913
        %v935 = vadd.f32 %v869, %v913
        %v936 = vadd.f32 %v870, %v913
        %v937 = vadd.f32 %v871, %v913
        %v938 = vadd.f32 %v872, %v913
        %v939 = vadd.f32 %v873, %v913
        %v940 = vadd.f32 %v874, %v913
        %v941 = vadd.f32 %v875, %v913
        %v942 = vadd.f32 %v876, %v913
        %v943 = vadd.f32 %v877, %v913
        %v944 = vadd.f32 %v878, %v913
        %v945 = vadd.f32 %v879, %v913
        %v946 = vadd.f32 %v880, %v913
        %v947 = vadd.f32 %v881, %v913
        %v948 = vadd.f32 %v882, %v913
        %v949 = vadd.f32 %v883, %v913
        %v950 = vadd.f32 %v884, %v913
        %v951 = vadd.f32 %v885, %v913
        %v952 = vadd.f32 %v886, %v913
        %v953 = vadd.f32 %v887, %v913
        %v954 = vadd.f32 %v888, %v913
        %v955 = vadd.f32 %v889, %v913
        %v956 = vadd.f32 %v890, %v913
        %v957 = vadd.f32 %v891, %v913
        %v958 = vadd.f32 %v892, %v913
        %v959 = vadd.f32 %v893, %v913
        %v960 = vadd.f32 %v894, %v913
        %v961 = vadd.f32 %v895, %v913
        %v962 = vadd.f32 %v896, %v913
        %v963 = vadd.f32 %v897, %v913
        %v964 = vadd.f32 %v898, %v913
        %v965 = vadd.f32 %v899, %v913
        %v966 = vadd.f32 %v900, %v913
        %v967 = vadd.f32 %v901, %v913
        %v968 = vadd.f32 %v902, %v913
        %v969 = vadd.f32 %v903, %v913
        %v970 = vadd.f32 %v904, %v913
        %v971 = vadd.f32 %v905, %v913
        %v972 = vadd.f32 %v906, %v913
        %v973 = vadd.f32 %v907, %v913
        %v974 = vadd.f32 %v908, %v913
        %v975 = vadd.f32 %v909, %v913
        %v976 = vadd.f32 %v910, %v913
        %v977 = vadd.f32 %v911, %v913
        %v978 = vmax.f32 %v914, 0.0
        %v979 = vmax.f32 %v915, 0.0
        %v980 = vmax.f32 %v916, 0.0
        %v981 = vmax.f32 %v917, 0.0
        %v982 = vmax.f32 %v918, 0.0
        %v983 = vmax.f32 %v919, 0.0
        %v984 = vmax.f32 %v920, 0.0
        %v985 = vmax.f32 %v921, 0.0
        %v986 = vmax.f32 %v922, 0.0
        %v987 = vmax.f32 %v923, 0.0
        %v988 = vmax.f32 %v924, 0.0
        %v989 = vmax.f32 %v925, 0.0
        %v990 = vmax.f32 %v926, 0.0
        %v991 = vmax.f32 %v927, 0.0
        %v992 = vmax.f32 %v928, 0.0
        %v993 = vmax.f32 %v929, 0.0
        %v994 = vmax.f32 %v930, 0.0
        %v995 = vmax.f32 %v931, 0.0
        %v996 = vmax.f32 %v932, 0.0
        %v997 = vmax.f32 %v933, 0.0
        %v998 = vmax.f32 %v934, 0.0
        %v999 = vmax.f32 %v935, 0.0
        %v1000 = vmax.f32 %v936, 0.0
        %v1001 = vmax.f32 %v937, 0.0
        %v1002 = vmax.f32 %v938, 0.0
        %v1003 = vmax.f32 %v939, 0.0
        %v1004 = vmax.f32 %v940, 0.0
        %v1005 = vmax.f32 %v941, 0.0
        %v1006 = vmax.f32 %v942, 0.0
        %v1007 = vmax.f32 %v943, 0.0
        %v1008 = vmax.f32 %v944, 0.0
        %v1009 = vmax.f32 %v945, 0.0
        %v1010 = vmax.f32 %v946, 0.0
        %v1011 = vmax.f32 %v947, 0.0
        %v1012 = vmax.f32 %v948, 0.0
        %v1013 = vmax.f32 %v949, 0.0
        %v1014 = vmax.f32 %v950, 0.0
        %v1015 = vmax.f32 %v951, 0.0
        %v1016 = vmax.f32 %v952, 0.0
        %v1017 = vmax.f32 %v953, 0.0
        %v1018 = vmax.f32 %v954, 0.0
        %v1019 = vmax.f32 %v955, 0.0
        %v1020 = vmax.f32 %v956, 0.0
        %v1021 = vmax.f32 %v957, 0.0
        %v1022 = vmax.f32 %v958, 0.0
        %v1023 = vmax.f32 %v959, 0.0
        %v1024 = vmax.f32 %v960, 0.0
        %v1025 = vmax.f32 %v961, 0.0
        %v1026 = vmax.f32 %v962, 0.0
        %v1027 = vmax.f32 %v963, 0.0
        %v1028 = vmax.f32 %v964, 0.0
        %v1029 = vmax.f32 %v965, 0.0
        %v1030 = vmax.f32 %v966, 0.0
        %v1031 = vmax.f32 %v967, 0.0
        %v1032 = vmax.f32 %v968, 0.0
        %v1033 = vmax.f32 %v969, 0.0
        %v1034 = vmax.f32 %v970, 0.0
        %v1035 = vmax.f32 %v971, 0.0
        %v1036 = vmax.f32 %v972, 0.0
        %v1037 = vmax.f32 %v973, 0.0
        %v1038 = vmax.f32 %v974, 0.0
        %v1039 = vmax.f32 %v975, 0.0
        %v1040 = vmax.f32 %v976, 0.0
        %v1041 = vmax.f32 %v977, 0.0
        %v1042 = vpack.c.bf16 %v979, %v978
        %v1043 = vpack.c.bf16 %v981, %v980
        %v1044 = vpack.c.bf16 %v983, %v982
        %v1045 = vpack.c.bf16 %v985, %v984
        %v1046 = vpack.c.bf16 %v987, %v986
        %v1047 = vpack.c.bf16 %v989, %v988
        %v1048 = vpack.c.bf16 %v991, %v990
        %v1049 = vpack.c.bf16 %v993, %v992
        %v1050 = vpack.c.bf16 %v995, %v994
        %v1051 = vpack.c.bf16 %v997, %v996
        %v1052 = vpack.c.bf16 %v999, %v998
        %v1053 = vpack.c.bf16 %v1001, %v1000
        %v1054 = vpack.c.bf16 %v1003, %v1002
        %v1055 = vpack.c.bf16 %v1005, %v1004
        %v1056 = vpack.c.bf16 %v1007, %v1006
        %v1057 = vpack.c.bf16 %v1009, %v1008
        %v1058 = vpack.c.bf16 %v1011, %v1010
        %v1059 = vpack.c.bf16 %v1013, %v1012
        %v1060 = vpack.c.bf16 %v1015, %v1014
        %v1061 = vpack.c.bf16 %v1017, %v1016
        %v1062 = vpack.c.bf16 %v1019, %v1018
        %v1063 = vpack.c.bf16 %v1021, %v1020
        %v1064 = vpack.c.bf16 %v1023, %v1022
        %v1065 = vpack.c.bf16 %v1025, %v1024
        %v1066 = vpack.c.bf16 %v1027, %v1026
        %v1067 = vpack.c.bf16 %v1029, %v1028
        %v1068 = vpack.c.bf16 %v1031, %v1030
        %v1069 = vpack.c.bf16 %v1033, %v1032
        %v1070 = vpack.c.bf16 %v1035, %v1034
        %v1071 = vpack.c.bf16 %v1037, %v1036
        %v1072 = vpack.c.bf16 %v1039, %v1038
        %v1073 = vpack.c.bf16 %v1041, %v1040
        %v1074 = vld [vmem:[%s3] sm:$0xf]
        %v1075 = vld [vmem:[%s3 + $0x4] sm:$0xf]
        %v1076 = vld [vmem:[%s3 + $0x8] sm:$0xf]
        %v1077 = vld [vmem:[%s3 + $0xc] sm:$0xf]
        %v1078 = vld [vmem:[%s3 + $0x10] sm:$0xf]
        %v1079 = vld [vmem:[%s3 + $0x14] sm:$0xf]
        %v1080 = vld [vmem:[%s3 + $0x18] sm:$0xf]
        %v1081 = vld [vmem:[%s3 + $0x1c] sm:$0xf]
        %v1082 = vld [vmem:[%s3 + $0x20] sm:$0xf]
        %v1083 = vld [vmem:[%s3 + $0x24] sm:$0xf]
        %v1084 = vld [vmem:[%s3 + $0x28] sm:$0xf]
        %v1085 = vld [vmem:[%s3 + $0x2c] sm:$0xf]
        %v1086 = vld [vmem:[%s3 + $0x30] sm:$0xf]
        %v1087 = vld [vmem:[%s3 + $0x34] sm:$0xf]
        %v1088 = vld [vmem:[%s3 + $0x38] sm:$0xf]
        %v1089 = vld [vmem:[%s3 + $0x3c] sm:$0xf]
        %v1106 = vunpack.c.l.b16 %v1074
        %v1107 = vunpack.c.l.b16 %v1075
        %v1108 = vunpack.c.l.b16 %v1076
        %v1109 = vunpack.c.l.b16 %v1077
        %v1110 = vunpack.c.l.b16 %v1078
        %v1111 = vunpack.c.l.b16 %v1079
        %v1112 = vunpack.c.l.b16 %v1080
        %v1113 = vunpack.c.l.b16 %v1081
        %v1114 = vunpack.c.l.b16 %v1082
        %v1115 = vunpack.c.l.b16 %v1083
        %v1116 = vunpack.c.l.b16 %v1084
        %v1117 = vunpack.c.l.b16 %v1085
        %v1118 = vunpack.c.l.b16 %v1086
        %v1119 = vunpack.c.l.b16 %v1087
        %v1120 = vunpack.c.l.b16 %v1088
        %v1121 = vunpack.c.l.b16 %v1089
        %v1122 = vpack.c.b16 %v1107, %v1106
        %v1123 = vpack.c.b16 %v1109, %v1108
        %v1124 = vpack.c.b16 %v1111, %v1110
        %v1125 = vpack.c.b16 %v1113, %v1112
        %v1126 = vpack.c.b16 %v1115, %v1114
        %v1127 = vpack.c.b16 %v1117, %v1116
        %v1128 = vpack.c.b16 %v1119, %v1118
        %v1129 = vpack.c.b16 %v1121, %v1120
        %1138 = vmatpush.bf16.msra.mxu0 %v1129
        %1139 = vmatpush.bf16.msra.mxu0 %v1128
        %1140 = vmatpush.bf16.msra.mxu0 %v1127
        %1141 = vmatpush.bf16.msra.mxu0 %v1126
        %1142 = vmatpush.bf16.msra.mxu0 %v1125
        %1143 = vmatpush.bf16.msra.mxu0 %v1124
        %1144 = vmatpush.bf16.msra.mxu0 %v1123
        %1145 = vmatpush.bf16.msra.mxu0 %v1122
        %1146 = vmatmul.bf16.gmra.mxu0 %v1042
        %v1147 = vpop.f32.mrf.mxu0
        %v1148 = vadd.f32 0.0, %v1147
        %v1149 = vpop.f32.mrf.mxu0
        %v1150 = vadd.f32 0.0, %v1149
        %1151 = vmatmul.bf16.gmra.mxu0 %v1043
        %v1152 = vpop.f32.mrf.mxu0
        %v1153 = vadd.f32 0.0, %v1152
        %v1154 = vpop.f32.mrf.mxu0
        %v1155 = vadd.f32 0.0, %v1154
        %1156 = vmatmul.bf16.gmra.mxu0 %v1044
        %v1157 = vpop.f32.mrf.mxu0
        %v1158 = vadd.f32 0.0, %v1157
        %v1159 = vpop.f32.mrf.mxu0
        %v1160 = vadd.f32 0.0, %v1159
        %1161 = vmatmul.bf16.gmra.mxu0 %v1045
        %v1162 = vpop.f32.mrf.mxu0
        %v1163 = vadd.f32 0.0, %v1162
        %v1164 = vpop.f32.mrf.mxu0
        %v1165 = vadd.f32 0.0, %v1164
        %1166 = vmatmul.bf16.gmra.mxu0 %v1046
        %v1167 = vpop.f32.mrf.mxu0
        %v1168 = vadd.f32 0.0, %v1167
        %v1169 = vpop.f32.mrf.mxu0
        %v1170 = vadd.f32 0.0, %v1169
        %1171 = vmatmul.bf16.gmra.mxu0 %v1047
        %v1172 = vpop.f32.mrf.mxu0
        %v1173 = vadd.f32 0.0, %v1172
        %v1174 = vpop.f32.mrf.mxu0
        %v1175 = vadd.f32 0.0, %v1174
        %1176 = vmatmul.bf16.gmra.mxu0 %v1048
        %v1177 = vpop.f32.mrf.mxu0
        %v1178 = vadd.f32 0.0, %v1177
        %v1179 = vpop.f32.mrf.mxu0
        %v1180 = vadd.f32 0.0, %v1179
        %1181 = vmatmul.bf16.gmra.mxu0 %v1049
        %v1182 = vpop.f32.mrf.mxu0
        %v1183 = vadd.f32 0.0, %v1182
        %v1184 = vpop.f32.mrf.mxu0
        %v1185 = vadd.f32 0.0, %v1184
        %1186 = vmatmul.bf16.gmra.mxu0 %v1050
        %v1187 = vpop.f32.mrf.mxu0
        %v1188 = vadd.f32 0.0, %v1187
        %v1189 = vpop.f32.mrf.mxu0
        %v1190 = vadd.f32 0.0, %v1189
        %1191 = vmatmul.bf16.gmra.mxu0 %v1051
        %v1192 = vpop.f32.mrf.mxu0
        %v1193 = vadd.f32 0.0, %v1192
        %v1194 = vpop.f32.mrf.mxu0
        %v1195 = vadd.f32 0.0, %v1194
        %1196 = vmatmul.bf16.gmra.mxu0 %v1052
        %v1197 = vpop.f32.mrf.mxu0
        %v1198 = vadd.f32 0.0, %v1197
        %v1199 = vpop.f32.mrf.mxu0
        %v1200 = vadd.f32 0.0, %v1199
        %1201 = vmatmul.bf16.gmra.mxu0 %v1053
        %v1202 = vpop.f32.mrf.mxu0
        %v1203 = vadd.f32 0.0, %v1202
        %v1204 = vpop.f32.mrf.mxu0
        %v1205 = vadd.f32 0.0, %v1204
        %1206 = vmatmul.bf16.gmra.mxu0 %v1054
        %v1207 = vpop.f32.mrf.mxu0
        %v1208 = vadd.f32 0.0, %v1207
        %v1209 = vpop.f32.mrf.mxu0
        %v1210 = vadd.f32 0.0, %v1209
        %1211 = vmatmul.bf16.gmra.mxu0 %v1055
        %v1212 = vpop.f32.mrf.mxu0
        %v1213 = vadd.f32 0.0, %v1212
        %v1214 = vpop.f32.mrf.mxu0
        %v1215 = vadd.f32 0.0, %v1214
        %1216 = vmatmul.bf16.gmra.mxu0 %v1056
        %v1217 = vpop.f32.mrf.mxu0
        %v1218 = vadd.f32 0.0, %v1217
        %v1219 = vpop.f32.mrf.mxu0
        %v1220 = vadd.f32 0.0, %v1219
        %1221 = vmatmul.bf16.gmra.mxu0 %v1057
        %v1222 = vpop.f32.mrf.mxu0
        %v1223 = vadd.f32 0.0, %v1222
        %v1224 = vpop.f32.mrf.mxu0
        %v1225 = vadd.f32 0.0, %v1224
        %1226 = vmatmul.bf16.gmra.mxu0 %v1058
        %v1227 = vpop.f32.mrf.mxu0
        %v1228 = vadd.f32 0.0, %v1227
        %v1229 = vpop.f32.mrf.mxu0
        %v1230 = vadd.f32 0.0, %v1229
        %1231 = vmatmul.bf16.gmra.mxu0 %v1059
        %v1232 = vpop.f32.mrf.mxu0
        %v1233 = vadd.f32 0.0, %v1232
        %v1234 = vpop.f32.mrf.mxu0
        %v1235 = vadd.f32 0.0, %v1234
        %1236 = vmatmul.bf16.gmra.mxu0 %v1060
        %v1237 = vpop.f32.mrf.mxu0
        %v1238 = vadd.f32 0.0, %v1237
        %v1239 = vpop.f32.mrf.mxu0
        %v1240 = vadd.f32 0.0, %v1239
        %1241 = vmatmul.bf16.gmra.mxu0 %v1061
        %v1242 = vpop.f32.mrf.mxu0
        %v1243 = vadd.f32 0.0, %v1242
        %v1244 = vpop.f32.mrf.mxu0
        %v1245 = vadd.f32 0.0, %v1244
        %1246 = vmatmul.bf16.gmra.mxu0 %v1062
        %v1247 = vpop.f32.mrf.mxu0
        %v1248 = vadd.f32 0.0, %v1247
        %v1249 = vpop.f32.mrf.mxu0
        %v1250 = vadd.f32 0.0, %v1249
        %1251 = vmatmul.bf16.gmra.mxu0 %v1063
        %v1252 = vpop.f32.mrf.mxu0
        %v1253 = vadd.f32 0.0, %v1252
        %v1254 = vpop.f32.mrf.mxu0
        %v1255 = vadd.f32 0.0, %v1254
        %1256 = vmatmul.bf16.gmra.mxu0 %v1064
        %v1257 = vpop.f32.mrf.mxu0
        %v1258 = vadd.f32 0.0, %v1257
        %v1259 = vpop.f32.mrf.mxu0
        %v1260 = vadd.f32 0.0, %v1259
        %1261 = vmatmul.bf16.gmra.mxu0 %v1065
        %v1262 = vpop.f32.mrf.mxu0
        %v1263 = vadd.f32 0.0, %v1262
        %v1264 = vpop.f32.mrf.mxu0
        %v1265 = vadd.f32 0.0, %v1264
        %1266 = vmatmul.bf16.gmra.mxu0 %v1066
        %v1267 = vpop.f32.mrf.mxu0
        %v1268 = vadd.f32 0.0, %v1267
        %v1269 = vpop.f32.mrf.mxu0
        %v1270 = vadd.f32 0.0, %v1269
        %1271 = vmatmul.bf16.gmra.mxu0 %v1067
        %v1272 = vpop.f32.mrf.mxu0
        %v1273 = vadd.f32 0.0, %v1272
        %v1274 = vpop.f32.mrf.mxu0
        %v1275 = vadd.f32 0.0, %v1274
        %1276 = vmatmul.bf16.gmra.mxu0 %v1068
        %v1277 = vpop.f32.mrf.mxu0
        %v1278 = vadd.f32 0.0, %v1277
        %v1279 = vpop.f32.mrf.mxu0
        %v1280 = vadd.f32 0.0, %v1279
        %1281 = vmatmul.bf16.gmra.mxu0 %v1069
        %v1282 = vpop.f32.mrf.mxu0
        %v1283 = vadd.f32 0.0, %v1282
        %v1284 = vpop.f32.mrf.mxu0
        %v1285 = vadd.f32 0.0, %v1284
        %1286 = vmatmul.bf16.gmra.mxu0 %v1070
        %v1287 = vpop.f32.mrf.mxu0
        %v1288 = vadd.f32 0.0, %v1287
        %v1289 = vpop.f32.mrf.mxu0
        %v1290 = vadd.f32 0.0, %v1289
        %1291 = vmatmul.bf16.gmra.mxu0 %v1071
        %v1292 = vpop.f32.mrf.mxu0
        %v1293 = vadd.f32 0.0, %v1292
        %v1294 = vpop.f32.mrf.mxu0
        %v1295 = vadd.f32 0.0, %v1294
        %1296 = vmatmul.bf16.gmra.mxu0 %v1072
        %v1297 = vpop.f32.mrf.mxu0
        %v1298 = vadd.f32 0.0, %v1297
        %v1299 = vpop.f32.mrf.mxu0
        %v1300 = vadd.f32 0.0, %v1299
        %1301 = vmatmul.bf16.gmra.mxu0 %v1073
        %v1302 = vpop.f32.mrf.mxu0
        %v1303 = vadd.f32 0.0, %v1302
        %v1304 = vpop.f32.mrf.mxu0
        %v1305 = vadd.f32 0.0, %v1304
        %1306 = vdwg.mxu0
        %v1307 = vld [vmem:[%s4] sm:$0x1]
        %v1308 = vperm.slane %v1307, 0
        %v1309 = vmul.f32 %v1148, %v1308
        %v1310 = vmul.f32 %v1150, %v1308
        %v1311 = vmul.f32 %v1153, %v1308
        %v1312 = vmul.f32 %v1155, %v1308
        %v1313 = vmul.f32 %v1158, %v1308
        %v1314 = vmul.f32 %v1160, %v1308
        %v1315 = vmul.f32 %v1163, %v1308
        %v1316 = vmul.f32 %v1165, %v1308
        %v1317 = vmul.f32 %v1168, %v1308
        %v1318 = vmul.f32 %v1170, %v1308
        %v1319 = vmul.f32 %v1173, %v1308
        %v1320 = vmul.f32 %v1175, %v1308
        %v1321 = vmul.f32 %v1178, %v1308
        %v1322 = vmul.f32 %v1180, %v1308
        %v1323 = vmul.f32 %v1183, %v1308
        %v1324 = vmul.f32 %v1185, %v1308
        %v1325 = vmul.f32 %v1188, %v1308
        %v1326 = vmul.f32 %v1190, %v1308
        %v1327 = vmul.f32 %v1193, %v1308
        %v1328 = vmul.f32 %v1195, %v1308
        %v1329 = vmul.f32 %v1198, %v1308
        %v1330 = vmul.f32 %v1200, %v1308
        %v1331 = vmul.f32 %v1203, %v1308
        %v1332 = vmul.f32 %v1205, %v1308
        %v1333 = vmul.f32 %v1208, %v1308
        %v1334 = vmul.f32 %v1210, %v1308
        %v1335 = vmul.f32 %v1213, %v1308
        %v1336 = vmul.f32 %v1215, %v1308
        %v1337 = vmul.f32 %v1218, %v1308
        %v1338 = vmul.f32 %v1220, %v1308
        %v1339 = vmul.f32 %v1223, %v1308
        %v1340 = vmul.f32 %v1225, %v1308
        %v1341 = vmul.f32 %v1228, %v1308
        %v1342 = vmul.f32 %v1230, %v1308
        %v1343 = vmul.f32 %v1233, %v1308
        %v1344 = vmul.f32 %v1235, %v1308
        %v1345 = vmul.f32 %v1238, %v1308
        %v1346 = vmul.f32 %v1240, %v1308
        %v1347 = vmul.f32 %v1243, %v1308
        %v1348 = vmul.f32 %v1245, %v1308
        %v1349 = vmul.f32 %v1248, %v1308
        %v1350 = vmul.f32 %v1250, %v1308
        %v1351 = vmul.f32 %v1253, %v1308
        %v1352 = vmul.f32 %v1255, %v1308
        %v1353 = vmul.f32 %v1258, %v1308
        %v1354 = vmul.f32 %v1260, %v1308
        %v1355 = vmul.f32 %v1263, %v1308
        %v1356 = vmul.f32 %v1265, %v1308
        %v1357 = vmul.f32 %v1268, %v1308
        %v1358 = vmul.f32 %v1270, %v1308
        %v1359 = vmul.f32 %v1273, %v1308
        %v1360 = vmul.f32 %v1275, %v1308
        %v1361 = vmul.f32 %v1278, %v1308
        %v1362 = vmul.f32 %v1280, %v1308
        %v1363 = vmul.f32 %v1283, %v1308
        %v1364 = vmul.f32 %v1285, %v1308
        %v1365 = vmul.f32 %v1288, %v1308
        %v1366 = vmul.f32 %v1290, %v1308
        %v1367 = vmul.f32 %v1293, %v1308
        %v1368 = vmul.f32 %v1295, %v1308
        %v1369 = vmul.f32 %v1298, %v1308
        %v1370 = vmul.f32 %v1300, %v1308
        %v1371 = vmul.f32 %v1303, %v1308
        %v1372 = vmul.f32 %v1305, %v1308
        %v1373 = vld [vmem:[%s4 + $0x1] sm:$0x1]
        %v1374 = vperm.slane %v1373, 0
        %v1375 = vadd.f32 %v1309, %v1374
        %v1376 = vadd.f32 %v1310, %v1374
        %v1377 = vadd.f32 %v1311, %v1374
        %v1378 = vadd.f32 %v1312, %v1374
        %v1379 = vadd.f32 %v1313, %v1374
        %v1380 = vadd.f32 %v1314, %v1374
        %v1381 = vadd.f32 %v1315, %v1374
        %v1382 = vadd.f32 %v1316, %v1374
        %v1383 = vadd.f32 %v1317, %v1374
        %v1384 = vadd.f32 %v1318, %v1374
        %v1385 = vadd.f32 %v1319, %v1374
        %v1386 = vadd.f32 %v1320, %v1374
        %v1387 = vadd.f32 %v1321, %v1374
        %v1388 = vadd.f32 %v1322, %v1374
        %v1389 = vadd.f32 %v1323, %v1374
        %v1390 = vadd.f32 %v1324, %v1374
        %v1391 = vadd.f32 %v1325, %v1374
        %v1392 = vadd.f32 %v1326, %v1374
        %v1393 = vadd.f32 %v1327, %v1374
        %v1394 = vadd.f32 %v1328, %v1374
        %v1395 = vadd.f32 %v1329, %v1374
        %v1396 = vadd.f32 %v1330, %v1374
        %v1397 = vadd.f32 %v1331, %v1374
        %v1398 = vadd.f32 %v1332, %v1374
        %v1399 = vadd.f32 %v1333, %v1374
        %v1400 = vadd.f32 %v1334, %v1374
        %v1401 = vadd.f32 %v1335, %v1374
        %v1402 = vadd.f32 %v1336, %v1374
        %v1403 = vadd.f32 %v1337, %v1374
        %v1404 = vadd.f32 %v1338, %v1374
        %v1405 = vadd.f32 %v1339, %v1374
        %v1406 = vadd.f32 %v1340, %v1374
        %v1407 = vadd.f32 %v1341, %v1374
        %v1408 = vadd.f32 %v1342, %v1374
        %v1409 = vadd.f32 %v1343, %v1374
        %v1410 = vadd.f32 %v1344, %v1374
        %v1411 = vadd.f32 %v1345, %v1374
        %v1412 = vadd.f32 %v1346, %v1374
        %v1413 = vadd.f32 %v1347, %v1374
        %v1414 = vadd.f32 %v1348, %v1374
        %v1415 = vadd.f32 %v1349, %v1374
        %v1416 = vadd.f32 %v1350, %v1374
        %v1417 = vadd.f32 %v1351, %v1374
        %v1418 = vadd.f32 %v1352, %v1374
        %v1419 = vadd.f32 %v1353, %v1374
        %v1420 = vadd.f32 %v1354, %v1374
        %v1421 = vadd.f32 %v1355, %v1374
        %v1422 = vadd.f32 %v1356, %v1374
        %v1423 = vadd.f32 %v1357, %v1374
        %v1424 = vadd.f32 %v1358, %v1374
        %v1425 = vadd.f32 %v1359, %v1374
        %v1426 = vadd.f32 %v1360, %v1374
        %v1427 = vadd.f32 %v1361, %v1374
        %v1428 = vadd.f32 %v1362, %v1374
        %v1429 = vadd.f32 %v1363, %v1374
        %v1430 = vadd.f32 %v1364, %v1374
        %v1431 = vadd.f32 %v1365, %v1374
        %v1432 = vadd.f32 %v1366, %v1374
        %v1433 = vadd.f32 %v1367, %v1374
        %v1434 = vadd.f32 %v1368, %v1374
        %v1435 = vadd.f32 %v1369, %v1374
        %v1436 = vadd.f32 %v1370, %v1374
        %v1437 = vadd.f32 %v1371, %v1374
        %v1438 = vadd.f32 %v1372, %v1374
        %v1439 = vmax.f32 %v1375, 0.0
        %v1440 = vmax.f32 %v1376, 0.0
        %v1441 = vmax.f32 %v1377, 0.0
        %v1442 = vmax.f32 %v1378, 0.0
        %v1443 = vmax.f32 %v1379, 0.0
        %v1444 = vmax.f32 %v1380, 0.0
        %v1445 = vmax.f32 %v1381, 0.0
        %v1446 = vmax.f32 %v1382, 0.0
        %v1447 = vmax.f32 %v1383, 0.0
        %v1448 = vmax.f32 %v1384, 0.0
        %v1449 = vmax.f32 %v1385, 0.0
        %v1450 = vmax.f32 %v1386, 0.0
        %v1451 = vmax.f32 %v1387, 0.0
        %v1452 = vmax.f32 %v1388, 0.0
        %v1453 = vmax.f32 %v1389, 0.0
        %v1454 = vmax.f32 %v1390, 0.0
        %v1455 = vmax.f32 %v1391, 0.0
        %v1456 = vmax.f32 %v1392, 0.0
        %v1457 = vmax.f32 %v1393, 0.0
        %v1458 = vmax.f32 %v1394, 0.0
        %v1459 = vmax.f32 %v1395, 0.0
        %v1460 = vmax.f32 %v1396, 0.0
        %v1461 = vmax.f32 %v1397, 0.0
        %v1462 = vmax.f32 %v1398, 0.0
        %v1463 = vmax.f32 %v1399, 0.0
        %v1464 = vmax.f32 %v1400, 0.0
        %v1465 = vmax.f32 %v1401, 0.0
        %v1466 = vmax.f32 %v1402, 0.0
        %v1467 = vmax.f32 %v1403, 0.0
        %v1468 = vmax.f32 %v1404, 0.0
        %v1469 = vmax.f32 %v1405, 0.0
        %v1470 = vmax.f32 %v1406, 0.0
        %v1471 = vmax.f32 %v1407, 0.0
        %v1472 = vmax.f32 %v1408, 0.0
        %v1473 = vmax.f32 %v1409, 0.0
        %v1474 = vmax.f32 %v1410, 0.0
        %v1475 = vmax.f32 %v1411, 0.0
        %v1476 = vmax.f32 %v1412, 0.0
        %v1477 = vmax.f32 %v1413, 0.0
        %v1478 = vmax.f32 %v1414, 0.0
        %v1479 = vmax.f32 %v1415, 0.0
        %v1480 = vmax.f32 %v1416, 0.0
        %v1481 = vmax.f32 %v1417, 0.0
        %v1482 = vmax.f32 %v1418, 0.0
        %v1483 = vmax.f32 %v1419, 0.0
        %v1484 = vmax.f32 %v1420, 0.0
        %v1485 = vmax.f32 %v1421, 0.0
        %v1486 = vmax.f32 %v1422, 0.0
        %v1487 = vmax.f32 %v1423, 0.0
        %v1488 = vmax.f32 %v1424, 0.0
        %v1489 = vmax.f32 %v1425, 0.0
        %v1490 = vmax.f32 %v1426, 0.0
        %v1491 = vmax.f32 %v1427, 0.0
        %v1492 = vmax.f32 %v1428, 0.0
        %v1493 = vmax.f32 %v1429, 0.0
        %v1494 = vmax.f32 %v1430, 0.0
        %v1495 = vmax.f32 %v1431, 0.0
        %v1496 = vmax.f32 %v1432, 0.0
        %v1497 = vmax.f32 %v1433, 0.0
        %v1498 = vmax.f32 %v1434, 0.0
        %v1499 = vmax.f32 %v1435, 0.0
        %v1500 = vmax.f32 %v1436, 0.0
        %v1501 = vmax.f32 %v1437, 0.0
        %v1502 = vmax.f32 %v1438, 0.0
        %v1503 = vlaneseq
        %v1504 = vshrl.u32 %v1503, 7
        %v1505 = vadd.s32 %v1504, 8
        %v1506 = vadd.s32 %v1504, 16
        %v1507 = vadd.s32 %v1504, 24
        %v1508 = vadd.s32 %v1504, 32
        %v1509 = vadd.s32 %v1504, 40
        %v1510 = vadd.s32 %v1504, 48
        %v1511 = vadd.s32 %v1504, 56
        %v1512 = vadd.s32 %v1504, 64
        %v1513 = vadd.s32 %v1504, 72
        %v1514 = vadd.s32 %v1504, 80
        %v1515 = vadd.s32 %v1504, 88
        %v1516 = vadd.s32 %v1504, 96
        %v1517 = vadd.s32 %v1504, 104
        %v1518 = vadd.s32 %v1504, 112
        %v1519 = vadd.s32 %v1504, 120
        %v1520 = vadd.s32 %v1504, 128
        %v1521 = vadd.s32 %v1504, 136
        %v1522 = vadd.s32 %v1504, 144
        %v1523 = vadd.s32 %v1504, 152
        %v1524 = vadd.s32 %v1504, 160
        %v1525 = vadd.s32 %v1504, 168
        %v1526 = vadd.s32 %v1504, 176
        %v1527 = vadd.s32 %v1504, 184
        %v1528 = vadd.s32 %v1504, 192
        %v1529 = vadd.s32 %v1504, 200
        %v1530 = vadd.s32 %v1504, 208
        %v1531 = vadd.s32 %v1504, 216
        %v1532 = vadd.s32 %v1504, 224
        %v1533 = vadd.s32 %v1504, 232
        %v1534 = vadd.s32 %v1504, 240
        %v1535 = vadd.s32 %v1504, 248
        %v1536 = vadd.s32 %v1504, 256
        %v1537 = vadd.s32 %v1504, 264
        %v1538 = vadd.s32 %v1504, 272
        %v1539 = vadd.s32 %v1504, 280
        %v1540 = vadd.s32 %v1504, 288
        %v1541 = vadd.s32 %v1504, 296
        %v1542 = vadd.s32 %v1504, 304
        %v1543 = vadd.s32 %v1504, 312
        %v1544 = vadd.s32 %v1504, 320
        %v1545 = vadd.s32 %v1504, 328
        %v1546 = vadd.s32 %v1504, 336
        %v1547 = vadd.s32 %v1504, 344
        %v1548 = vadd.s32 %v1504, 352
        %v1549 = vadd.s32 %v1504, 360
        %v1550 = vadd.s32 %v1504, 368
        %v1551 = vadd.s32 %v1504, 376
        %v1552 = vadd.s32 %v1504, 384
        %v1553 = vadd.s32 %v1504, 392
        %v1554 = vadd.s32 %v1504, 400
        %v1555 = vadd.s32 %v1504, 408
        %v1556 = vadd.s32 %v1504, 416
        %v1557 = vadd.s32 %v1504, 424
        %v1558 = vadd.s32 %v1504, 432
        %v1559 = vadd.s32 %v1504, 440
        %v1560 = vadd.s32 %v1504, 448
        %v1561 = vadd.s32 %v1504, 456
        %v1562 = vadd.s32 %v1504, 464
        %v1563 = vadd.s32 %v1504, 472
        %v1564 = vadd.s32 %v1504, 480
        %v1565 = vadd.s32 %v1504, 488
        %v1566 = vadd.s32 %v1504, 496
        %v1567 = vadd.s32 %v1504, 504
        %vm1568 = vcmp.lt.s32.totalorder %v1504, 0
        %v1569 = vsub.s32 0, %v1504
        %v1570 = vsel %vm1568, %v1569, %v1504
        %v1571 = vshrl.u32 %v1570, 4
        %v1572 = vand.u32 %v1570, 15
        %v1573 = vsub.s32 0, %v1572
        %v1574 = vsel %vm1568, %v1573, %v1572
        %vm1575 = vcmp.lt.s32.totalorder %v1505, 0
        %v1576 = vsub.s32 0, %v1505
        %v1577 = vsel %vm1575, %v1576, %v1505
        %v1578 = vshrl.u32 %v1577, 4
        %v1579 = vand.u32 %v1577, 15
        %v1580 = vsub.s32 0, %v1579
        %v1581 = vsel %vm1575, %v1580, %v1579
        %vm1582 = vcmp.lt.s32.totalorder %v1506, 0
        %v1583 = vsub.s32 0, %v1506
        %v1584 = vsel %vm1582, %v1583, %v1506
        %v1585 = vshrl.u32 %v1584, 4
        %v1586 = vand.u32 %v1584, 15
        %v1587 = vsub.s32 0, %v1586
        %v1588 = vsel %vm1582, %v1587, %v1586
        %vm1589 = vcmp.lt.s32.totalorder %v1507, 0
        %v1590 = vsub.s32 0, %v1507
        %v1591 = vsel %vm1589, %v1590, %v1507
        %v1592 = vshrl.u32 %v1591, 4
        %v1593 = vand.u32 %v1591, 15
        %v1594 = vsub.s32 0, %v1593
        %v1595 = vsel %vm1589, %v1594, %v1593
        %vm1596 = vcmp.lt.s32.totalorder %v1508, 0
        %v1597 = vsub.s32 0, %v1508
        %v1598 = vsel %vm1596, %v1597, %v1508
        %v1599 = vshrl.u32 %v1598, 4
        %v1600 = vand.u32 %v1598, 15
        %v1601 = vsub.s32 0, %v1600
        %v1602 = vsel %vm1596, %v1601, %v1600
        %vm1603 = vcmp.lt.s32.totalorder %v1509, 0
        %v1604 = vsub.s32 0, %v1509
        %v1605 = vsel %vm1603, %v1604, %v1509
        %v1606 = vshrl.u32 %v1605, 4
        %v1607 = vand.u32 %v1605, 15
        %v1608 = vsub.s32 0, %v1607
        %v1609 = vsel %vm1603, %v1608, %v1607
        %vm1610 = vcmp.lt.s32.totalorder %v1510, 0
        %v1611 = vsub.s32 0, %v1510
        %v1612 = vsel %vm1610, %v1611, %v1510
        %v1613 = vshrl.u32 %v1612, 4
        %v1614 = vand.u32 %v1612, 15
        %v1615 = vsub.s32 0, %v1614
        %v1616 = vsel %vm1610, %v1615, %v1614
        %vm1617 = vcmp.lt.s32.totalorder %v1511, 0
        %v1618 = vsub.s32 0, %v1511
        %v1619 = vsel %vm1617, %v1618, %v1511
        %v1620 = vshrl.u32 %v1619, 4
        %v1621 = vand.u32 %v1619, 15
        %v1622 = vsub.s32 0, %v1621
        %v1623 = vsel %vm1617, %v1622, %v1621
        %vm1624 = vcmp.lt.s32.totalorder %v1512, 0
        %v1625 = vsub.s32 0, %v1512
        %v1626 = vsel %vm1624, %v1625, %v1512
        %v1627 = vshrl.u32 %v1626, 4
        %v1628 = vand.u32 %v1626, 15
        %v1629 = vsub.s32 0, %v1628
        %v1630 = vsel %vm1624, %v1629, %v1628
        %vm1631 = vcmp.lt.s32.totalorder %v1513, 0
        %v1632 = vsub.s32 0, %v1513
        %v1633 = vsel %vm1631, %v1632, %v1513
        %v1634 = vshrl.u32 %v1633, 4
        %v1635 = vand.u32 %v1633, 15
        %v1636 = vsub.s32 0, %v1635
        %v1637 = vsel %vm1631, %v1636, %v1635
        %vm1638 = vcmp.lt.s32.totalorder %v1514, 0
        %v1639 = vsub.s32 0, %v1514
        %v1640 = vsel %vm1638, %v1639, %v1514
        %v1641 = vshrl.u32 %v1640, 4
        %v1642 = vand.u32 %v1640, 15
        %v1643 = vsub.s32 0, %v1642
        %v1644 = vsel %vm1638, %v1643, %v1642
        %vm1645 = vcmp.lt.s32.totalorder %v1515, 0
        %v1646 = vsub.s32 0, %v1515
        %v1647 = vsel %vm1645, %v1646, %v1515
        %v1648 = vshrl.u32 %v1647, 4
        %v1649 = vand.u32 %v1647, 15
        %v1650 = vsub.s32 0, %v1649
        %v1651 = vsel %vm1645, %v1650, %v1649
        %vm1652 = vcmp.lt.s32.totalorder %v1516, 0
        %v1653 = vsub.s32 0, %v1516
        %v1654 = vsel %vm1652, %v1653, %v1516
        %v1655 = vshrl.u32 %v1654, 4
        %v1656 = vand.u32 %v1654, 15
        %v1657 = vsub.s32 0, %v1656
        %v1658 = vsel %vm1652, %v1657, %v1656
        %vm1659 = vcmp.lt.s32.totalorder %v1517, 0
        %v1660 = vsub.s32 0, %v1517
        %v1661 = vsel %vm1659, %v1660, %v1517
        %v1662 = vshrl.u32 %v1661, 4
        %v1663 = vand.u32 %v1661, 15
        %v1664 = vsub.s32 0, %v1663
        %v1665 = vsel %vm1659, %v1664, %v1663
        %vm1666 = vcmp.lt.s32.totalorder %v1518, 0
        %v1667 = vsub.s32 0, %v1518
        %v1668 = vsel %vm1666, %v1667, %v1518
        %v1669 = vshrl.u32 %v1668, 4
        %v1670 = vand.u32 %v1668, 15
        %v1671 = vsub.s32 0, %v1670
        %v1672 = vsel %vm1666, %v1671, %v1670
        %vm1673 = vcmp.lt.s32.totalorder %v1519, 0
        %v1674 = vsub.s32 0, %v1519
        %v1675 = vsel %vm1673, %v1674, %v1519
        %v1676 = vshrl.u32 %v1675, 4
        %v1677 = vand.u32 %v1675, 15
        %v1678 = vsub.s32 0, %v1677
        %v1679 = vsel %vm1673, %v1678, %v1677
        %vm1680 = vcmp.lt.s32.totalorder %v1520, 0
        %v1681 = vsub.s32 0, %v1520
        %v1682 = vsel %vm1680, %v1681, %v1520
        %v1683 = vshrl.u32 %v1682, 4
        %v1684 = vand.u32 %v1682, 15
        %v1685 = vsub.s32 0, %v1684
        %v1686 = vsel %vm1680, %v1685, %v1684
        %vm1687 = vcmp.lt.s32.totalorder %v1521, 0
        %v1688 = vsub.s32 0, %v1521
        %v1689 = vsel %vm1687, %v1688, %v1521
        %v1690 = vshrl.u32 %v1689, 4
        %v1691 = vand.u32 %v1689, 15
        %v1692 = vsub.s32 0, %v1691
        %v1693 = vsel %vm1687, %v1692, %v1691
        %vm1694 = vcmp.lt.s32.totalorder %v1522, 0
        %v1695 = vsub.s32 0, %v1522
        %v1696 = vsel %vm1694, %v1695, %v1522
        %v1697 = vshrl.u32 %v1696, 4
        %v1698 = vand.u32 %v1696, 15
        %v1699 = vsub.s32 0, %v1698
        %v1700 = vsel %vm1694, %v1699, %v1698
        %vm1701 = vcmp.lt.s32.totalorder %v1523, 0
        %v1702 = vsub.s32 0, %v1523
        %v1703 = vsel %vm1701, %v1702, %v1523
        %v1704 = vshrl.u32 %v1703, 4
        %v1705 = vand.u32 %v1703, 15
        %v1706 = vsub.s32 0, %v1705
        %v1707 = vsel %vm1701, %v1706, %v1705
        %vm1708 = vcmp.lt.s32.totalorder %v1524, 0
        %v1709 = vsub.s32 0, %v1524
        %v1710 = vsel %vm1708, %v1709, %v1524
        %v1711 = vshrl.u32 %v1710, 4
        %v1712 = vand.u32 %v1710, 15
        %v1713 = vsub.s32 0, %v1712
        %v1714 = vsel %vm1708, %v1713, %v1712
        %vm1715 = vcmp.lt.s32.totalorder %v1525, 0
        %v1716 = vsub.s32 0, %v1525
        %v1717 = vsel %vm1715, %v1716, %v1525
        %v1718 = vshrl.u32 %v1717, 4
        %v1719 = vand.u32 %v1717, 15
        %v1720 = vsub.s32 0, %v1719
        %v1721 = vsel %vm1715, %v1720, %v1719
        %vm1722 = vcmp.lt.s32.totalorder %v1526, 0
        %v1723 = vsub.s32 0, %v1526
        %v1724 = vsel %vm1722, %v1723, %v1526
        %v1725 = vshrl.u32 %v1724, 4
        %v1726 = vand.u32 %v1724, 15
        %v1727 = vsub.s32 0, %v1726
        %v1728 = vsel %vm1722, %v1727, %v1726
        %vm1729 = vcmp.lt.s32.totalorder %v1527, 0
        %v1730 = vsub.s32 0, %v1527
        %v1731 = vsel %vm1729, %v1730, %v1527
        %v1732 = vshrl.u32 %v1731, 4
        %v1733 = vand.u32 %v1731, 15
        %v1734 = vsub.s32 0, %v1733
        %v1735 = vsel %vm1729, %v1734, %v1733
        %vm1736 = vcmp.lt.s32.totalorder %v1528, 0
        %v1737 = vsub.s32 0, %v1528
        %v1738 = vsel %vm1736, %v1737, %v1528
        %v1739 = vshrl.u32 %v1738, 4
        %v1740 = vand.u32 %v1738, 15
        %v1741 = vsub.s32 0, %v1740
        %v1742 = vsel %vm1736, %v1741, %v1740
        %vm1743 = vcmp.lt.s32.totalorder %v1529, 0
        %v1744 = vsub.s32 0, %v1529
        %v1745 = vsel %vm1743, %v1744, %v1529
        %v1746 = vshrl.u32 %v1745, 4
        %v1747 = vand.u32 %v1745, 15
        %v1748 = vsub.s32 0, %v1747
        %v1749 = vsel %vm1743, %v1748, %v1747
        %vm1750 = vcmp.lt.s32.totalorder %v1530, 0
        %v1751 = vsub.s32 0, %v1530
        %v1752 = vsel %vm1750, %v1751, %v1530
        %v1753 = vshrl.u32 %v1752, 4
        %v1754 = vand.u32 %v1752, 15
        %v1755 = vsub.s32 0, %v1754
        %v1756 = vsel %vm1750, %v1755, %v1754
        %vm1757 = vcmp.lt.s32.totalorder %v1531, 0
        %v1758 = vsub.s32 0, %v1531
        %v1759 = vsel %vm1757, %v1758, %v1531
        %v1760 = vshrl.u32 %v1759, 4
        %v1761 = vand.u32 %v1759, 15
        %v1762 = vsub.s32 0, %v1761
        %v1763 = vsel %vm1757, %v1762, %v1761
        %vm1764 = vcmp.lt.s32.totalorder %v1532, 0
        %v1765 = vsub.s32 0, %v1532
        %v1766 = vsel %vm1764, %v1765, %v1532
        %v1767 = vshrl.u32 %v1766, 4
        %v1768 = vand.u32 %v1766, 15
        %v1769 = vsub.s32 0, %v1768
        %v1770 = vsel %vm1764, %v1769, %v1768
        %vm1771 = vcmp.lt.s32.totalorder %v1533, 0
        %v1772 = vsub.s32 0, %v1533
        %v1773 = vsel %vm1771, %v1772, %v1533
        %v1774 = vshrl.u32 %v1773, 4
        %v1775 = vand.u32 %v1773, 15
        %v1776 = vsub.s32 0, %v1775
        %v1777 = vsel %vm1771, %v1776, %v1775
        %vm1778 = vcmp.lt.s32.totalorder %v1534, 0
        %v1779 = vsub.s32 0, %v1534
        %v1780 = vsel %vm1778, %v1779, %v1534
        %v1781 = vshrl.u32 %v1780, 4
        %v1782 = vand.u32 %v1780, 15
        %v1783 = vsub.s32 0, %v1782
        %v1784 = vsel %vm1778, %v1783, %v1782
        %vm1785 = vcmp.lt.s32.totalorder %v1535, 0
        %v1786 = vsub.s32 0, %v1535
        %v1787 = vsel %vm1785, %v1786, %v1535
        %v1788 = vshrl.u32 %v1787, 4
        %v1789 = vand.u32 %v1787, 15
        %v1790 = vsub.s32 0, %v1789
        %v1791 = vsel %vm1785, %v1790, %v1789
        %vm1792 = vcmp.lt.s32.totalorder %v1536, 0
        %v1793 = vsub.s32 0, %v1536
        %v1794 = vsel %vm1792, %v1793, %v1536
        %v1795 = vshrl.u32 %v1794, 4
        %v1796 = vand.u32 %v1794, 15
        %v1797 = vsub.s32 0, %v1796
        %v1798 = vsel %vm1792, %v1797, %v1796
        %vm1799 = vcmp.lt.s32.totalorder %v1537, 0
        %v1800 = vsub.s32 0, %v1537
        %v1801 = vsel %vm1799, %v1800, %v1537
        %v1802 = vshrl.u32 %v1801, 4
        %v1803 = vand.u32 %v1801, 15
        %v1804 = vsub.s32 0, %v1803
        %v1805 = vsel %vm1799, %v1804, %v1803
        %vm1806 = vcmp.lt.s32.totalorder %v1538, 0
        %v1807 = vsub.s32 0, %v1538
        %v1808 = vsel %vm1806, %v1807, %v1538
        %v1809 = vshrl.u32 %v1808, 4
        %v1810 = vand.u32 %v1808, 15
        %v1811 = vsub.s32 0, %v1810
        %v1812 = vsel %vm1806, %v1811, %v1810
        %vm1813 = vcmp.lt.s32.totalorder %v1539, 0
        %v1814 = vsub.s32 0, %v1539
        %v1815 = vsel %vm1813, %v1814, %v1539
        %v1816 = vshrl.u32 %v1815, 4
        %v1817 = vand.u32 %v1815, 15
        %v1818 = vsub.s32 0, %v1817
        %v1819 = vsel %vm1813, %v1818, %v1817
        %vm1820 = vcmp.lt.s32.totalorder %v1540, 0
        %v1821 = vsub.s32 0, %v1540
        %v1822 = vsel %vm1820, %v1821, %v1540
        %v1823 = vshrl.u32 %v1822, 4
        %v1824 = vand.u32 %v1822, 15
        %v1825 = vsub.s32 0, %v1824
        %v1826 = vsel %vm1820, %v1825, %v1824
        %vm1827 = vcmp.lt.s32.totalorder %v1541, 0
        %v1828 = vsub.s32 0, %v1541
        %v1829 = vsel %vm1827, %v1828, %v1541
        %v1830 = vshrl.u32 %v1829, 4
        %v1831 = vand.u32 %v1829, 15
        %v1832 = vsub.s32 0, %v1831
        %v1833 = vsel %vm1827, %v1832, %v1831
        %vm1834 = vcmp.lt.s32.totalorder %v1542, 0
        %v1835 = vsub.s32 0, %v1542
        %v1836 = vsel %vm1834, %v1835, %v1542
        %v1837 = vshrl.u32 %v1836, 4
        %v1838 = vand.u32 %v1836, 15
        %v1839 = vsub.s32 0, %v1838
        %v1840 = vsel %vm1834, %v1839, %v1838
        %vm1841 = vcmp.lt.s32.totalorder %v1543, 0
        %v1842 = vsub.s32 0, %v1543
        %v1843 = vsel %vm1841, %v1842, %v1543
        %v1844 = vshrl.u32 %v1843, 4
        %v1845 = vand.u32 %v1843, 15
        %v1846 = vsub.s32 0, %v1845
        %v1847 = vsel %vm1841, %v1846, %v1845
        %vm1848 = vcmp.lt.s32.totalorder %v1544, 0
        %v1849 = vsub.s32 0, %v1544
        %v1850 = vsel %vm1848, %v1849, %v1544
        %v1851 = vshrl.u32 %v1850, 4
        %v1852 = vand.u32 %v1850, 15
        %v1853 = vsub.s32 0, %v1852
        %v1854 = vsel %vm1848, %v1853, %v1852
        %vm1855 = vcmp.lt.s32.totalorder %v1545, 0
        %v1856 = vsub.s32 0, %v1545
        %v1857 = vsel %vm1855, %v1856, %v1545
        %v1858 = vshrl.u32 %v1857, 4
        %v1859 = vand.u32 %v1857, 15
        %v1860 = vsub.s32 0, %v1859
        %v1861 = vsel %vm1855, %v1860, %v1859
        %vm1862 = vcmp.lt.s32.totalorder %v1546, 0
        %v1863 = vsub.s32 0, %v1546
        %v1864 = vsel %vm1862, %v1863, %v1546
        %v1865 = vshrl.u32 %v1864, 4
        %v1866 = vand.u32 %v1864, 15
        %v1867 = vsub.s32 0, %v1866
        %v1868 = vsel %vm1862, %v1867, %v1866
        %vm1869 = vcmp.lt.s32.totalorder %v1547, 0
        %v1870 = vsub.s32 0, %v1547
        %v1871 = vsel %vm1869, %v1870, %v1547
        %v1872 = vshrl.u32 %v1871, 4
        %v1873 = vand.u32 %v1871, 15
        %v1874 = vsub.s32 0, %v1873
        %v1875 = vsel %vm1869, %v1874, %v1873
        %vm1876 = vcmp.lt.s32.totalorder %v1548, 0
        %v1877 = vsub.s32 0, %v1548
        %v1878 = vsel %vm1876, %v1877, %v1548
        %v1879 = vshrl.u32 %v1878, 4
        %v1880 = vand.u32 %v1878, 15
        %v1881 = vsub.s32 0, %v1880
        %v1882 = vsel %vm1876, %v1881, %v1880
        %vm1883 = vcmp.lt.s32.totalorder %v1549, 0
        %v1884 = vsub.s32 0, %v1549
        %v1885 = vsel %vm1883, %v1884, %v1549
        %v1886 = vshrl.u32 %v1885, 4
        %v1887 = vand.u32 %v1885, 15
        %v1888 = vsub.s32 0, %v1887
        %v1889 = vsel %vm1883, %v1888, %v1887
        %vm1890 = vcmp.lt.s32.totalorder %v1550, 0
        %v1891 = vsub.s32 0, %v1550
        %v1892 = vsel %vm1890, %v1891, %v1550
        %v1893 = vshrl.u32 %v1892, 4
        %v1894 = vand.u32 %v1892, 15
        %v1895 = vsub.s32 0, %v1894
        %v1896 = vsel %vm1890, %v1895, %v1894
        %vm1897 = vcmp.lt.s32.totalorder %v1551, 0
        %v1898 = vsub.s32 0, %v1551
        %v1899 = vsel %vm1897, %v1898, %v1551
        %v1900 = vshrl.u32 %v1899, 4
        %v1901 = vand.u32 %v1899, 15
        %v1902 = vsub.s32 0, %v1901
        %v1903 = vsel %vm1897, %v1902, %v1901
        %vm1904 = vcmp.lt.s32.totalorder %v1552, 0
        %v1905 = vsub.s32 0, %v1552
        %v1906 = vsel %vm1904, %v1905, %v1552
        %v1907 = vshrl.u32 %v1906, 4
        %v1908 = vand.u32 %v1906, 15
        %v1909 = vsub.s32 0, %v1908
        %v1910 = vsel %vm1904, %v1909, %v1908
        %vm1911 = vcmp.lt.s32.totalorder %v1553, 0
        %v1912 = vsub.s32 0, %v1553
        %v1913 = vsel %vm1911, %v1912, %v1553
        %v1914 = vshrl.u32 %v1913, 4
        %v1915 = vand.u32 %v1913, 15
        %v1916 = vsub.s32 0, %v1915
        %v1917 = vsel %vm1911, %v1916, %v1915
        %vm1918 = vcmp.lt.s32.totalorder %v1554, 0
        %v1919 = vsub.s32 0, %v1554
        %v1920 = vsel %vm1918, %v1919, %v1554
        %v1921 = vshrl.u32 %v1920, 4
        %v1922 = vand.u32 %v1920, 15
        %v1923 = vsub.s32 0, %v1922
        %v1924 = vsel %vm1918, %v1923, %v1922
        %vm1925 = vcmp.lt.s32.totalorder %v1555, 0
        %v1926 = vsub.s32 0, %v1555
        %v1927 = vsel %vm1925, %v1926, %v1555
        %v1928 = vshrl.u32 %v1927, 4
        %v1929 = vand.u32 %v1927, 15
        %v1930 = vsub.s32 0, %v1929
        %v1931 = vsel %vm1925, %v1930, %v1929
        %vm1932 = vcmp.lt.s32.totalorder %v1556, 0
        %v1933 = vsub.s32 0, %v1556
        %v1934 = vsel %vm1932, %v1933, %v1556
        %v1935 = vshrl.u32 %v1934, 4
        %v1936 = vand.u32 %v1934, 15
        %v1937 = vsub.s32 0, %v1936
        %v1938 = vsel %vm1932, %v1937, %v1936
        %vm1939 = vcmp.lt.s32.totalorder %v1557, 0
        %v1940 = vsub.s32 0, %v1557
        %v1941 = vsel %vm1939, %v1940, %v1557
        %v1942 = vshrl.u32 %v1941, 4
        %v1943 = vand.u32 %v1941, 15
        %v1944 = vsub.s32 0, %v1943
        %v1945 = vsel %vm1939, %v1944, %v1943
        %vm1946 = vcmp.lt.s32.totalorder %v1558, 0
        %v1947 = vsub.s32 0, %v1558
        %v1948 = vsel %vm1946, %v1947, %v1558
        %v1949 = vshrl.u32 %v1948, 4
        %v1950 = vand.u32 %v1948, 15
        %v1951 = vsub.s32 0, %v1950
        %v1952 = vsel %vm1946, %v1951, %v1950
        %vm1953 = vcmp.lt.s32.totalorder %v1559, 0
        %v1954 = vsub.s32 0, %v1559
        %v1955 = vsel %vm1953, %v1954, %v1559
        %v1956 = vshrl.u32 %v1955, 4
        %v1957 = vand.u32 %v1955, 15
        %v1958 = vsub.s32 0, %v1957
        %v1959 = vsel %vm1953, %v1958, %v1957
        %vm1960 = vcmp.lt.s32.totalorder %v1560, 0
        %v1961 = vsub.s32 0, %v1560
        %v1962 = vsel %vm1960, %v1961, %v1560
        %v1963 = vshrl.u32 %v1962, 4
        %v1964 = vand.u32 %v1962, 15
        %v1965 = vsub.s32 0, %v1964
        %v1966 = vsel %vm1960, %v1965, %v1964
        %vm1967 = vcmp.lt.s32.totalorder %v1561, 0
        %v1968 = vsub.s32 0, %v1561
        %v1969 = vsel %vm1967, %v1968, %v1561
        %v1970 = vshrl.u32 %v1969, 4
        %v1971 = vand.u32 %v1969, 15
        %v1972 = vsub.s32 0, %v1971
        %v1973 = vsel %vm1967, %v1972, %v1971
        %vm1974 = vcmp.lt.s32.totalorder %v1562, 0
        %v1975 = vsub.s32 0, %v1562
        %v1976 = vsel %vm1974, %v1975, %v1562
        %v1977 = vshrl.u32 %v1976, 4
        %v1978 = vand.u32 %v1976, 15
        %v1979 = vsub.s32 0, %v1978
        %v1980 = vsel %vm1974, %v1979, %v1978
        %vm1981 = vcmp.lt.s32.totalorder %v1563, 0
        %v1982 = vsub.s32 0, %v1563
        %v1983 = vsel %vm1981, %v1982, %v1563
        %v1984 = vshrl.u32 %v1983, 4
        %v1985 = vand.u32 %v1983, 15
        %v1986 = vsub.s32 0, %v1985
        %v1987 = vsel %vm1981, %v1986, %v1985
        %vm1988 = vcmp.lt.s32.totalorder %v1564, 0
        %v1989 = vsub.s32 0, %v1564
        %v1990 = vsel %vm1988, %v1989, %v1564
        %v1991 = vshrl.u32 %v1990, 4
        %v1992 = vand.u32 %v1990, 15
        %v1993 = vsub.s32 0, %v1992
        %v1994 = vsel %vm1988, %v1993, %v1992
        %vm1995 = vcmp.lt.s32.totalorder %v1565, 0
        %v1996 = vsub.s32 0, %v1565
        %v1997 = vsel %vm1995, %v1996, %v1565
        %v1998 = vshrl.u32 %v1997, 4
        %v1999 = vand.u32 %v1997, 15
        %v2000 = vsub.s32 0, %v1999
        %v2001 = vsel %vm1995, %v2000, %v1999
        %vm2002 = vcmp.lt.s32.totalorder %v1566, 0
        %v2003 = vsub.s32 0, %v1566
        %v2004 = vsel %vm2002, %v2003, %v1566
        %v2005 = vshrl.u32 %v2004, 4
        %v2006 = vand.u32 %v2004, 15
        %v2007 = vsub.s32 0, %v2006
        %v2008 = vsel %vm2002, %v2007, %v2006
        %vm2009 = vcmp.lt.s32.totalorder %v1567, 0
        %v2010 = vsub.s32 0, %v1567
        %v2011 = vsel %vm2009, %v2010, %v1567
        %v2012 = vshrl.u32 %v2011, 4
        %v2013 = vand.u32 %v2011, 15
        %v2014 = vsub.s32 0, %v2013
        %v2015 = vsel %vm2009, %v2014, %v2013
        %vm2016 = vcmp.ne.s32.totalorder %v1574, 0
        %vm2017 = vcmp.ne.s32.totalorder %v1581, 0
        %vm2018 = vcmp.ne.s32.totalorder %v1588, 0
        %vm2019 = vcmp.ne.s32.totalorder %v1595, 0
        %vm2020 = vcmp.ne.s32.totalorder %v1602, 0
        %vm2021 = vcmp.ne.s32.totalorder %v1609, 0
        %vm2022 = vcmp.ne.s32.totalorder %v1616, 0
        %vm2023 = vcmp.ne.s32.totalorder %v1623, 0
        %vm2024 = vcmp.ne.s32.totalorder %v1630, 0
        %vm2025 = vcmp.ne.s32.totalorder %v1637, 0
        %vm2026 = vcmp.ne.s32.totalorder %v1644, 0
        %vm2027 = vcmp.ne.s32.totalorder %v1651, 0
        %vm2028 = vcmp.ne.s32.totalorder %v1658, 0
        %vm2029 = vcmp.ne.s32.totalorder %v1665, 0
        %vm2030 = vcmp.ne.s32.totalorder %v1672, 0
        %vm2031 = vcmp.ne.s32.totalorder %v1679, 0
        %vm2032 = vcmp.ne.s32.totalorder %v1686, 0
        %vm2033 = vcmp.ne.s32.totalorder %v1693, 0
        %vm2034 = vcmp.ne.s32.totalorder %v1700, 0
        %vm2035 = vcmp.ne.s32.totalorder %v1707, 0
        %vm2036 = vcmp.ne.s32.totalorder %v1714, 0
        %vm2037 = vcmp.ne.s32.totalorder %v1721, 0
        %vm2038 = vcmp.ne.s32.totalorder %v1728, 0
        %vm2039 = vcmp.ne.s32.totalorder %v1735, 0
        %vm2040 = vcmp.ne.s32.totalorder %v1742, 0
        %vm2041 = vcmp.ne.s32.totalorder %v1749, 0
        %vm2042 = vcmp.ne.s32.totalorder %v1756, 0
        %vm2043 = vcmp.ne.s32.totalorder %v1763, 0
        %vm2044 = vcmp.ne.s32.totalorder %v1770, 0
        %vm2045 = vcmp.ne.s32.totalorder %v1777, 0
        %vm2046 = vcmp.ne.s32.totalorder %v1784, 0
        %vm2047 = vcmp.ne.s32.totalorder %v1791, 0
        %vm2048 = vcmp.ne.s32.totalorder %v1798, 0
        %vm2049 = vcmp.ne.s32.totalorder %v1805, 0
        %vm2050 = vcmp.ne.s32.totalorder %v1812, 0
        %vm2051 = vcmp.ne.s32.totalorder %v1819, 0
        %vm2052 = vcmp.ne.s32.totalorder %v1826, 0
        %vm2053 = vcmp.ne.s32.totalorder %v1833, 0
        %vm2054 = vcmp.ne.s32.totalorder %v1840, 0
        %vm2055 = vcmp.ne.s32.totalorder %v1847, 0
        %vm2056 = vcmp.ne.s32.totalorder %v1854, 0
        %vm2057 = vcmp.ne.s32.totalorder %v1861, 0
        %vm2058 = vcmp.ne.s32.totalorder %v1868, 0
        %vm2059 = vcmp.ne.s32.totalorder %v1875, 0
        %vm2060 = vcmp.ne.s32.totalorder %v1882, 0
        %vm2061 = vcmp.ne.s32.totalorder %v1889, 0
        %vm2062 = vcmp.ne.s32.totalorder %v1896, 0
        %vm2063 = vcmp.ne.s32.totalorder %v1903, 0
        %vm2064 = vcmp.ne.s32.totalorder %v1910, 0
        %vm2065 = vcmp.ne.s32.totalorder %v1917, 0
        %vm2066 = vcmp.ne.s32.totalorder %v1924, 0
        %vm2067 = vcmp.ne.s32.totalorder %v1931, 0
        %vm2068 = vcmp.ne.s32.totalorder %v1938, 0
        %vm2069 = vcmp.ne.s32.totalorder %v1945, 0
        %vm2070 = vcmp.ne.s32.totalorder %v1952, 0
        %vm2071 = vcmp.ne.s32.totalorder %v1959, 0
        %vm2072 = vcmp.ne.s32.totalorder %v1966, 0
        %vm2073 = vcmp.ne.s32.totalorder %v1973, 0
        %vm2074 = vcmp.ne.s32.totalorder %v1980, 0
        %vm2075 = vcmp.ne.s32.totalorder %v1987, 0
        %vm2076 = vcmp.ne.s32.totalorder %v1994, 0
        %vm2077 = vcmp.ne.s32.totalorder %v2001, 0
        %vm2078 = vcmp.ne.s32.totalorder %v2008, 0
        %vm2079 = vcmp.ne.s32.totalorder %v2015, 0
        %vm2080 = vcmp.lt.s32.totalorder %v1574, 0
        %vm2081 = vcmp.lt.s32.totalorder %v1581, 0
        %vm2082 = vcmp.lt.s32.totalorder %v1588, 0
        %vm2083 = vcmp.lt.s32.totalorder %v1595, 0
        %vm2084 = vcmp.lt.s32.totalorder %v1602, 0
        %vm2085 = vcmp.lt.s32.totalorder %v1609, 0
        %vm2086 = vcmp.lt.s32.totalorder %v1616, 0
        %vm2087 = vcmp.lt.s32.totalorder %v1623, 0
        %vm2088 = vcmp.lt.s32.totalorder %v1630, 0
        %vm2089 = vcmp.lt.s32.totalorder %v1637, 0
        %vm2090 = vcmp.lt.s32.totalorder %v1644, 0
        %vm2091 = vcmp.lt.s32.totalorder %v1651, 0
        %vm2092 = vcmp.lt.s32.totalorder %v1658, 0
        %vm2093 = vcmp.lt.s32.totalorder %v1665, 0
        %vm2094 = vcmp.lt.s32.totalorder %v1672, 0
        %vm2095 = vcmp.lt.s32.totalorder %v1679, 0
        %vm2096 = vcmp.lt.s32.totalorder %v1686, 0
        %vm2097 = vcmp.lt.s32.totalorder %v1693, 0
        %vm2098 = vcmp.lt.s32.totalorder %v1700, 0
        %vm2099 = vcmp.lt.s32.totalorder %v1707, 0
        %vm2100 = vcmp.lt.s32.totalorder %v1714, 0
        %vm2101 = vcmp.lt.s32.totalorder %v1721, 0
        %vm2102 = vcmp.lt.s32.totalorder %v1728, 0
        %vm2103 = vcmp.lt.s32.totalorder %v1735, 0
        %vm2104 = vcmp.lt.s32.totalorder %v1742, 0
        %vm2105 = vcmp.lt.s32.totalorder %v1749, 0
        %vm2106 = vcmp.lt.s32.totalorder %v1756, 0
        %vm2107 = vcmp.lt.s32.totalorder %v1763, 0
        %vm2108 = vcmp.lt.s32.totalorder %v1770, 0
        %vm2109 = vcmp.lt.s32.totalorder %v1777, 0
        %vm2110 = vcmp.lt.s32.totalorder %v1784, 0
        %vm2111 = vcmp.lt.s32.totalorder %v1791, 0
        %vm2112 = vcmp.lt.s32.totalorder %v1798, 0
        %vm2113 = vcmp.lt.s32.totalorder %v1805, 0
        %vm2114 = vcmp.lt.s32.totalorder %v1812, 0
        %vm2115 = vcmp.lt.s32.totalorder %v1819, 0
        %vm2116 = vcmp.lt.s32.totalorder %v1826, 0
        %vm2117 = vcmp.lt.s32.totalorder %v1833, 0
        %vm2118 = vcmp.lt.s32.totalorder %v1840, 0
        %vm2119 = vcmp.lt.s32.totalorder %v1847, 0
        %vm2120 = vcmp.lt.s32.totalorder %v1854, 0
        %vm2121 = vcmp.lt.s32.totalorder %v1861, 0
        %vm2122 = vcmp.lt.s32.totalorder %v1868, 0
        %vm2123 = vcmp.lt.s32.totalorder %v1875, 0
        %vm2124 = vcmp.lt.s32.totalorder %v1882, 0
        %vm2125 = vcmp.lt.s32.totalorder %v1889, 0
        %vm2126 = vcmp.lt.s32.totalorder %v1896, 0
        %vm2127 = vcmp.lt.s32.totalorder %v1903, 0
        %vm2128 = vcmp.lt.s32.totalorder %v1910, 0
        %vm2129 = vcmp.lt.s32.totalorder %v1917, 0
        %vm2130 = vcmp.lt.s32.totalorder %v1924, 0
        %vm2131 = vcmp.lt.s32.totalorder %v1931, 0
        %vm2132 = vcmp.lt.s32.totalorder %v1938, 0
        %vm2133 = vcmp.lt.s32.totalorder %v1945, 0
        %vm2134 = vcmp.lt.s32.totalorder %v1952, 0
        %vm2135 = vcmp.lt.s32.totalorder %v1959, 0
        %vm2136 = vcmp.lt.s32.totalorder %v1966, 0
        %vm2137 = vcmp.lt.s32.totalorder %v1973, 0
        %vm2138 = vcmp.lt.s32.totalorder %v1980, 0
        %vm2139 = vcmp.lt.s32.totalorder %v1987, 0
        %vm2140 = vcmp.lt.s32.totalorder %v1994, 0
        %vm2141 = vcmp.lt.s32.totalorder %v2001, 0
        %vm2142 = vcmp.lt.s32.totalorder %v2008, 0
        %vm2143 = vcmp.lt.s32.totalorder %v2015, 0
        %vm2144 = vmand %vm2080, %vm2016
        %vm2145 = vmand %vm2081, %vm2017
        %vm2146 = vmand %vm2082, %vm2018
        %vm2147 = vmand %vm2083, %vm2019
        %vm2148 = vmand %vm2084, %vm2020
        %vm2149 = vmand %vm2085, %vm2021
        %vm2150 = vmand %vm2086, %vm2022
        %vm2151 = vmand %vm2087, %vm2023
        %vm2152 = vmand %vm2088, %vm2024
        %vm2153 = vmand %vm2089, %vm2025
        %vm2154 = vmand %vm2090, %vm2026
        %vm2155 = vmand %vm2091, %vm2027
        %vm2156 = vmand %vm2092, %vm2028
        %vm2157 = vmand %vm2093, %vm2029
        %vm2158 = vmand %vm2094, %vm2030
        %vm2159 = vmand %vm2095, %vm2031
        %vm2160 = vmand %vm2096, %vm2032
        %vm2161 = vmand %vm2097, %vm2033
        %vm2162 = vmand %vm2098, %vm2034
        %vm2163 = vmand %vm2099, %vm2035
        %vm2164 = vmand %vm2100, %vm2036
        %vm2165 = vmand %vm2101, %vm2037
        %vm2166 = vmand %vm2102, %vm2038
        %vm2167 = vmand %vm2103, %vm2039
        %vm2168 = vmand %vm2104, %vm2040
        %vm2169 = vmand %vm2105, %vm2041
        %vm2170 = vmand %vm2106, %vm2042
        %vm2171 = vmand %vm2107, %vm2043
        %vm2172 = vmand %vm2108, %vm2044
        %vm2173 = vmand %vm2109, %vm2045
        %vm2174 = vmand %vm2110, %vm2046
        %vm2175 = vmand %vm2111, %vm2047
        %vm2176 = vmand %vm2112, %vm2048
        %vm2177 = vmand %vm2113, %vm2049
        %vm2178 = vmand %vm2114, %vm2050
        %vm2179 = vmand %vm2115, %vm2051
        %vm2180 = vmand %vm2116, %vm2052
        %vm2181 = vmand %vm2117, %vm2053
        %vm2182 = vmand %vm2118, %vm2054
        %vm2183 = vmand %vm2119, %vm2055
        %vm2184 = vmand %vm2120, %vm2056
        %vm2185 = vmand %vm2121, %vm2057
        %vm2186 = vmand %vm2122, %vm2058
        %vm2187 = vmand %vm2123, %vm2059
        %vm2188 = vmand %vm2124, %vm2060
        %vm2189 = vmand %vm2125, %vm2061
        %vm2190 = vmand %vm2126, %vm2062
        %vm2191 = vmand %vm2127, %vm2063
        %vm2192 = vmand %vm2128, %vm2064
        %vm2193 = vmand %vm2129, %vm2065
        %vm2194 = vmand %vm2130, %vm2066
        %vm2195 = vmand %vm2131, %vm2067
        %vm2196 = vmand %vm2132, %vm2068
        %vm2197 = vmand %vm2133, %vm2069
        %vm2198 = vmand %vm2134, %vm2070
        %vm2199 = vmand %vm2135, %vm2071
        %vm2200 = vmand %vm2136, %vm2072
        %vm2201 = vmand %vm2137, %vm2073
        %vm2202 = vmand %vm2138, %vm2074
        %vm2203 = vmand %vm2139, %vm2075
        %vm2204 = vmand %vm2140, %vm2076
        %vm2205 = vmand %vm2141, %vm2077
        %vm2206 = vmand %vm2142, %vm2078
        %vm2207 = vmand %vm2143, %vm2079
        %v2208 = vadd.s32 %v1574, 16
        %v2209 = vadd.s32 %v1581, 16
        %v2210 = vadd.s32 %v1588, 16
        %v2211 = vadd.s32 %v1595, 16
        %v2212 = vadd.s32 %v1602, 16
        %v2213 = vadd.s32 %v1609, 16
        %v2214 = vadd.s32 %v1616, 16
        %v2215 = vadd.s32 %v1623, 16
        %v2216 = vadd.s32 %v1630, 16
        %v2217 = vadd.s32 %v1637, 16
        %v2218 = vadd.s32 %v1644, 16
        %v2219 = vadd.s32 %v1651, 16
        %v2220 = vadd.s32 %v1658, 16
        %v2221 = vadd.s32 %v1665, 16
        %v2222 = vadd.s32 %v1672, 16
        %v2223 = vadd.s32 %v1679, 16
        %v2224 = vadd.s32 %v1686, 16
        %v2225 = vadd.s32 %v1693, 16
        %v2226 = vadd.s32 %v1700, 16
        %v2227 = vadd.s32 %v1707, 16
        %v2228 = vadd.s32 %v1714, 16
        %v2229 = vadd.s32 %v1721, 16
        %v2230 = vadd.s32 %v1728, 16
        %v2231 = vadd.s32 %v1735, 16
        %v2232 = vadd.s32 %v1742, 16
        %v2233 = vadd.s32 %v1749, 16
        %v2234 = vadd.s32 %v1756, 16
        %v2235 = vadd.s32 %v1763, 16
        %v2236 = vadd.s32 %v1770, 16
        %v2237 = vadd.s32 %v1777, 16
        %v2238 = vadd.s32 %v1784, 16
        %v2239 = vadd.s32 %v1791, 16
        %v2240 = vadd.s32 %v1798, 16
        %v2241 = vadd.s32 %v1805, 16
        %v2242 = vadd.s32 %v1812, 16
        %v2243 = vadd.s32 %v1819, 16
        %v2244 = vadd.s32 %v1826, 16
        %v2245 = vadd.s32 %v1833, 16
        %v2246 = vadd.s32 %v1840, 16
        %v2247 = vadd.s32 %v1847, 16
        %v2248 = vadd.s32 %v1854, 16
        %v2249 = vadd.s32 %v1861, 16
        %v2250 = vadd.s32 %v1868, 16
        %v2251 = vadd.s32 %v1875, 16
        %v2252 = vadd.s32 %v1882, 16
        %v2253 = vadd.s32 %v1889, 16
        %v2254 = vadd.s32 %v1896, 16
        %v2255 = vadd.s32 %v1903, 16
        %v2256 = vadd.s32 %v1910, 16
        %v2257 = vadd.s32 %v1917, 16
        %v2258 = vadd.s32 %v1924, 16
        %v2259 = vadd.s32 %v1931, 16
        %v2260 = vadd.s32 %v1938, 16
        %v2261 = vadd.s32 %v1945, 16
        %v2262 = vadd.s32 %v1952, 16
        %v2263 = vadd.s32 %v1959, 16
        %v2264 = vadd.s32 %v1966, 16
        %v2265 = vadd.s32 %v1973, 16
        %v2266 = vadd.s32 %v1980, 16
        %v2267 = vadd.s32 %v1987, 16
        %v2268 = vadd.s32 %v1994, 16
        %v2269 = vadd.s32 %v2001, 16
        %v2270 = vadd.s32 %v2008, 16
        %v2271 = vadd.s32 %v2015, 16
        %v2272 = vsel %vm2144, %v2208, %v1574
        %v2273 = vsel %vm2145, %v2209, %v1581
        %v2274 = vsel %vm2146, %v2210, %v1588
        %v2275 = vsel %vm2147, %v2211, %v1595
        %v2276 = vsel %vm2148, %v2212, %v1602
        %v2277 = vsel %vm2149, %v2213, %v1609
        %v2278 = vsel %vm2150, %v2214, %v1616
        %v2279 = vsel %vm2151, %v2215, %v1623
        %v2280 = vsel %vm2152, %v2216, %v1630
        %v2281 = vsel %vm2153, %v2217, %v1637
        %v2282 = vsel %vm2154, %v2218, %v1644
        %v2283 = vsel %vm2155, %v2219, %v1651
        %v2284 = vsel %vm2156, %v2220, %v1658
        %v2285 = vsel %vm2157, %v2221, %v1665
        %v2286 = vsel %vm2158, %v2222, %v1672
        %v2287 = vsel %vm2159, %v2223, %v1679
        %v2288 = vsel %vm2160, %v2224, %v1686
        %v2289 = vsel %vm2161, %v2225, %v1693
        %v2290 = vsel %vm2162, %v2226, %v1700
        %v2291 = vsel %vm2163, %v2227, %v1707
        %v2292 = vsel %vm2164, %v2228, %v1714
        %v2293 = vsel %vm2165, %v2229, %v1721
        %v2294 = vsel %vm2166, %v2230, %v1728
        %v2295 = vsel %vm2167, %v2231, %v1735
        %v2296 = vsel %vm2168, %v2232, %v1742
        %v2297 = vsel %vm2169, %v2233, %v1749
        %v2298 = vsel %vm2170, %v2234, %v1756
        %v2299 = vsel %vm2171, %v2235, %v1763
        %v2300 = vsel %vm2172, %v2236, %v1770
        %v2301 = vsel %vm2173, %v2237, %v1777
        %v2302 = vsel %vm2174, %v2238, %v1784
        %v2303 = vsel %vm2175, %v2239, %v1791
        %v2304 = vsel %vm2176, %v2240, %v1798
        %v2305 = vsel %vm2177, %v2241, %v1805
        %v2306 = vsel %vm2178, %v2242, %v1812
        %v2307 = vsel %vm2179, %v2243, %v1819
        %v2308 = vsel %vm2180, %v2244, %v1826
        %v2309 = vsel %vm2181, %v2245, %v1833
        %v2310 = vsel %vm2182, %v2246, %v1840
        %v2311 = vsel %vm2183, %v2247, %v1847
        %v2312 = vsel %vm2184, %v2248, %v1854
        %v2313 = vsel %vm2185, %v2249, %v1861
        %v2314 = vsel %vm2186, %v2250, %v1868
        %v2315 = vsel %vm2187, %v2251, %v1875
        %v2316 = vsel %vm2188, %v2252, %v1882
        %v2317 = vsel %vm2189, %v2253, %v1889
        %v2318 = vsel %vm2190, %v2254, %v1896
        %v2319 = vsel %vm2191, %v2255, %v1903
        %v2320 = vsel %vm2192, %v2256, %v1910
        %v2321 = vsel %vm2193, %v2257, %v1917
        %v2322 = vsel %vm2194, %v2258, %v1924
        %v2323 = vsel %vm2195, %v2259, %v1931
        %v2324 = vsel %vm2196, %v2260, %v1938
        %v2325 = vsel %vm2197, %v2261, %v1945
        %v2326 = vsel %vm2198, %v2262, %v1952
        %v2327 = vsel %vm2199, %v2263, %v1959
        %v2328 = vsel %vm2200, %v2264, %v1966
        %v2329 = vsel %vm2201, %v2265, %v1973
        %v2330 = vsel %vm2202, %v2266, %v1980
        %v2331 = vsel %vm2203, %v2267, %v1987
        %v2332 = vsel %vm2204, %v2268, %v1994
        %v2333 = vsel %vm2205, %v2269, %v2001
        %v2334 = vsel %vm2206, %v2270, %v2008
        %v2335 = vsel %vm2207, %v2271, %v2015
        %v2336 = vrot.slane %v1439, 7
        %v2337 = vrot.slane %v1440, 7
        %v2338 = vrot.slane %v1441, 7
        %v2339 = vrot.slane %v1442, 7
        %v2340 = vrot.slane %v1443, 7
        %v2341 = vrot.slane %v1444, 7
        %v2342 = vrot.slane %v1445, 7
        %v2343 = vrot.slane %v1446, 7
        %v2344 = vrot.slane %v1447, 7
        %v2345 = vrot.slane %v1448, 7
        %v2346 = vrot.slane %v1449, 7
        %v2347 = vrot.slane %v1450, 7
        %v2348 = vrot.slane %v1451, 7
        %v2349 = vrot.slane %v1452, 7
        %v2350 = vrot.slane %v1453, 7
        %v2351 = vrot.slane %v1454, 7
        %v2352 = vrot.slane %v1455, 7
        %v2353 = vrot.slane %v1456, 7
        %v2354 = vrot.slane %v1457, 7
        %v2355 = vrot.slane %v1458, 7
        %v2356 = vrot.slane %v1459, 7
        %v2357 = vrot.slane %v1460, 7
        %v2358 = vrot.slane %v1461, 7
        %v2359 = vrot.slane %v1462, 7
        %v2360 = vrot.slane %v1463, 7
        %v2361 = vrot.slane %v1464, 7
        %v2362 = vrot.slane %v1465, 7
        %v2363 = vrot.slane %v1466, 7
        %v2364 = vrot.slane %v1467, 7
        %v2365 = vrot.slane %v1468, 7
        %v2366 = vrot.slane %v1469, 7
        %v2367 = vrot.slane %v1470, 7
        %v2368 = vrot.slane %v1471, 7
        %v2369 = vrot.slane %v1472, 7
        %v2370 = vrot.slane %v1473, 7
        %v2371 = vrot.slane %v1474, 7
        %v2372 = vrot.slane %v1475, 7
        %v2373 = vrot.slane %v1476, 7
        %v2374 = vrot.slane %v1477, 7
        %v2375 = vrot.slane %v1478, 7
        %v2376 = vrot.slane %v1479, 7
        %v2377 = vrot.slane %v1480, 7
        %v2378 = vrot.slane %v1481, 7
        %v2379 = vrot.slane %v1482, 7
        %v2380 = vrot.slane %v1483, 7
        %v2381 = vrot.slane %v1484, 7
        %v2382 = vrot.slane %v1485, 7
        %v2383 = vrot.slane %v1486, 7
        %v2384 = vrot.slane %v1487, 7
        %v2385 = vrot.slane %v1488, 7
        %v2386 = vrot.slane %v1489, 7
        %v2387 = vrot.slane %v1490, 7
        %v2388 = vrot.slane %v1491, 7
        %v2389 = vrot.slane %v1492, 7
        %v2390 = vrot.slane %v1493, 7
        %v2391 = vrot.slane %v1494, 7
        %v2392 = vrot.slane %v1495, 7
        %v2393 = vrot.slane %v1496, 7
        %v2394 = vrot.slane %v1497, 7
        %v2395 = vrot.slane %v1498, 7
        %v2396 = vrot.slane %v1499, 7
        %v2397 = vrot.slane %v1500, 7
        %v2398 = vrot.slane %v1501, 7
        %v2399 = vrot.slane %v1502, 7
        %vm2400 = vcmp.lt.s32.totalorder %v1504, 1
        %v2401 = vsel %vm2400, %v2398, %v2399
        %v2402 = vsel %vm2400, %v2397, %v2398
        %v2403 = vsel %vm2400, %v2396, %v2397
        %v2404 = vsel %vm2400, %v2395, %v2396
        %v2405 = vsel %vm2400, %v2394, %v2395
        %v2406 = vsel %vm2400, %v2393, %v2394
        %v2407 = vsel %vm2400, %v2392, %v2393
        %v2408 = vsel %vm2400, %v2391, %v2392
        %v2409 = vsel %vm2400, %v2390, %v2391
        %v2410 = vsel %vm2400, %v2389, %v2390
        %v2411 = vsel %vm2400, %v2388, %v2389
        %v2412 = vsel %vm2400, %v2387, %v2388
        %v2413 = vsel %vm2400, %v2386, %v2387
        %v2414 = vsel %vm2400, %v2385, %v2386
        %v2415 = vsel %vm2400, %v2384, %v2385
        %v2416 = vsel %vm2400, %v2383, %v2384
        %v2417 = vsel %vm2400, %v2382, %v2383
        %v2418 = vsel %vm2400, %v2381, %v2382
        %v2419 = vsel %vm2400, %v2380, %v2381
        %v2420 = vsel %vm2400, %v2379, %v2380
        %v2421 = vsel %vm2400, %v2378, %v2379
        %v2422 = vsel %vm2400, %v2377, %v2378
        %v2423 = vsel %vm2400, %v2376, %v2377
        %v2424 = vsel %vm2400, %v2375, %v2376
        %v2425 = vsel %vm2400, %v2374, %v2375
        %v2426 = vsel %vm2400, %v2373, %v2374
        %v2427 = vsel %vm2400, %v2372, %v2373
        %v2428 = vsel %vm2400, %v2371, %v2372
        %v2429 = vsel %vm2400, %v2370, %v2371
        %v2430 = vsel %vm2400, %v2369, %v2370
        %v2431 = vsel %vm2400, %v2368, %v2369
        %v2432 = vsel %vm2400, %v2367, %v2368
        %v2433 = vsel %vm2400, %v2366, %v2367
        %v2434 = vsel %vm2400, %v2365, %v2366
        %v2435 = vsel %vm2400, %v2364, %v2365
        %v2436 = vsel %vm2400, %v2363, %v2364
        %v2437 = vsel %vm2400, %v2362, %v2363
        %v2438 = vsel %vm2400, %v2361, %v2362
        %v2439 = vsel %vm2400, %v2360, %v2361
        %v2440 = vsel %vm2400, %v2359, %v2360
        %v2441 = vsel %vm2400, %v2358, %v2359
        %v2442 = vsel %vm2400, %v2357, %v2358
        %v2443 = vsel %vm2400, %v2356, %v2357
        %v2444 = vsel %vm2400, %v2355, %v2356
        %v2445 = vsel %vm2400, %v2354, %v2355
        %v2446 = vsel %vm2400, %v2353, %v2354
        %v2447 = vsel %vm2400, %v2352, %v2353
        %v2448 = vsel %vm2400, %v2351, %v2352
        %v2449 = vsel %vm2400, %v2350, %v2351
        %v2450 = vsel %vm2400, %v2349, %v2350
        %v2451 = vsel %vm2400, %v2348, %v2349
        %v2452 = vsel %vm2400, %v2347, %v2348
        %v2453 = vsel %vm2400, %v2346, %v2347
        %v2454 = vsel %vm2400, %v2345, %v2346
        %v2455 = vsel %vm2400, %v2344, %v2345
        %v2456 = vsel %vm2400, %v2343, %v2344
        %v2457 = vsel %vm2400, %v2342, %v2343
        %v2458 = vsel %vm2400, %v2341, %v2342
        %v2459 = vsel %vm2400, %v2340, %v2341
        %v2460 = vsel %vm2400, %v2339, %v2340
        %v2461 = vsel %vm2400, %v2338, %v2339
        %v2462 = vsel %vm2400, %v2337, %v2338
        %v2463 = vsel %vm2400, %v2336, %v2337
        %v2464 = vsel %vm2400, %v2399, %v2336
        %vm2465 = vcmp.ge.s32.totalorder %v1504, 16
        %vm2466 = vcmp.ge.s32.totalorder %v1505, 16
        %vm2467 = vcmp.ge.s32.totalorder %v1506, 16
        %vm2468 = vcmp.ge.s32.totalorder %v1507, 16
        %vm2469 = vcmp.ge.s32.totalorder %v1508, 16
        %vm2470 = vcmp.ge.s32.totalorder %v1509, 16
        %vm2471 = vcmp.ge.s32.totalorder %v1510, 16
        %vm2472 = vcmp.ge.s32.totalorder %v1511, 16
        %vm2473 = vcmp.ge.s32.totalorder %v1512, 16
        %vm2474 = vcmp.ge.s32.totalorder %v1513, 16
        %vm2475 = vcmp.ge.s32.totalorder %v1514, 16
        %vm2476 = vcmp.ge.s32.totalorder %v1515, 16
        %vm2477 = vcmp.ge.s32.totalorder %v1516, 16
        %vm2478 = vcmp.ge.s32.totalorder %v1517, 16
        %vm2479 = vcmp.ge.s32.totalorder %v1518, 16
        %vm2480 = vcmp.ge.s32.totalorder %v1519, 16
        %vm2481 = vcmp.ge.s32.totalorder %v1520, 16
        %vm2482 = vcmp.ge.s32.totalorder %v1521, 16
        %vm2483 = vcmp.ge.s32.totalorder %v1522, 16
        %vm2484 = vcmp.ge.s32.totalorder %v1523, 16
        %vm2485 = vcmp.ge.s32.totalorder %v1524, 16
        %vm2486 = vcmp.ge.s32.totalorder %v1525, 16
        %vm2487 = vcmp.ge.s32.totalorder %v1526, 16
        %vm2488 = vcmp.ge.s32.totalorder %v1527, 16
        %vm2489 = vcmp.ge.s32.totalorder %v1528, 16
        %vm2490 = vcmp.ge.s32.totalorder %v1529, 16
        %vm2491 = vcmp.ge.s32.totalorder %v1530, 16
        %vm2492 = vcmp.ge.s32.totalorder %v1531, 16
        %vm2493 = vcmp.ge.s32.totalorder %v1532, 16
        %vm2494 = vcmp.ge.s32.totalorder %v1533, 16
        %vm2495 = vcmp.ge.s32.totalorder %v1534, 16
        %vm2496 = vcmp.ge.s32.totalorder %v1535, 16
        %vm2497 = vcmp.ge.s32.totalorder %v1536, 16
        %vm2498 = vcmp.ge.s32.totalorder %v1537, 16
        %vm2499 = vcmp.ge.s32.totalorder %v1538, 16
        %vm2500 = vcmp.ge.s32.totalorder %v1539, 16
        %vm2501 = vcmp.ge.s32.totalorder %v1540, 16
        %vm2502 = vcmp.ge.s32.totalorder %v1541, 16
        %vm2503 = vcmp.ge.s32.totalorder %v1542, 16
        %vm2504 = vcmp.ge.s32.totalorder %v1543, 16
        %vm2505 = vcmp.ge.s32.totalorder %v1544, 16
        %vm2506 = vcmp.ge.s32.totalorder %v1545, 16
        %vm2507 = vcmp.ge.s32.totalorder %v1546, 16
        %vm2508 = vcmp.ge.s32.totalorder %v1547, 16
        %vm2509 = vcmp.ge.s32.totalorder %v1548, 16
        %vm2510 = vcmp.ge.s32.totalorder %v1549, 16
        %vm2511 = vcmp.ge.s32.totalorder %v1550, 16
        %vm2512 = vcmp.ge.s32.totalorder %v1551, 16
        %vm2513 = vcmp.ge.s32.totalorder %v1552, 16
        %vm2514 = vcmp.ge.s32.totalorder %v1553, 16
        %vm2515 = vcmp.ge.s32.totalorder %v1554, 16
        %vm2516 = vcmp.ge.s32.totalorder %v1555, 16
        %vm2517 = vcmp.ge.s32.totalorder %v1556, 16
        %vm2518 = vcmp.ge.s32.totalorder %v1557, 16
        %vm2519 = vcmp.ge.s32.totalorder %v1558, 16
        %vm2520 = vcmp.ge.s32.totalorder %v1559, 16
        %vm2521 = vcmp.ge.s32.totalorder %v1560, 16
        %vm2522 = vcmp.ge.s32.totalorder %v1561, 16
        %vm2523 = vcmp.ge.s32.totalorder %v1562, 16
        %vm2524 = vcmp.ge.s32.totalorder %v1563, 16
        %vm2525 = vcmp.ge.s32.totalorder %v1564, 16
        %vm2526 = vcmp.ge.s32.totalorder %v1565, 16
        %vm2527 = vcmp.ge.s32.totalorder %v1566, 16
        %vm2528 = vcmp.ge.s32.totalorder %v1567, 16
        %vm2529 = vcmp.ge.s32.totalorder %v2272, 1
        %vm2530 = vcmp.ge.s32.totalorder %v2273, 1
        %vm2531 = vcmp.ge.s32.totalorder %v2274, 1
        %vm2532 = vcmp.ge.s32.totalorder %v2275, 1
        %vm2533 = vcmp.ge.s32.totalorder %v2276, 1
        %vm2534 = vcmp.ge.s32.totalorder %v2277, 1
        %vm2535 = vcmp.ge.s32.totalorder %v2278, 1
        %vm2536 = vcmp.ge.s32.totalorder %v2279, 1
        %vm2537 = vcmp.ge.s32.totalorder %v2280, 1
        %vm2538 = vcmp.ge.s32.totalorder %v2281, 1
        %vm2539 = vcmp.ge.s32.totalorder %v2282, 1
        %vm2540 = vcmp.ge.s32.totalorder %v2283, 1
        %vm2541 = vcmp.ge.s32.totalorder %v2284, 1
        %vm2542 = vcmp.ge.s32.totalorder %v2285, 1
        %vm2543 = vcmp.ge.s32.totalorder %v2286, 1
        %vm2544 = vcmp.ge.s32.totalorder %v2287, 1
        %vm2545 = vcmp.ge.s32.totalorder %v2288, 1
        %vm2546 = vcmp.ge.s32.totalorder %v2289, 1
        %vm2547 = vcmp.ge.s32.totalorder %v2290, 1
        %vm2548 = vcmp.ge.s32.totalorder %v2291, 1
        %vm2549 = vcmp.ge.s32.totalorder %v2292, 1
        %vm2550 = vcmp.ge.s32.totalorder %v2293, 1
        %vm2551 = vcmp.ge.s32.totalorder %v2294, 1
        %vm2552 = vcmp.ge.s32.totalorder %v2295, 1
        %vm2553 = vcmp.ge.s32.totalorder %v2296, 1
        %vm2554 = vcmp.ge.s32.totalorder %v2297, 1
        %vm2555 = vcmp.ge.s32.totalorder %v2298, 1
        %vm2556 = vcmp.ge.s32.totalorder %v2299, 1
        %vm2557 = vcmp.ge.s32.totalorder %v2300, 1
        %vm2558 = vcmp.ge.s32.totalorder %v2301, 1
        %vm2559 = vcmp.ge.s32.totalorder %v2302, 1
        %vm2560 = vcmp.ge.s32.totalorder %v2303, 1
        %vm2561 = vcmp.ge.s32.totalorder %v2304, 1
        %vm2562 = vcmp.ge.s32.totalorder %v2305, 1
        %vm2563 = vcmp.ge.s32.totalorder %v2306, 1
        %vm2564 = vcmp.ge.s32.totalorder %v2307, 1
        %vm2565 = vcmp.ge.s32.totalorder %v2308, 1
        %vm2566 = vcmp.ge.s32.totalorder %v2309, 1
        %vm2567 = vcmp.ge.s32.totalorder %v2310, 1
        %vm2568 = vcmp.ge.s32.totalorder %v2311, 1
        %vm2569 = vcmp.ge.s32.totalorder %v2312, 1
        %vm2570 = vcmp.ge.s32.totalorder %v2313, 1
        %vm2571 = vcmp.ge.s32.totalorder %v2314, 1
        %vm2572 = vcmp.ge.s32.totalorder %v2315, 1
        %vm2573 = vcmp.ge.s32.totalorder %v2316, 1
        %vm2574 = vcmp.ge.s32.totalorder %v2317, 1
        %vm2575 = vcmp.ge.s32.totalorder %v2318, 1
        %vm2576 = vcmp.ge.s32.totalorder %v2319, 1
        %vm2577 = vcmp.ge.s32.totalorder %v2320, 1
        %vm2578 = vcmp.ge.s32.totalorder %v2321, 1
        %vm2579 = vcmp.ge.s32.totalorder %v2322, 1
        %vm2580 = vcmp.ge.s32.totalorder %v2323, 1
        %vm2581 = vcmp.ge.s32.totalorder %v2324, 1
        %vm2582 = vcmp.ge.s32.totalorder %v2325, 1
        %vm2583 = vcmp.ge.s32.totalorder %v2326, 1
        %vm2584 = vcmp.ge.s32.totalorder %v2327, 1
        %vm2585 = vcmp.ge.s32.totalorder %v2328, 1
        %vm2586 = vcmp.ge.s32.totalorder %v2329, 1
        %vm2587 = vcmp.ge.s32.totalorder %v2330, 1
        %vm2588 = vcmp.ge.s32.totalorder %v2331, 1
        %vm2589 = vcmp.ge.s32.totalorder %v2332, 1
        %vm2590 = vcmp.ge.s32.totalorder %v2333, 1
        %vm2591 = vcmp.ge.s32.totalorder %v2334, 1
        %vm2592 = vcmp.ge.s32.totalorder %v2335, 1
        %vm2593 = vmand %vm2465, %vm2529
        %vm2594 = vmand %vm2466, %vm2530
        %vm2595 = vmand %vm2467, %vm2531
        %vm2596 = vmand %vm2468, %vm2532
        %vm2597 = vmand %vm2469, %vm2533
        %vm2598 = vmand %vm2470, %vm2534
        %vm2599 = vmand %vm2471, %vm2535
        %vm2600 = vmand %vm2472, %vm2536
        %vm2601 = vmand %vm2473, %vm2537
        %vm2602 = vmand %vm2474, %vm2538
        %vm2603 = vmand %vm2475, %vm2539
        %vm2604 = vmand %vm2476, %vm2540
        %vm2605 = vmand %vm2477, %vm2541
        %vm2606 = vmand %vm2478, %vm2542
        %vm2607 = vmand %vm2479, %vm2543
        %vm2608 = vmand %vm2480, %vm2544
        %vm2609 = vmand %vm2481, %vm2545
        %vm2610 = vmand %vm2482, %vm2546
        %vm2611 = vmand %vm2483, %vm2547
        %vm2612 = vmand %vm2484, %vm2548
        %vm2613 = vmand %vm2485, %vm2549
        %vm2614 = vmand %vm2486, %vm2550
        %vm2615 = vmand %vm2487, %vm2551
        %vm2616 = vmand %vm2488, %vm2552
        %vm2617 = vmand %vm2489, %vm2553
        %vm2618 = vmand %vm2490, %vm2554
        %vm2619 = vmand %vm2491, %vm2555
        %vm2620 = vmand %vm2492, %vm2556
        %vm2621 = vmand %vm2493, %vm2557
        %vm2622 = vmand %vm2494, %vm2558
        %vm2623 = vmand %vm2495, %vm2559
        %vm2624 = vmand %vm2496, %vm2560
        %vm2625 = vmand %vm2497, %vm2561
        %vm2626 = vmand %vm2498, %vm2562
        %vm2627 = vmand %vm2499, %vm2563
        %vm2628 = vmand %vm2500, %vm2564
        %vm2629 = vmand %vm2501, %vm2565
        %vm2630 = vmand %vm2502, %vm2566
        %vm2631 = vmand %vm2503, %vm2567
        %vm2632 = vmand %vm2504, %vm2568
        %vm2633 = vmand %vm2505, %vm2569
        %vm2634 = vmand %vm2506, %vm2570
        %vm2635 = vmand %vm2507, %vm2571
        %vm2636 = vmand %vm2508, %vm2572
        %vm2637 = vmand %vm2509, %vm2573
        %vm2638 = vmand %vm2510, %vm2574
        %vm2639 = vmand %vm2511, %vm2575
        %vm2640 = vmand %vm2512, %vm2576
        %vm2641 = vmand %vm2513, %vm2577
        %vm2642 = vmand %vm2514, %vm2578
        %vm2643 = vmand %vm2515, %vm2579
        %vm2644 = vmand %vm2516, %vm2580
        %vm2645 = vmand %vm2517, %vm2581
        %vm2646 = vmand %vm2518, %vm2582
        %vm2647 = vmand %vm2519, %vm2583
        %vm2648 = vmand %vm2520, %vm2584
        %vm2649 = vmand %vm2521, %vm2585
        %vm2650 = vmand %vm2522, %vm2586
        %vm2651 = vmand %vm2523, %vm2587
        %vm2652 = vmand %vm2524, %vm2588
        %vm2653 = vmand %vm2525, %vm2589
        %vm2654 = vmand %vm2526, %vm2590
        %vm2655 = vmand %vm2527, %vm2591
        %vm2656 = vmand %vm2528, %vm2592
        %v2657 = vsel %vm2593, 1, 0
        %v2658 = vsel %vm2594, 1, 0
        %v2659 = vsel %vm2595, 1, 0
        %v2660 = vsel %vm2596, 1, 0
        %v2661 = vsel %vm2597, 1, 0
        %v2662 = vsel %vm2598, 1, 0
        %v2663 = vsel %vm2599, 1, 0
        %v2664 = vsel %vm2600, 1, 0
        %v2665 = vsel %vm2601, 1, 0
        %v2666 = vsel %vm2602, 1, 0
        %v2667 = vsel %vm2603, 1, 0
        %v2668 = vsel %vm2604, 1, 0
        %v2669 = vsel %vm2605, 1, 0
        %v2670 = vsel %vm2606, 1, 0
        %v2671 = vsel %vm2607, 1, 0
        %v2672 = vsel %vm2608, 1, 0
        %v2673 = vsel %vm2609, 1, 0
        %v2674 = vsel %vm2610, 1, 0
        %v2675 = vsel %vm2611, 1, 0
        %v2676 = vsel %vm2612, 1, 0
        %v2677 = vsel %vm2613, 1, 0
        %v2678 = vsel %vm2614, 1, 0
        %v2679 = vsel %vm2615, 1, 0
        %v2680 = vsel %vm2616, 1, 0
        %v2681 = vsel %vm2617, 1, 0
        %v2682 = vsel %vm2618, 1, 0
        %v2683 = vsel %vm2619, 1, 0
        %v2684 = vsel %vm2620, 1, 0
        %v2685 = vsel %vm2621, 1, 0
        %v2686 = vsel %vm2622, 1, 0
        %v2687 = vsel %vm2623, 1, 0
        %v2688 = vsel %vm2624, 1, 0
        %v2689 = vsel %vm2625, 1, 0
        %v2690 = vsel %vm2626, 1, 0
        %v2691 = vsel %vm2627, 1, 0
        %v2692 = vsel %vm2628, 1, 0
        %v2693 = vsel %vm2629, 1, 0
        %v2694 = vsel %vm2630, 1, 0
        %v2695 = vsel %vm2631, 1, 0
        %v2696 = vsel %vm2632, 1, 0
        %v2697 = vsel %vm2633, 1, 0
        %v2698 = vsel %vm2634, 1, 0
        %v2699 = vsel %vm2635, 1, 0
        %v2700 = vsel %vm2636, 1, 0
        %v2701 = vsel %vm2637, 1, 0
        %v2702 = vsel %vm2638, 1, 0
        %v2703 = vsel %vm2639, 1, 0
        %v2704 = vsel %vm2640, 1, 0
        %v2705 = vsel %vm2641, 1, 0
        %v2706 = vsel %vm2642, 1, 0
        %v2707 = vsel %vm2643, 1, 0
        %v2708 = vsel %vm2644, 1, 0
        %v2709 = vsel %vm2645, 1, 0
        %v2710 = vsel %vm2646, 1, 0
        %v2711 = vsel %vm2647, 1, 0
        %v2712 = vsel %vm2648, 1, 0
        %v2713 = vsel %vm2649, 1, 0
        %v2714 = vsel %vm2650, 1, 0
        %v2715 = vsel %vm2651, 1, 0
        %v2716 = vsel %vm2652, 1, 0
        %v2717 = vsel %vm2653, 1, 0
        %v2718 = vsel %vm2654, 1, 0
        %v2719 = vsel %vm2655, 1, 0
        %v2720 = vsel %vm2656, 1, 0
        %vm2721 = vcmp.eq.s32.totalorder %v2657, 1
        %vm2722 = vcmp.eq.s32.totalorder %v2658, 1
        %vm2723 = vcmp.eq.s32.totalorder %v2659, 1
        %vm2724 = vcmp.eq.s32.totalorder %v2660, 1
        %vm2725 = vcmp.eq.s32.totalorder %v2661, 1
        %vm2726 = vcmp.eq.s32.totalorder %v2662, 1
        %vm2727 = vcmp.eq.s32.totalorder %v2663, 1
        %vm2728 = vcmp.eq.s32.totalorder %v2664, 1
        %vm2729 = vcmp.eq.s32.totalorder %v2665, 1
        %vm2730 = vcmp.eq.s32.totalorder %v2666, 1
        %vm2731 = vcmp.eq.s32.totalorder %v2667, 1
        %vm2732 = vcmp.eq.s32.totalorder %v2668, 1
        %vm2733 = vcmp.eq.s32.totalorder %v2669, 1
        %vm2734 = vcmp.eq.s32.totalorder %v2670, 1
        %vm2735 = vcmp.eq.s32.totalorder %v2671, 1
        %vm2736 = vcmp.eq.s32.totalorder %v2672, 1
        %vm2737 = vcmp.eq.s32.totalorder %v2673, 1
        %vm2738 = vcmp.eq.s32.totalorder %v2674, 1
        %vm2739 = vcmp.eq.s32.totalorder %v2675, 1
        %vm2740 = vcmp.eq.s32.totalorder %v2676, 1
        %vm2741 = vcmp.eq.s32.totalorder %v2677, 1
        %vm2742 = vcmp.eq.s32.totalorder %v2678, 1
        %vm2743 = vcmp.eq.s32.totalorder %v2679, 1
        %vm2744 = vcmp.eq.s32.totalorder %v2680, 1
        %vm2745 = vcmp.eq.s32.totalorder %v2681, 1
        %vm2746 = vcmp.eq.s32.totalorder %v2682, 1
        %vm2747 = vcmp.eq.s32.totalorder %v2683, 1
        %vm2748 = vcmp.eq.s32.totalorder %v2684, 1
        %vm2749 = vcmp.eq.s32.totalorder %v2685, 1
        %vm2750 = vcmp.eq.s32.totalorder %v2686, 1
        %vm2751 = vcmp.eq.s32.totalorder %v2687, 1
        %vm2752 = vcmp.eq.s32.totalorder %v2688, 1
        %vm2753 = vcmp.eq.s32.totalorder %v2689, 1
        %vm2754 = vcmp.eq.s32.totalorder %v2690, 1
        %vm2755 = vcmp.eq.s32.totalorder %v2691, 1
        %vm2756 = vcmp.eq.s32.totalorder %v2692, 1
        %vm2757 = vcmp.eq.s32.totalorder %v2693, 1
        %vm2758 = vcmp.eq.s32.totalorder %v2694, 1
        %vm2759 = vcmp.eq.s32.totalorder %v2695, 1
        %vm2760 = vcmp.eq.s32.totalorder %v2696, 1
        %vm2761 = vcmp.eq.s32.totalorder %v2697, 1
        %vm2762 = vcmp.eq.s32.totalorder %v2698, 1
        %vm2763 = vcmp.eq.s32.totalorder %v2699, 1
        %vm2764 = vcmp.eq.s32.totalorder %v2700, 1
        %vm2765 = vcmp.eq.s32.totalorder %v2701, 1
        %vm2766 = vcmp.eq.s32.totalorder %v2702, 1
        %vm2767 = vcmp.eq.s32.totalorder %v2703, 1
        %vm2768 = vcmp.eq.s32.totalorder %v2704, 1
        %vm2769 = vcmp.eq.s32.totalorder %v2705, 1
        %vm2770 = vcmp.eq.s32.totalorder %v2706, 1
        %vm2771 = vcmp.eq.s32.totalorder %v2707, 1
        %vm2772 = vcmp.eq.s32.totalorder %v2708, 1
        %vm2773 = vcmp.eq.s32.totalorder %v2709, 1
        %vm2774 = vcmp.eq.s32.totalorder %v2710, 1
        %vm2775 = vcmp.eq.s32.totalorder %v2711, 1
        %vm2776 = vcmp.eq.s32.totalorder %v2712, 1
        %vm2777 = vcmp.eq.s32.totalorder %v2713, 1
        %vm2778 = vcmp.eq.s32.totalorder %v2714, 1
        %vm2779 = vcmp.eq.s32.totalorder %v2715, 1
        %vm2780 = vcmp.eq.s32.totalorder %v2716, 1
        %vm2781 = vcmp.eq.s32.totalorder %v2717, 1
        %vm2782 = vcmp.eq.s32.totalorder %v2718, 1
        %vm2783 = vcmp.eq.s32.totalorder %v2719, 1
        %vm2784 = vcmp.eq.s32.totalorder %v2720, 1
        %v2785 = vsel %vm2721, %v2402, 0.0
        %v2786 = vsel %vm2722, %v2401, 0.0
        %v2787 = vsel %vm2723, %v2464, 0.0
        %v2788 = vsel %vm2724, %v2463, 0.0
        %v2789 = vsel %vm2725, %v2462, 0.0
        %v2790 = vsel %vm2726, %v2461, 0.0
        %v2791 = vsel %vm2727, %v2460, 0.0
        %v2792 = vsel %vm2728, %v2459, 0.0
        %v2793 = vsel %vm2729, %v2458, 0.0
        %v2794 = vsel %vm2730, %v2457, 0.0
        %v2795 = vsel %vm2731, %v2456, 0.0
        %v2796 = vsel %vm2732, %v2455, 0.0
        %v2797 = vsel %vm2733, %v2454, 0.0
        %v2798 = vsel %vm2734, %v2453, 0.0
        %v2799 = vsel %vm2735, %v2452, 0.0
        %v2800 = vsel %vm2736, %v2451, 0.0
        %v2801 = vsel %vm2737, %v2450, 0.0
        %v2802 = vsel %vm2738, %v2449, 0.0
        %v2803 = vsel %vm2739, %v2448, 0.0
        %v2804 = vsel %vm2740, %v2447, 0.0
        %v2805 = vsel %vm2741, %v2446, 0.0
        %v2806 = vsel %vm2742, %v2445, 0.0
        %v2807 = vsel %vm2743, %v2444, 0.0
        %v2808 = vsel %vm2744, %v2443, 0.0
        %v2809 = vsel %vm2745, %v2442, 0.0
        %v2810 = vsel %vm2746, %v2441, 0.0
        %v2811 = vsel %vm2747, %v2440, 0.0
        %v2812 = vsel %vm2748, %v2439, 0.0
        %v2813 = vsel %vm2749, %v2438, 0.0
        %v2814 = vsel %vm2750, %v2437, 0.0
        %v2815 = vsel %vm2751, %v2436, 0.0
        %v2816 = vsel %vm2752, %v2435, 0.0
        %v2817 = vsel %vm2753, %v2434, 0.0
        %v2818 = vsel %vm2754, %v2433, 0.0
        %v2819 = vsel %vm2755, %v2432, 0.0
        %v2820 = vsel %vm2756, %v2431, 0.0
        %v2821 = vsel %vm2757, %v2430, 0.0
        %v2822 = vsel %vm2758, %v2429, 0.0
        %v2823 = vsel %vm2759, %v2428, 0.0
        %v2824 = vsel %vm2760, %v2427, 0.0
        %v2825 = vsel %vm2761, %v2426, 0.0
        %v2826 = vsel %vm2762, %v2425, 0.0
        %v2827 = vsel %vm2763, %v2424, 0.0
        %v2828 = vsel %vm2764, %v2423, 0.0
        %v2829 = vsel %vm2765, %v2422, 0.0
        %v2830 = vsel %vm2766, %v2421, 0.0
        %v2831 = vsel %vm2767, %v2420, 0.0
        %v2832 = vsel %vm2768, %v2419, 0.0
        %v2833 = vsel %vm2769, %v2418, 0.0
        %v2834 = vsel %vm2770, %v2417, 0.0
        %v2835 = vsel %vm2771, %v2416, 0.0
        %v2836 = vsel %vm2772, %v2415, 0.0
        %v2837 = vsel %vm2773, %v2414, 0.0
        %v2838 = vsel %vm2774, %v2413, 0.0
        %v2839 = vsel %vm2775, %v2412, 0.0
        %v2840 = vsel %vm2776, %v2411, 0.0
        %v2841 = vsel %vm2777, %v2410, 0.0
        %v2842 = vsel %vm2778, %v2409, 0.0
        %v2843 = vsel %vm2779, %v2408, 0.0
        %v2844 = vsel %vm2780, %v2407, 0.0
        %v2845 = vsel %vm2781, %v2406, 0.0
        %v2846 = vsel %vm2782, %v2405, 0.0
        %v2847 = vsel %vm2783, %v2404, 0.0
        %v2848 = vsel %vm2784, %v2403, 0.0
        %v2849 = vpack.c.bf16 %v2785, %v2785
        %v2850 = vpack.c.bf16 %v2786, %v2786
        %v2851 = vpack.c.bf16 %v2787, %v2787
        %v2852 = vpack.c.bf16 %v2788, %v2788
        %v2853 = vpack.c.bf16 %v2789, %v2789
        %v2854 = vpack.c.bf16 %v2790, %v2790
        %v2855 = vpack.c.bf16 %v2791, %v2791
        %v2856 = vpack.c.bf16 %v2792, %v2792
        %v2857 = vpack.c.bf16 %v2793, %v2793
        %v2858 = vpack.c.bf16 %v2794, %v2794
        %v2859 = vpack.c.bf16 %v2795, %v2795
        %v2860 = vpack.c.bf16 %v2796, %v2796
        %v2861 = vpack.c.bf16 %v2797, %v2797
        %v2862 = vpack.c.bf16 %v2798, %v2798
        %v2863 = vpack.c.bf16 %v2799, %v2799
        %v2864 = vpack.c.bf16 %v2800, %v2800
        %v2865 = vpack.c.bf16 %v2801, %v2801
        %v2866 = vpack.c.bf16 %v2802, %v2802
        %v2867 = vpack.c.bf16 %v2803, %v2803
        %v2868 = vpack.c.bf16 %v2804, %v2804
        %v2869 = vpack.c.bf16 %v2805, %v2805
        %v2870 = vpack.c.bf16 %v2806, %v2806
        %v2871 = vpack.c.bf16 %v2807, %v2807
        %v2872 = vpack.c.bf16 %v2808, %v2808
        %v2873 = vpack.c.bf16 %v2809, %v2809
        %v2874 = vpack.c.bf16 %v2810, %v2810
        %v2875 = vpack.c.bf16 %v2811, %v2811
        %v2876 = vpack.c.bf16 %v2812, %v2812
        %v2877 = vpack.c.bf16 %v2813, %v2813
        %v2878 = vpack.c.bf16 %v2814, %v2814
        %v2879 = vpack.c.bf16 %v2815, %v2815
        %v2880 = vpack.c.bf16 %v2816, %v2816
        %v2881 = vpack.c.bf16 %v2817, %v2817
        %v2882 = vpack.c.bf16 %v2818, %v2818
        %v2883 = vpack.c.bf16 %v2819, %v2819
        %v2884 = vpack.c.bf16 %v2820, %v2820
        %v2885 = vpack.c.bf16 %v2821, %v2821
        %v2886 = vpack.c.bf16 %v2822, %v2822
        %v2887 = vpack.c.bf16 %v2823, %v2823
        %v2888 = vpack.c.bf16 %v2824, %v2824
        %v2889 = vpack.c.bf16 %v2825, %v2825
        %v2890 = vpack.c.bf16 %v2826, %v2826
        %v2891 = vpack.c.bf16 %v2827, %v2827
        %v2892 = vpack.c.bf16 %v2828, %v2828
        %v2893 = vpack.c.bf16 %v2829, %v2829
        %v2894 = vpack.c.bf16 %v2830, %v2830
        %v2895 = vpack.c.bf16 %v2831, %v2831
        %v2896 = vpack.c.bf16 %v2832, %v2832
        %v2897 = vpack.c.bf16 %v2833, %v2833
        %v2898 = vpack.c.bf16 %v2834, %v2834
        %v2899 = vpack.c.bf16 %v2835, %v2835
        %v2900 = vpack.c.bf16 %v2836, %v2836
        %v2901 = vpack.c.bf16 %v2837, %v2837
        %v2902 = vpack.c.bf16 %v2838, %v2838
        %v2903 = vpack.c.bf16 %v2839, %v2839
        %v2904 = vpack.c.bf16 %v2840, %v2840
        %v2905 = vpack.c.bf16 %v2841, %v2841
        %v2906 = vpack.c.bf16 %v2842, %v2842
        %v2907 = vpack.c.bf16 %v2843, %v2843
        %v2908 = vpack.c.bf16 %v2844, %v2844
        %v2909 = vpack.c.bf16 %v2845, %v2845
        %v2910 = vpack.c.bf16 %v2846, %v2846
        %v2911 = vpack.c.bf16 %v2847, %v2847
        %v2912 = vpack.c.bf16 %v2848, %v2848
        %2913 = vst [vmem:[#allocation2] sm:$0xf] %v2849
        %2914 = vst [vmem:[#allocation2 + $0x24] sm:$0xf] %v2850
        %2915 = vst [vmem:[#allocation2 + $0x48] sm:$0xf] %v2851
        %2916 = vst [vmem:[#allocation2 + $0x6c] sm:$0xf] %v2852
        %2917 = vst [vmem:[#allocation2 + $0x90] sm:$0xf] %v2853
        %2918 = vst [vmem:[#allocation2 + $0xb4] sm:$0xf] %v2854
        %2919 = vst [vmem:[#allocation2 + $0xd8] sm:$0xf] %v2855
        %2920 = vst [vmem:[#allocation2 + $0xfc] sm:$0xf] %v2856
        %2921 = vst [vmem:[#allocation2 + $0x120] sm:$0xf] %v2857
        %2922 = vst [vmem:[#allocation2 + $0x144] sm:$0xf] %v2858
        %2923 = vst [vmem:[#allocation2 + $0x168] sm:$0xf] %v2859
        %2924 = vst [vmem:[#allocation2 + $0x18c] sm:$0xf] %v2860
        %2925 = vst [vmem:[#allocation2 + $0x1b0] sm:$0xf] %v2861
        %2926 = vst [vmem:[#allocation2 + $0x1d4] sm:$0xf] %v2862
        %2927 = vst [vmem:[#allocation2 + $0x1f8] sm:$0xf] %v2863
        %2928 = vst [vmem:[#allocation2 + $0x21c] sm:$0xf] %v2864
        %2929 = vst [vmem:[#allocation2 + $0x240] sm:$0xf] %v2865
        %2930 = vst [vmem:[#allocation2 + $0x264] sm:$0xf] %v2866
        %2931 = vst [vmem:[#allocation2 + $0x288] sm:$0xf] %v2867
        %2932 = vst [vmem:[#allocation2 + $0x2ac] sm:$0xf] %v2868
        %2933 = vst [vmem:[#allocation2 + $0x2d0] sm:$0xf] %v2869
        %2934 = vst [vmem:[#allocation2 + $0x2f4] sm:$0xf] %v2870
        %2935 = vst [vmem:[#allocation2 + $0x318] sm:$0xf] %v2871
        %2936 = vst [vmem:[#allocation2 + $0x33c] sm:$0xf] %v2872
        %2937 = vst [vmem:[#allocation2 + $0x360] sm:$0xf] %v2873
        %2938 = vst [vmem:[#allocation2 + $0x384] sm:$0xf] %v2874
        %2939 = vst [vmem:[#allocation2 + $0x3a8] sm:$0xf] %v2875
        %2940 = vst [vmem:[#allocation2 + $0x3cc] sm:$0xf] %v2876
        %2941 = vst [vmem:[#allocation2 + $0x3f0] sm:$0xf] %v2877
        %2942 = vst [vmem:[#allocation2 + $0x414] sm:$0xf] %v2878
        %2943 = vst [vmem:[#allocation2 + $0x438] sm:$0xf] %v2879
        %2944 = vst [vmem:[#allocation2 + $0x45c] sm:$0xf] %v2880
        %2945 = vst [vmem:[#allocation2 + $0x480] sm:$0xf] %v2881
        %2946 = vst [vmem:[#allocation2 + $0x4a4] sm:$0xf] %v2882
        %2947 = vst [vmem:[#allocation2 + $0x4c8] sm:$0xf] %v2883
        %2948 = vst [vmem:[#allocation2 + $0x4ec] sm:$0xf] %v2884
        %2949 = vst [vmem:[#allocation2 + $0x510] sm:$0xf] %v2885
        %2950 = vst [vmem:[#allocation2 + $0x534] sm:$0xf] %v2886
        %2951 = vst [vmem:[#allocation2 + $0x558] sm:$0xf] %v2887
        %2952 = vst [vmem:[#allocation2 + $0x57c] sm:$0xf] %v2888
        %2953 = vst [vmem:[#allocation2 + $0x5a0] sm:$0xf] %v2889
        %2954 = vst [vmem:[#allocation2 + $0x5c4] sm:$0xf] %v2890
        %2955 = vst [vmem:[#allocation2 + $0x5e8] sm:$0xf] %v2891
        %2956 = vst [vmem:[#allocation2 + $0x60c] sm:$0xf] %v2892
        %2957 = vst [vmem:[#allocation2 + $0x630] sm:$0xf] %v2893
        %2958 = vst [vmem:[#allocation2 + $0x654] sm:$0xf] %v2894
        %2959 = vst [vmem:[#allocation2 + $0x678] sm:$0xf] %v2895
        %2960 = vst [vmem:[#allocation2 + $0x69c] sm:$0xf] %v2896
        %2961 = vst [vmem:[#allocation2 + $0x6c0] sm:$0xf] %v2897
        %2962 = vst [vmem:[#allocation2 + $0x6e4] sm:$0xf] %v2898
        %2963 = vst [vmem:[#allocation2 + $0x708] sm:$0xf] %v2899
        %2964 = vst [vmem:[#allocation2 + $0x72c] sm:$0xf] %v2900
        %2965 = vst [vmem:[#allocation2 + $0x750] sm:$0xf] %v2901
        %2966 = vst [vmem:[#allocation2 + $0x774] sm:$0xf] %v2902
        %2967 = vst [vmem:[#allocation2 + $0x798] sm:$0xf] %v2903
        %2968 = vst [vmem:[#allocation2 + $0x7bc] sm:$0xf] %v2904
        %2969 = vst [vmem:[#allocation2 + $0x7e0] sm:$0xf] %v2905
        %2970 = vst [vmem:[#allocation2 + $0x804] sm:$0xf] %v2906
        %2971 = vst [vmem:[#allocation2 + $0x828] sm:$0xf] %v2907
        %2972 = vst [vmem:[#allocation2 + $0x84c] sm:$0xf] %v2908
        %2973 = vst [vmem:[#allocation2 + $0x870] sm:$0xf] %v2909
        %2974 = vst [vmem:[#allocation2 + $0x894] sm:$0xf] %v2910
        %2975 = vst [vmem:[#allocation2 + $0x8b8] sm:$0xf] %v2911
        %2976 = vst [vmem:[#allocation2 + $0x8dc] sm:$0xf] %v2912
        %v2977 = vsel %vm2465, 1, 0
        %v2978 = vsel %vm2466, 1, 0
        %v2979 = vsel %vm2467, 1, 0
        %v2980 = vsel %vm2468, 1, 0
        %v2981 = vsel %vm2469, 1, 0
        %v2982 = vsel %vm2470, 1, 0
        %v2983 = vsel %vm2471, 1, 0
        %v2984 = vsel %vm2472, 1, 0
        %v2985 = vsel %vm2473, 1, 0
        %v2986 = vsel %vm2474, 1, 0
        %v2987 = vsel %vm2475, 1, 0
        %v2988 = vsel %vm2476, 1, 0
        %v2989 = vsel %vm2477, 1, 0
        %v2990 = vsel %vm2478, 1, 0
        %v2991 = vsel %vm2479, 1, 0
        %v2992 = vsel %vm2480, 1, 0
        %v2993 = vsel %vm2481, 1, 0
        %v2994 = vsel %vm2482, 1, 0
        %v2995 = vsel %vm2483, 1, 0
        %v2996 = vsel %vm2484, 1, 0
        %v2997 = vsel %vm2485, 1, 0
        %v2998 = vsel %vm2486, 1, 0
        %v2999 = vsel %vm2487, 1, 0
        %v3000 = vsel %vm2488, 1, 0
        %v3001 = vsel %vm2489, 1, 0
        %v3002 = vsel %vm2490, 1, 0
        %v3003 = vsel %vm2491, 1, 0
        %v3004 = vsel %vm2492, 1, 0
        %v3005 = vsel %vm2493, 1, 0
        %v3006 = vsel %vm2494, 1, 0
        %v3007 = vsel %vm2495, 1, 0
        %v3008 = vsel %vm2496, 1, 0
        %v3009 = vsel %vm2497, 1, 0
        %v3010 = vsel %vm2498, 1, 0
        %v3011 = vsel %vm2499, 1, 0
        %v3012 = vsel %vm2500, 1, 0
        %v3013 = vsel %vm2501, 1, 0
        %v3014 = vsel %vm2502, 1, 0
        %v3015 = vsel %vm2503, 1, 0
        %v3016 = vsel %vm2504, 1, 0
        %v3017 = vsel %vm2505, 1, 0
        %v3018 = vsel %vm2506, 1, 0
        %v3019 = vsel %vm2507, 1, 0
        %v3020 = vsel %vm2508, 1, 0
        %v3021 = vsel %vm2509, 1, 0
        %v3022 = vsel %vm2510, 1, 0
        %v3023 = vsel %vm2511, 1, 0
        %v3024 = vsel %vm2512, 1, 0
        %v3025 = vsel %vm2513, 1, 0
        %v3026 = vsel %vm2514, 1, 0
        %v3027 = vsel %vm2515, 1, 0
        %v3028 = vsel %vm2516, 1, 0
        %v3029 = vsel %vm2517, 1, 0
        %v3030 = vsel %vm2518, 1, 0
        %v3031 = vsel %vm2519, 1, 0
        %v3032 = vsel %vm2520, 1, 0
        %v3033 = vsel %vm2521, 1, 0
        %v3034 = vsel %vm2522, 1, 0
        %v3035 = vsel %vm2523, 1, 0
        %v3036 = vsel %vm2524, 1, 0
        %v3037 = vsel %vm2525, 1, 0
        %v3038 = vsel %vm2526, 1, 0
        %v3039 = vsel %vm2527, 1, 0
        %v3040 = vsel %vm2528, 1, 0
        %vm3041 = vcmp.eq.s32.totalorder %v2977, 1
        %vm3042 = vcmp.eq.s32.totalorder %v2978, 1
        %vm3043 = vcmp.eq.s32.totalorder %v2979, 1
        %vm3044 = vcmp.eq.s32.totalorder %v2980, 1
        %vm3045 = vcmp.eq.s32.totalorder %v2981, 1
        %vm3046 = vcmp.eq.s32.totalorder %v2982, 1
        %vm3047 = vcmp.eq.s32.totalorder %v2983, 1
        %vm3048 = vcmp.eq.s32.totalorder %v2984, 1
        %vm3049 = vcmp.eq.s32.totalorder %v2985, 1
        %vm3050 = vcmp.eq.s32.totalorder %v2986, 1
        %vm3051 = vcmp.eq.s32.totalorder %v2987, 1
        %vm3052 = vcmp.eq.s32.totalorder %v2988, 1
        %vm3053 = vcmp.eq.s32.totalorder %v2989, 1
        %vm3054 = vcmp.eq.s32.totalorder %v2990, 1
        %vm3055 = vcmp.eq.s32.totalorder %v2991, 1
        %vm3056 = vcmp.eq.s32.totalorder %v2992, 1
        %vm3057 = vcmp.eq.s32.totalorder %v2993, 1
        %vm3058 = vcmp.eq.s32.totalorder %v2994, 1
        %vm3059 = vcmp.eq.s32.totalorder %v2995, 1
        %vm3060 = vcmp.eq.s32.totalorder %v2996, 1
        %vm3061 = vcmp.eq.s32.totalorder %v2997, 1
        %vm3062 = vcmp.eq.s32.totalorder %v2998, 1
        %vm3063 = vcmp.eq.s32.totalorder %v2999, 1
        %vm3064 = vcmp.eq.s32.totalorder %v3000, 1
        %vm3065 = vcmp.eq.s32.totalorder %v3001, 1
        %vm3066 = vcmp.eq.s32.totalorder %v3002, 1
        %vm3067 = vcmp.eq.s32.totalorder %v3003, 1
        %vm3068 = vcmp.eq.s32.totalorder %v3004, 1
        %vm3069 = vcmp.eq.s32.totalorder %v3005, 1
        %vm3070 = vcmp.eq.s32.totalorder %v3006, 1
        %vm3071 = vcmp.eq.s32.totalorder %v3007, 1
        %vm3072 = vcmp.eq.s32.totalorder %v3008, 1
        %vm3073 = vcmp.eq.s32.totalorder %v3009, 1
        %vm3074 = vcmp.eq.s32.totalorder %v3010, 1
        %vm3075 = vcmp.eq.s32.totalorder %v3011, 1
        %vm3076 = vcmp.eq.s32.totalorder %v3012, 1
        %vm3077 = vcmp.eq.s32.totalorder %v3013, 1
        %vm3078 = vcmp.eq.s32.totalorder %v3014, 1
        %vm3079 = vcmp.eq.s32.totalorder %v3015, 1
        %vm3080 = vcmp.eq.s32.totalorder %v3016, 1
        %vm3081 = vcmp.eq.s32.totalorder %v3017, 1
        %vm3082 = vcmp.eq.s32.totalorder %v3018, 1
        %vm3083 = vcmp.eq.s32.totalorder %v3019, 1
        %vm3084 = vcmp.eq.s32.totalorder %v3020, 1
        %vm3085 = vcmp.eq.s32.totalorder %v3021, 1
        %vm3086 = vcmp.eq.s32.totalorder %v3022, 1
        %vm3087 = vcmp.eq.s32.totalorder %v3023, 1
        %vm3088 = vcmp.eq.s32.totalorder %v3024, 1
        %vm3089 = vcmp.eq.s32.totalorder %v3025, 1
        %vm3090 = vcmp.eq.s32.totalorder %v3026, 1
        %vm3091 = vcmp.eq.s32.totalorder %v3027, 1
        %vm3092 = vcmp.eq.s32.totalorder %v3028, 1
        %vm3093 = vcmp.eq.s32.totalorder %v3029, 1
        %vm3094 = vcmp.eq.s32.totalorder %v3030, 1
        %vm3095 = vcmp.eq.s32.totalorder %v3031, 1
        %vm3096 = vcmp.eq.s32.totalorder %v3032, 1
        %vm3097 = vcmp.eq.s32.totalorder %v3033, 1
        %vm3098 = vcmp.eq.s32.totalorder %v3034, 1
        %vm3099 = vcmp.eq.s32.totalorder %v3035, 1
        %vm3100 = vcmp.eq.s32.totalorder %v3036, 1
        %vm3101 = vcmp.eq.s32.totalorder %v3037, 1
        %vm3102 = vcmp.eq.s32.totalorder %v3038, 1
        %vm3103 = vcmp.eq.s32.totalorder %v3039, 1
        %vm3104 = vcmp.eq.s32.totalorder %v3040, 1
        %v3105 = vsel %vm3041, %v1501, 0.0
        %v3106 = vsel %vm3042, %v1502, 0.0
        %v3107 = vsel %vm3043, %v1439, 0.0
        %v3108 = vsel %vm3044, %v1440, 0.0
        %v3109 = vsel %vm3045, %v1441, 0.0
        %v3110 = vsel %vm3046, %v1442, 0.0
        %v3111 = vsel %vm3047, %v1443, 0.0
        %v3112 = vsel %vm3048, %v1444, 0.0
        %v3113 = vsel %vm3049, %v1445, 0.0
        %v3114 = vsel %vm3050, %v1446, 0.0
        %v3115 = vsel %vm3051, %v1447, 0.0
        %v3116 = vsel %vm3052, %v1448, 0.0
        %v3117 = vsel %vm3053, %v1449, 0.0
        %v3118 = vsel %vm3054, %v1450, 0.0
        %v3119 = vsel %vm3055, %v1451, 0.0
        %v3120 = vsel %vm3056, %v1452, 0.0
        %v3121 = vsel %vm3057, %v1453, 0.0
        %v3122 = vsel %vm3058, %v1454, 0.0
        %v3123 = vsel %vm3059, %v1455, 0.0
        %v3124 = vsel %vm3060, %v1456, 0.0
        %v3125 = vsel %vm3061, %v1457, 0.0
        %v3126 = vsel %vm3062, %v1458, 0.0
        %v3127 = vsel %vm3063, %v1459, 0.0
        %v3128 = vsel %vm3064, %v1460, 0.0
        %v3129 = vsel %vm3065, %v1461, 0.0
        %v3130 = vsel %vm3066, %v1462, 0.0
        %v3131 = vsel %vm3067, %v1463, 0.0
        %v3132 = vsel %vm3068, %v1464, 0.0
        %v3133 = vsel %vm3069, %v1465, 0.0
        %v3134 = vsel %vm3070, %v1466, 0.0
        %v3135 = vsel %vm3071, %v1467, 0.0
        %v3136 = vsel %vm3072, %v1468, 0.0
        %v3137 = vsel %vm3073, %v1469, 0.0
        %v3138 = vsel %vm3074, %v1470, 0.0
        %v3139 = vsel %vm3075, %v1471, 0.0
        %v3140 = vsel %vm3076, %v1472, 0.0
        %v3141 = vsel %vm3077, %v1473, 0.0
        %v3142 = vsel %vm3078, %v1474, 0.0
        %v3143 = vsel %vm3079, %v1475, 0.0
        %v3144 = vsel %vm3080, %v1476, 0.0
        %v3145 = vsel %vm3081, %v1477, 0.0
        %v3146 = vsel %vm3082, %v1478, 0.0
        %v3147 = vsel %vm3083, %v1479, 0.0
        %v3148 = vsel %vm3084, %v1480, 0.0
        %v3149 = vsel %vm3085, %v1481, 0.0
        %v3150 = vsel %vm3086, %v1482, 0.0
        %v3151 = vsel %vm3087, %v1483, 0.0
        %v3152 = vsel %vm3088, %v1484, 0.0
        %v3153 = vsel %vm3089, %v1485, 0.0
        %v3154 = vsel %vm3090, %v1486, 0.0
        %v3155 = vsel %vm3091, %v1487, 0.0
        %v3156 = vsel %vm3092, %v1488, 0.0
        %v3157 = vsel %vm3093, %v1489, 0.0
        %v3158 = vsel %vm3094, %v1490, 0.0
        %v3159 = vsel %vm3095, %v1491, 0.0
        %v3160 = vsel %vm3096, %v1492, 0.0
        %v3161 = vsel %vm3097, %v1493, 0.0
        %v3162 = vsel %vm3098, %v1494, 0.0
        %v3163 = vsel %vm3099, %v1495, 0.0
        %v3164 = vsel %vm3100, %v1496, 0.0
        %v3165 = vsel %vm3101, %v1497, 0.0
        %v3166 = vsel %vm3102, %v1498, 0.0
        %v3167 = vsel %vm3103, %v1499, 0.0
        %v3168 = vsel %vm3104, %v1500, 0.0
        %v3169 = vpack.c.bf16 %v3105, %v3105
        %v3170 = vpack.c.bf16 %v3106, %v3106
        %v3171 = vpack.c.bf16 %v3107, %v3107
        %v3172 = vpack.c.bf16 %v3108, %v3108
        %v3173 = vpack.c.bf16 %v3109, %v3109
        %v3174 = vpack.c.bf16 %v3110, %v3110
        %v3175 = vpack.c.bf16 %v3111, %v3111
        %v3176 = vpack.c.bf16 %v3112, %v3112
        %v3177 = vpack.c.bf16 %v3113, %v3113
        %v3178 = vpack.c.bf16 %v3114, %v3114
        %v3179 = vpack.c.bf16 %v3115, %v3115
        %v3180 = vpack.c.bf16 %v3116, %v3116
        %v3181 = vpack.c.bf16 %v3117, %v3117
        %v3182 = vpack.c.bf16 %v3118, %v3118
        %v3183 = vpack.c.bf16 %v3119, %v3119
        %v3184 = vpack.c.bf16 %v3120, %v3120
        %v3185 = vpack.c.bf16 %v3121, %v3121
        %v3186 = vpack.c.bf16 %v3122, %v3122
        %v3187 = vpack.c.bf16 %v3123, %v3123
        %v3188 = vpack.c.bf16 %v3124, %v3124
        %v3189 = vpack.c.bf16 %v3125, %v3125
        %v3190 = vpack.c.bf16 %v3126, %v3126
        %v3191 = vpack.c.bf16 %v3127, %v3127
        %v3192 = vpack.c.bf16 %v3128, %v3128
        %v3193 = vpack.c.bf16 %v3129, %v3129
        %v3194 = vpack.c.bf16 %v3130, %v3130
        %v3195 = vpack.c.bf16 %v3131, %v3131
        %v3196 = vpack.c.bf16 %v3132, %v3132
        %v3197 = vpack.c.bf16 %v3133, %v3133
        %v3198 = vpack.c.bf16 %v3134, %v3134
        %v3199 = vpack.c.bf16 %v3135, %v3135
        %v3200 = vpack.c.bf16 %v3136, %v3136
        %v3201 = vpack.c.bf16 %v3137, %v3137
        %v3202 = vpack.c.bf16 %v3138, %v3138
        %v3203 = vpack.c.bf16 %v3139, %v3139
        %v3204 = vpack.c.bf16 %v3140, %v3140
        %v3205 = vpack.c.bf16 %v3141, %v3141
        %v3206 = vpack.c.bf16 %v3142, %v3142
        %v3207 = vpack.c.bf16 %v3143, %v3143
        %v3208 = vpack.c.bf16 %v3144, %v3144
        %v3209 = vpack.c.bf16 %v3145, %v3145
        %v3210 = vpack.c.bf16 %v3146, %v3146
        %v3211 = vpack.c.bf16 %v3147, %v3147
        %v3212 = vpack.c.bf16 %v3148, %v3148
        %v3213 = vpack.c.bf16 %v3149, %v3149
        %v3214 = vpack.c.bf16 %v3150, %v3150
        %v3215 = vpack.c.bf16 %v3151, %v3151
        %v3216 = vpack.c.bf16 %v3152, %v3152
        %v3217 = vpack.c.bf16 %v3153, %v3153
        %v3218 = vpack.c.bf16 %v3154, %v3154
        %v3219 = vpack.c.bf16 %v3155, %v3155
        %v3220 = vpack.c.bf16 %v3156, %v3156
        %v3221 = vpack.c.bf16 %v3157, %v3157
        %v3222 = vpack.c.bf16 %v3158, %v3158
        %v3223 = vpack.c.bf16 %v3159, %v3159
        %v3224 = vpack.c.bf16 %v3160, %v3160
        %v3225 = vpack.c.bf16 %v3161, %v3161
        %v3226 = vpack.c.bf16 %v3162, %v3162
        %v3227 = vpack.c.bf16 %v3163, %v3163
        %v3228 = vpack.c.bf16 %v3164, %v3164
        %v3229 = vpack.c.bf16 %v3165, %v3165
        %v3230 = vpack.c.bf16 %v3166, %v3166
        %v3231 = vpack.c.bf16 %v3167, %v3167
        %v3232 = vpack.c.bf16 %v3168, %v3168
        %3233 = vst [vmem:[#allocation2 + $0x4] sm:$0xf] %v3169
        %3234 = vst [vmem:[#allocation2 + $0x28] sm:$0xf] %v3170
        %3235 = vst [vmem:[#allocation2 + $0x4c] sm:$0xf] %v3171
        %3236 = vst [vmem:[#allocation2 + $0x70] sm:$0xf] %v3172
        %3237 = vst [vmem:[#allocation2 + $0x94] sm:$0xf] %v3173
        %3238 = vst [vmem:[#allocation2 + $0xb8] sm:$0xf] %v3174
        %3239 = vst [vmem:[#allocation2 + $0xdc] sm:$0xf] %v3175
        %3240 = vst [vmem:[#allocation2 + $0x100] sm:$0xf] %v3176
        %3241 = vst [vmem:[#allocation2 + $0x124] sm:$0xf] %v3177
        %3242 = vst [vmem:[#allocation2 + $0x148] sm:$0xf] %v3178
        %3243 = vst [vmem:[#allocation2 + $0x16c] sm:$0xf] %v3179
        %3244 = vst [vmem:[#allocation2 + $0x190] sm:$0xf] %v3180
        %3245 = vst [vmem:[#allocation2 + $0x1b4] sm:$0xf] %v3181
        %3246 = vst [vmem:[#allocation2 + $0x1d8] sm:$0xf] %v3182
        %3247 = vst [vmem:[#allocation2 + $0x1fc] sm:$0xf] %v3183
        %3248 = vst [vmem:[#allocation2 + $0x220] sm:$0xf] %v3184
        %3249 = vst [vmem:[#allocation2 + $0x244] sm:$0xf] %v3185
        %3250 = vst [vmem:[#allocation2 + $0x268] sm:$0xf] %v3186
        %3251 = vst [vmem:[#allocation2 + $0x28c] sm:$0xf] %v3187
        %3252 = vst [vmem:[#allocation2 + $0x2b0] sm:$0xf] %v3188
        %3253 = vst [vmem:[#allocation2 + $0x2d4] sm:$0xf] %v3189
        %3254 = vst [vmem:[#allocation2 + $0x2f8] sm:$0xf] %v3190
        %3255 = vst [vmem:[#allocation2 + $0x31c] sm:$0xf] %v3191
        %3256 = vst [vmem:[#allocation2 + $0x340] sm:$0xf] %v3192
        %3257 = vst [vmem:[#allocation2 + $0x364] sm:$0xf] %v3193
        %3258 = vst [vmem:[#allocation2 + $0x388] sm:$0xf] %v3194
        %3259 = vst [vmem:[#allocation2 + $0x3ac] sm:$0xf] %v3195
        %3260 = vst [vmem:[#allocation2 + $0x3d0] sm:$0xf] %v3196
        %3261 = vst [vmem:[#allocation2 + $0x3f4] sm:$0xf] %v3197
        %3262 = vst [vmem:[#allocation2 + $0x418] sm:$0xf] %v3198
        %3263 = vst [vmem:[#allocation2 + $0x43c] sm:$0xf] %v3199
        %3264 = vst [vmem:[#allocation2 + $0x460] sm:$0xf] %v3200
        %3265 = vst [vmem:[#allocation2 + $0x484] sm:$0xf] %v3201
        %3266 = vst [vmem:[#allocation2 + $0x4a8] sm:$0xf] %v3202
        %3267 = vst [vmem:[#allocation2 + $0x4cc] sm:$0xf] %v3203
        %3268 = vst [vmem:[#allocation2 + $0x4f0] sm:$0xf] %v3204
        %3269 = vst [vmem:[#allocation2 + $0x514] sm:$0xf] %v3205
        %3270 = vst [vmem:[#allocation2 + $0x538] sm:$0xf] %v3206
        %3271 = vst [vmem:[#allocation2 + $0x55c] sm:$0xf] %v3207
        %3272 = vst [vmem:[#allocation2 + $0x580] sm:$0xf] %v3208
        %3273 = vst [vmem:[#allocation2 + $0x5a4] sm:$0xf] %v3209
        %3274 = vst [vmem:[#allocation2 + $0x5c8] sm:$0xf] %v3210
        %3275 = vst [vmem:[#allocation2 + $0x5ec] sm:$0xf] %v3211
        %3276 = vst [vmem:[#allocation2 + $0x610] sm:$0xf] %v3212
        %3277 = vst [vmem:[#allocation2 + $0x634] sm:$0xf] %v3213
        %3278 = vst [vmem:[#allocation2 + $0x658] sm:$0xf] %v3214
        %3279 = vst [vmem:[#allocation2 + $0x67c] sm:$0xf] %v3215
        %3280 = vst [vmem:[#allocation2 + $0x6a0] sm:$0xf] %v3216
        %3281 = vst [vmem:[#allocation2 + $0x6c4] sm:$0xf] %v3217
        %3282 = vst [vmem:[#allocation2 + $0x6e8] sm:$0xf] %v3218
        %3283 = vst [vmem:[#allocation2 + $0x70c] sm:$0xf] %v3219
        %3284 = vst [vmem:[#allocation2 + $0x730] sm:$0xf] %v3220
        %3285 = vst [vmem:[#allocation2 + $0x754] sm:$0xf] %v3221
        %3286 = vst [vmem:[#allocation2 + $0x778] sm:$0xf] %v3222
        %3287 = vst [vmem:[#allocation2 + $0x79c] sm:$0xf] %v3223
        %3288 = vst [vmem:[#allocation2 + $0x7c0] sm:$0xf] %v3224
        %3289 = vst [vmem:[#allocation2 + $0x7e4] sm:$0xf] %v3225
        %3290 = vst [vmem:[#allocation2 + $0x808] sm:$0xf] %v3226
        %3291 = vst [vmem:[#allocation2 + $0x82c] sm:$0xf] %v3227
        %3292 = vst [vmem:[#allocation2 + $0x850] sm:$0xf] %v3228
        %3293 = vst [vmem:[#allocation2 + $0x874] sm:$0xf] %v3229
        %3294 = vst [vmem:[#allocation2 + $0x898] sm:$0xf] %v3230
        %3295 = vst [vmem:[#allocation2 + $0x8bc] sm:$0xf] %v3231
        %3296 = vst [vmem:[#allocation2 + $0x8e0] sm:$0xf] %v3232
        %v3297 = vrot.slane %v1439, 1
        %v3298 = vrot.slane %v1440, 1
        %v3299 = vrot.slane %v1441, 1
        %v3300 = vrot.slane %v1442, 1
        %v3301 = vrot.slane %v1443, 1
        %v3302 = vrot.slane %v1444, 1
        %v3303 = vrot.slane %v1445, 1
        %v3304 = vrot.slane %v1446, 1
        %v3305 = vrot.slane %v1447, 1
        %v3306 = vrot.slane %v1448, 1
        %v3307 = vrot.slane %v1449, 1
        %v3308 = vrot.slane %v1450, 1
        %v3309 = vrot.slane %v1451, 1
        %v3310 = vrot.slane %v1452, 1
        %v3311 = vrot.slane %v1453, 1
        %v3312 = vrot.slane %v1454, 1
        %v3313 = vrot.slane %v1455, 1
        %v3314 = vrot.slane %v1456, 1
        %v3315 = vrot.slane %v1457, 1
        %v3316 = vrot.slane %v1458, 1
        %v3317 = vrot.slane %v1459, 1
        %v3318 = vrot.slane %v1460, 1
        %v3319 = vrot.slane %v1461, 1
        %v3320 = vrot.slane %v1462, 1
        %v3321 = vrot.slane %v1463, 1
        %v3322 = vrot.slane %v1464, 1
        %v3323 = vrot.slane %v1465, 1
        %v3324 = vrot.slane %v1466, 1
        %v3325 = vrot.slane %v1467, 1
        %v3326 = vrot.slane %v1468, 1
        %v3327 = vrot.slane %v1469, 1
        %v3328 = vrot.slane %v1470, 1
        %v3329 = vrot.slane %v1471, 1
        %v3330 = vrot.slane %v1472, 1
        %v3331 = vrot.slane %v1473, 1
        %v3332 = vrot.slane %v1474, 1
        %v3333 = vrot.slane %v1475, 1
        %v3334 = vrot.slane %v1476, 1
        %v3335 = vrot.slane %v1477, 1
        %v3336 = vrot.slane %v1478, 1
        %v3337 = vrot.slane %v1479, 1
        %v3338 = vrot.slane %v1480, 1
        %v3339 = vrot.slane %v1481, 1
        %v3340 = vrot.slane %v1482, 1
        %v3341 = vrot.slane %v1483, 1
        %v3342 = vrot.slane %v1484, 1
        %v3343 = vrot.slane %v1485, 1
        %v3344 = vrot.slane %v1486, 1
        %v3345 = vrot.slane %v1487, 1
        %v3346 = vrot.slane %v1488, 1
        %v3347 = vrot.slane %v1489, 1
        %v3348 = vrot.slane %v1490, 1
        %v3349 = vrot.slane %v1491, 1
        %v3350 = vrot.slane %v1492, 1
        %v3351 = vrot.slane %v1493, 1
        %v3352 = vrot.slane %v1494, 1
        %v3353 = vrot.slane %v1495, 1
        %v3354 = vrot.slane %v1496, 1
        %v3355 = vrot.slane %v1497, 1
        %v3356 = vrot.slane %v1498, 1
        %v3357 = vrot.slane %v1499, 1
        %v3358 = vrot.slane %v1500, 1
        %v3359 = vrot.slane %v1501, 1
        %v3360 = vrot.slane %v1502, 1
        %vm3361 = vcmp.lt.s32.totalorder %v1504, 7
        %v3362 = vsel %vm3361, %v3359, %v3360
        %v3363 = vsel %vm3361, %v3358, %v3359
        %v3364 = vsel %vm3361, %v3357, %v3358
        %v3365 = vsel %vm3361, %v3356, %v3357
        %v3366 = vsel %vm3361, %v3355, %v3356
        %v3367 = vsel %vm3361, %v3354, %v3355
        %v3368 = vsel %vm3361, %v3353, %v3354
        %v3369 = vsel %vm3361, %v3352, %v3353
        %v3370 = vsel %vm3361, %v3351, %v3352
        %v3371 = vsel %vm3361, %v3350, %v3351
        %v3372 = vsel %vm3361, %v3349, %v3350
        %v3373 = vsel %vm3361, %v3348, %v3349
        %v3374 = vsel %vm3361, %v3347, %v3348
        %v3375 = vsel %vm3361, %v3346, %v3347
        %v3376 = vsel %vm3361, %v3345, %v3346
        %v3377 = vsel %vm3361, %v3344, %v3345
        %v3378 = vsel %vm3361, %v3343, %v3344
        %v3379 = vsel %vm3361, %v3342, %v3343
        %v3380 = vsel %vm3361, %v3341, %v3342
        %v3381 = vsel %vm3361, %v3340, %v3341
        %v3382 = vsel %vm3361, %v3339, %v3340
        %v3383 = vsel %vm3361, %v3338, %v3339
        %v3384 = vsel %vm3361, %v3337, %v3338
        %v3385 = vsel %vm3361, %v3336, %v3337
        %v3386 = vsel %vm3361, %v3335, %v3336
        %v3387 = vsel %vm3361, %v3334, %v3335
        %v3388 = vsel %vm3361, %v3333, %v3334
        %v3389 = vsel %vm3361, %v3332, %v3333
        %v3390 = vsel %vm3361, %v3331, %v3332
        %v3391 = vsel %vm3361, %v3330, %v3331
        %v3392 = vsel %vm3361, %v3329, %v3330
        %v3393 = vsel %vm3361, %v3328, %v3329
        %v3394 = vsel %vm3361, %v3327, %v3328
        %v3395 = vsel %vm3361, %v3326, %v3327
        %v3396 = vsel %vm3361, %v3325, %v3326
        %v3397 = vsel %vm3361, %v3324, %v3325
        %v3398 = vsel %vm3361, %v3323, %v3324
        %v3399 = vsel %vm3361, %v3322, %v3323
        %v3400 = vsel %vm3361, %v3321, %v3322
        %v3401 = vsel %vm3361, %v3320, %v3321
        %v3402 = vsel %vm3361, %v3319, %v3320
        %v3403 = vsel %vm3361, %v3318, %v3319
        %v3404 = vsel %vm3361, %v3317, %v3318
        %v3405 = vsel %vm3361, %v3316, %v3317
        %v3406 = vsel %vm3361, %v3315, %v3316
        %v3407 = vsel %vm3361, %v3314, %v3315
        %v3408 = vsel %vm3361, %v3313, %v3314
        %v3409 = vsel %vm3361, %v3312, %v3313
        %v3410 = vsel %vm3361, %v3311, %v3312
        %v3411 = vsel %vm3361, %v3310, %v3311
        %v3412 = vsel %vm3361, %v3309, %v3310
        %v3413 = vsel %vm3361, %v3308, %v3309
        %v3414 = vsel %vm3361, %v3307, %v3308
        %v3415 = vsel %vm3361, %v3306, %v3307
        %v3416 = vsel %vm3361, %v3305, %v3306
        %v3417 = vsel %vm3361, %v3304, %v3305
        %v3418 = vsel %vm3361, %v3303, %v3304
        %v3419 = vsel %vm3361, %v3302, %v3303
        %v3420 = vsel %vm3361, %v3301, %v3302
        %v3421 = vsel %vm3361, %v3300, %v3301
        %v3422 = vsel %vm3361, %v3299, %v3300
        %v3423 = vsel %vm3361, %v3298, %v3299
        %v3424 = vsel %vm3361, %v3297, %v3298
        %v3425 = vsel %vm3361, %v3360, %v3297
        %vm3426 = vcmp.lt.s32.totalorder %v2272, 15
        %vm3427 = vcmp.lt.s32.totalorder %v2273, 15
        %vm3428 = vcmp.lt.s32.totalorder %v2274, 15
        %vm3429 = vcmp.lt.s32.totalorder %v2275, 15
        %vm3430 = vcmp.lt.s32.totalorder %v2276, 15
        %vm3431 = vcmp.lt.s32.totalorder %v2277, 15
        %vm3432 = vcmp.lt.s32.totalorder %v2278, 15
        %vm3433 = vcmp.lt.s32.totalorder %v2279, 15
        %vm3434 = vcmp.lt.s32.totalorder %v2280, 15
        %vm3435 = vcmp.lt.s32.totalorder %v2281, 15
        %vm3436 = vcmp.lt.s32.totalorder %v2282, 15
        %vm3437 = vcmp.lt.s32.totalorder %v2283, 15
        %vm3438 = vcmp.lt.s32.totalorder %v2284, 15
        %vm3439 = vcmp.lt.s32.totalorder %v2285, 15
        %vm3440 = vcmp.lt.s32.totalorder %v2286, 15
        %vm3441 = vcmp.lt.s32.totalorder %v2287, 15
        %vm3442 = vcmp.lt.s32.totalorder %v2288, 15
        %vm3443 = vcmp.lt.s32.totalorder %v2289, 15
        %vm3444 = vcmp.lt.s32.totalorder %v2290, 15
        %vm3445 = vcmp.lt.s32.totalorder %v2291, 15
        %vm3446 = vcmp.lt.s32.totalorder %v2292, 15
        %vm3447 = vcmp.lt.s32.totalorder %v2293, 15
        %vm3448 = vcmp.lt.s32.totalorder %v2294, 15
        %vm3449 = vcmp.lt.s32.totalorder %v2295, 15
        %vm3450 = vcmp.lt.s32.totalorder %v2296, 15
        %vm3451 = vcmp.lt.s32.totalorder %v2297, 15
        %vm3452 = vcmp.lt.s32.totalorder %v2298, 15
        %vm3453 = vcmp.lt.s32.totalorder %v2299, 15
        %vm3454 = vcmp.lt.s32.totalorder %v2300, 15
        %vm3455 = vcmp.lt.s32.totalorder %v2301, 15
        %vm3456 = vcmp.lt.s32.totalorder %v2302, 15
        %vm3457 = vcmp.lt.s32.totalorder %v2303, 15
        %vm3458 = vcmp.lt.s32.totalorder %v2304, 15
        %vm3459 = vcmp.lt.s32.totalorder %v2305, 15
        %vm3460 = vcmp.lt.s32.totalorder %v2306, 15
        %vm3461 = vcmp.lt.s32.totalorder %v2307, 15
        %vm3462 = vcmp.lt.s32.totalorder %v2308, 15
        %vm3463 = vcmp.lt.s32.totalorder %v2309, 15
        %vm3464 = vcmp.lt.s32.totalorder %v2310, 15
        %vm3465 = vcmp.lt.s32.totalorder %v2311, 15
        %vm3466 = vcmp.lt.s32.totalorder %v2312, 15
        %vm3467 = vcmp.lt.s32.totalorder %v2313, 15
        %vm3468 = vcmp.lt.s32.totalorder %v2314, 15
        %vm3469 = vcmp.lt.s32.totalorder %v2315, 15
        %vm3470 = vcmp.lt.s32.totalorder %v2316, 15
        %vm3471 = vcmp.lt.s32.totalorder %v2317, 15
        %vm3472 = vcmp.lt.s32.totalorder %v2318, 15
        %vm3473 = vcmp.lt.s32.totalorder %v2319, 15
        %vm3474 = vcmp.lt.s32.totalorder %v2320, 15
        %vm3475 = vcmp.lt.s32.totalorder %v2321, 15
        %vm3476 = vcmp.lt.s32.totalorder %v2322, 15
        %vm3477 = vcmp.lt.s32.totalorder %v2323, 15
        %vm3478 = vcmp.lt.s32.totalorder %v2324, 15
        %vm3479 = vcmp.lt.s32.totalorder %v2325, 15
        %vm3480 = vcmp.lt.s32.totalorder %v2326, 15
        %vm3481 = vcmp.lt.s32.totalorder %v2327, 15
        %vm3482 = vcmp.lt.s32.totalorder %v2328, 15
        %vm3483 = vcmp.lt.s32.totalorder %v2329, 15
        %vm3484 = vcmp.lt.s32.totalorder %v2330, 15
        %vm3485 = vcmp.lt.s32.totalorder %v2331, 15
        %vm3486 = vcmp.lt.s32.totalorder %v2332, 15
        %vm3487 = vcmp.lt.s32.totalorder %v2333, 15
        %vm3488 = vcmp.lt.s32.totalorder %v2334, 15
        %vm3489 = vcmp.lt.s32.totalorder %v2335, 15
        %vm3490 = vmand %vm2465, %vm3426
        %vm3491 = vmand %vm2466, %vm3427
        %vm3492 = vmand %vm2467, %vm3428
        %vm3493 = vmand %vm2468, %vm3429
        %vm3494 = vmand %vm2469, %vm3430
        %vm3495 = vmand %vm2470, %vm3431
        %vm3496 = vmand %vm2471, %vm3432
        %vm3497 = vmand %vm2472, %vm3433
        %vm3498 = vmand %vm2473, %vm3434
        %vm3499 = vmand %vm2474, %vm3435
        %vm3500 = vmand %vm2475, %vm3436
        %vm3501 = vmand %vm2476, %vm3437
        %vm3502 = vmand %vm2477, %vm3438
        %vm3503 = vmand %vm2478, %vm3439
        %vm3504 = vmand %vm2479, %vm3440
        %vm3505 = vmand %vm2480, %vm3441
        %vm3506 = vmand %vm2481, %vm3442
        %vm3507 = vmand %vm2482, %vm3443
        %vm3508 = vmand %vm2483, %vm3444
        %vm3509 = vmand %vm2484, %vm3445
        %vm3510 = vmand %vm2485, %vm3446
        %vm3511 = vmand %vm2486, %vm3447
        %vm3512 = vmand %vm2487, %vm3448
        %vm3513 = vmand %vm2488, %vm3449
        %vm3514 = vmand %vm2489, %vm3450
        %vm3515 = vmand %vm2490, %vm3451
        %vm3516 = vmand %vm2491, %vm3452
        %vm3517 = vmand %vm2492, %vm3453
        %vm3518 = vmand %vm2493, %vm3454
        %vm3519 = vmand %vm2494, %vm3455
        %vm3520 = vmand %vm2495, %vm3456
        %vm3521 = vmand %vm2496, %vm3457
        %vm3522 = vmand %vm2497, %vm3458
        %vm3523 = vmand %vm2498, %vm3459
        %vm3524 = vmand %vm2499, %vm3460
        %vm3525 = vmand %vm2500, %vm3461
        %vm3526 = vmand %vm2501, %vm3462
        %vm3527 = vmand %vm2502, %vm3463
        %vm3528 = vmand %vm2503, %vm3464
        %vm3529 = vmand %vm2504, %vm3465
        %vm3530 = vmand %vm2505, %vm3466
        %vm3531 = vmand %vm2506, %vm3467
        %vm3532 = vmand %vm2507, %vm3468
        %vm3533 = vmand %vm2508, %vm3469
        %vm3534 = vmand %vm2509, %vm3470
        %vm3535 = vmand %vm2510, %vm3471
        %vm3536 = vmand %vm2511, %vm3472
        %vm3537 = vmand %vm2512, %vm3473
        %vm3538 = vmand %vm2513, %vm3474
        %vm3539 = vmand %vm2514, %vm3475
        %vm3540 = vmand %vm2515, %vm3476
        %vm3541 = vmand %vm2516, %vm3477
        %vm3542 = vmand %vm2517, %vm3478
        %vm3543 = vmand %vm2518, %vm3479
        %vm3544 = vmand %vm2519, %vm3480
        %vm3545 = vmand %vm2520, %vm3481
        %vm3546 = vmand %vm2521, %vm3482
        %vm3547 = vmand %vm2522, %vm3483
        %vm3548 = vmand %vm2523, %vm3484
        %vm3549 = vmand %vm2524, %vm3485
        %vm3550 = vmand %vm2525, %vm3486
        %vm3551 = vmand %vm2526, %vm3487
        %vm3552 = vmand %vm2527, %vm3488
        %vm3553 = vmand %vm2528, %vm3489
        %v3554 = vsel %vm3490, 1, 0
        %v3555 = vsel %vm3491, 1, 0
        %v3556 = vsel %vm3492, 1, 0
        %v3557 = vsel %vm3493, 1, 0
        %v3558 = vsel %vm3494, 1, 0
        %v3559 = vsel %vm3495, 1, 0
        %v3560 = vsel %vm3496, 1, 0
        %v3561 = vsel %vm3497, 1, 0
        %v3562 = vsel %vm3498, 1, 0
        %v3563 = vsel %vm3499, 1, 0
        %v3564 = vsel %vm3500, 1, 0
        %v3565 = vsel %vm3501, 1, 0
        %v3566 = vsel %vm3502, 1, 0
        %v3567 = vsel %vm3503, 1, 0
        %v3568 = vsel %vm3504, 1, 0
        %v3569 = vsel %vm3505, 1, 0
        %v3570 = vsel %vm3506, 1, 0
        %v3571 = vsel %vm3507, 1, 0
        %v3572 = vsel %vm3508, 1, 0
        %v3573 = vsel %vm3509, 1, 0
        %v3574 = vsel %vm3510, 1, 0
        %v3575 = vsel %vm3511, 1, 0
        %v3576 = vsel %vm3512, 1, 0
        %v3577 = vsel %vm3513, 1, 0
        %v3578 = vsel %vm3514, 1, 0
        %v3579 = vsel %vm3515, 1, 0
        %v3580 = vsel %vm3516, 1, 0
        %v3581 = vsel %vm3517, 1, 0
        %v3582 = vsel %vm3518, 1, 0
        %v3583 = vsel %vm3519, 1, 0
        %v3584 = vsel %vm3520, 1, 0
        %v3585 = vsel %vm3521, 1, 0
        %v3586 = vsel %vm3522, 1, 0
        %v3587 = vsel %vm3523, 1, 0
        %v3588 = vsel %vm3524, 1, 0
        %v3589 = vsel %vm3525, 1, 0
        %v3590 = vsel %vm3526, 1, 0
        %v3591 = vsel %vm3527, 1, 0
        %v3592 = vsel %vm3528, 1, 0
        %v3593 = vsel %vm3529, 1, 0
        %v3594 = vsel %vm3530, 1, 0
        %v3595 = vsel %vm3531, 1, 0
        %v3596 = vsel %vm3532, 1, 0
        %v3597 = vsel %vm3533, 1, 0
        %v3598 = vsel %vm3534, 1, 0
        %v3599 = vsel %vm3535, 1, 0
        %v3600 = vsel %vm3536, 1, 0
        %v3601 = vsel %vm3537, 1, 0
        %v3602 = vsel %vm3538, 1, 0
        %v3603 = vsel %vm3539, 1, 0
        %v3604 = vsel %vm3540, 1, 0
        %v3605 = vsel %vm3541, 1, 0
        %v3606 = vsel %vm3542, 1, 0
        %v3607 = vsel %vm3543, 1, 0
        %v3608 = vsel %vm3544, 1, 0
        %v3609 = vsel %vm3545, 1, 0
        %v3610 = vsel %vm3546, 1, 0
        %v3611 = vsel %vm3547, 1, 0
        %v3612 = vsel %vm3548, 1, 0
        %v3613 = vsel %vm3549, 1, 0
        %v3614 = vsel %vm3550, 1, 0
        %v3615 = vsel %vm3551, 1, 0
        %v3616 = vsel %vm3552, 1, 0
        %v3617 = vsel %vm3553, 1, 0
        %vm3618 = vcmp.eq.s32.totalorder %v3554, 1
        %vm3619 = vcmp.eq.s32.totalorder %v3555, 1
        %vm3620 = vcmp.eq.s32.totalorder %v3556, 1
        %vm3621 = vcmp.eq.s32.totalorder %v3557, 1
        %vm3622 = vcmp.eq.s32.totalorder %v3558, 1
        %vm3623 = vcmp.eq.s32.totalorder %v3559, 1
        %vm3624 = vcmp.eq.s32.totalorder %v3560, 1
        %vm3625 = vcmp.eq.s32.totalorder %v3561, 1
        %vm3626 = vcmp.eq.s32.totalorder %v3562, 1
        %vm3627 = vcmp.eq.s32.totalorder %v3563, 1
        %vm3628 = vcmp.eq.s32.totalorder %v3564, 1
        %vm3629 = vcmp.eq.s32.totalorder %v3565, 1
        %vm3630 = vcmp.eq.s32.totalorder %v3566, 1
        %vm3631 = vcmp.eq.s32.totalorder %v3567, 1
        %vm3632 = vcmp.eq.s32.totalorder %v3568, 1
        %vm3633 = vcmp.eq.s32.totalorder %v3569, 1
        %vm3634 = vcmp.eq.s32.totalorder %v3570, 1
        %vm3635 = vcmp.eq.s32.totalorder %v3571, 1
        %vm3636 = vcmp.eq.s32.totalorder %v3572, 1
        %vm3637 = vcmp.eq.s32.totalorder %v3573, 1
        %vm3638 = vcmp.eq.s32.totalorder %v3574, 1
        %vm3639 = vcmp.eq.s32.totalorder %v3575, 1
        %vm3640 = vcmp.eq.s32.totalorder %v3576, 1
        %vm3641 = vcmp.eq.s32.totalorder %v3577, 1
        %vm3642 = vcmp.eq.s32.totalorder %v3578, 1
        %vm3643 = vcmp.eq.s32.totalorder %v3579, 1
        %vm3644 = vcmp.eq.s32.totalorder %v3580, 1
        %vm3645 = vcmp.eq.s32.totalorder %v3581, 1
        %vm3646 = vcmp.eq.s32.totalorder %v3582, 1
        %vm3647 = vcmp.eq.s32.totalorder %v3583, 1
        %vm3648 = vcmp.eq.s32.totalorder %v3584, 1
        %vm3649 = vcmp.eq.s32.totalorder %v3585, 1
        %vm3650 = vcmp.eq.s32.totalorder %v3586, 1
        %vm3651 = vcmp.eq.s32.totalorder %v3587, 1
        %vm3652 = vcmp.eq.s32.totalorder %v3588, 1
        %vm3653 = vcmp.eq.s32.totalorder %v3589, 1
        %vm3654 = vcmp.eq.s32.totalorder %v3590, 1
        %vm3655 = vcmp.eq.s32.totalorder %v3591, 1
        %vm3656 = vcmp.eq.s32.totalorder %v3592, 1
        %vm3657 = vcmp.eq.s32.totalorder %v3593, 1
        %vm3658 = vcmp.eq.s32.totalorder %v3594, 1
        %vm3659 = vcmp.eq.s32.totalorder %v3595, 1
        %vm3660 = vcmp.eq.s32.totalorder %v3596, 1
        %vm3661 = vcmp.eq.s32.totalorder %v3597, 1
        %vm3662 = vcmp.eq.s32.totalorder %v3598, 1
        %vm3663 = vcmp.eq.s32.totalorder %v3599, 1
        %vm3664 = vcmp.eq.s32.totalorder %v3600, 1
        %vm3665 = vcmp.eq.s32.totalorder %v3601, 1
        %vm3666 = vcmp.eq.s32.totalorder %v3602, 1
        %vm3667 = vcmp.eq.s32.totalorder %v3603, 1
        %vm3668 = vcmp.eq.s32.totalorder %v3604, 1
        %vm3669 = vcmp.eq.s32.totalorder %v3605, 1
        %vm3670 = vcmp.eq.s32.totalorder %v3606, 1
        %vm3671 = vcmp.eq.s32.totalorder %v3607, 1
        %vm3672 = vcmp.eq.s32.totalorder %v3608, 1
        %vm3673 = vcmp.eq.s32.totalorder %v3609, 1
        %vm3674 = vcmp.eq.s32.totalorder %v3610, 1
        %vm3675 = vcmp.eq.s32.totalorder %v3611, 1
        %vm3676 = vcmp.eq.s32.totalorder %v3612, 1
        %vm3677 = vcmp.eq.s32.totalorder %v3613, 1
        %vm3678 = vcmp.eq.s32.totalorder %v3614, 1
        %vm3679 = vcmp.eq.s32.totalorder %v3615, 1
        %vm3680 = vcmp.eq.s32.totalorder %v3616, 1
        %vm3681 = vcmp.eq.s32.totalorder %v3617, 1
        %v3682 = vsel %vm3618, %v3362, 0.0
        %v3683 = vsel %vm3619, %v3425, 0.0
        %v3684 = vsel %vm3620, %v3424, 0.0
        %v3685 = vsel %vm3621, %v3423, 0.0
        %v3686 = vsel %vm3622, %v3422, 0.0
        %v3687 = vsel %vm3623, %v3421, 0.0
        %v3688 = vsel %vm3624, %v3420, 0.0
        %v3689 = vsel %vm3625, %v3419, 0.0
        %v3690 = vsel %vm3626, %v3418, 0.0
        %v3691 = vsel %vm3627, %v3417, 0.0
        %v3692 = vsel %vm3628, %v3416, 0.0
        %v3693 = vsel %vm3629, %v3415, 0.0
        %v3694 = vsel %vm3630, %v3414, 0.0
        %v3695 = vsel %vm3631, %v3413, 0.0
        %v3696 = vsel %vm3632, %v3412, 0.0
        %v3697 = vsel %vm3633, %v3411, 0.0
        %v3698 = vsel %vm3634, %v3410, 0.0
        %v3699 = vsel %vm3635, %v3409, 0.0
        %v3700 = vsel %vm3636, %v3408, 0.0
        %v3701 = vsel %vm3637, %v3407, 0.0
        %v3702 = vsel %vm3638, %v3406, 0.0
        %v3703 = vsel %vm3639, %v3405, 0.0
        %v3704 = vsel %vm3640, %v3404, 0.0
        %v3705 = vsel %vm3641, %v3403, 0.0
        %v3706 = vsel %vm3642, %v3402, 0.0
        %v3707 = vsel %vm3643, %v3401, 0.0
        %v3708 = vsel %vm3644, %v3400, 0.0
        %v3709 = vsel %vm3645, %v3399, 0.0
        %v3710 = vsel %vm3646, %v3398, 0.0
        %v3711 = vsel %vm3647, %v3397, 0.0
        %v3712 = vsel %vm3648, %v3396, 0.0
        %v3713 = vsel %vm3649, %v3395, 0.0
        %v3714 = vsel %vm3650, %v3394, 0.0
        %v3715 = vsel %vm3651, %v3393, 0.0
        %v3716 = vsel %vm3652, %v3392, 0.0
        %v3717 = vsel %vm3653, %v3391, 0.0
        %v3718 = vsel %vm3654, %v3390, 0.0
        %v3719 = vsel %vm3655, %v3389, 0.0
        %v3720 = vsel %vm3656, %v3388, 0.0
        %v3721 = vsel %vm3657, %v3387, 0.0
        %v3722 = vsel %vm3658, %v3386, 0.0
        %v3723 = vsel %vm3659, %v3385, 0.0
        %v3724 = vsel %vm3660, %v3384, 0.0
        %v3725 = vsel %vm3661, %v3383, 0.0
        %v3726 = vsel %vm3662, %v3382, 0.0
        %v3727 = vsel %vm3663, %v3381, 0.0
        %v3728 = vsel %vm3664, %v3380, 0.0
        %v3729 = vsel %vm3665, %v3379, 0.0
        %v3730 = vsel %vm3666, %v3378, 0.0
        %v3731 = vsel %vm3667, %v3377, 0.0
        %v3732 = vsel %vm3668, %v3376, 0.0
        %v3733 = vsel %vm3669, %v3375, 0.0
        %v3734 = vsel %vm3670, %v3374, 0.0
        %v3735 = vsel %vm3671, %v3373, 0.0
        %v3736 = vsel %vm3672, %v3372, 0.0
        %v3737 = vsel %vm3673, %v3371, 0.0
        %v3738 = vsel %vm3674, %v3370, 0.0
        %v3739 = vsel %vm3675, %v3369, 0.0
        %v3740 = vsel %vm3676, %v3368, 0.0
        %v3741 = vsel %vm3677, %v3367, 0.0
        %v3742 = vsel %vm3678, %v3366, 0.0
        %v3743 = vsel %vm3679, %v3365, 0.0
        %v3744 = vsel %vm3680, %v3364, 0.0
        %v3745 = vsel %vm3681, %v3363, 0.0
        %v3746 = vpack.c.bf16 %v3682, %v3682
        %v3747 = vpack.c.bf16 %v3683, %v3683
        %v3748 = vpack.c.bf16 %v3684, %v3684
        %v3749 = vpack.c.bf16 %v3685, %v3685
        %v3750 = vpack.c.bf16 %v3686, %v3686
        %v3751 = vpack.c.bf16 %v3687, %v3687
        %v3752 = vpack.c.bf16 %v3688, %v3688
        %v3753 = vpack.c.bf16 %v3689, %v3689
        %v3754 = vpack.c.bf16 %v3690, %v3690
        %v3755 = vpack.c.bf16 %v3691, %v3691
        %v3756 = vpack.c.bf16 %v3692, %v3692
        %v3757 = vpack.c.bf16 %v3693, %v3693
        %v3758 = vpack.c.bf16 %v3694, %v3694
        %v3759 = vpack.c.bf16 %v3695, %v3695
        %v3760 = vpack.c.bf16 %v3696, %v3696
        %v3761 = vpack.c.bf16 %v3697, %v3697
        %v3762 = vpack.c.bf16 %v3698, %v3698
        %v3763 = vpack.c.bf16 %v3699, %v3699
        %v3764 = vpack.c.bf16 %v3700, %v3700
        %v3765 = vpack.c.bf16 %v3701, %v3701
        %v3766 = vpack.c.bf16 %v3702, %v3702
        %v3767 = vpack.c.bf16 %v3703, %v3703
        %v3768 = vpack.c.bf16 %v3704, %v3704
        %v3769 = vpack.c.bf16 %v3705, %v3705
        %v3770 = vpack.c.bf16 %v3706, %v3706
        %v3771 = vpack.c.bf16 %v3707, %v3707
        %v3772 = vpack.c.bf16 %v3708, %v3708
        %v3773 = vpack.c.bf16 %v3709, %v3709
        %v3774 = vpack.c.bf16 %v3710, %v3710
        %v3775 = vpack.c.bf16 %v3711, %v3711
        %v3776 = vpack.c.bf16 %v3712, %v3712
        %v3777 = vpack.c.bf16 %v3713, %v3713
        %v3778 = vpack.c.bf16 %v3714, %v3714
        %v3779 = vpack.c.bf16 %v3715, %v3715
        %v3780 = vpack.c.bf16 %v3716, %v3716
        %v3781 = vpack.c.bf16 %v3717, %v3717
        %v3782 = vpack.c.bf16 %v3718, %v3718
        %v3783 = vpack.c.bf16 %v3719, %v3719
        %v3784 = vpack.c.bf16 %v3720, %v3720
        %v3785 = vpack.c.bf16 %v3721, %v3721
        %v3786 = vpack.c.bf16 %v3722, %v3722
        %v3787 = vpack.c.bf16 %v3723, %v3723
        %v3788 = vpack.c.bf16 %v3724, %v3724
        %v3789 = vpack.c.bf16 %v3725, %v3725
        %v3790 = vpack.c.bf16 %v3726, %v3726
        %v3791 = vpack.c.bf16 %v3727, %v3727
        %v3792 = vpack.c.bf16 %v3728, %v3728
        %v3793 = vpack.c.bf16 %v3729, %v3729
        %v3794 = vpack.c.bf16 %v3730, %v3730
        %v3795 = vpack.c.bf16 %v3731, %v3731
        %v3796 = vpack.c.bf16 %v3732, %v3732
        %v3797 = vpack.c.bf16 %v3733, %v3733
        %v3798 = vpack.c.bf16 %v3734, %v3734
        %v3799 = vpack.c.bf16 %v3735, %v3735
        %v3800 = vpack.c.bf16 %v3736, %v3736
        %v3801 = vpack.c.bf16 %v3737, %v3737
        %v3802 = vpack.c.bf16 %v3738, %v3738
        %v3803 = vpack.c.bf16 %v3739, %v3739
        %v3804 = vpack.c.bf16 %v3740, %v3740
        %v3805 = vpack.c.bf16 %v3741, %v3741
        %v3806 = vpack.c.bf16 %v3742, %v3742
        %v3807 = vpack.c.bf16 %v3743, %v3743
        %v3808 = vpack.c.bf16 %v3744, %v3744
        %v3809 = vpack.c.bf16 %v3745, %v3745
        %3810 = vst [vmem:[#allocation2 + $0x8] sm:$0xf] %v3746
        %3811 = vst [vmem:[#allocation2 + $0x2c] sm:$0xf] %v3747
        %3812 = vst [vmem:[#allocation2 + $0x50] sm:$0xf] %v3748
        %3813 = vst [vmem:[#allocation2 + $0x74] sm:$0xf] %v3749
        %3814 = vst [vmem:[#allocation2 + $0x98] sm:$0xf] %v3750
        %3815 = vst [vmem:[#allocation2 + $0xbc] sm:$0xf] %v3751
        %3816 = vst [vmem:[#allocation2 + $0xe0] sm:$0xf] %v3752
        %3817 = vst [vmem:[#allocation2 + $0x104] sm:$0xf] %v3753
        %3818 = vst [vmem:[#allocation2 + $0x128] sm:$0xf] %v3754
        %3819 = vst [vmem:[#allocation2 + $0x14c] sm:$0xf] %v3755
        %3820 = vst [vmem:[#allocation2 + $0x170] sm:$0xf] %v3756
        %3821 = vst [vmem:[#allocation2 + $0x194] sm:$0xf] %v3757
        %3822 = vst [vmem:[#allocation2 + $0x1b8] sm:$0xf] %v3758
        %3823 = vst [vmem:[#allocation2 + $0x1dc] sm:$0xf] %v3759
        %3824 = vst [vmem:[#allocation2 + $0x200] sm:$0xf] %v3760
        %3825 = vst [vmem:[#allocation2 + $0x224] sm:$0xf] %v3761
        %3826 = vst [vmem:[#allocation2 + $0x248] sm:$0xf] %v3762
        %3827 = vst [vmem:[#allocation2 + $0x26c] sm:$0xf] %v3763
        %3828 = vst [vmem:[#allocation2 + $0x290] sm:$0xf] %v3764
        %3829 = vst [vmem:[#allocation2 + $0x2b4] sm:$0xf] %v3765
        %3830 = vst [vmem:[#allocation2 + $0x2d8] sm:$0xf] %v3766
        %3831 = vst [vmem:[#allocation2 + $0x2fc] sm:$0xf] %v3767
        %3832 = vst [vmem:[#allocation2 + $0x320] sm:$0xf] %v3768
        %3833 = vst [vmem:[#allocation2 + $0x344] sm:$0xf] %v3769
        %3834 = vst [vmem:[#allocation2 + $0x368] sm:$0xf] %v3770
        %3835 = vst [vmem:[#allocation2 + $0x38c] sm:$0xf] %v3771
        %3836 = vst [vmem:[#allocation2 + $0x3b0] sm:$0xf] %v3772
        %3837 = vst [vmem:[#allocation2 + $0x3d4] sm:$0xf] %v3773
        %3838 = vst [vmem:[#allocation2 + $0x3f8] sm:$0xf] %v3774
        %3839 = vst [vmem:[#allocation2 + $0x41c] sm:$0xf] %v3775
        %3840 = vst [vmem:[#allocation2 + $0x440] sm:$0xf] %v3776
        %3841 = vst [vmem:[#allocation2 + $0x464] sm:$0xf] %v3777
        %3842 = vst [vmem:[#allocation2 + $0x488] sm:$0xf] %v3778
        %3843 = vst [vmem:[#allocation2 + $0x4ac] sm:$0xf] %v3779
        %3844 = vst [vmem:[#allocation2 + $0x4d0] sm:$0xf] %v3780
        %3845 = vst [vmem:[#allocation2 + $0x4f4] sm:$0xf] %v3781
        %3846 = vst [vmem:[#allocation2 + $0x518] sm:$0xf] %v3782
        %3847 = vst [vmem:[#allocation2 + $0x53c] sm:$0xf] %v3783
        %3848 = vst [vmem:[#allocation2 + $0x560] sm:$0xf] %v3784
        %3849 = vst [vmem:[#allocation2 + $0x584] sm:$0xf] %v3785
        %3850 = vst [vmem:[#allocation2 + $0x5a8] sm:$0xf] %v3786
        %3851 = vst [vmem:[#allocation2 + $0x5cc] sm:$0xf] %v3787
        %3852 = vst [vmem:[#allocation2 + $0x5f0] sm:$0xf] %v3788
        %3853 = vst [vmem:[#allocation2 + $0x614] sm:$0xf] %v3789
        %3854 = vst [vmem:[#allocation2 + $0x638] sm:$0xf] %v3790
        %3855 = vst [vmem:[#allocation2 + $0x65c] sm:$0xf] %v3791
        %3856 = vst [vmem:[#allocation2 + $0x680] sm:$0xf] %v3792
        %3857 = vst [vmem:[#allocation2 + $0x6a4] sm:$0xf] %v3793
        %3858 = vst [vmem:[#allocation2 + $0x6c8] sm:$0xf] %v3794
        %3859 = vst [vmem:[#allocation2 + $0x6ec] sm:$0xf] %v3795
        %3860 = vst [vmem:[#allocation2 + $0x710] sm:$0xf] %v3796
        %3861 = vst [vmem:[#allocation2 + $0x734] sm:$0xf] %v3797
        %3862 = vst [vmem:[#allocation2 + $0x758] sm:$0xf] %v3798
        %3863 = vst [vmem:[#allocation2 + $0x77c] sm:$0xf] %v3799
        %3864 = vst [vmem:[#allocation2 + $0x7a0] sm:$0xf] %v3800
        %3865 = vst [vmem:[#allocation2 + $0x7c4] sm:$0xf] %v3801
        %3866 = vst [vmem:[#allocation2 + $0x7e8] sm:$0xf] %v3802
        %3867 = vst [vmem:[#allocation2 + $0x80c] sm:$0xf] %v3803
        %3868 = vst [vmem:[#allocation2 + $0x830] sm:$0xf] %v3804
        %3869 = vst [vmem:[#allocation2 + $0x854] sm:$0xf] %v3805
        %3870 = vst [vmem:[#allocation2 + $0x878] sm:$0xf] %v3806
        %3871 = vst [vmem:[#allocation2 + $0x89c] sm:$0xf] %v3807
        %3872 = vst [vmem:[#allocation2 + $0x8c0] sm:$0xf] %v3808
        %3873 = vst [vmem:[#allocation2 + $0x8e4] sm:$0xf] %v3809
        %v3874 = vsel %vm2529, 1, 0
        %v3875 = vsel %vm2530, 1, 0
        %v3876 = vsel %vm2531, 1, 0
        %v3877 = vsel %vm2532, 1, 0
        %v3878 = vsel %vm2533, 1, 0
        %v3879 = vsel %vm2534, 1, 0
        %v3880 = vsel %vm2535, 1, 0
        %v3881 = vsel %vm2536, 1, 0
        %v3882 = vsel %vm2537, 1, 0
        %v3883 = vsel %vm2538, 1, 0
        %v3884 = vsel %vm2539, 1, 0
        %v3885 = vsel %vm2540, 1, 0
        %v3886 = vsel %vm2541, 1, 0
        %v3887 = vsel %vm2542, 1, 0
        %v3888 = vsel %vm2543, 1, 0
        %v3889 = vsel %vm2544, 1, 0
        %v3890 = vsel %vm2545, 1, 0
        %v3891 = vsel %vm2546, 1, 0
        %v3892 = vsel %vm2547, 1, 0
        %v3893 = vsel %vm2548, 1, 0
        %v3894 = vsel %vm2549, 1, 0
        %v3895 = vsel %vm2550, 1, 0
        %v3896 = vsel %vm2551, 1, 0
        %v3897 = vsel %vm2552, 1, 0
        %v3898 = vsel %vm2553, 1, 0
        %v3899 = vsel %vm2554, 1, 0
        %v3900 = vsel %vm2555, 1, 0
        %v3901 = vsel %vm2556, 1, 0
        %v3902 = vsel %vm2557, 1, 0
        %v3903 = vsel %vm2558, 1, 0
        %v3904 = vsel %vm2559, 1, 0
        %v3905 = vsel %vm2560, 1, 0
        %v3906 = vsel %vm2561, 1, 0
        %v3907 = vsel %vm2562, 1, 0
        %v3908 = vsel %vm2563, 1, 0
        %v3909 = vsel %vm2564, 1, 0
        %v3910 = vsel %vm2565, 1, 0
        %v3911 = vsel %vm2566, 1, 0
        %v3912 = vsel %vm2567, 1, 0
        %v3913 = vsel %vm2568, 1, 0
        %v3914 = vsel %vm2569, 1, 0
        %v3915 = vsel %vm2570, 1, 0
        %v3916 = vsel %vm2571, 1, 0
        %v3917 = vsel %vm2572, 1, 0
        %v3918 = vsel %vm2573, 1, 0
        %v3919 = vsel %vm2574, 1, 0
        %v3920 = vsel %vm2575, 1, 0
        %v3921 = vsel %vm2576, 1, 0
        %v3922 = vsel %vm2577, 1, 0
        %v3923 = vsel %vm2578, 1, 0
        %v3924 = vsel %vm2579, 1, 0
        %v3925 = vsel %vm2580, 1, 0
        %v3926 = vsel %vm2581, 1, 0
        %v3927 = vsel %vm2582, 1, 0
        %v3928 = vsel %vm2583, 1, 0
        %v3929 = vsel %vm2584, 1, 0
        %v3930 = vsel %vm2585, 1, 0
        %v3931 = vsel %vm2586, 1, 0
        %v3932 = vsel %vm2587, 1, 0
        %v3933 = vsel %vm2588, 1, 0
        %v3934 = vsel %vm2589, 1, 0
        %v3935 = vsel %vm2590, 1, 0
        %v3936 = vsel %vm2591, 1, 0
        %v3937 = vsel %vm2592, 1, 0
        %vm3938 = vcmp.eq.s32.totalorder %v3874, 1
        %vm3939 = vcmp.eq.s32.totalorder %v3875, 1
        %vm3940 = vcmp.eq.s32.totalorder %v3876, 1
        %vm3941 = vcmp.eq.s32.totalorder %v3877, 1
        %vm3942 = vcmp.eq.s32.totalorder %v3878, 1
        %vm3943 = vcmp.eq.s32.totalorder %v3879, 1
        %vm3944 = vcmp.eq.s32.totalorder %v3880, 1
        %vm3945 = vcmp.eq.s32.totalorder %v3881, 1
        %vm3946 = vcmp.eq.s32.totalorder %v3882, 1
        %vm3947 = vcmp.eq.s32.totalorder %v3883, 1
        %vm3948 = vcmp.eq.s32.totalorder %v3884, 1
        %vm3949 = vcmp.eq.s32.totalorder %v3885, 1
        %vm3950 = vcmp.eq.s32.totalorder %v3886, 1
        %vm3951 = vcmp.eq.s32.totalorder %v3887, 1
        %vm3952 = vcmp.eq.s32.totalorder %v3888, 1
        %vm3953 = vcmp.eq.s32.totalorder %v3889, 1
        %vm3954 = vcmp.eq.s32.totalorder %v3890, 1
        %vm3955 = vcmp.eq.s32.totalorder %v3891, 1
        %vm3956 = vcmp.eq.s32.totalorder %v3892, 1
        %vm3957 = vcmp.eq.s32.totalorder %v3893, 1
        %vm3958 = vcmp.eq.s32.totalorder %v3894, 1
        %vm3959 = vcmp.eq.s32.totalorder %v3895, 1
        %vm3960 = vcmp.eq.s32.totalorder %v3896, 1
        %vm3961 = vcmp.eq.s32.totalorder %v3897, 1
        %vm3962 = vcmp.eq.s32.totalorder %v3898, 1
        %vm3963 = vcmp.eq.s32.totalorder %v3899, 1
        %vm3964 = vcmp.eq.s32.totalorder %v3900, 1
        %vm3965 = vcmp.eq.s32.totalorder %v3901, 1
        %vm3966 = vcmp.eq.s32.totalorder %v3902, 1
        %vm3967 = vcmp.eq.s32.totalorder %v3903, 1
        %vm3968 = vcmp.eq.s32.totalorder %v3904, 1
        %vm3969 = vcmp.eq.s32.totalorder %v3905, 1
        %vm3970 = vcmp.eq.s32.totalorder %v3906, 1
        %vm3971 = vcmp.eq.s32.totalorder %v3907, 1
        %vm3972 = vcmp.eq.s32.totalorder %v3908, 1
        %vm3973 = vcmp.eq.s32.totalorder %v3909, 1
        %vm3974 = vcmp.eq.s32.totalorder %v3910, 1
        %vm3975 = vcmp.eq.s32.totalorder %v3911, 1
        %vm3976 = vcmp.eq.s32.totalorder %v3912, 1
        %vm3977 = vcmp.eq.s32.totalorder %v3913, 1
        %vm3978 = vcmp.eq.s32.totalorder %v3914, 1
        %vm3979 = vcmp.eq.s32.totalorder %v3915, 1
        %vm3980 = vcmp.eq.s32.totalorder %v3916, 1
        %vm3981 = vcmp.eq.s32.totalorder %v3917, 1
        %vm3982 = vcmp.eq.s32.totalorder %v3918, 1
        %vm3983 = vcmp.eq.s32.totalorder %v3919, 1
        %vm3984 = vcmp.eq.s32.totalorder %v3920, 1
        %vm3985 = vcmp.eq.s32.totalorder %v3921, 1
        %vm3986 = vcmp.eq.s32.totalorder %v3922, 1
        %vm3987 = vcmp.eq.s32.totalorder %v3923, 1
        %vm3988 = vcmp.eq.s32.totalorder %v3924, 1
        %vm3989 = vcmp.eq.s32.totalorder %v3925, 1
        %vm3990 = vcmp.eq.s32.totalorder %v3926, 1
        %vm3991 = vcmp.eq.s32.totalorder %v3927, 1
        %vm3992 = vcmp.eq.s32.totalorder %v3928, 1
        %vm3993 = vcmp.eq.s32.totalorder %v3929, 1
        %vm3994 = vcmp.eq.s32.totalorder %v3930, 1
        %vm3995 = vcmp.eq.s32.totalorder %v3931, 1
        %vm3996 = vcmp.eq.s32.totalorder %v3932, 1
        %vm3997 = vcmp.eq.s32.totalorder %v3933, 1
        %vm3998 = vcmp.eq.s32.totalorder %v3934, 1
        %vm3999 = vcmp.eq.s32.totalorder %v3935, 1
        %vm4000 = vcmp.eq.s32.totalorder %v3936, 1
        %vm4001 = vcmp.eq.s32.totalorder %v3937, 1
        %v4002 = vsel %vm3938, %v2464, 0.0
        %v4003 = vsel %vm3939, %v2463, 0.0
        %v4004 = vsel %vm3940, %v2462, 0.0
        %v4005 = vsel %vm3941, %v2461, 0.0
        %v4006 = vsel %vm3942, %v2460, 0.0
        %v4007 = vsel %vm3943, %v2459, 0.0
        %v4008 = vsel %vm3944, %v2458, 0.0
        %v4009 = vsel %vm3945, %v2457, 0.0
        %v4010 = vsel %vm3946, %v2456, 0.0
        %v4011 = vsel %vm3947, %v2455, 0.0
        %v4012 = vsel %vm3948, %v2454, 0.0
        %v4013 = vsel %vm3949, %v2453, 0.0
        %v4014 = vsel %vm3950, %v2452, 0.0
        %v4015 = vsel %vm3951, %v2451, 0.0
        %v4016 = vsel %vm3952, %v2450, 0.0
        %v4017 = vsel %vm3953, %v2449, 0.0
        %v4018 = vsel %vm3954, %v2448, 0.0
        %v4019 = vsel %vm3955, %v2447, 0.0
        %v4020 = vsel %vm3956, %v2446, 0.0
        %v4021 = vsel %vm3957, %v2445, 0.0
        %v4022 = vsel %vm3958, %v2444, 0.0
        %v4023 = vsel %vm3959, %v2443, 0.0
        %v4024 = vsel %vm3960, %v2442, 0.0
        %v4025 = vsel %vm3961, %v2441, 0.0
        %v4026 = vsel %vm3962, %v2440, 0.0
        %v4027 = vsel %vm3963, %v2439, 0.0
        %v4028 = vsel %vm3964, %v2438, 0.0
        %v4029 = vsel %vm3965, %v2437, 0.0
        %v4030 = vsel %vm3966, %v2436, 0.0
        %v4031 = vsel %vm3967, %v2435, 0.0
        %v4032 = vsel %vm3968, %v2434, 0.0
        %v4033 = vsel %vm3969, %v2433, 0.0
        %v4034 = vsel %vm3970, %v2432, 0.0
        %v4035 = vsel %vm3971, %v2431, 0.0
        %v4036 = vsel %vm3972, %v2430, 0.0
        %v4037 = vsel %vm3973, %v2429, 0.0
        %v4038 = vsel %vm3974, %v2428, 0.0
        %v4039 = vsel %vm3975, %v2427, 0.0
        %v4040 = vsel %vm3976, %v2426, 0.0
        %v4041 = vsel %vm3977, %v2425, 0.0
        %v4042 = vsel %vm3978, %v2424, 0.0
        %v4043 = vsel %vm3979, %v2423, 0.0
        %v4044 = vsel %vm3980, %v2422, 0.0
        %v4045 = vsel %vm3981, %v2421, 0.0
        %v4046 = vsel %vm3982, %v2420, 0.0
        %v4047 = vsel %vm3983, %v2419, 0.0
        %v4048 = vsel %vm3984, %v2418, 0.0
        %v4049 = vsel %vm3985, %v2417, 0.0
        %v4050 = vsel %vm3986, %v2416, 0.0
        %v4051 = vsel %vm3987, %v2415, 0.0
        %v4052 = vsel %vm3988, %v2414, 0.0
        %v4053 = vsel %vm3989, %v2413, 0.0
        %v4054 = vsel %vm3990, %v2412, 0.0
        %v4055 = vsel %vm3991, %v2411, 0.0
        %v4056 = vsel %vm3992, %v2410, 0.0
        %v4057 = vsel %vm3993, %v2409, 0.0
        %v4058 = vsel %vm3994, %v2408, 0.0
        %v4059 = vsel %vm3995, %v2407, 0.0
        %v4060 = vsel %vm3996, %v2406, 0.0
        %v4061 = vsel %vm3997, %v2405, 0.0
        %v4062 = vsel %vm3998, %v2404, 0.0
        %v4063 = vsel %vm3999, %v2403, 0.0
        %v4064 = vsel %vm4000, %v2402, 0.0
        %v4065 = vsel %vm4001, %v2401, 0.0
        %v4066 = vpack.c.bf16 %v4002, %v4002
        %v4067 = vpack.c.bf16 %v4003, %v4003
        %v4068 = vpack.c.bf16 %v4004, %v4004
        %v4069 = vpack.c.bf16 %v4005, %v4005
        %v4070 = vpack.c.bf16 %v4006, %v4006
        %v4071 = vpack.c.bf16 %v4007, %v4007
        %v4072 = vpack.c.bf16 %v4008, %v4008
        %v4073 = vpack.c.bf16 %v4009, %v4009
        %v4074 = vpack.c.bf16 %v4010, %v4010
        %v4075 = vpack.c.bf16 %v4011, %v4011
        %v4076 = vpack.c.bf16 %v4012, %v4012
        %v4077 = vpack.c.bf16 %v4013, %v4013
        %v4078 = vpack.c.bf16 %v4014, %v4014
        %v4079 = vpack.c.bf16 %v4015, %v4015
        %v4080 = vpack.c.bf16 %v4016, %v4016
        %v4081 = vpack.c.bf16 %v4017, %v4017
        %v4082 = vpack.c.bf16 %v4018, %v4018
        %v4083 = vpack.c.bf16 %v4019, %v4019
        %v4084 = vpack.c.bf16 %v4020, %v4020
        %v4085 = vpack.c.bf16 %v4021, %v4021
        %v4086 = vpack.c.bf16 %v4022, %v4022
        %v4087 = vpack.c.bf16 %v4023, %v4023
        %v4088 = vpack.c.bf16 %v4024, %v4024
        %v4089 = vpack.c.bf16 %v4025, %v4025
        %v4090 = vpack.c.bf16 %v4026, %v4026
        %v4091 = vpack.c.bf16 %v4027, %v4027
        %v4092 = vpack.c.bf16 %v4028, %v4028
        %v4093 = vpack.c.bf16 %v4029, %v4029
        %v4094 = vpack.c.bf16 %v4030, %v4030
        %v4095 = vpack.c.bf16 %v4031, %v4031
        %v4096 = vpack.c.bf16 %v4032, %v4032
        %v4097 = vpack.c.bf16 %v4033, %v4033
        %v4098 = vpack.c.bf16 %v4034, %v4034
        %v4099 = vpack.c.bf16 %v4035, %v4035
        %v4100 = vpack.c.bf16 %v4036, %v4036
        %v4101 = vpack.c.bf16 %v4037, %v4037
        %v4102 = vpack.c.bf16 %v4038, %v4038
        %v4103 = vpack.c.bf16 %v4039, %v4039
        %v4104 = vpack.c.bf16 %v4040, %v4040
        %v4105 = vpack.c.bf16 %v4041, %v4041
        %v4106 = vpack.c.bf16 %v4042, %v4042
        %v4107 = vpack.c.bf16 %v4043, %v4043
        %v4108 = vpack.c.bf16 %v4044, %v4044
        %v4109 = vpack.c.bf16 %v4045, %v4045
        %v4110 = vpack.c.bf16 %v4046, %v4046
        %v4111 = vpack.c.bf16 %v4047, %v4047
        %v4112 = vpack.c.bf16 %v4048, %v4048
        %v4113 = vpack.c.bf16 %v4049, %v4049
        %v4114 = vpack.c.bf16 %v4050, %v4050
        %v4115 = vpack.c.bf16 %v4051, %v4051
        %v4116 = vpack.c.bf16 %v4052, %v4052
        %v4117 = vpack.c.bf16 %v4053, %v4053
        %v4118 = vpack.c.bf16 %v4054, %v4054
        %v4119 = vpack.c.bf16 %v4055, %v4055
        %v4120 = vpack.c.bf16 %v4056, %v4056
        %v4121 = vpack.c.bf16 %v4057, %v4057
        %v4122 = vpack.c.bf16 %v4058, %v4058
        %v4123 = vpack.c.bf16 %v4059, %v4059
        %v4124 = vpack.c.bf16 %v4060, %v4060
        %v4125 = vpack.c.bf16 %v4061, %v4061
        %v4126 = vpack.c.bf16 %v4062, %v4062
        %v4127 = vpack.c.bf16 %v4063, %v4063
        %v4128 = vpack.c.bf16 %v4064, %v4064
        %v4129 = vpack.c.bf16 %v4065, %v4065
        %4130 = vst [vmem:[#allocation2 + $0xc] sm:$0xf] %v4066
        %4131 = vst [vmem:[#allocation2 + $0x30] sm:$0xf] %v4067
        %4132 = vst [vmem:[#allocation2 + $0x54] sm:$0xf] %v4068
        %4133 = vst [vmem:[#allocation2 + $0x78] sm:$0xf] %v4069
        %4134 = vst [vmem:[#allocation2 + $0x9c] sm:$0xf] %v4070
        %4135 = vst [vmem:[#allocation2 + $0xc0] sm:$0xf] %v4071
        %4136 = vst [vmem:[#allocation2 + $0xe4] sm:$0xf] %v4072
        %4137 = vst [vmem:[#allocation2 + $0x108] sm:$0xf] %v4073
        %4138 = vst [vmem:[#allocation2 + $0x12c] sm:$0xf] %v4074
        %4139 = vst [vmem:[#allocation2 + $0x150] sm:$0xf] %v4075
        %4140 = vst [vmem:[#allocation2 + $0x174] sm:$0xf] %v4076
        %4141 = vst [vmem:[#allocation2 + $0x198] sm:$0xf] %v4077
        %4142 = vst [vmem:[#allocation2 + $0x1bc] sm:$0xf] %v4078
        %4143 = vst [vmem:[#allocation2 + $0x1e0] sm:$0xf] %v4079
        %4144 = vst [vmem:[#allocation2 + $0x204] sm:$0xf] %v4080
        %4145 = vst [vmem:[#allocation2 + $0x228] sm:$0xf] %v4081
        %4146 = vst [vmem:[#allocation2 + $0x24c] sm:$0xf] %v4082
        %4147 = vst [vmem:[#allocation2 + $0x270] sm:$0xf] %v4083
        %4148 = vst [vmem:[#allocation2 + $0x294] sm:$0xf] %v4084
        %4149 = vst [vmem:[#allocation2 + $0x2b8] sm:$0xf] %v4085
        %4150 = vst [vmem:[#allocation2 + $0x2dc] sm:$0xf] %v4086
        %4151 = vst [vmem:[#allocation2 + $0x300] sm:$0xf] %v4087
        %4152 = vst [vmem:[#allocation2 + $0x324] sm:$0xf] %v4088
        %4153 = vst [vmem:[#allocation2 + $0x348] sm:$0xf] %v4089
        %4154 = vst [vmem:[#allocation2 + $0x36c] sm:$0xf] %v4090
        %4155 = vst [vmem:[#allocation2 + $0x390] sm:$0xf] %v4091
        %4156 = vst [vmem:[#allocation2 + $0x3b4] sm:$0xf] %v4092
        %4157 = vst [vmem:[#allocation2 + $0x3d8] sm:$0xf] %v4093
        %4158 = vst [vmem:[#allocation2 + $0x3fc] sm:$0xf] %v4094
        %4159 = vst [vmem:[#allocation2 + $0x420] sm:$0xf] %v4095
        %4160 = vst [vmem:[#allocation2 + $0x444] sm:$0xf] %v4096
        %4161 = vst [vmem:[#allocation2 + $0x468] sm:$0xf] %v4097
        %4162 = vst [vmem:[#allocation2 + $0x48c] sm:$0xf] %v4098
        %4163 = vst [vmem:[#allocation2 + $0x4b0] sm:$0xf] %v4099
        %4164 = vst [vmem:[#allocation2 + $0x4d4] sm:$0xf] %v4100
        %4165 = vst [vmem:[#allocation2 + $0x4f8] sm:$0xf] %v4101
        %4166 = vst [vmem:[#allocation2 + $0x51c] sm:$0xf] %v4102
        %4167 = vst [vmem:[#allocation2 + $0x540] sm:$0xf] %v4103
        %4168 = vst [vmem:[#allocation2 + $0x564] sm:$0xf] %v4104
        %4169 = vst [vmem:[#allocation2 + $0x588] sm:$0xf] %v4105
        %4170 = vst [vmem:[#allocation2 + $0x5ac] sm:$0xf] %v4106
        %4171 = vst [vmem:[#allocation2 + $0x5d0] sm:$0xf] %v4107
        %4172 = vst [vmem:[#allocation2 + $0x5f4] sm:$0xf] %v4108
        %4173 = vst [vmem:[#allocation2 + $0x618] sm:$0xf] %v4109
        %4174 = vst [vmem:[#allocation2 + $0x63c] sm:$0xf] %v4110
        %4175 = vst [vmem:[#allocation2 + $0x660] sm:$0xf] %v4111
        %4176 = vst [vmem:[#allocation2 + $0x684] sm:$0xf] %v4112
        %4177 = vst [vmem:[#allocation2 + $0x6a8] sm:$0xf] %v4113
        %4178 = vst [vmem:[#allocation2 + $0x6cc] sm:$0xf] %v4114
        %4179 = vst [vmem:[#allocation2 + $0x6f0] sm:$0xf] %v4115
        %4180 = vst [vmem:[#allocation2 + $0x714] sm:$0xf] %v4116
        %4181 = vst [vmem:[#allocation2 + $0x738] sm:$0xf] %v4117
        %4182 = vst [vmem:[#allocation2 + $0x75c] sm:$0xf] %v4118
        %4183 = vst [vmem:[#allocation2 + $0x780] sm:$0xf] %v4119
        %4184 = vst [vmem:[#allocation2 + $0x7a4] sm:$0xf] %v4120
        %4185 = vst [vmem:[#allocation2 + $0x7c8] sm:$0xf] %v4121
        %4186 = vst [vmem:[#allocation2 + $0x7ec] sm:$0xf] %v4122
        %4187 = vst [vmem:[#allocation2 + $0x810] sm:$0xf] %v4123
        %4188 = vst [vmem:[#allocation2 + $0x834] sm:$0xf] %v4124
        %4189 = vst [vmem:[#allocation2 + $0x858] sm:$0xf] %v4125
        %4190 = vst [vmem:[#allocation2 + $0x87c] sm:$0xf] %v4126
        %4191 = vst [vmem:[#allocation2 + $0x8a0] sm:$0xf] %v4127
        %4192 = vst [vmem:[#allocation2 + $0x8c4] sm:$0xf] %v4128
        %4193 = vst [vmem:[#allocation2 + $0x8e8] sm:$0xf] %v4129
        %v4194 = vpack.c.bf16 %v1439, %v1439
        %v4195 = vpack.c.bf16 %v1440, %v1440
        %v4196 = vpack.c.bf16 %v1441, %v1441
        %v4197 = vpack.c.bf16 %v1442, %v1442
        %v4198 = vpack.c.bf16 %v1443, %v1443
        %v4199 = vpack.c.bf16 %v1444, %v1444
        %v4200 = vpack.c.bf16 %v1445, %v1445
        %v4201 = vpack.c.bf16 %v1446, %v1446
        %v4202 = vpack.c.bf16 %v1447, %v1447
        %v4203 = vpack.c.bf16 %v1448, %v1448
        %v4204 = vpack.c.bf16 %v1449, %v1449
        %v4205 = vpack.c.bf16 %v1450, %v1450
        %v4206 = vpack.c.bf16 %v1451, %v1451
        %v4207 = vpack.c.bf16 %v1452, %v1452
        %v4208 = vpack.c.bf16 %v1453, %v1453
        %v4209 = vpack.c.bf16 %v1454, %v1454
        %v4210 = vpack.c.bf16 %v1455, %v1455
        %v4211 = vpack.c.bf16 %v1456, %v1456
        %v4212 = vpack.c.bf16 %v1457, %v1457
        %v4213 = vpack.c.bf16 %v1458, %v1458
        %v4214 = vpack.c.bf16 %v1459, %v1459
        %v4215 = vpack.c.bf16 %v1460, %v1460
        %v4216 = vpack.c.bf16 %v1461, %v1461
        %v4217 = vpack.c.bf16 %v1462, %v1462
        %v4218 = vpack.c.bf16 %v1463, %v1463
        %v4219 = vpack.c.bf16 %v1464, %v1464
        %v4220 = vpack.c.bf16 %v1465, %v1465
        %v4221 = vpack.c.bf16 %v1466, %v1466
        %v4222 = vpack.c.bf16 %v1467, %v1467
        %v4223 = vpack.c.bf16 %v1468, %v1468
        %v4224 = vpack.c.bf16 %v1469, %v1469
        %v4225 = vpack.c.bf16 %v1470, %v1470
        %v4226 = vpack.c.bf16 %v1471, %v1471
        %v4227 = vpack.c.bf16 %v1472, %v1472
        %v4228 = vpack.c.bf16 %v1473, %v1473
        %v4229 = vpack.c.bf16 %v1474, %v1474
        %v4230 = vpack.c.bf16 %v1475, %v1475
        %v4231 = vpack.c.bf16 %v1476, %v1476
        %v4232 = vpack.c.bf16 %v1477, %v1477
        %v4233 = vpack.c.bf16 %v1478, %v1478
        %v4234 = vpack.c.bf16 %v1479, %v1479
        %v4235 = vpack.c.bf16 %v1480, %v1480
        %v4236 = vpack.c.bf16 %v1481, %v1481
        %v4237 = vpack.c.bf16 %v1482, %v1482
        %v4238 = vpack.c.bf16 %v1483, %v1483
        %v4239 = vpack.c.bf16 %v1484, %v1484
        %v4240 = vpack.c.bf16 %v1485, %v1485
        %v4241 = vpack.c.bf16 %v1486, %v1486
        %v4242 = vpack.c.bf16 %v1487, %v1487
        %v4243 = vpack.c.bf16 %v1488, %v1488
        %v4244 = vpack.c.bf16 %v1489, %v1489
        %v4245 = vpack.c.bf16 %v1490, %v1490
        %v4246 = vpack.c.bf16 %v1491, %v1491
        %v4247 = vpack.c.bf16 %v1492, %v1492
        %v4248 = vpack.c.bf16 %v1493, %v1493
        %v4249 = vpack.c.bf16 %v1494, %v1494
        %v4250 = vpack.c.bf16 %v1495, %v1495
        %v4251 = vpack.c.bf16 %v1496, %v1496
        %v4252 = vpack.c.bf16 %v1497, %v1497
        %v4253 = vpack.c.bf16 %v1498, %v1498
        %v4254 = vpack.c.bf16 %v1499, %v1499
        %v4255 = vpack.c.bf16 %v1500, %v1500
        %v4256 = vpack.c.bf16 %v1501, %v1501
        %v4257 = vpack.c.bf16 %v1502, %v1502
        %4258 = vst [vmem:[#allocation2 + $0x10] sm:$0xf] %v4194
        %4259 = vst [vmem:[#allocation2 + $0x34] sm:$0xf] %v4195
        %4260 = vst [vmem:[#allocation2 + $0x58] sm:$0xf] %v4196
        %4261 = vst [vmem:[#allocation2 + $0x7c] sm:$0xf] %v4197
        %4262 = vst [vmem:[#allocation2 + $0xa0] sm:$0xf] %v4198
        %4263 = vst [vmem:[#allocation2 + $0xc4] sm:$0xf] %v4199
        %4264 = vst [vmem:[#allocation2 + $0xe8] sm:$0xf] %v4200
        %4265 = vst [vmem:[#allocation2 + $0x10c] sm:$0xf] %v4201
        %4266 = vst [vmem:[#allocation2 + $0x130] sm:$0xf] %v4202
        %4267 = vst [vmem:[#allocation2 + $0x154] sm:$0xf] %v4203
        %4268 = vst [vmem:[#allocation2 + $0x178] sm:$0xf] %v4204
        %4269 = vst [vmem:[#allocation2 + $0x19c] sm:$0xf] %v4205
        %4270 = vst [vmem:[#allocation2 + $0x1c0] sm:$0xf] %v4206
        %4271 = vst [vmem:[#allocation2 + $0x1e4] sm:$0xf] %v4207
        %4272 = vst [vmem:[#allocation2 + $0x208] sm:$0xf] %v4208
        %4273 = vst [vmem:[#allocation2 + $0x22c] sm:$0xf] %v4209
        %4274 = vst [vmem:[#allocation2 + $0x250] sm:$0xf] %v4210
        %4275 = vst [vmem:[#allocation2 + $0x274] sm:$0xf] %v4211
        %4276 = vst [vmem:[#allocation2 + $0x298] sm:$0xf] %v4212
        %4277 = vst [vmem:[#allocation2 + $0x2bc] sm:$0xf] %v4213
        %4278 = vst [vmem:[#allocation2 + $0x2e0] sm:$0xf] %v4214
        %4279 = vst [vmem:[#allocation2 + $0x304] sm:$0xf] %v4215
        %4280 = vst [vmem:[#allocation2 + $0x328] sm:$0xf] %v4216
        %4281 = vst [vmem:[#allocation2 + $0x34c] sm:$0xf] %v4217
        %4282 = vst [vmem:[#allocation2 + $0x370] sm:$0xf] %v4218
        %4283 = vst [vmem:[#allocation2 + $0x394] sm:$0xf] %v4219
        %4284 = vst [vmem:[#allocation2 + $0x3b8] sm:$0xf] %v4220
        %4285 = vst [vmem:[#allocation2 + $0x3dc] sm:$0xf] %v4221
        %4286 = vst [vmem:[#allocation2 + $0x400] sm:$0xf] %v4222
        %4287 = vst [vmem:[#allocation2 + $0x424] sm:$0xf] %v4223
        %4288 = vst [vmem:[#allocation2 + $0x448] sm:$0xf] %v4224
        %4289 = vst [vmem:[#allocation2 + $0x46c] sm:$0xf] %v4225
        %4290 = vst [vmem:[#allocation2 + $0x490] sm:$0xf] %v4226
        %4291 = vst [vmem:[#allocation2 + $0x4b4] sm:$0xf] %v4227
        %4292 = vst [vmem:[#allocation2 + $0x4d8] sm:$0xf] %v4228
        %4293 = vst [vmem:[#allocation2 + $0x4fc] sm:$0xf] %v4229
        %4294 = vst [vmem:[#allocation2 + $0x520] sm:$0xf] %v4230
        %4295 = vst [vmem:[#allocation2 + $0x544] sm:$0xf] %v4231
        %4296 = vst [vmem:[#allocation2 + $0x568] sm:$0xf] %v4232
        %4297 = vst [vmem:[#allocation2 + $0x58c] sm:$0xf] %v4233
        %4298 = vst [vmem:[#allocation2 + $0x5b0] sm:$0xf] %v4234
        %4299 = vst [vmem:[#allocation2 + $0x5d4] sm:$0xf] %v4235
        %4300 = vst [vmem:[#allocation2 + $0x5f8] sm:$0xf] %v4236
        %4301 = vst [vmem:[#allocation2 + $0x61c] sm:$0xf] %v4237
        %4302 = vst [vmem:[#allocation2 + $0x640] sm:$0xf] %v4238
        %4303 = vst [vmem:[#allocation2 + $0x664] sm:$0xf] %v4239
        %4304 = vst [vmem:[#allocation2 + $0x688] sm:$0xf] %v4240
        %4305 = vst [vmem:[#allocation2 + $0x6ac] sm:$0xf] %v4241
        %4306 = vst [vmem:[#allocation2 + $0x6d0] sm:$0xf] %v4242
        %4307 = vst [vmem:[#allocation2 + $0x6f4] sm:$0xf] %v4243
        %4308 = vst [vmem:[#allocation2 + $0x718] sm:$0xf] %v4244
        %4309 = vst [vmem:[#allocation2 + $0x73c] sm:$0xf] %v4245
        %4310 = vst [vmem:[#allocation2 + $0x760] sm:$0xf] %v4246
        %4311 = vst [vmem:[#allocation2 + $0x784] sm:$0xf] %v4247
        %4312 = vst [vmem:[#allocation2 + $0x7a8] sm:$0xf] %v4248
        %4313 = vst [vmem:[#allocation2 + $0x7cc] sm:$0xf] %v4249
        %4314 = vst [vmem:[#allocation2 + $0x7f0] sm:$0xf] %v4250
        %4315 = vst [vmem:[#allocation2 + $0x814] sm:$0xf] %v4251
        %4316 = vst [vmem:[#allocation2 + $0x838] sm:$0xf] %v4252
        %4317 = vst [vmem:[#allocation2 + $0x85c] sm:$0xf] %v4253
        %4318 = vst [vmem:[#allocation2 + $0x880] sm:$0xf] %v4254
        %4319 = vst [vmem:[#allocation2 + $0x8a4] sm:$0xf] %v4255
        %4320 = vst [vmem:[#allocation2 + $0x8c8] sm:$0xf] %v4256
        %4321 = vst [vmem:[#allocation2 + $0x8ec] sm:$0xf] %v4257
        %v4322 = vsel %vm3426, 1, 0
        %v4323 = vsel %vm3427, 1, 0
        %v4324 = vsel %vm3428, 1, 0
        %v4325 = vsel %vm3429, 1, 0
        %v4326 = vsel %vm3430, 1, 0
        %v4327 = vsel %vm3431, 1, 0
        %v4328 = vsel %vm3432, 1, 0
        %v4329 = vsel %vm3433, 1, 0
        %v4330 = vsel %vm3434, 1, 0
        %v4331 = vsel %vm3435, 1, 0
        %v4332 = vsel %vm3436, 1, 0
        %v4333 = vsel %vm3437, 1, 0
        %v4334 = vsel %vm3438, 1, 0
        %v4335 = vsel %vm3439, 1, 0
        %v4336 = vsel %vm3440, 1, 0
        %v4337 = vsel %vm3441, 1, 0
        %v4338 = vsel %vm3442, 1, 0
        %v4339 = vsel %vm3443, 1, 0
        %v4340 = vsel %vm3444, 1, 0
        %v4341 = vsel %vm3445, 1, 0
        %v4342 = vsel %vm3446, 1, 0
        %v4343 = vsel %vm3447, 1, 0
        %v4344 = vsel %vm3448, 1, 0
        %v4345 = vsel %vm3449, 1, 0
        %v4346 = vsel %vm3450, 1, 0
        %v4347 = vsel %vm3451, 1, 0
        %v4348 = vsel %vm3452, 1, 0
        %v4349 = vsel %vm3453, 1, 0
        %v4350 = vsel %vm3454, 1, 0
        %v4351 = vsel %vm3455, 1, 0
        %v4352 = vsel %vm3456, 1, 0
        %v4353 = vsel %vm3457, 1, 0
        %v4354 = vsel %vm3458, 1, 0
        %v4355 = vsel %vm3459, 1, 0
        %v4356 = vsel %vm3460, 1, 0
        %v4357 = vsel %vm3461, 1, 0
        %v4358 = vsel %vm3462, 1, 0
        %v4359 = vsel %vm3463, 1, 0
        %v4360 = vsel %vm3464, 1, 0
        %v4361 = vsel %vm3465, 1, 0
        %v4362 = vsel %vm3466, 1, 0
        %v4363 = vsel %vm3467, 1, 0
        %v4364 = vsel %vm3468, 1, 0
        %v4365 = vsel %vm3469, 1, 0
        %v4366 = vsel %vm3470, 1, 0
        %v4367 = vsel %vm3471, 1, 0
        %v4368 = vsel %vm3472, 1, 0
        %v4369 = vsel %vm3473, 1, 0
        %v4370 = vsel %vm3474, 1, 0
        %v4371 = vsel %vm3475, 1, 0
        %v4372 = vsel %vm3476, 1, 0
        %v4373 = vsel %vm3477, 1, 0
        %v4374 = vsel %vm3478, 1, 0
        %v4375 = vsel %vm3479, 1, 0
        %v4376 = vsel %vm3480, 1, 0
        %v4377 = vsel %vm3481, 1, 0
        %v4378 = vsel %vm3482, 1, 0
        %v4379 = vsel %vm3483, 1, 0
        %v4380 = vsel %vm3484, 1, 0
        %v4381 = vsel %vm3485, 1, 0
        %v4382 = vsel %vm3486, 1, 0
        %v4383 = vsel %vm3487, 1, 0
        %v4384 = vsel %vm3488, 1, 0
        %v4385 = vsel %vm3489, 1, 0
        %vm4386 = vcmp.eq.s32.totalorder %v4322, 1
        %vm4387 = vcmp.eq.s32.totalorder %v4323, 1
        %vm4388 = vcmp.eq.s32.totalorder %v4324, 1
        %vm4389 = vcmp.eq.s32.totalorder %v4325, 1
        %vm4390 = vcmp.eq.s32.totalorder %v4326, 1
        %vm4391 = vcmp.eq.s32.totalorder %v4327, 1
        %vm4392 = vcmp.eq.s32.totalorder %v4328, 1
        %vm4393 = vcmp.eq.s32.totalorder %v4329, 1
        %vm4394 = vcmp.eq.s32.totalorder %v4330, 1
        %vm4395 = vcmp.eq.s32.totalorder %v4331, 1
        %vm4396 = vcmp.eq.s32.totalorder %v4332, 1
        %vm4397 = vcmp.eq.s32.totalorder %v4333, 1
        %vm4398 = vcmp.eq.s32.totalorder %v4334, 1
        %vm4399 = vcmp.eq.s32.totalorder %v4335, 1
        %vm4400 = vcmp.eq.s32.totalorder %v4336, 1
        %vm4401 = vcmp.eq.s32.totalorder %v4337, 1
        %vm4402 = vcmp.eq.s32.totalorder %v4338, 1
        %vm4403 = vcmp.eq.s32.totalorder %v4339, 1
        %vm4404 = vcmp.eq.s32.totalorder %v4340, 1
        %vm4405 = vcmp.eq.s32.totalorder %v4341, 1
        %vm4406 = vcmp.eq.s32.totalorder %v4342, 1
        %vm4407 = vcmp.eq.s32.totalorder %v4343, 1
        %vm4408 = vcmp.eq.s32.totalorder %v4344, 1
        %vm4409 = vcmp.eq.s32.totalorder %v4345, 1
        %vm4410 = vcmp.eq.s32.totalorder %v4346, 1
        %vm4411 = vcmp.eq.s32.totalorder %v4347, 1
        %vm4412 = vcmp.eq.s32.totalorder %v4348, 1
        %vm4413 = vcmp.eq.s32.totalorder %v4349, 1
        %vm4414 = vcmp.eq.s32.totalorder %v4350, 1
        %vm4415 = vcmp.eq.s32.totalorder %v4351, 1
        %vm4416 = vcmp.eq.s32.totalorder %v4352, 1
        %vm4417 = vcmp.eq.s32.totalorder %v4353, 1
        %vm4418 = vcmp.eq.s32.totalorder %v4354, 1
        %vm4419 = vcmp.eq.s32.totalorder %v4355, 1
        %vm4420 = vcmp.eq.s32.totalorder %v4356, 1
        %vm4421 = vcmp.eq.s32.totalorder %v4357, 1
        %vm4422 = vcmp.eq.s32.totalorder %v4358, 1
        %vm4423 = vcmp.eq.s32.totalorder %v4359, 1
        %vm4424 = vcmp.eq.s32.totalorder %v4360, 1
        %vm4425 = vcmp.eq.s32.totalorder %v4361, 1
        %vm4426 = vcmp.eq.s32.totalorder %v4362, 1
        %vm4427 = vcmp.eq.s32.totalorder %v4363, 1
        %vm4428 = vcmp.eq.s32.totalorder %v4364, 1
        %vm4429 = vcmp.eq.s32.totalorder %v4365, 1
        %vm4430 = vcmp.eq.s32.totalorder %v4366, 1
        %vm4431 = vcmp.eq.s32.totalorder %v4367, 1
        %vm4432 = vcmp.eq.s32.totalorder %v4368, 1
        %vm4433 = vcmp.eq.s32.totalorder %v4369, 1
        %vm4434 = vcmp.eq.s32.totalorder %v4370, 1
        %vm4435 = vcmp.eq.s32.totalorder %v4371, 1
        %vm4436 = vcmp.eq.s32.totalorder %v4372, 1
        %vm4437 = vcmp.eq.s32.totalorder %v4373, 1
        %vm4438 = vcmp.eq.s32.totalorder %v4374, 1
        %vm4439 = vcmp.eq.s32.totalorder %v4375, 1
        %vm4440 = vcmp.eq.s32.totalorder %v4376, 1
        %vm4441 = vcmp.eq.s32.totalorder %v4377, 1
        %vm4442 = vcmp.eq.s32.totalorder %v4378, 1
        %vm4443 = vcmp.eq.s32.totalorder %v4379, 1
        %vm4444 = vcmp.eq.s32.totalorder %v4380, 1
        %vm4445 = vcmp.eq.s32.totalorder %v4381, 1
        %vm4446 = vcmp.eq.s32.totalorder %v4382, 1
        %vm4447 = vcmp.eq.s32.totalorder %v4383, 1
        %vm4448 = vcmp.eq.s32.totalorder %v4384, 1
        %vm4449 = vcmp.eq.s32.totalorder %v4385, 1
        %v4450 = vsel %vm4386, %v3424, 0.0
        %v4451 = vsel %vm4387, %v3423, 0.0
        %v4452 = vsel %vm4388, %v3422, 0.0
        %v4453 = vsel %vm4389, %v3421, 0.0
        %v4454 = vsel %vm4390, %v3420, 0.0
        %v4455 = vsel %vm4391, %v3419, 0.0
        %v4456 = vsel %vm4392, %v3418, 0.0
        %v4457 = vsel %vm4393, %v3417, 0.0
        %v4458 = vsel %vm4394, %v3416, 0.0
        %v4459 = vsel %vm4395, %v3415, 0.0
        %v4460 = vsel %vm4396, %v3414, 0.0
        %v4461 = vsel %vm4397, %v3413, 0.0
        %v4462 = vsel %vm4398, %v3412, 0.0
        %v4463 = vsel %vm4399, %v3411, 0.0
        %v4464 = vsel %vm4400, %v3410, 0.0
        %v4465 = vsel %vm4401, %v3409, 0.0
        %v4466 = vsel %vm4402, %v3408, 0.0
        %v4467 = vsel %vm4403, %v3407, 0.0
        %v4468 = vsel %vm4404, %v3406, 0.0
        %v4469 = vsel %vm4405, %v3405, 0.0
        %v4470 = vsel %vm4406, %v3404, 0.0
        %v4471 = vsel %vm4407, %v3403, 0.0
        %v4472 = vsel %vm4408, %v3402, 0.0
        %v4473 = vsel %vm4409, %v3401, 0.0
        %v4474 = vsel %vm4410, %v3400, 0.0
        %v4475 = vsel %vm4411, %v3399, 0.0
        %v4476 = vsel %vm4412, %v3398, 0.0
        %v4477 = vsel %vm4413, %v3397, 0.0
        %v4478 = vsel %vm4414, %v3396, 0.0
        %v4479 = vsel %vm4415, %v3395, 0.0
        %v4480 = vsel %vm4416, %v3394, 0.0
        %v4481 = vsel %vm4417, %v3393, 0.0
        %v4482 = vsel %vm4418, %v3392, 0.0
        %v4483 = vsel %vm4419, %v3391, 0.0
        %v4484 = vsel %vm4420, %v3390, 0.0
        %v4485 = vsel %vm4421, %v3389, 0.0
        %v4486 = vsel %vm4422, %v3388, 0.0
        %v4487 = vsel %vm4423, %v3387, 0.0
        %v4488 = vsel %vm4424, %v3386, 0.0
        %v4489 = vsel %vm4425, %v3385, 0.0
        %v4490 = vsel %vm4426, %v3384, 0.0
        %v4491 = vsel %vm4427, %v3383, 0.0
        %v4492 = vsel %vm4428, %v3382, 0.0
        %v4493 = vsel %vm4429, %v3381, 0.0
        %v4494 = vsel %vm4430, %v3380, 0.0
        %v4495 = vsel %vm4431, %v3379, 0.0
        %v4496 = vsel %vm4432, %v3378, 0.0
        %v4497 = vsel %vm4433, %v3377, 0.0
        %v4498 = vsel %vm4434, %v3376, 0.0
        %v4499 = vsel %vm4435, %v3375, 0.0
        %v4500 = vsel %vm4436, %v3374, 0.0
        %v4501 = vsel %vm4437, %v3373, 0.0
        %v4502 = vsel %vm4438, %v3372, 0.0
        %v4503 = vsel %vm4439, %v3371, 0.0
        %v4504 = vsel %vm4440, %v3370, 0.0
        %v4505 = vsel %vm4441, %v3369, 0.0
        %v4506 = vsel %vm4442, %v3368, 0.0
        %v4507 = vsel %vm4443, %v3367, 0.0
        %v4508 = vsel %vm4444, %v3366, 0.0
        %v4509 = vsel %vm4445, %v3365, 0.0
        %v4510 = vsel %vm4446, %v3364, 0.0
        %v4511 = vsel %vm4447, %v3363, 0.0
        %v4512 = vsel %vm4448, %v3362, 0.0
        %v4513 = vsel %vm4449, %v3425, 0.0
        %v4514 = vpack.c.bf16 %v4450, %v4450
        %v4515 = vpack.c.bf16 %v4451, %v4451
        %v4516 = vpack.c.bf16 %v4452, %v4452
        %v4517 = vpack.c.bf16 %v4453, %v4453
        %v4518 = vpack.c.bf16 %v4454, %v4454
        %v4519 = vpack.c.bf16 %v4455, %v4455
        %v4520 = vpack.c.bf16 %v4456, %v4456
        %v4521 = vpack.c.bf16 %v4457, %v4457
        %v4522 = vpack.c.bf16 %v4458, %v4458
        %v4523 = vpack.c.bf16 %v4459, %v4459
        %v4524 = vpack.c.bf16 %v4460, %v4460
        %v4525 = vpack.c.bf16 %v4461, %v4461
        %v4526 = vpack.c.bf16 %v4462, %v4462
        %v4527 = vpack.c.bf16 %v4463, %v4463
        %v4528 = vpack.c.bf16 %v4464, %v4464
        %v4529 = vpack.c.bf16 %v4465, %v4465
        %v4530 = vpack.c.bf16 %v4466, %v4466
        %v4531 = vpack.c.bf16 %v4467, %v4467
        %v4532 = vpack.c.bf16 %v4468, %v4468
        %v4533 = vpack.c.bf16 %v4469, %v4469
        %v4534 = vpack.c.bf16 %v4470, %v4470
        %v4535 = vpack.c.bf16 %v4471, %v4471
        %v4536 = vpack.c.bf16 %v4472, %v4472
        %v4537 = vpack.c.bf16 %v4473, %v4473
        %v4538 = vpack.c.bf16 %v4474, %v4474
        %v4539 = vpack.c.bf16 %v4475, %v4475
        %v4540 = vpack.c.bf16 %v4476, %v4476
        %v4541 = vpack.c.bf16 %v4477, %v4477
        %v4542 = vpack.c.bf16 %v4478, %v4478
        %v4543 = vpack.c.bf16 %v4479, %v4479
        %v4544 = vpack.c.bf16 %v4480, %v4480
        %v4545 = vpack.c.bf16 %v4481, %v4481
        %v4546 = vpack.c.bf16 %v4482, %v4482
        %v4547 = vpack.c.bf16 %v4483, %v4483
        %v4548 = vpack.c.bf16 %v4484, %v4484
        %v4549 = vpack.c.bf16 %v4485, %v4485
        %v4550 = vpack.c.bf16 %v4486, %v4486
        %v4551 = vpack.c.bf16 %v4487, %v4487
        %v4552 = vpack.c.bf16 %v4488, %v4488
        %v4553 = vpack.c.bf16 %v4489, %v4489
        %v4554 = vpack.c.bf16 %v4490, %v4490
        %v4555 = vpack.c.bf16 %v4491, %v4491
        %v4556 = vpack.c.bf16 %v4492, %v4492
        %v4557 = vpack.c.bf16 %v4493, %v4493
        %v4558 = vpack.c.bf16 %v4494, %v4494
        %v4559 = vpack.c.bf16 %v4495, %v4495
        %v4560 = vpack.c.bf16 %v4496, %v4496
        %v4561 = vpack.c.bf16 %v4497, %v4497
        %v4562 = vpack.c.bf16 %v4498, %v4498
        %v4563 = vpack.c.bf16 %v4499, %v4499
        %v4564 = vpack.c.bf16 %v4500, %v4500
        %v4565 = vpack.c.bf16 %v4501, %v4501
        %v4566 = vpack.c.bf16 %v4502, %v4502
        %v4567 = vpack.c.bf16 %v4503, %v4503
        %v4568 = vpack.c.bf16 %v4504, %v4504
        %v4569 = vpack.c.bf16 %v4505, %v4505
        %v4570 = vpack.c.bf16 %v4506, %v4506
        %v4571 = vpack.c.bf16 %v4507, %v4507
        %v4572 = vpack.c.bf16 %v4508, %v4508
        %v4573 = vpack.c.bf16 %v4509, %v4509
        %v4574 = vpack.c.bf16 %v4510, %v4510
        %v4575 = vpack.c.bf16 %v4511, %v4511
        %v4576 = vpack.c.bf16 %v4512, %v4512
        %v4577 = vpack.c.bf16 %v4513, %v4513
        %4578 = vst [vmem:[#allocation2 + $0x14] sm:$0xf] %v4514
        %4579 = vst [vmem:[#allocation2 + $0x38] sm:$0xf] %v4515
        %4580 = vst [vmem:[#allocation2 + $0x5c] sm:$0xf] %v4516
        %4581 = vst [vmem:[#allocation2 + $0x80] sm:$0xf] %v4517
        %4582 = vst [vmem:[#allocation2 + $0xa4] sm:$0xf] %v4518
        %4583 = vst [vmem:[#allocation2 + $0xc8] sm:$0xf] %v4519
        %4584 = vst [vmem:[#allocation2 + $0xec] sm:$0xf] %v4520
        %4585 = vst [vmem:[#allocation2 + $0x110] sm:$0xf] %v4521
        %4586 = vst [vmem:[#allocation2 + $0x134] sm:$0xf] %v4522
        %4587 = vst [vmem:[#allocation2 + $0x158] sm:$0xf] %v4523
        %4588 = vst [vmem:[#allocation2 + $0x17c] sm:$0xf] %v4524
        %4589 = vst [vmem:[#allocation2 + $0x1a0] sm:$0xf] %v4525
        %4590 = vst [vmem:[#allocation2 + $0x1c4] sm:$0xf] %v4526
        %4591 = vst [vmem:[#allocation2 + $0x1e8] sm:$0xf] %v4527
        %4592 = vst [vmem:[#allocation2 + $0x20c] sm:$0xf] %v4528
        %4593 = vst [vmem:[#allocation2 + $0x230] sm:$0xf] %v4529
        %4594 = vst [vmem:[#allocation2 + $0x254] sm:$0xf] %v4530
        %4595 = vst [vmem:[#allocation2 + $0x278] sm:$0xf] %v4531
        %4596 = vst [vmem:[#allocation2 + $0x29c] sm:$0xf] %v4532
        %4597 = vst [vmem:[#allocation2 + $0x2c0] sm:$0xf] %v4533
        %4598 = vst [vmem:[#allocation2 + $0x2e4] sm:$0xf] %v4534
        %4599 = vst [vmem:[#allocation2 + $0x308] sm:$0xf] %v4535
        %4600 = vst [vmem:[#allocation2 + $0x32c] sm:$0xf] %v4536
        %4601 = vst [vmem:[#allocation2 + $0x350] sm:$0xf] %v4537
        %4602 = vst [vmem:[#allocation2 + $0x374] sm:$0xf] %v4538
        %4603 = vst [vmem:[#allocation2 + $0x398] sm:$0xf] %v4539
        %4604 = vst [vmem:[#allocation2 + $0x3bc] sm:$0xf] %v4540
        %4605 = vst [vmem:[#allocation2 + $0x3e0] sm:$0xf] %v4541
        %4606 = vst [vmem:[#allocation2 + $0x404] sm:$0xf] %v4542
        %4607 = vst [vmem:[#allocation2 + $0x428] sm:$0xf] %v4543
        %4608 = vst [vmem:[#allocation2 + $0x44c] sm:$0xf] %v4544
        %4609 = vst [vmem:[#allocation2 + $0x470] sm:$0xf] %v4545
        %4610 = vst [vmem:[#allocation2 + $0x494] sm:$0xf] %v4546
        %4611 = vst [vmem:[#allocation2 + $0x4b8] sm:$0xf] %v4547
        %4612 = vst [vmem:[#allocation2 + $0x4dc] sm:$0xf] %v4548
        %4613 = vst [vmem:[#allocation2 + $0x500] sm:$0xf] %v4549
        %4614 = vst [vmem:[#allocation2 + $0x524] sm:$0xf] %v4550
        %4615 = vst [vmem:[#allocation2 + $0x548] sm:$0xf] %v4551
        %4616 = vst [vmem:[#allocation2 + $0x56c] sm:$0xf] %v4552
        %4617 = vst [vmem:[#allocation2 + $0x590] sm:$0xf] %v4553
        %4618 = vst [vmem:[#allocation2 + $0x5b4] sm:$0xf] %v4554
        %4619 = vst [vmem:[#allocation2 + $0x5d8] sm:$0xf] %v4555
        %4620 = vst [vmem:[#allocation2 + $0x5fc] sm:$0xf] %v4556
        %4621 = vst [vmem:[#allocation2 + $0x620] sm:$0xf] %v4557
        %4622 = vst [vmem:[#allocation2 + $0x644] sm:$0xf] %v4558
        %4623 = vst [vmem:[#allocation2 + $0x668] sm:$0xf] %v4559
        %4624 = vst [vmem:[#allocation2 + $0x68c] sm:$0xf] %v4560
        %4625 = vst [vmem:[#allocation2 + $0x6b0] sm:$0xf] %v4561
        %4626 = vst [vmem:[#allocation2 + $0x6d4] sm:$0xf] %v4562
        %4627 = vst [vmem:[#allocation2 + $0x6f8] sm:$0xf] %v4563
        %4628 = vst [vmem:[#allocation2 + $0x71c] sm:$0xf] %v4564
        %4629 = vst [vmem:[#allocation2 + $0x740] sm:$0xf] %v4565
        %4630 = vst [vmem:[#allocation2 + $0x764] sm:$0xf] %v4566
        %4631 = vst [vmem:[#allocation2 + $0x788] sm:$0xf] %v4567
        %4632 = vst [vmem:[#allocation2 + $0x7ac] sm:$0xf] %v4568
        %4633 = vst [vmem:[#allocation2 + $0x7d0] sm:$0xf] %v4569
        %4634 = vst [vmem:[#allocation2 + $0x7f4] sm:$0xf] %v4570
        %4635 = vst [vmem:[#allocation2 + $0x818] sm:$0xf] %v4571
        %4636 = vst [vmem:[#allocation2 + $0x83c] sm:$0xf] %v4572
        %4637 = vst [vmem:[#allocation2 + $0x860] sm:$0xf] %v4573
        %4638 = vst [vmem:[#allocation2 + $0x884] sm:$0xf] %v4574
        %4639 = vst [vmem:[#allocation2 + $0x8a8] sm:$0xf] %v4575
        %4640 = vst [vmem:[#allocation2 + $0x8cc] sm:$0xf] %v4576
        %4641 = vst [vmem:[#allocation2 + $0x8f0] sm:$0xf] %v4577
        %vm4642 = vcmp.lt.s32.totalorder %v1504, 496
        %vm4643 = vcmp.lt.s32.totalorder %v1505, 496
        %vm4644 = vcmp.lt.s32.totalorder %v1506, 496
        %vm4645 = vcmp.lt.s32.totalorder %v1507, 496
        %vm4646 = vcmp.lt.s32.totalorder %v1508, 496
        %vm4647 = vcmp.lt.s32.totalorder %v1509, 496
        %vm4648 = vcmp.lt.s32.totalorder %v1510, 496
        %vm4649 = vcmp.lt.s32.totalorder %v1511, 496
        %vm4650 = vcmp.lt.s32.totalorder %v1512, 496
        %vm4651 = vcmp.lt.s32.totalorder %v1513, 496
        %vm4652 = vcmp.lt.s32.totalorder %v1514, 496
        %vm4653 = vcmp.lt.s32.totalorder %v1515, 496
        %vm4654 = vcmp.lt.s32.totalorder %v1516, 496
        %vm4655 = vcmp.lt.s32.totalorder %v1517, 496
        %vm4656 = vcmp.lt.s32.totalorder %v1518, 496
        %vm4657 = vcmp.lt.s32.totalorder %v1519, 496
        %vm4658 = vcmp.lt.s32.totalorder %v1520, 496
        %vm4659 = vcmp.lt.s32.totalorder %v1521, 496
        %vm4660 = vcmp.lt.s32.totalorder %v1522, 496
        %vm4661 = vcmp.lt.s32.totalorder %v1523, 496
        %vm4662 = vcmp.lt.s32.totalorder %v1524, 496
        %vm4663 = vcmp.lt.s32.totalorder %v1525, 496
        %vm4664 = vcmp.lt.s32.totalorder %v1526, 496
        %vm4665 = vcmp.lt.s32.totalorder %v1527, 496
        %vm4666 = vcmp.lt.s32.totalorder %v1528, 496
        %vm4667 = vcmp.lt.s32.totalorder %v1529, 496
        %vm4668 = vcmp.lt.s32.totalorder %v1530, 496
        %vm4669 = vcmp.lt.s32.totalorder %v1531, 496
        %vm4670 = vcmp.lt.s32.totalorder %v1532, 496
        %vm4671 = vcmp.lt.s32.totalorder %v1533, 496
        %vm4672 = vcmp.lt.s32.totalorder %v1534, 496
        %vm4673 = vcmp.lt.s32.totalorder %v1535, 496
        %vm4674 = vcmp.lt.s32.totalorder %v1536, 496
        %vm4675 = vcmp.lt.s32.totalorder %v1537, 496
        %vm4676 = vcmp.lt.s32.totalorder %v1538, 496
        %vm4677 = vcmp.lt.s32.totalorder %v1539, 496
        %vm4678 = vcmp.lt.s32.totalorder %v1540, 496
        %vm4679 = vcmp.lt.s32.totalorder %v1541, 496
        %vm4680 = vcmp.lt.s32.totalorder %v1542, 496
        %vm4681 = vcmp.lt.s32.totalorder %v1543, 496
        %vm4682 = vcmp.lt.s32.totalorder %v1544, 496
        %vm4683 = vcmp.lt.s32.totalorder %v1545, 496
        %vm4684 = vcmp.lt.s32.totalorder %v1546, 496
        %vm4685 = vcmp.lt.s32.totalorder %v1547, 496
        %vm4686 = vcmp.lt.s32.totalorder %v1548, 496
        %vm4687 = vcmp.lt.s32.totalorder %v1549, 496
        %vm4688 = vcmp.lt.s32.totalorder %v1550, 496
        %vm4689 = vcmp.lt.s32.totalorder %v1551, 496
        %vm4690 = vcmp.lt.s32.totalorder %v1552, 496
        %vm4691 = vcmp.lt.s32.totalorder %v1553, 496
        %vm4692 = vcmp.lt.s32.totalorder %v1554, 496
        %vm4693 = vcmp.lt.s32.totalorder %v1555, 496
        %vm4694 = vcmp.lt.s32.totalorder %v1556, 496
        %vm4695 = vcmp.lt.s32.totalorder %v1557, 496
        %vm4696 = vcmp.lt.s32.totalorder %v1558, 496
        %vm4697 = vcmp.lt.s32.totalorder %v1559, 496
        %vm4698 = vcmp.lt.s32.totalorder %v1560, 496
        %vm4699 = vcmp.lt.s32.totalorder %v1561, 496
        %vm4700 = vcmp.lt.s32.totalorder %v1562, 496
        %vm4701 = vcmp.lt.s32.totalorder %v1563, 496
        %vm4702 = vcmp.lt.s32.totalorder %v1564, 496
        %vm4703 = vcmp.lt.s32.totalorder %v1565, 496
        %vm4704 = vcmp.lt.s32.totalorder %v1566, 496
        %vm4705 = vcmp.lt.s32.totalorder %v1567, 496
        %vm4706 = vmand %vm4642, %vm2529
        %vm4707 = vmand %vm4643, %vm2530
        %vm4708 = vmand %vm4644, %vm2531
        %vm4709 = vmand %vm4645, %vm2532
        %vm4710 = vmand %vm4646, %vm2533
        %vm4711 = vmand %vm4647, %vm2534
        %vm4712 = vmand %vm4648, %vm2535
        %vm4713 = vmand %vm4649, %vm2536
        %vm4714 = vmand %vm4650, %vm2537
        %vm4715 = vmand %vm4651, %vm2538
        %vm4716 = vmand %vm4652, %vm2539
        %vm4717 = vmand %vm4653, %vm2540
        %vm4718 = vmand %vm4654, %vm2541
        %vm4719 = vmand %vm4655, %vm2542
        %vm4720 = vmand %vm4656, %vm2543
        %vm4721 = vmand %vm4657, %vm2544
        %vm4722 = vmand %vm4658, %vm2545
        %vm4723 = vmand %vm4659, %vm2546
        %vm4724 = vmand %vm4660, %vm2547
        %vm4725 = vmand %vm4661, %vm2548
        %vm4726 = vmand %vm4662, %vm2549
        %vm4727 = vmand %vm4663, %vm2550
        %vm4728 = vmand %vm4664, %vm2551
        %vm4729 = vmand %vm4665, %vm2552
        %vm4730 = vmand %vm4666, %vm2553
        %vm4731 = vmand %vm4667, %vm2554
        %vm4732 = vmand %vm4668, %vm2555
        %vm4733 = vmand %vm4669, %vm2556
        %vm4734 = vmand %vm4670, %vm2557
        %vm4735 = vmand %vm4671, %vm2558
        %vm4736 = vmand %vm4672, %vm2559
        %vm4737 = vmand %vm4673, %vm2560
        %vm4738 = vmand %vm4674, %vm2561
        %vm4739 = vmand %vm4675, %vm2562
        %vm4740 = vmand %vm4676, %vm2563
        %vm4741 = vmand %vm4677, %vm2564
        %vm4742 = vmand %vm4678, %vm2565
        %vm4743 = vmand %vm4679, %vm2566
        %vm4744 = vmand %vm4680, %vm2567
        %vm4745 = vmand %vm4681, %vm2568
        %vm4746 = vmand %vm4682, %vm2569
        %vm4747 = vmand %vm4683, %vm2570
        %vm4748 = vmand %vm4684, %vm2571
        %vm4749 = vmand %vm4685, %vm2572
        %vm4750 = vmand %vm4686, %vm2573
        %vm4751 = vmand %vm4687, %vm2574
        %vm4752 = vmand %vm4688, %vm2575
        %vm4753 = vmand %vm4689, %vm2576
        %vm4754 = vmand %vm4690, %vm2577
        %vm4755 = vmand %vm4691, %vm2578
        %vm4756 = vmand %vm4692, %vm2579
        %vm4757 = vmand %vm4693, %vm2580
        %vm4758 = vmand %vm4694, %vm2581
        %vm4759 = vmand %vm4695, %vm2582
        %vm4760 = vmand %vm4696, %vm2583
        %vm4761 = vmand %vm4697, %vm2584
        %vm4762 = vmand %vm4698, %vm2585
        %vm4763 = vmand %vm4699, %vm2586
        %vm4764 = vmand %vm4700, %vm2587
        %vm4765 = vmand %vm4701, %vm2588
        %vm4766 = vmand %vm4702, %vm2589
        %vm4767 = vmand %vm4703, %vm2590
        %vm4768 = vmand %vm4704, %vm2591
        %vm4769 = vmand %vm4705, %vm2592
        %v4770 = vsel %vm4706, 1, 0
        %v4771 = vsel %vm4707, 1, 0
        %v4772 = vsel %vm4708, 1, 0
        %v4773 = vsel %vm4709, 1, 0
        %v4774 = vsel %vm4710, 1, 0
        %v4775 = vsel %vm4711, 1, 0
        %v4776 = vsel %vm4712, 1, 0
        %v4777 = vsel %vm4713, 1, 0
        %v4778 = vsel %vm4714, 1, 0
        %v4779 = vsel %vm4715, 1, 0
        %v4780 = vsel %vm4716, 1, 0
        %v4781 = vsel %vm4717, 1, 0
        %v4782 = vsel %vm4718, 1, 0
        %v4783 = vsel %vm4719, 1, 0
        %v4784 = vsel %vm4720, 1, 0
        %v4785 = vsel %vm4721, 1, 0
        %v4786 = vsel %vm4722, 1, 0
        %v4787 = vsel %vm4723, 1, 0
        %v4788 = vsel %vm4724, 1, 0
        %v4789 = vsel %vm4725, 1, 0
        %v4790 = vsel %vm4726, 1, 0
        %v4791 = vsel %vm4727, 1, 0
        %v4792 = vsel %vm4728, 1, 0
        %v4793 = vsel %vm4729, 1, 0
        %v4794 = vsel %vm4730, 1, 0
        %v4795 = vsel %vm4731, 1, 0
        %v4796 = vsel %vm4732, 1, 0
        %v4797 = vsel %vm4733, 1, 0
        %v4798 = vsel %vm4734, 1, 0
        %v4799 = vsel %vm4735, 1, 0
        %v4800 = vsel %vm4736, 1, 0
        %v4801 = vsel %vm4737, 1, 0
        %v4802 = vsel %vm4738, 1, 0
        %v4803 = vsel %vm4739, 1, 0
        %v4804 = vsel %vm4740, 1, 0
        %v4805 = vsel %vm4741, 1, 0
        %v4806 = vsel %vm4742, 1, 0
        %v4807 = vsel %vm4743, 1, 0
        %v4808 = vsel %vm4744, 1, 0
        %v4809 = vsel %vm4745, 1, 0
        %v4810 = vsel %vm4746, 1, 0
        %v4811 = vsel %vm4747, 1, 0
        %v4812 = vsel %vm4748, 1, 0
        %v4813 = vsel %vm4749, 1, 0
        %v4814 = vsel %vm4750, 1, 0
        %v4815 = vsel %vm4751, 1, 0
        %v4816 = vsel %vm4752, 1, 0
        %v4817 = vsel %vm4753, 1, 0
        %v4818 = vsel %vm4754, 1, 0
        %v4819 = vsel %vm4755, 1, 0
        %v4820 = vsel %vm4756, 1, 0
        %v4821 = vsel %vm4757, 1, 0
        %v4822 = vsel %vm4758, 1, 0
        %v4823 = vsel %vm4759, 1, 0
        %v4824 = vsel %vm4760, 1, 0
        %v4825 = vsel %vm4761, 1, 0
        %v4826 = vsel %vm4762, 1, 0
        %v4827 = vsel %vm4763, 1, 0
        %v4828 = vsel %vm4764, 1, 0
        %v4829 = vsel %vm4765, 1, 0
        %v4830 = vsel %vm4766, 1, 0
        %v4831 = vsel %vm4767, 1, 0
        %v4832 = vsel %vm4768, 1, 0
        %v4833 = vsel %vm4769, 1, 0
        %vm4834 = vcmp.eq.s32.totalorder %v4770, 1
        %vm4835 = vcmp.eq.s32.totalorder %v4771, 1
        %vm4836 = vcmp.eq.s32.totalorder %v4772, 1
        %vm4837 = vcmp.eq.s32.totalorder %v4773, 1
        %vm4838 = vcmp.eq.s32.totalorder %v4774, 1
        %vm4839 = vcmp.eq.s32.totalorder %v4775, 1
        %vm4840 = vcmp.eq.s32.totalorder %v4776, 1
        %vm4841 = vcmp.eq.s32.totalorder %v4777, 1
        %vm4842 = vcmp.eq.s32.totalorder %v4778, 1
        %vm4843 = vcmp.eq.s32.totalorder %v4779, 1
        %vm4844 = vcmp.eq.s32.totalorder %v4780, 1
        %vm4845 = vcmp.eq.s32.totalorder %v4781, 1
        %vm4846 = vcmp.eq.s32.totalorder %v4782, 1
        %vm4847 = vcmp.eq.s32.totalorder %v4783, 1
        %vm4848 = vcmp.eq.s32.totalorder %v4784, 1
        %vm4849 = vcmp.eq.s32.totalorder %v4785, 1
        %vm4850 = vcmp.eq.s32.totalorder %v4786, 1
        %vm4851 = vcmp.eq.s32.totalorder %v4787, 1
        %vm4852 = vcmp.eq.s32.totalorder %v4788, 1
        %vm4853 = vcmp.eq.s32.totalorder %v4789, 1
        %vm4854 = vcmp.eq.s32.totalorder %v4790, 1
        %vm4855 = vcmp.eq.s32.totalorder %v4791, 1
        %vm4856 = vcmp.eq.s32.totalorder %v4792, 1
        %vm4857 = vcmp.eq.s32.totalorder %v4793, 1
        %vm4858 = vcmp.eq.s32.totalorder %v4794, 1
        %vm4859 = vcmp.eq.s32.totalorder %v4795, 1
        %vm4860 = vcmp.eq.s32.totalorder %v4796, 1
        %vm4861 = vcmp.eq.s32.totalorder %v4797, 1
        %vm4862 = vcmp.eq.s32.totalorder %v4798, 1
        %vm4863 = vcmp.eq.s32.totalorder %v4799, 1
        %vm4864 = vcmp.eq.s32.totalorder %v4800, 1
        %vm4865 = vcmp.eq.s32.totalorder %v4801, 1
        %vm4866 = vcmp.eq.s32.totalorder %v4802, 1
        %vm4867 = vcmp.eq.s32.totalorder %v4803, 1
        %vm4868 = vcmp.eq.s32.totalorder %v4804, 1
        %vm4869 = vcmp.eq.s32.totalorder %v4805, 1
        %vm4870 = vcmp.eq.s32.totalorder %v4806, 1
        %vm4871 = vcmp.eq.s32.totalorder %v4807, 1
        %vm4872 = vcmp.eq.s32.totalorder %v4808, 1
        %vm4873 = vcmp.eq.s32.totalorder %v4809, 1
        %vm4874 = vcmp.eq.s32.totalorder %v4810, 1
        %vm4875 = vcmp.eq.s32.totalorder %v4811, 1
        %vm4876 = vcmp.eq.s32.totalorder %v4812, 1
        %vm4877 = vcmp.eq.s32.totalorder %v4813, 1
        %vm4878 = vcmp.eq.s32.totalorder %v4814, 1
        %vm4879 = vcmp.eq.s32.totalorder %v4815, 1
        %vm4880 = vcmp.eq.s32.totalorder %v4816, 1
        %vm4881 = vcmp.eq.s32.totalorder %v4817, 1
        %vm4882 = vcmp.eq.s32.totalorder %v4818, 1
        %vm4883 = vcmp.eq.s32.totalorder %v4819, 1
        %vm4884 = vcmp.eq.s32.totalorder %v4820, 1
        %vm4885 = vcmp.eq.s32.totalorder %v4821, 1
        %vm4886 = vcmp.eq.s32.totalorder %v4822, 1
        %vm4887 = vcmp.eq.s32.totalorder %v4823, 1
        %vm4888 = vcmp.eq.s32.totalorder %v4824, 1
        %vm4889 = vcmp.eq.s32.totalorder %v4825, 1
        %vm4890 = vcmp.eq.s32.totalorder %v4826, 1
        %vm4891 = vcmp.eq.s32.totalorder %v4827, 1
        %vm4892 = vcmp.eq.s32.totalorder %v4828, 1
        %vm4893 = vcmp.eq.s32.totalorder %v4829, 1
        %vm4894 = vcmp.eq.s32.totalorder %v4830, 1
        %vm4895 = vcmp.eq.s32.totalorder %v4831, 1
        %vm4896 = vcmp.eq.s32.totalorder %v4832, 1
        %vm4897 = vcmp.eq.s32.totalorder %v4833, 1
        %v4898 = vsel %vm4834, %v2462, 0.0
        %v4899 = vsel %vm4835, %v2461, 0.0
        %v4900 = vsel %vm4836, %v2460, 0.0
        %v4901 = vsel %vm4837, %v2459, 0.0
        %v4902 = vsel %vm4838, %v2458, 0.0
        %v4903 = vsel %vm4839, %v2457, 0.0
        %v4904 = vsel %vm4840, %v2456, 0.0
        %v4905 = vsel %vm4841, %v2455, 0.0
        %v4906 = vsel %vm4842, %v2454, 0.0
        %v4907 = vsel %vm4843, %v2453, 0.0
        %v4908 = vsel %vm4844, %v2452, 0.0
        %v4909 = vsel %vm4845, %v2451, 0.0
        %v4910 = vsel %vm4846, %v2450, 0.0
        %v4911 = vsel %vm4847, %v2449, 0.0
        %v4912 = vsel %vm4848, %v2448, 0.0
        %v4913 = vsel %vm4849, %v2447, 0.0
        %v4914 = vsel %vm4850, %v2446, 0.0
        %v4915 = vsel %vm4851, %v2445, 0.0
        %v4916 = vsel %vm4852, %v2444, 0.0
        %v4917 = vsel %vm4853, %v2443, 0.0
        %v4918 = vsel %vm4854, %v2442, 0.0
        %v4919 = vsel %vm4855, %v2441, 0.0
        %v4920 = vsel %vm4856, %v2440, 0.0
        %v4921 = vsel %vm4857, %v2439, 0.0
        %v4922 = vsel %vm4858, %v2438, 0.0
        %v4923 = vsel %vm4859, %v2437, 0.0
        %v4924 = vsel %vm4860, %v2436, 0.0
        %v4925 = vsel %vm4861, %v2435, 0.0
        %v4926 = vsel %vm4862, %v2434, 0.0
        %v4927 = vsel %vm4863, %v2433, 0.0
        %v4928 = vsel %vm4864, %v2432, 0.0
        %v4929 = vsel %vm4865, %v2431, 0.0
        %v4930 = vsel %vm4866, %v2430, 0.0
        %v4931 = vsel %vm4867, %v2429, 0.0
        %v4932 = vsel %vm4868, %v2428, 0.0
        %v4933 = vsel %vm4869, %v2427, 0.0
        %v4934 = vsel %vm4870, %v2426, 0.0
        %v4935 = vsel %vm4871, %v2425, 0.0
        %v4936 = vsel %vm4872, %v2424, 0.0
        %v4937 = vsel %vm4873, %v2423, 0.0
        %v4938 = vsel %vm4874, %v2422, 0.0
        %v4939 = vsel %vm4875, %v2421, 0.0
        %v4940 = vsel %vm4876, %v2420, 0.0
        %v4941 = vsel %vm4877, %v2419, 0.0
        %v4942 = vsel %vm4878, %v2418, 0.0
        %v4943 = vsel %vm4879, %v2417, 0.0
        %v4944 = vsel %vm4880, %v2416, 0.0
        %v4945 = vsel %vm4881, %v2415, 0.0
        %v4946 = vsel %vm4882, %v2414, 0.0
        %v4947 = vsel %vm4883, %v2413, 0.0
        %v4948 = vsel %vm4884, %v2412, 0.0
        %v4949 = vsel %vm4885, %v2411, 0.0
        %v4950 = vsel %vm4886, %v2410, 0.0
        %v4951 = vsel %vm4887, %v2409, 0.0
        %v4952 = vsel %vm4888, %v2408, 0.0
        %v4953 = vsel %vm4889, %v2407, 0.0
        %v4954 = vsel %vm4890, %v2406, 0.0
        %v4955 = vsel %vm4891, %v2405, 0.0
        %v4956 = vsel %vm4892, %v2404, 0.0
        %v4957 = vsel %vm4893, %v2403, 0.0
        %v4958 = vsel %vm4894, %v2402, 0.0
        %v4959 = vsel %vm4895, %v2401, 0.0
        %v4960 = vsel %vm4896, %v2464, 0.0
        %v4961 = vsel %vm4897, %v2463, 0.0
        %v4962 = vpack.c.bf16 %v4898, %v4898
        %v4963 = vpack.c.bf16 %v4899, %v4899
        %v4964 = vpack.c.bf16 %v4900, %v4900
        %v4965 = vpack.c.bf16 %v4901, %v4901
        %v4966 = vpack.c.bf16 %v4902, %v4902
        %v4967 = vpack.c.bf16 %v4903, %v4903
        %v4968 = vpack.c.bf16 %v4904, %v4904
        %v4969 = vpack.c.bf16 %v4905, %v4905
        %v4970 = vpack.c.bf16 %v4906, %v4906
        %v4971 = vpack.c.bf16 %v4907, %v4907
        %v4972 = vpack.c.bf16 %v4908, %v4908
        %v4973 = vpack.c.bf16 %v4909, %v4909
        %v4974 = vpack.c.bf16 %v4910, %v4910
        %v4975 = vpack.c.bf16 %v4911, %v4911
        %v4976 = vpack.c.bf16 %v4912, %v4912
        %v4977 = vpack.c.bf16 %v4913, %v4913
        %v4978 = vpack.c.bf16 %v4914, %v4914
        %v4979 = vpack.c.bf16 %v4915, %v4915
        %v4980 = vpack.c.bf16 %v4916, %v4916
        %v4981 = vpack.c.bf16 %v4917, %v4917
        %v4982 = vpack.c.bf16 %v4918, %v4918
        %v4983 = vpack.c.bf16 %v4919, %v4919
        %v4984 = vpack.c.bf16 %v4920, %v4920
        %v4985 = vpack.c.bf16 %v4921, %v4921
        %v4986 = vpack.c.bf16 %v4922, %v4922
        %v4987 = vpack.c.bf16 %v4923, %v4923
        %v4988 = vpack.c.bf16 %v4924, %v4924
        %v4989 = vpack.c.bf16 %v4925, %v4925
        %v4990 = vpack.c.bf16 %v4926, %v4926
        %v4991 = vpack.c.bf16 %v4927, %v4927
        %v4992 = vpack.c.bf16 %v4928, %v4928
        %v4993 = vpack.c.bf16 %v4929, %v4929
        %v4994 = vpack.c.bf16 %v4930, %v4930
        %v4995 = vpack.c.bf16 %v4931, %v4931
        %v4996 = vpack.c.bf16 %v4932, %v4932
        %v4997 = vpack.c.bf16 %v4933, %v4933
        %v4998 = vpack.c.bf16 %v4934, %v4934
        %v4999 = vpack.c.bf16 %v4935, %v4935
        %v5000 = vpack.c.bf16 %v4936, %v4936
        %v5001 = vpack.c.bf16 %v4937, %v4937
        %v5002 = vpack.c.bf16 %v4938, %v4938
        %v5003 = vpack.c.bf16 %v4939, %v4939
        %v5004 = vpack.c.bf16 %v4940, %v4940
        %v5005 = vpack.c.bf16 %v4941, %v4941
        %v5006 = vpack.c.bf16 %v4942, %v4942
        %v5007 = vpack.c.bf16 %v4943, %v4943
        %v5008 = vpack.c.bf16 %v4944, %v4944
        %v5009 = vpack.c.bf16 %v4945, %v4945
        %v5010 = vpack.c.bf16 %v4946, %v4946
        %v5011 = vpack.c.bf16 %v4947, %v4947
        %v5012 = vpack.c.bf16 %v4948, %v4948
        %v5013 = vpack.c.bf16 %v4949, %v4949
        %v5014 = vpack.c.bf16 %v4950, %v4950
        %v5015 = vpack.c.bf16 %v4951, %v4951
        %v5016 = vpack.c.bf16 %v4952, %v4952
        %v5017 = vpack.c.bf16 %v4953, %v4953
        %v5018 = vpack.c.bf16 %v4954, %v4954
        %v5019 = vpack.c.bf16 %v4955, %v4955
        %v5020 = vpack.c.bf16 %v4956, %v4956
        %v5021 = vpack.c.bf16 %v4957, %v4957
        %v5022 = vpack.c.bf16 %v4958, %v4958
        %v5023 = vpack.c.bf16 %v4959, %v4959
        %v5024 = vpack.c.bf16 %v4960, %v4960
        %v5025 = vpack.c.bf16 %v4961, %v4961
        %5026 = vst [vmem:[#allocation2 + $0x18] sm:$0xf] %v4962
        %5027 = vst [vmem:[#allocation2 + $0x3c] sm:$0xf] %v4963
        %5028 = vst [vmem:[#allocation2 + $0x60] sm:$0xf] %v4964
        %5029 = vst [vmem:[#allocation2 + $0x84] sm:$0xf] %v4965
        %5030 = vst [vmem:[#allocation2 + $0xa8] sm:$0xf] %v4966
        %5031 = vst [vmem:[#allocation2 + $0xcc] sm:$0xf] %v4967
        %5032 = vst [vmem:[#allocation2 + $0xf0] sm:$0xf] %v4968
        %5033 = vst [vmem:[#allocation2 + $0x114] sm:$0xf] %v4969
        %5034 = vst [vmem:[#allocation2 + $0x138] sm:$0xf] %v4970
        %5035 = vst [vmem:[#allocation2 + $0x15c] sm:$0xf] %v4971
        %5036 = vst [vmem:[#allocation2 + $0x180] sm:$0xf] %v4972
        %5037 = vst [vmem:[#allocation2 + $0x1a4] sm:$0xf] %v4973
        %5038 = vst [vmem:[#allocation2 + $0x1c8] sm:$0xf] %v4974
        %5039 = vst [vmem:[#allocation2 + $0x1ec] sm:$0xf] %v4975
        %5040 = vst [vmem:[#allocation2 + $0x210] sm:$0xf] %v4976
        %5041 = vst [vmem:[#allocation2 + $0x234] sm:$0xf] %v4977
        %5042 = vst [vmem:[#allocation2 + $0x258] sm:$0xf] %v4978
        %5043 = vst [vmem:[#allocation2 + $0x27c] sm:$0xf] %v4979
        %5044 = vst [vmem:[#allocation2 + $0x2a0] sm:$0xf] %v4980
        %5045 = vst [vmem:[#allocation2 + $0x2c4] sm:$0xf] %v4981
        %5046 = vst [vmem:[#allocation2 + $0x2e8] sm:$0xf] %v4982
        %5047 = vst [vmem:[#allocation2 + $0x30c] sm:$0xf] %v4983
        %5048 = vst [vmem:[#allocation2 + $0x330] sm:$0xf] %v4984
        %5049 = vst [vmem:[#allocation2 + $0x354] sm:$0xf] %v4985
        %5050 = vst [vmem:[#allocation2 + $0x378] sm:$0xf] %v4986
        %5051 = vst [vmem:[#allocation2 + $0x39c] sm:$0xf] %v4987
        %5052 = vst [vmem:[#allocation2 + $0x3c0] sm:$0xf] %v4988
        %5053 = vst [vmem:[#allocation2 + $0x3e4] sm:$0xf] %v4989
        %5054 = vst [vmem:[#allocation2 + $0x408] sm:$0xf] %v4990
        %5055 = vst [vmem:[#allocation2 + $0x42c] sm:$0xf] %v4991
        %5056 = vst [vmem:[#allocation2 + $0x450] sm:$0xf] %v4992
        %5057 = vst [vmem:[#allocation2 + $0x474] sm:$0xf] %v4993
        %5058 = vst [vmem:[#allocation2 + $0x498] sm:$0xf] %v4994
        %5059 = vst [vmem:[#allocation2 + $0x4bc] sm:$0xf] %v4995
        %5060 = vst [vmem:[#allocation2 + $0x4e0] sm:$0xf] %v4996
        %5061 = vst [vmem:[#allocation2 + $0x504] sm:$0xf] %v4997
        %5062 = vst [vmem:[#allocation2 + $0x528] sm:$0xf] %v4998
        %5063 = vst [vmem:[#allocation2 + $0x54c] sm:$0xf] %v4999
        %5064 = vst [vmem:[#allocation2 + $0x570] sm:$0xf] %v5000
        %5065 = vst [vmem:[#allocation2 + $0x594] sm:$0xf] %v5001
        %5066 = vst [vmem:[#allocation2 + $0x5b8] sm:$0xf] %v5002
        %5067 = vst [vmem:[#allocation2 + $0x5dc] sm:$0xf] %v5003
        %5068 = vst [vmem:[#allocation2 + $0x600] sm:$0xf] %v5004
        %5069 = vst [vmem:[#allocation2 + $0x624] sm:$0xf] %v5005
        %5070 = vst [vmem:[#allocation2 + $0x648] sm:$0xf] %v5006
        %5071 = vst [vmem:[#allocation2 + $0x66c] sm:$0xf] %v5007
        %5072 = vst [vmem:[#allocation2 + $0x690] sm:$0xf] %v5008
        %5073 = vst [vmem:[#allocation2 + $0x6b4] sm:$0xf] %v5009
        %5074 = vst [vmem:[#allocation2 + $0x6d8] sm:$0xf] %v5010
        %5075 = vst [vmem:[#allocation2 + $0x6fc] sm:$0xf] %v5011
        %5076 = vst [vmem:[#allocation2 + $0x720] sm:$0xf] %v5012
        %5077 = vst [vmem:[#allocation2 + $0x744] sm:$0xf] %v5013
        %5078 = vst [vmem:[#allocation2 + $0x768] sm:$0xf] %v5014
        %5079 = vst [vmem:[#allocation2 + $0x78c] sm:$0xf] %v5015
        %5080 = vst [vmem:[#allocation2 + $0x7b0] sm:$0xf] %v5016
        %5081 = vst [vmem:[#allocation2 + $0x7d4] sm:$0xf] %v5017
        %5082 = vst [vmem:[#allocation2 + $0x7f8] sm:$0xf] %v5018
        %5083 = vst [vmem:[#allocation2 + $0x81c] sm:$0xf] %v5019
        %5084 = vst [vmem:[#allocation2 + $0x840] sm:$0xf] %v5020
        %5085 = vst [vmem:[#allocation2 + $0x864] sm:$0xf] %v5021
        %5086 = vst [vmem:[#allocation2 + $0x888] sm:$0xf] %v5022
        %5087 = vst [vmem:[#allocation2 + $0x8ac] sm:$0xf] %v5023
        %5088 = vst [vmem:[#allocation2 + $0x8d0] sm:$0xf] %v5024
        %5089 = vst [vmem:[#allocation2 + $0x8f4] sm:$0xf] %v5025
        %v5090 = vsel %vm4642, 1, 0
        %v5091 = vsel %vm4643, 1, 0
        %v5092 = vsel %vm4644, 1, 0
        %v5093 = vsel %vm4645, 1, 0
        %v5094 = vsel %vm4646, 1, 0
        %v5095 = vsel %vm4647, 1, 0
        %v5096 = vsel %vm4648, 1, 0
        %v5097 = vsel %vm4649, 1, 0
        %v5098 = vsel %vm4650, 1, 0
        %v5099 = vsel %vm4651, 1, 0
        %v5100 = vsel %vm4652, 1, 0
        %v5101 = vsel %vm4653, 1, 0
        %v5102 = vsel %vm4654, 1, 0
        %v5103 = vsel %vm4655, 1, 0
        %v5104 = vsel %vm4656, 1, 0
        %v5105 = vsel %vm4657, 1, 0
        %v5106 = vsel %vm4658, 1, 0
        %v5107 = vsel %vm4659, 1, 0
        %v5108 = vsel %vm4660, 1, 0
        %v5109 = vsel %vm4661, 1, 0
        %v5110 = vsel %vm4662, 1, 0
        %v5111 = vsel %vm4663, 1, 0
        %v5112 = vsel %vm4664, 1, 0
        %v5113 = vsel %vm4665, 1, 0
        %v5114 = vsel %vm4666, 1, 0
        %v5115 = vsel %vm4667, 1, 0
        %v5116 = vsel %vm4668, 1, 0
        %v5117 = vsel %vm4669, 1, 0
        %v5118 = vsel %vm4670, 1, 0
        %v5119 = vsel %vm4671, 1, 0
        %v5120 = vsel %vm4672, 1, 0
        %v5121 = vsel %vm4673, 1, 0
        %v5122 = vsel %vm4674, 1, 0
        %v5123 = vsel %vm4675, 1, 0
        %v5124 = vsel %vm4676, 1, 0
        %v5125 = vsel %vm4677, 1, 0
        %v5126 = vsel %vm4678, 1, 0
        %v5127 = vsel %vm4679, 1, 0
        %v5128 = vsel %vm4680, 1, 0
        %v5129 = vsel %vm4681, 1, 0
        %v5130 = vsel %vm4682, 1, 0
        %v5131 = vsel %vm4683, 1, 0
        %v5132 = vsel %vm4684, 1, 0
        %v5133 = vsel %vm4685, 1, 0
        %v5134 = vsel %vm4686, 1, 0
        %v5135 = vsel %vm4687, 1, 0
        %v5136 = vsel %vm4688, 1, 0
        %v5137 = vsel %vm4689, 1, 0
        %v5138 = vsel %vm4690, 1, 0
        %v5139 = vsel %vm4691, 1, 0
        %v5140 = vsel %vm4692, 1, 0
        %v5141 = vsel %vm4693, 1, 0
        %v5142 = vsel %vm4694, 1, 0
        %v5143 = vsel %vm4695, 1, 0
        %v5144 = vsel %vm4696, 1, 0
        %v5145 = vsel %vm4697, 1, 0
        %v5146 = vsel %vm4698, 1, 0
        %v5147 = vsel %vm4699, 1, 0
        %v5148 = vsel %vm4700, 1, 0
        %v5149 = vsel %vm4701, 1, 0
        %v5150 = vsel %vm4702, 1, 0
        %v5151 = vsel %vm4703, 1, 0
        %v5152 = vsel %vm4704, 1, 0
        %v5153 = vsel %vm4705, 1, 0
        %vm5154 = vcmp.eq.s32.totalorder %v5090, 1
        %vm5155 = vcmp.eq.s32.totalorder %v5091, 1
        %vm5156 = vcmp.eq.s32.totalorder %v5092, 1
        %vm5157 = vcmp.eq.s32.totalorder %v5093, 1
        %vm5158 = vcmp.eq.s32.totalorder %v5094, 1
        %vm5159 = vcmp.eq.s32.totalorder %v5095, 1
        %vm5160 = vcmp.eq.s32.totalorder %v5096, 1
        %vm5161 = vcmp.eq.s32.totalorder %v5097, 1
        %vm5162 = vcmp.eq.s32.totalorder %v5098, 1
        %vm5163 = vcmp.eq.s32.totalorder %v5099, 1
        %vm5164 = vcmp.eq.s32.totalorder %v5100, 1
        %vm5165 = vcmp.eq.s32.totalorder %v5101, 1
        %vm5166 = vcmp.eq.s32.totalorder %v5102, 1
        %vm5167 = vcmp.eq.s32.totalorder %v5103, 1
        %vm5168 = vcmp.eq.s32.totalorder %v5104, 1
        %vm5169 = vcmp.eq.s32.totalorder %v5105, 1
        %vm5170 = vcmp.eq.s32.totalorder %v5106, 1
        %vm5171 = vcmp.eq.s32.totalorder %v5107, 1
        %vm5172 = vcmp.eq.s32.totalorder %v5108, 1
        %vm5173 = vcmp.eq.s32.totalorder %v5109, 1
        %vm5174 = vcmp.eq.s32.totalorder %v5110, 1
        %vm5175 = vcmp.eq.s32.totalorder %v5111, 1
        %vm5176 = vcmp.eq.s32.totalorder %v5112, 1
        %vm5177 = vcmp.eq.s32.totalorder %v5113, 1
        %vm5178 = vcmp.eq.s32.totalorder %v5114, 1
        %vm5179 = vcmp.eq.s32.totalorder %v5115, 1
        %vm5180 = vcmp.eq.s32.totalorder %v5116, 1
        %vm5181 = vcmp.eq.s32.totalorder %v5117, 1
        %vm5182 = vcmp.eq.s32.totalorder %v5118, 1
        %vm5183 = vcmp.eq.s32.totalorder %v5119, 1
        %vm5184 = vcmp.eq.s32.totalorder %v5120, 1
        %vm5185 = vcmp.eq.s32.totalorder %v5121, 1
        %vm5186 = vcmp.eq.s32.totalorder %v5122, 1
        %vm5187 = vcmp.eq.s32.totalorder %v5123, 1
        %vm5188 = vcmp.eq.s32.totalorder %v5124, 1
        %vm5189 = vcmp.eq.s32.totalorder %v5125, 1
        %vm5190 = vcmp.eq.s32.totalorder %v5126, 1
        %vm5191 = vcmp.eq.s32.totalorder %v5127, 1
        %vm5192 = vcmp.eq.s32.totalorder %v5128, 1
        %vm5193 = vcmp.eq.s32.totalorder %v5129, 1
        %vm5194 = vcmp.eq.s32.totalorder %v5130, 1
        %vm5195 = vcmp.eq.s32.totalorder %v5131, 1
        %vm5196 = vcmp.eq.s32.totalorder %v5132, 1
        %vm5197 = vcmp.eq.s32.totalorder %v5133, 1
        %vm5198 = vcmp.eq.s32.totalorder %v5134, 1
        %vm5199 = vcmp.eq.s32.totalorder %v5135, 1
        %vm5200 = vcmp.eq.s32.totalorder %v5136, 1
        %vm5201 = vcmp.eq.s32.totalorder %v5137, 1
        %vm5202 = vcmp.eq.s32.totalorder %v5138, 1
        %vm5203 = vcmp.eq.s32.totalorder %v5139, 1
        %vm5204 = vcmp.eq.s32.totalorder %v5140, 1
        %vm5205 = vcmp.eq.s32.totalorder %v5141, 1
        %vm5206 = vcmp.eq.s32.totalorder %v5142, 1
        %vm5207 = vcmp.eq.s32.totalorder %v5143, 1
        %vm5208 = vcmp.eq.s32.totalorder %v5144, 1
        %vm5209 = vcmp.eq.s32.totalorder %v5145, 1
        %vm5210 = vcmp.eq.s32.totalorder %v5146, 1
        %vm5211 = vcmp.eq.s32.totalorder %v5147, 1
        %vm5212 = vcmp.eq.s32.totalorder %v5148, 1
        %vm5213 = vcmp.eq.s32.totalorder %v5149, 1
        %vm5214 = vcmp.eq.s32.totalorder %v5150, 1
        %vm5215 = vcmp.eq.s32.totalorder %v5151, 1
        %vm5216 = vcmp.eq.s32.totalorder %v5152, 1
        %vm5217 = vcmp.eq.s32.totalorder %v5153, 1
        %v5218 = vsel %vm5154, %v1441, 0.0
        %v5219 = vsel %vm5155, %v1442, 0.0
        %v5220 = vsel %vm5156, %v1443, 0.0
        %v5221 = vsel %vm5157, %v1444, 0.0
        %v5222 = vsel %vm5158, %v1445, 0.0
        %v5223 = vsel %vm5159, %v1446, 0.0
        %v5224 = vsel %vm5160, %v1447, 0.0
        %v5225 = vsel %vm5161, %v1448, 0.0
        %v5226 = vsel %vm5162, %v1449, 0.0
        %v5227 = vsel %vm5163, %v1450, 0.0
        %v5228 = vsel %vm5164, %v1451, 0.0
        %v5229 = vsel %vm5165, %v1452, 0.0
        %v5230 = vsel %vm5166, %v1453, 0.0
        %v5231 = vsel %vm5167, %v1454, 0.0
        %v5232 = vsel %vm5168, %v1455, 0.0
        %v5233 = vsel %vm5169, %v1456, 0.0
        %v5234 = vsel %vm5170, %v1457, 0.0
        %v5235 = vsel %vm5171, %v1458, 0.0
        %v5236 = vsel %vm5172, %v1459, 0.0
        %v5237 = vsel %vm5173, %v1460, 0.0
        %v5238 = vsel %vm5174, %v1461, 0.0
        %v5239 = vsel %vm5175, %v1462, 0.0
        %v5240 = vsel %vm5176, %v1463, 0.0
        %v5241 = vsel %vm5177, %v1464, 0.0
        %v5242 = vsel %vm5178, %v1465, 0.0
        %v5243 = vsel %vm5179, %v1466, 0.0
        %v5244 = vsel %vm5180, %v1467, 0.0
        %v5245 = vsel %vm5181, %v1468, 0.0
        %v5246 = vsel %vm5182, %v1469, 0.0
        %v5247 = vsel %vm5183, %v1470, 0.0
        %v5248 = vsel %vm5184, %v1471, 0.0
        %v5249 = vsel %vm5185, %v1472, 0.0
        %v5250 = vsel %vm5186, %v1473, 0.0
        %v5251 = vsel %vm5187, %v1474, 0.0
        %v5252 = vsel %vm5188, %v1475, 0.0
        %v5253 = vsel %vm5189, %v1476, 0.0
        %v5254 = vsel %vm5190, %v1477, 0.0
        %v5255 = vsel %vm5191, %v1478, 0.0
        %v5256 = vsel %vm5192, %v1479, 0.0
        %v5257 = vsel %vm5193, %v1480, 0.0
        %v5258 = vsel %vm5194, %v1481, 0.0
        %v5259 = vsel %vm5195, %v1482, 0.0
        %v5260 = vsel %vm5196, %v1483, 0.0
        %v5261 = vsel %vm5197, %v1484, 0.0
        %v5262 = vsel %vm5198, %v1485, 0.0
        %v5263 = vsel %vm5199, %v1486, 0.0
        %v5264 = vsel %vm5200, %v1487, 0.0
        %v5265 = vsel %vm5201, %v1488, 0.0
        %v5266 = vsel %vm5202, %v1489, 0.0
        %v5267 = vsel %vm5203, %v1490, 0.0
        %v5268 = vsel %vm5204, %v1491, 0.0
        %v5269 = vsel %vm5205, %v1492, 0.0
        %v5270 = vsel %vm5206, %v1493, 0.0
        %v5271 = vsel %vm5207, %v1494, 0.0
        %v5272 = vsel %vm5208, %v1495, 0.0
        %v5273 = vsel %vm5209, %v1496, 0.0
        %v5274 = vsel %vm5210, %v1497, 0.0
        %v5275 = vsel %vm5211, %v1498, 0.0
        %v5276 = vsel %vm5212, %v1499, 0.0
        %v5277 = vsel %vm5213, %v1500, 0.0
        %v5278 = vsel %vm5214, %v1501, 0.0
        %v5279 = vsel %vm5215, %v1502, 0.0
        %v5280 = vsel %vm5216, %v1439, 0.0
        %v5281 = vsel %vm5217, %v1440, 0.0
        %v5282 = vpack.c.bf16 %v5218, %v5218
        %v5283 = vpack.c.bf16 %v5219, %v5219
        %v5284 = vpack.c.bf16 %v5220, %v5220
        %v5285 = vpack.c.bf16 %v5221, %v5221
        %v5286 = vpack.c.bf16 %v5222, %v5222
        %v5287 = vpack.c.bf16 %v5223, %v5223
        %v5288 = vpack.c.bf16 %v5224, %v5224
        %v5289 = vpack.c.bf16 %v5225, %v5225
        %v5290 = vpack.c.bf16 %v5226, %v5226
        %v5291 = vpack.c.bf16 %v5227, %v5227
        %v5292 = vpack.c.bf16 %v5228, %v5228
        %v5293 = vpack.c.bf16 %v5229, %v5229
        %v5294 = vpack.c.bf16 %v5230, %v5230
        %v5295 = vpack.c.bf16 %v5231, %v5231
        %v5296 = vpack.c.bf16 %v5232, %v5232
        %v5297 = vpack.c.bf16 %v5233, %v5233
        %v5298 = vpack.c.bf16 %v5234, %v5234
        %v5299 = vpack.c.bf16 %v5235, %v5235
        %v5300 = vpack.c.bf16 %v5236, %v5236
        %v5301 = vpack.c.bf16 %v5237, %v5237
        %v5302 = vpack.c.bf16 %v5238, %v5238
        %v5303 = vpack.c.bf16 %v5239, %v5239
        %v5304 = vpack.c.bf16 %v5240, %v5240
        %v5305 = vpack.c.bf16 %v5241, %v5241
        %v5306 = vpack.c.bf16 %v5242, %v5242
        %v5307 = vpack.c.bf16 %v5243, %v5243
        %v5308 = vpack.c.bf16 %v5244, %v5244
        %v5309 = vpack.c.bf16 %v5245, %v5245
        %v5310 = vpack.c.bf16 %v5246, %v5246
        %v5311 = vpack.c.bf16 %v5247, %v5247
        %v5312 = vpack.c.bf16 %v5248, %v5248
        %v5313 = vpack.c.bf16 %v5249, %v5249
        %v5314 = vpack.c.bf16 %v5250, %v5250
        %v5315 = vpack.c.bf16 %v5251, %v5251
        %v5316 = vpack.c.bf16 %v5252, %v5252
        %v5317 = vpack.c.bf16 %v5253, %v5253
        %v5318 = vpack.c.bf16 %v5254, %v5254
        %v5319 = vpack.c.bf16 %v5255, %v5255
        %v5320 = vpack.c.bf16 %v5256, %v5256
        %v5321 = vpack.c.bf16 %v5257, %v5257
        %v5322 = vpack.c.bf16 %v5258, %v5258
        %v5323 = vpack.c.bf16 %v5259, %v5259
        %v5324 = vpack.c.bf16 %v5260, %v5260
        %v5325 = vpack.c.bf16 %v5261, %v5261
        %v5326 = vpack.c.bf16 %v5262, %v5262
        %v5327 = vpack.c.bf16 %v5263, %v5263
        %v5328 = vpack.c.bf16 %v5264, %v5264
        %v5329 = vpack.c.bf16 %v5265, %v5265
        %v5330 = vpack.c.bf16 %v5266, %v5266
        %v5331 = vpack.c.bf16 %v5267, %v5267
        %v5332 = vpack.c.bf16 %v5268, %v5268
        %v5333 = vpack.c.bf16 %v5269, %v5269
        %v5334 = vpack.c.bf16 %v5270, %v5270
        %v5335 = vpack.c.bf16 %v5271, %v5271
        %v5336 = vpack.c.bf16 %v5272, %v5272
        %v5337 = vpack.c.bf16 %v5273, %v5273
        %v5338 = vpack.c.bf16 %v5274, %v5274
        %v5339 = vpack.c.bf16 %v5275, %v5275
        %v5340 = vpack.c.bf16 %v5276, %v5276
        %v5341 = vpack.c.bf16 %v5277, %v5277
        %v5342 = vpack.c.bf16 %v5278, %v5278
        %v5343 = vpack.c.bf16 %v5279, %v5279
        %v5344 = vpack.c.bf16 %v5280, %v5280
        %v5345 = vpack.c.bf16 %v5281, %v5281
        %5346 = vst [vmem:[#allocation2 + $0x1c] sm:$0xf] %v5282
        %5347 = vst [vmem:[#allocation2 + $0x40] sm:$0xf] %v5283
        %5348 = vst [vmem:[#allocation2 + $0x64] sm:$0xf] %v5284
        %5349 = vst [vmem:[#allocation2 + $0x88] sm:$0xf] %v5285
        %5350 = vst [vmem:[#allocation2 + $0xac] sm:$0xf] %v5286
        %5351 = vst [vmem:[#allocation2 + $0xd0] sm:$0xf] %v5287
        %5352 = vst [vmem:[#allocation2 + $0xf4] sm:$0xf] %v5288
        %5353 = vst [vmem:[#allocation2 + $0x118] sm:$0xf] %v5289
        %5354 = vst [vmem:[#allocation2 + $0x13c] sm:$0xf] %v5290
        %5355 = vst [vmem:[#allocation2 + $0x160] sm:$0xf] %v5291
        %5356 = vst [vmem:[#allocation2 + $0x184] sm:$0xf] %v5292
        %5357 = vst [vmem:[#allocation2 + $0x1a8] sm:$0xf] %v5293
        %5358 = vst [vmem:[#allocation2 + $0x1cc] sm:$0xf] %v5294
        %5359 = vst [vmem:[#allocation2 + $0x1f0] sm:$0xf] %v5295
        %5360 = vst [vmem:[#allocation2 + $0x214] sm:$0xf] %v5296
        %5361 = vst [vmem:[#allocation2 + $0x238] sm:$0xf] %v5297
        %5362 = vst [vmem:[#allocation2 + $0x25c] sm:$0xf] %v5298
        %5363 = vst [vmem:[#allocation2 + $0x280] sm:$0xf] %v5299
        %5364 = vst [vmem:[#allocation2 + $0x2a4] sm:$0xf] %v5300
        %5365 = vst [vmem:[#allocation2 + $0x2c8] sm:$0xf] %v5301
        %5366 = vst [vmem:[#allocation2 + $0x2ec] sm:$0xf] %v5302
        %5367 = vst [vmem:[#allocation2 + $0x310] sm:$0xf] %v5303
        %5368 = vst [vmem:[#allocation2 + $0x334] sm:$0xf] %v5304
        %5369 = vst [vmem:[#allocation2 + $0x358] sm:$0xf] %v5305
        %5370 = vst [vmem:[#allocation2 + $0x37c] sm:$0xf] %v5306
        %5371 = vst [vmem:[#allocation2 + $0x3a0] sm:$0xf] %v5307
        %5372 = vst [vmem:[#allocation2 + $0x3c4] sm:$0xf] %v5308
        %5373 = vst [vmem:[#allocation2 + $0x3e8] sm:$0xf] %v5309
        %5374 = vst [vmem:[#allocation2 + $0x40c] sm:$0xf] %v5310
        %5375 = vst [vmem:[#allocation2 + $0x430] sm:$0xf] %v5311
        %5376 = vst [vmem:[#allocation2 + $0x454] sm:$0xf] %v5312
        %5377 = vst [vmem:[#allocation2 + $0x478] sm:$0xf] %v5313
        %5378 = vst [vmem:[#allocation2 + $0x49c] sm:$0xf] %v5314
        %5379 = vst [vmem:[#allocation2 + $0x4c0] sm:$0xf] %v5315
        %5380 = vst [vmem:[#allocation2 + $0x4e4] sm:$0xf] %v5316
        %5381 = vst [vmem:[#allocation2 + $0x508] sm:$0xf] %v5317
        %5382 = vst [vmem:[#allocation2 + $0x52c] sm:$0xf] %v5318
        %5383 = vst [vmem:[#allocation2 + $0x550] sm:$0xf] %v5319
        %5384 = vst [vmem:[#allocation2 + $0x574] sm:$0xf] %v5320
        %5385 = vst [vmem:[#allocation2 + $0x598] sm:$0xf] %v5321
        %5386 = vst [vmem:[#allocation2 + $0x5bc] sm:$0xf] %v5322
        %5387 = vst [vmem:[#allocation2 + $0x5e0] sm:$0xf] %v5323
        %5388 = vst [vmem:[#allocation2 + $0x604] sm:$0xf] %v5324
        %5389 = vst [vmem:[#allocation2 + $0x628] sm:$0xf] %v5325
        %5390 = vst [vmem:[#allocation2 + $0x64c] sm:$0xf] %v5326
        %5391 = vst [vmem:[#allocation2 + $0x670] sm:$0xf] %v5327
        %5392 = vst [vmem:[#allocation2 + $0x694] sm:$0xf] %v5328
        %5393 = vst [vmem:[#allocation2 + $0x6b8] sm:$0xf] %v5329
        %5394 = vst [vmem:[#allocation2 + $0x6dc] sm:$0xf] %v5330
        %5395 = vst [vmem:[#allocation2 + $0x700] sm:$0xf] %v5331
        %5396 = vst [vmem:[#allocation2 + $0x724] sm:$0xf] %v5332
        %5397 = vst [vmem:[#allocation2 + $0x748] sm:$0xf] %v5333
        %5398 = vst [vmem:[#allocation2 + $0x76c] sm:$0xf] %v5334
        %5399 = vst [vmem:[#allocation2 + $0x790] sm:$0xf] %v5335
        %5400 = vst [vmem:[#allocation2 + $0x7b4] sm:$0xf] %v5336
        %5401 = vst [vmem:[#allocation2 + $0x7d8] sm:$0xf] %v5337
        %5402 = vst [vmem:[#allocation2 + $0x7fc] sm:$0xf] %v5338
        %5403 = vst [vmem:[#allocation2 + $0x820] sm:$0xf] %v5339
        %5404 = vst [vmem:[#allocation2 + $0x844] sm:$0xf] %v5340
        %5405 = vst [vmem:[#allocation2 + $0x868] sm:$0xf] %v5341
        %5406 = vst [vmem:[#allocation2 + $0x88c] sm:$0xf] %v5342
        %5407 = vst [vmem:[#allocation2 + $0x8b0] sm:$0xf] %v5343
        %5408 = vst [vmem:[#allocation2 + $0x8d4] sm:$0xf] %v5344
        %5409 = vst [vmem:[#allocation2 + $0x8f8] sm:$0xf] %v5345
        %vm5410 = vmand %vm4642, %vm3426
        %vm5411 = vmand %vm4643, %vm3427
        %vm5412 = vmand %vm4644, %vm3428
        %vm5413 = vmand %vm4645, %vm3429
        %vm5414 = vmand %vm4646, %vm3430
        %vm5415 = vmand %vm4647, %vm3431
        %vm5416 = vmand %vm4648, %vm3432
        %vm5417 = vmand %vm4649, %vm3433
        %vm5418 = vmand %vm4650, %vm3434
        %vm5419 = vmand %vm4651, %vm3435
        %vm5420 = vmand %vm4652, %vm3436
        %vm5421 = vmand %vm4653, %vm3437
        %vm5422 = vmand %vm4654, %vm3438
        %vm5423 = vmand %vm4655, %vm3439
        %vm5424 = vmand %vm4656, %vm3440
        %vm5425 = vmand %vm4657, %vm3441
        %vm5426 = vmand %vm4658, %vm3442
        %vm5427 = vmand %vm4659, %vm3443
        %vm5428 = vmand %vm4660, %vm3444
        %vm5429 = vmand %vm4661, %vm3445
        %vm5430 = vmand %vm4662, %vm3446
        %vm5431 = vmand %vm4663, %vm3447
        %vm5432 = vmand %vm4664, %vm3448
        %vm5433 = vmand %vm4665, %vm3449
        %vm5434 = vmand %vm4666, %vm3450
        %vm5435 = vmand %vm4667, %vm3451
        %vm5436 = vmand %vm4668, %vm3452
        %vm5437 = vmand %vm4669, %vm3453
        %vm5438 = vmand %vm4670, %vm3454
        %vm5439 = vmand %vm4671, %vm3455
        %vm5440 = vmand %vm4672, %vm3456
        %vm5441 = vmand %vm4673, %vm3457
        %vm5442 = vmand %vm4674, %vm3458
        %vm5443 = vmand %vm4675, %vm3459
        %vm5444 = vmand %vm4676, %vm3460
        %vm5445 = vmand %vm4677, %vm3461
        %vm5446 = vmand %vm4678, %vm3462
        %vm5447 = vmand %vm4679, %vm3463
        %vm5448 = vmand %vm4680, %vm3464
        %vm5449 = vmand %vm4681, %vm3465
        %vm5450 = vmand %vm4682, %vm3466
        %vm5451 = vmand %vm4683, %vm3467
        %vm5452 = vmand %vm4684, %vm3468
        %vm5453 = vmand %vm4685, %vm3469
        %vm5454 = vmand %vm4686, %vm3470
        %vm5455 = vmand %vm4687, %vm3471
        %vm5456 = vmand %vm4688, %vm3472
        %vm5457 = vmand %vm4689, %vm3473
        %vm5458 = vmand %vm4690, %vm3474
        %vm5459 = vmand %vm4691, %vm3475
        %vm5460 = vmand %vm4692, %vm3476
        %vm5461 = vmand %vm4693, %vm3477
        %vm5462 = vmand %vm4694, %vm3478
        %vm5463 = vmand %vm4695, %vm3479
        %vm5464 = vmand %vm4696, %vm3480
        %vm5465 = vmand %vm4697, %vm3481
        %vm5466 = vmand %vm4698, %vm3482
        %vm5467 = vmand %vm4699, %vm3483
        %vm5468 = vmand %vm4700, %vm3484
        %vm5469 = vmand %vm4701, %vm3485
        %vm5470 = vmand %vm4702, %vm3486
        %vm5471 = vmand %vm4703, %vm3487
        %vm5472 = vmand %vm4704, %vm3488
        %vm5473 = vmand %vm4705, %vm3489
        %v5474 = vsel %vm5410, 1, 0
        %v5475 = vsel %vm5411, 1, 0
        %v5476 = vsel %vm5412, 1, 0
        %v5477 = vsel %vm5413, 1, 0
        %v5478 = vsel %vm5414, 1, 0
        %v5479 = vsel %vm5415, 1, 0
        %v5480 = vsel %vm5416, 1, 0
        %v5481 = vsel %vm5417, 1, 0
        %v5482 = vsel %vm5418, 1, 0
        %v5483 = vsel %vm5419, 1, 0
        %v5484 = vsel %vm5420, 1, 0
        %v5485 = vsel %vm5421, 1, 0
        %v5486 = vsel %vm5422, 1, 0
        %v5487 = vsel %vm5423, 1, 0
        %v5488 = vsel %vm5424, 1, 0
        %v5489 = vsel %vm5425, 1, 0
        %v5490 = vsel %vm5426, 1, 0
        %v5491 = vsel %vm5427, 1, 0
        %v5492 = vsel %vm5428, 1, 0
        %v5493 = vsel %vm5429, 1, 0
        %v5494 = vsel %vm5430, 1, 0
        %v5495 = vsel %vm5431, 1, 0
        %v5496 = vsel %vm5432, 1, 0
        %v5497 = vsel %vm5433, 1, 0
        %v5498 = vsel %vm5434, 1, 0
        %v5499 = vsel %vm5435, 1, 0
        %v5500 = vsel %vm5436, 1, 0
        %v5501 = vsel %vm5437, 1, 0
        %v5502 = vsel %vm5438, 1, 0
        %v5503 = vsel %vm5439, 1, 0
        %v5504 = vsel %vm5440, 1, 0
        %v5505 = vsel %vm5441, 1, 0
        %v5506 = vsel %vm5442, 1, 0
        %v5507 = vsel %vm5443, 1, 0
        %v5508 = vsel %vm5444, 1, 0
        %v5509 = vsel %vm5445, 1, 0
        %v5510 = vsel %vm5446, 1, 0
        %v5511 = vsel %vm5447, 1, 0
        %v5512 = vsel %vm5448, 1, 0
        %v5513 = vsel %vm5449, 1, 0
        %v5514 = vsel %vm5450, 1, 0
        %v5515 = vsel %vm5451, 1, 0
        %v5516 = vsel %vm5452, 1, 0
        %v5517 = vsel %vm5453, 1, 0
        %v5518 = vsel %vm5454, 1, 0
        %v5519 = vsel %vm5455, 1, 0
        %v5520 = vsel %vm5456, 1, 0
        %v5521 = vsel %vm5457, 1, 0
        %v5522 = vsel %vm5458, 1, 0
        %v5523 = vsel %vm5459, 1, 0
        %v5524 = vsel %vm5460, 1, 0
        %v5525 = vsel %vm5461, 1, 0
        %v5526 = vsel %vm5462, 1, 0
        %v5527 = vsel %vm5463, 1, 0
        %v5528 = vsel %vm5464, 1, 0
        %v5529 = vsel %vm5465, 1, 0
        %v5530 = vsel %vm5466, 1, 0
        %v5531 = vsel %vm5467, 1, 0
        %v5532 = vsel %vm5468, 1, 0
        %v5533 = vsel %vm5469, 1, 0
        %v5534 = vsel %vm5470, 1, 0
        %v5535 = vsel %vm5471, 1, 0
        %v5536 = vsel %vm5472, 1, 0
        %v5537 = vsel %vm5473, 1, 0
        %vm5538 = vcmp.eq.s32.totalorder %v5474, 1
        %vm5539 = vcmp.eq.s32.totalorder %v5475, 1
        %vm5540 = vcmp.eq.s32.totalorder %v5476, 1
        %vm5541 = vcmp.eq.s32.totalorder %v5477, 1
        %vm5542 = vcmp.eq.s32.totalorder %v5478, 1
        %vm5543 = vcmp.eq.s32.totalorder %v5479, 1
        %vm5544 = vcmp.eq.s32.totalorder %v5480, 1
        %vm5545 = vcmp.eq.s32.totalorder %v5481, 1
        %vm5546 = vcmp.eq.s32.totalorder %v5482, 1
        %vm5547 = vcmp.eq.s32.totalorder %v5483, 1
        %vm5548 = vcmp.eq.s32.totalorder %v5484, 1
        %vm5549 = vcmp.eq.s32.totalorder %v5485, 1
        %vm5550 = vcmp.eq.s32.totalorder %v5486, 1
        %vm5551 = vcmp.eq.s32.totalorder %v5487, 1
        %vm5552 = vcmp.eq.s32.totalorder %v5488, 1
        %vm5553 = vcmp.eq.s32.totalorder %v5489, 1
        %vm5554 = vcmp.eq.s32.totalorder %v5490, 1
        %vm5555 = vcmp.eq.s32.totalorder %v5491, 1
        %vm5556 = vcmp.eq.s32.totalorder %v5492, 1
        %vm5557 = vcmp.eq.s32.totalorder %v5493, 1
        %vm5558 = vcmp.eq.s32.totalorder %v5494, 1
        %vm5559 = vcmp.eq.s32.totalorder %v5495, 1
        %vm5560 = vcmp.eq.s32.totalorder %v5496, 1
        %vm5561 = vcmp.eq.s32.totalorder %v5497, 1
        %vm5562 = vcmp.eq.s32.totalorder %v5498, 1
        %vm5563 = vcmp.eq.s32.totalorder %v5499, 1
        %vm5564 = vcmp.eq.s32.totalorder %v5500, 1
        %vm5565 = vcmp.eq.s32.totalorder %v5501, 1
        %vm5566 = vcmp.eq.s32.totalorder %v5502, 1
        %vm5567 = vcmp.eq.s32.totalorder %v5503, 1
        %vm5568 = vcmp.eq.s32.totalorder %v5504, 1
        %vm5569 = vcmp.eq.s32.totalorder %v5505, 1
        %vm5570 = vcmp.eq.s32.totalorder %v5506, 1
        %vm5571 = vcmp.eq.s32.totalorder %v5507, 1
        %vm5572 = vcmp.eq.s32.totalorder %v5508, 1
        %vm5573 = vcmp.eq.s32.totalorder %v5509, 1
        %vm5574 = vcmp.eq.s32.totalorder %v5510, 1
        %vm5575 = vcmp.eq.s32.totalorder %v5511, 1
        %vm5576 = vcmp.eq.s32.totalorder %v5512, 1
        %vm5577 = vcmp.eq.s32.totalorder %v5513, 1
        %vm5578 = vcmp.eq.s32.totalorder %v5514, 1
        %vm5579 = vcmp.eq.s32.totalorder %v5515, 1
        %vm5580 = vcmp.eq.s32.totalorder %v5516, 1
        %vm5581 = vcmp.eq.s32.totalorder %v5517, 1
        %vm5582 = vcmp.eq.s32.totalorder %v5518, 1
        %vm5583 = vcmp.eq.s32.totalorder %v5519, 1
        %vm5584 = vcmp.eq.s32.totalorder %v5520, 1
        %vm5585 = vcmp.eq.s32.totalorder %v5521, 1
        %vm5586 = vcmp.eq.s32.totalorder %v5522, 1
        %vm5587 = vcmp.eq.s32.totalorder %v5523, 1
        %vm5588 = vcmp.eq.s32.totalorder %v5524, 1
        %vm5589 = vcmp.eq.s32.totalorder %v5525, 1
        %vm5590 = vcmp.eq.s32.totalorder %v5526, 1
        %vm5591 = vcmp.eq.s32.totalorder %v5527, 1
        %vm5592 = vcmp.eq.s32.totalorder %v5528, 1
        %vm5593 = vcmp.eq.s32.totalorder %v5529, 1
        %vm5594 = vcmp.eq.s32.totalorder %v5530, 1
        %vm5595 = vcmp.eq.s32.totalorder %v5531, 1
        %vm5596 = vcmp.eq.s32.totalorder %v5532, 1
        %vm5597 = vcmp.eq.s32.totalorder %v5533, 1
        %vm5598 = vcmp.eq.s32.totalorder %v5534, 1
        %vm5599 = vcmp.eq.s32.totalorder %v5535, 1
        %vm5600 = vcmp.eq.s32.totalorder %v5536, 1
        %vm5601 = vcmp.eq.s32.totalorder %v5537, 1
        %v5602 = vsel %vm5538, %v3422, 0.0
        %v5603 = vsel %vm5539, %v3421, 0.0
        %v5604 = vsel %vm5540, %v3420, 0.0
        %v5605 = vsel %vm5541, %v3419, 0.0
        %v5606 = vsel %vm5542, %v3418, 0.0
        %v5607 = vsel %vm5543, %v3417, 0.0
        %v5608 = vsel %vm5544, %v3416, 0.0
        %v5609 = vsel %vm5545, %v3415, 0.0
        %v5610 = vsel %vm5546, %v3414, 0.0
        %v5611 = vsel %vm5547, %v3413, 0.0
        %v5612 = vsel %vm5548, %v3412, 0.0
        %v5613 = vsel %vm5549, %v3411, 0.0
        %v5614 = vsel %vm5550, %v3410, 0.0
        %v5615 = vsel %vm5551, %v3409, 0.0
        %v5616 = vsel %vm5552, %v3408, 0.0
        %v5617 = vsel %vm5553, %v3407, 0.0
        %v5618 = vsel %vm5554, %v3406, 0.0
        %v5619 = vsel %vm5555, %v3405, 0.0
        %v5620 = vsel %vm5556, %v3404, 0.0
        %v5621 = vsel %vm5557, %v3403, 0.0
        %v5622 = vsel %vm5558, %v3402, 0.0
        %v5623 = vsel %vm5559, %v3401, 0.0
        %v5624 = vsel %vm5560, %v3400, 0.0
        %v5625 = vsel %vm5561, %v3399, 0.0
        %v5626 = vsel %vm5562, %v3398, 0.0
        %v5627 = vsel %vm5563, %v3397, 0.0
        %v5628 = vsel %vm5564, %v3396, 0.0
        %v5629 = vsel %vm5565, %v3395, 0.0
        %v5630 = vsel %vm5566, %v3394, 0.0
        %v5631 = vsel %vm5567, %v3393, 0.0
        %v5632 = vsel %vm5568, %v3392, 0.0
        %v5633 = vsel %vm5569, %v3391, 0.0
        %v5634 = vsel %vm5570, %v3390, 0.0
        %v5635 = vsel %vm5571, %v3389, 0.0
        %v5636 = vsel %vm5572, %v3388, 0.0
        %v5637 = vsel %vm5573, %v3387, 0.0
        %v5638 = vsel %vm5574, %v3386, 0.0
        %v5639 = vsel %vm5575, %v3385, 0.0
        %v5640 = vsel %vm5576, %v3384, 0.0
        %v5641 = vsel %vm5577, %v3383, 0.0
        %v5642 = vsel %vm5578, %v3382, 0.0
        %v5643 = vsel %vm5579, %v3381, 0.0
        %v5644 = vsel %vm5580, %v3380, 0.0
        %v5645 = vsel %vm5581, %v3379, 0.0
        %v5646 = vsel %vm5582, %v3378, 0.0
        %v5647 = vsel %vm5583, %v3377, 0.0
        %v5648 = vsel %vm5584, %v3376, 0.0
        %v5649 = vsel %vm5585, %v3375, 0.0
        %v5650 = vsel %vm5586, %v3374, 0.0
        %v5651 = vsel %vm5587, %v3373, 0.0
        %v5652 = vsel %vm5588, %v3372, 0.0
        %v5653 = vsel %vm5589, %v3371, 0.0
        %v5654 = vsel %vm5590, %v3370, 0.0
        %v5655 = vsel %vm5591, %v3369, 0.0
        %v5656 = vsel %vm5592, %v3368, 0.0
        %v5657 = vsel %vm5593, %v3367, 0.0
        %v5658 = vsel %vm5594, %v3366, 0.0
        %v5659 = vsel %vm5595, %v3365, 0.0
        %v5660 = vsel %vm5596, %v3364, 0.0
        %v5661 = vsel %vm5597, %v3363, 0.0
        %v5662 = vsel %vm5598, %v3362, 0.0
        %v5663 = vsel %vm5599, %v3425, 0.0
        %v5664 = vsel %vm5600, %v3424, 0.0
        %v5665 = vsel %vm5601, %v3423, 0.0
        %v5666 = vpack.c.bf16 %v5602, %v5602
        %v5667 = vpack.c.bf16 %v5603, %v5603
        %v5668 = vpack.c.bf16 %v5604, %v5604
        %v5669 = vpack.c.bf16 %v5605, %v5605
        %v5670 = vpack.c.bf16 %v5606, %v5606
        %v5671 = vpack.c.bf16 %v5607, %v5607
        %v5672 = vpack.c.bf16 %v5608, %v5608
        %v5673 = vpack.c.bf16 %v5609, %v5609
        %v5674 = vpack.c.bf16 %v5610, %v5610
        %v5675 = vpack.c.bf16 %v5611, %v5611
        %v5676 = vpack.c.bf16 %v5612, %v5612
        %v5677 = vpack.c.bf16 %v5613, %v5613
        %v5678 = vpack.c.bf16 %v5614, %v5614
        %v5679 = vpack.c.bf16 %v5615, %v5615
        %v5680 = vpack.c.bf16 %v5616, %v5616
        %v5681 = vpack.c.bf16 %v5617, %v5617
        %v5682 = vpack.c.bf16 %v5618, %v5618
        %v5683 = vpack.c.bf16 %v5619, %v5619
        %v5684 = vpack.c.bf16 %v5620, %v5620
        %v5685 = vpack.c.bf16 %v5621, %v5621
        %v5686 = vpack.c.bf16 %v5622, %v5622
        %v5687 = vpack.c.bf16 %v5623, %v5623
        %v5688 = vpack.c.bf16 %v5624, %v5624
        %v5689 = vpack.c.bf16 %v5625, %v5625
        %v5690 = vpack.c.bf16 %v5626, %v5626
        %v5691 = vpack.c.bf16 %v5627, %v5627
        %v5692 = vpack.c.bf16 %v5628, %v5628
        %v5693 = vpack.c.bf16 %v5629, %v5629
        %v5694 = vpack.c.bf16 %v5630, %v5630
        %v5695 = vpack.c.bf16 %v5631, %v5631
        %v5696 = vpack.c.bf16 %v5632, %v5632
        %v5697 = vpack.c.bf16 %v5633, %v5633
        %v5698 = vpack.c.bf16 %v5634, %v5634
        %v5699 = vpack.c.bf16 %v5635, %v5635
        %v5700 = vpack.c.bf16 %v5636, %v5636
        %v5701 = vpack.c.bf16 %v5637, %v5637
        %v5702 = vpack.c.bf16 %v5638, %v5638
        %v5703 = vpack.c.bf16 %v5639, %v5639
        %v5704 = vpack.c.bf16 %v5640, %v5640
        %v5705 = vpack.c.bf16 %v5641, %v5641
        %v5706 = vpack.c.bf16 %v5642, %v5642
        %v5707 = vpack.c.bf16 %v5643, %v5643
        %v5708 = vpack.c.bf16 %v5644, %v5644
        %v5709 = vpack.c.bf16 %v5645, %v5645
        %v5710 = vpack.c.bf16 %v5646, %v5646
        %v5711 = vpack.c.bf16 %v5647, %v5647
        %v5712 = vpack.c.bf16 %v5648, %v5648
        %v5713 = vpack.c.bf16 %v5649, %v5649
        %v5714 = vpack.c.bf16 %v5650, %v5650
        %v5715 = vpack.c.bf16 %v5651, %v5651
        %v5716 = vpack.c.bf16 %v5652, %v5652
        %v5717 = vpack.c.bf16 %v5653, %v5653
        %v5718 = vpack.c.bf16 %v5654, %v5654
        %v5719 = vpack.c.bf16 %v5655, %v5655
        %v5720 = vpack.c.bf16 %v5656, %v5656
        %v5721 = vpack.c.bf16 %v5657, %v5657
        %v5722 = vpack.c.bf16 %v5658, %v5658
        %v5723 = vpack.c.bf16 %v5659, %v5659
        %v5724 = vpack.c.bf16 %v5660, %v5660
        %v5725 = vpack.c.bf16 %v5661, %v5661
        %v5726 = vpack.c.bf16 %v5662, %v5662
        %v5727 = vpack.c.bf16 %v5663, %v5663
        %v5728 = vpack.c.bf16 %v5664, %v5664
        %v5729 = vpack.c.bf16 %v5665, %v5665
        %5730 = vst [vmem:[#allocation2 + $0x20] sm:$0xf] %v5666
        %5731 = vst [vmem:[#allocation2 + $0x44] sm:$0xf] %v5667
        %5732 = vst [vmem:[#allocation2 + $0x68] sm:$0xf] %v5668
        %5733 = vst [vmem:[#allocation2 + $0x8c] sm:$0xf] %v5669
        %5734 = vst [vmem:[#allocation2 + $0xb0] sm:$0xf] %v5670
        %5735 = vst [vmem:[#allocation2 + $0xd4] sm:$0xf] %v5671
        %5736 = vst [vmem:[#allocation2 + $0xf8] sm:$0xf] %v5672
        %5737 = vst [vmem:[#allocation2 + $0x11c] sm:$0xf] %v5673
        %5738 = vst [vmem:[#allocation2 + $0x140] sm:$0xf] %v5674
        %5739 = vst [vmem:[#allocation2 + $0x164] sm:$0xf] %v5675
        %5740 = vst [vmem:[#allocation2 + $0x188] sm:$0xf] %v5676
        %5741 = vst [vmem:[#allocation2 + $0x1ac] sm:$0xf] %v5677
        %5742 = vst [vmem:[#allocation2 + $0x1d0] sm:$0xf] %v5678
        %5743 = vst [vmem:[#allocation2 + $0x1f4] sm:$0xf] %v5679
        %5744 = vst [vmem:[#allocation2 + $0x218] sm:$0xf] %v5680
        %5745 = vst [vmem:[#allocation2 + $0x23c] sm:$0xf] %v5681
        %5746 = vst [vmem:[#allocation2 + $0x260] sm:$0xf] %v5682
        %5747 = vst [vmem:[#allocation2 + $0x284] sm:$0xf] %v5683
        %5748 = vst [vmem:[#allocation2 + $0x2a8] sm:$0xf] %v5684
        %5749 = vst [vmem:[#allocation2 + $0x2cc] sm:$0xf] %v5685
        %5750 = vst [vmem:[#allocation2 + $0x2f0] sm:$0xf] %v5686
        %5751 = vst [vmem:[#allocation2 + $0x314] sm:$0xf] %v5687
        %5752 = vst [vmem:[#allocation2 + $0x338] sm:$0xf] %v5688
        %5753 = vst [vmem:[#allocation2 + $0x35c] sm:$0xf] %v5689
        %5754 = vst [vmem:[#allocation2 + $0x380] sm:$0xf] %v5690
        %5755 = vst [vmem:[#allocation2 + $0x3a4] sm:$0xf] %v5691
        %5756 = vst [vmem:[#allocation2 + $0x3c8] sm:$0xf] %v5692
        %5757 = vst [vmem:[#allocation2 + $0x3ec] sm:$0xf] %v5693
        %5758 = vst [vmem:[#allocation2 + $0x410] sm:$0xf] %v5694
        %5759 = vst [vmem:[#allocation2 + $0x434] sm:$0xf] %v5695
        %5760 = vst [vmem:[#allocation2 + $0x458] sm:$0xf] %v5696
        %5761 = vst [vmem:[#allocation2 + $0x47c] sm:$0xf] %v5697
        %5762 = vst [vmem:[#allocation2 + $0x4a0] sm:$0xf] %v5698
        %5763 = vst [vmem:[#allocation2 + $0x4c4] sm:$0xf] %v5699
        %5764 = vst [vmem:[#allocation2 + $0x4e8] sm:$0xf] %v5700
        %5765 = vst [vmem:[#allocation2 + $0x50c] sm:$0xf] %v5701
        %5766 = vst [vmem:[#allocation2 + $0x530] sm:$0xf] %v5702
        %5767 = vst [vmem:[#allocation2 + $0x554] sm:$0xf] %v5703
        %5768 = vst [vmem:[#allocation2 + $0x578] sm:$0xf] %v5704
        %5769 = vst [vmem:[#allocation2 + $0x59c] sm:$0xf] %v5705
        %5770 = vst [vmem:[#allocation2 + $0x5c0] sm:$0xf] %v5706
        %5771 = vst [vmem:[#allocation2 + $0x5e4] sm:$0xf] %v5707
        %5772 = vst [vmem:[#allocation2 + $0x608] sm:$0xf] %v5708
        %5773 = vst [vmem:[#allocation2 + $0x62c] sm:$0xf] %v5709
        %5774 = vst [vmem:[#allocation2 + $0x650] sm:$0xf] %v5710
        %5775 = vst [vmem:[#allocation2 + $0x674] sm:$0xf] %v5711
        %5776 = vst [vmem:[#allocation2 + $0x698] sm:$0xf] %v5712
        %5777 = vst [vmem:[#allocation2 + $0x6bc] sm:$0xf] %v5713
        %5778 = vst [vmem:[#allocation2 + $0x6e0] sm:$0xf] %v5714
        %5779 = vst [vmem:[#allocation2 + $0x704] sm:$0xf] %v5715
        %5780 = vst [vmem:[#allocation2 + $0x728] sm:$0xf] %v5716
        %5781 = vst [vmem:[#allocation2 + $0x74c] sm:$0xf] %v5717
        %5782 = vst [vmem:[#allocation2 + $0x770] sm:$0xf] %v5718
        %5783 = vst [vmem:[#allocation2 + $0x794] sm:$0xf] %v5719
        %5784 = vst [vmem:[#allocation2 + $0x7b8] sm:$0xf] %v5720
        %5785 = vst [vmem:[#allocation2 + $0x7dc] sm:$0xf] %v5721
        %5786 = vst [vmem:[#allocation2 + $0x800] sm:$0xf] %v5722
        %5787 = vst [vmem:[#allocation2 + $0x824] sm:$0xf] %v5723
        %5788 = vst [vmem:[#allocation2 + $0x848] sm:$0xf] %v5724
        %5789 = vst [vmem:[#allocation2 + $0x86c] sm:$0xf] %v5725
        %5790 = vst [vmem:[#allocation2 + $0x890] sm:$0xf] %v5726
        %5791 = vst [vmem:[#allocation2 + $0x8b4] sm:$0xf] %v5727
        %5792 = vst [vmem:[#allocation2 + $0x8d8] sm:$0xf] %v5728
        %5793 = vst [vmem:[#allocation2 + $0x8fc] sm:$0xf] %v5729
        %v5794 = vld [vmem:[#allocation2] sm:$0xff]
        %v5795 = vld [vmem:[#allocation2 + $0x8] sm:$0xff]
        %v5796 = vld [vmem:[#allocation2 + $0x10] sm:$0xff]
        %v5797 = vld [vmem:[#allocation2 + $0x18] sm:$0xff]
        %v5798 = vld [vmem:[#allocation2 + $0x20] sm:$0xf]
        %v5799 = vld [vmem:[#allocation2 + $0x24] sm:$0xff]
        %v5800 = vld [vmem:[#allocation2 + $0x2c] sm:$0xff]
        %v5801 = vld [vmem:[#allocation2 + $0x34] sm:$0xff]
        %v5802 = vld [vmem:[#allocation2 + $0x3c] sm:$0xff]
        %v5803 = vld [vmem:[#allocation2 + $0x44] sm:$0xf]
        %v5804 = vld [vmem:[#allocation2 + $0x48] sm:$0xff]
        %v5805 = vld [vmem:[#allocation2 + $0x50] sm:$0xff]
        %v5806 = vld [vmem:[#allocation2 + $0x58] sm:$0xff]
        %v5807 = vld [vmem:[#allocation2 + $0x60] sm:$0xff]
        %v5808 = vld [vmem:[#allocation2 + $0x68] sm:$0xf]
        %v5809 = vld [vmem:[#allocation2 + $0x6c] sm:$0xff]
        %v5810 = vld [vmem:[#allocation2 + $0x74] sm:$0xff]
        %v5811 = vld [vmem:[#allocation2 + $0x7c] sm:$0xff]
        %v5812 = vld [vmem:[#allocation2 + $0x84] sm:$0xff]
        %v5813 = vld [vmem:[#allocation2 + $0x8c] sm:$0xf]
        %v5814 = vld [vmem:[#allocation2 + $0x90] sm:$0xff]
        %v5815 = vld [vmem:[#allocation2 + $0x98] sm:$0xff]
        %v5816 = vld [vmem:[#allocation2 + $0xa0] sm:$0xff]
        %v5817 = vld [vmem:[#allocation2 + $0xa8] sm:$0xff]
        %v5818 = vld [vmem:[#allocation2 + $0xb0] sm:$0xf]
        %v5819 = vld [vmem:[#allocation2 + $0xb4] sm:$0xff]
        %v5820 = vld [vmem:[#allocation2 + $0xbc] sm:$0xff]
        %v5821 = vld [vmem:[#allocation2 + $0xc4] sm:$0xff]
        %v5822 = vld [vmem:[#allocation2 + $0xcc] sm:$0xff]
        %v5823 = vld [vmem:[#allocation2 + $0xd4] sm:$0xf]
        %v5824 = vld [vmem:[#allocation2 + $0xd8] sm:$0xff]
        %v5825 = vld [vmem:[#allocation2 + $0xe0] sm:$0xff]
        %v5826 = vld [vmem:[#allocation2 + $0xe8] sm:$0xff]
        %v5827 = vld [vmem:[#allocation2 + $0xf0] sm:$0xff]
        %v5828 = vld [vmem:[#allocation2 + $0xf8] sm:$0xf]
        %v5829 = vld [vmem:[#allocation2 + $0xfc] sm:$0xff]
        %v5830 = vld [vmem:[#allocation2 + $0x104] sm:$0xff]
        %v5831 = vld [vmem:[#allocation2 + $0x10c] sm:$0xff]
        %v5832 = vld [vmem:[#allocation2 + $0x114] sm:$0xff]
        %v5833 = vld [vmem:[#allocation2 + $0x11c] sm:$0xf]
        %v5834 = vld [vmem:[#allocation2 + $0x120] sm:$0xff]
        %v5835 = vld [vmem:[#allocation2 + $0x128] sm:$0xff]
        %v5836 = vld [vmem:[#allocation2 + $0x130] sm:$0xff]
        %v5837 = vld [vmem:[#allocation2 + $0x138] sm:$0xff]
        %v5838 = vld [vmem:[#allocation2 + $0x140] sm:$0xf]
        %v5839 = vld [vmem:[#allocation2 + $0x144] sm:$0xff]
        %v5840 = vld [vmem:[#allocation2 + $0x14c] sm:$0xff]
        %v5841 = vld [vmem:[#allocation2 + $0x154] sm:$0xff]
        %v5842 = vld [vmem:[#allocation2 + $0x15c] sm:$0xff]
        %v5843 = vld [vmem:[#allocation2 + $0x164] sm:$0xf]
        %v5844 = vld [vmem:[#allocation2 + $0x168] sm:$0xff]
        %v5845 = vld [vmem:[#allocation2 + $0x170] sm:$0xff]
        %v5846 = vld [vmem:[#allocation2 + $0x178] sm:$0xff]
        %v5847 = vld [vmem:[#allocation2 + $0x180] sm:$0xff]
        %v5848 = vld [vmem:[#allocation2 + $0x188] sm:$0xf]
        %v5849 = vld [vmem:[#allocation2 + $0x18c] sm:$0xff]
        %v5850 = vld [vmem:[#allocation2 + $0x194] sm:$0xff]
        %v5851 = vld [vmem:[#allocation2 + $0x19c] sm:$0xff]
        %v5852 = vld [vmem:[#allocation2 + $0x1a4] sm:$0xff]
        %v5853 = vld [vmem:[#allocation2 + $0x1ac] sm:$0xf]
        %v5854 = vld [vmem:[#allocation2 + $0x1b0] sm:$0xff]
        %v5855 = vld [vmem:[#allocation2 + $0x1b8] sm:$0xff]
        %v5856 = vld [vmem:[#allocation2 + $0x1c0] sm:$0xff]
        %v5857 = vld [vmem:[#allocation2 + $0x1c8] sm:$0xff]
        %v5858 = vld [vmem:[#allocation2 + $0x1d0] sm:$0xf]
        %v5859 = vld [vmem:[#allocation2 + $0x1d4] sm:$0xff]
        %v5860 = vld [vmem:[#allocation2 + $0x1dc] sm:$0xff]
        %v5861 = vld [vmem:[#allocation2 + $0x1e4] sm:$0xff]
        %v5862 = vld [vmem:[#allocation2 + $0x1ec] sm:$0xff]
        %v5863 = vld [vmem:[#allocation2 + $0x1f4] sm:$0xf]
        %v5864 = vld [vmem:[#allocation2 + $0x1f8] sm:$0xff]
        %v5865 = vld [vmem:[#allocation2 + $0x200] sm:$0xff]
        %v5866 = vld [vmem:[#allocation2 + $0x208] sm:$0xff]
        %v5867 = vld [vmem:[#allocation2 + $0x210] sm:$0xff]
        %v5868 = vld [vmem:[#allocation2 + $0x218] sm:$0xf]
        %v5869 = vld [vmem:[#allocation2 + $0x21c] sm:$0xff]
        %v5870 = vld [vmem:[#allocation2 + $0x224] sm:$0xff]
        %v5871 = vld [vmem:[#allocation2 + $0x22c] sm:$0xff]
        %v5872 = vld [vmem:[#allocation2 + $0x234] sm:$0xff]
        %v5873 = vld [vmem:[#allocation2 + $0x23c] sm:$0xf]
        %v5874 = vld [vmem:[#allocation2 + $0x240] sm:$0xff]
        %v5875 = vld [vmem:[#allocation2 + $0x248] sm:$0xff]
        %v5876 = vld [vmem:[#allocation2 + $0x250] sm:$0xff]
        %v5877 = vld [vmem:[#allocation2 + $0x258] sm:$0xff]
        %v5878 = vld [vmem:[#allocation2 + $0x260] sm:$0xf]
        %v5879 = vld [vmem:[#allocation2 + $0x264] sm:$0xff]
        %v5880 = vld [vmem:[#allocation2 + $0x26c] sm:$0xff]
        %v5881 = vld [vmem:[#allocation2 + $0x274] sm:$0xff]
        %v5882 = vld [vmem:[#allocation2 + $0x27c] sm:$0xff]
        %v5883 = vld [vmem:[#allocation2 + $0x284] sm:$0xf]
        %v5884 = vld [vmem:[#allocation2 + $0x288] sm:$0xff]
        %v5885 = vld [vmem:[#allocation2 + $0x290] sm:$0xff]
        %v5886 = vld [vmem:[#allocation2 + $0x298] sm:$0xff]
        %v5887 = vld [vmem:[#allocation2 + $0x2a0] sm:$0xff]
        %v5888 = vld [vmem:[#allocation2 + $0x2a8] sm:$0xf]
        %v5889 = vld [vmem:[#allocation2 + $0x2ac] sm:$0xff]
        %v5890 = vld [vmem:[#allocation2 + $0x2b4] sm:$0xff]
        %v5891 = vld [vmem:[#allocation2 + $0x2bc] sm:$0xff]
        %v5892 = vld [vmem:[#allocation2 + $0x2c4] sm:$0xff]
        %v5893 = vld [vmem:[#allocation2 + $0x2cc] sm:$0xf]
        %v5894 = vld [vmem:[#allocation2 + $0x2d0] sm:$0xff]
        %v5895 = vld [vmem:[#allocation2 + $0x2d8] sm:$0xff]
        %v5896 = vld [vmem:[#allocation2 + $0x2e0] sm:$0xff]
        %v5897 = vld [vmem:[#allocation2 + $0x2e8] sm:$0xff]
        %v5898 = vld [vmem:[#allocation2 + $0x2f0] sm:$0xf]
        %v5899 = vld [vmem:[#allocation2 + $0x2f4] sm:$0xff]
        %v5900 = vld [vmem:[#allocation2 + $0x2fc] sm:$0xff]
        %v5901 = vld [vmem:[#allocation2 + $0x304] sm:$0xff]
        %v5902 = vld [vmem:[#allocation2 + $0x30c] sm:$0xff]
        %v5903 = vld [vmem:[#allocation2 + $0x314] sm:$0xf]
        %v5904 = vld [vmem:[#allocation2 + $0x318] sm:$0xff]
        %v5905 = vld [vmem:[#allocation2 + $0x320] sm:$0xff]
        %v5906 = vld [vmem:[#allocation2 + $0x328] sm:$0xff]
        %v5907 = vld [vmem:[#allocation2 + $0x330] sm:$0xff]
        %v5908 = vld [vmem:[#allocation2 + $0x338] sm:$0xf]
        %v5909 = vld [vmem:[#allocation2 + $0x33c] sm:$0xff]
        %v5910 = vld [vmem:[#allocation2 + $0x344] sm:$0xff]
        %v5911 = vld [vmem:[#allocation2 + $0x34c] sm:$0xff]
        %v5912 = vld [vmem:[#allocation2 + $0x354] sm:$0xff]
        %v5913 = vld [vmem:[#allocation2 + $0x35c] sm:$0xf]
        %v5914 = vld [vmem:[#allocation2 + $0x360] sm:$0xff]
        %v5915 = vld [vmem:[#allocation2 + $0x368] sm:$0xff]
        %v5916 = vld [vmem:[#allocation2 + $0x370] sm:$0xff]
        %v5917 = vld [vmem:[#allocation2 + $0x378] sm:$0xff]
        %v5918 = vld [vmem:[#allocation2 + $0x380] sm:$0xf]
        %v5919 = vld [vmem:[#allocation2 + $0x384] sm:$0xff]
        %v5920 = vld [vmem:[#allocation2 + $0x38c] sm:$0xff]
        %v5921 = vld [vmem:[#allocation2 + $0x394] sm:$0xff]
        %v5922 = vld [vmem:[#allocation2 + $0x39c] sm:$0xff]
        %v5923 = vld [vmem:[#allocation2 + $0x3a4] sm:$0xf]
        %v5924 = vld [vmem:[#allocation2 + $0x3a8] sm:$0xff]
        %v5925 = vld [vmem:[#allocation2 + $0x3b0] sm:$0xff]
        %v5926 = vld [vmem:[#allocation2 + $0x3b8] sm:$0xff]
        %v5927 = vld [vmem:[#allocation2 + $0x3c0] sm:$0xff]
        %v5928 = vld [vmem:[#allocation2 + $0x3c8] sm:$0xf]
        %v5929 = vld [vmem:[#allocation2 + $0x3cc] sm:$0xff]
        %v5930 = vld [vmem:[#allocation2 + $0x3d4] sm:$0xff]
        %v5931 = vld [vmem:[#allocation2 + $0x3dc] sm:$0xff]
        %v5932 = vld [vmem:[#allocation2 + $0x3e4] sm:$0xff]
        %v5933 = vld [vmem:[#allocation2 + $0x3ec] sm:$0xf]
        %v5934 = vld [vmem:[#allocation2 + $0x3f0] sm:$0xff]
        %v5935 = vld [vmem:[#allocation2 + $0x3f8] sm:$0xff]
        %v5936 = vld [vmem:[#allocation2 + $0x400] sm:$0xff]
        %v5937 = vld [vmem:[#allocation2 + $0x408] sm:$0xff]
        %v5938 = vld [vmem:[#allocation2 + $0x410] sm:$0xf]
        %v5939 = vld [vmem:[#allocation2 + $0x414] sm:$0xff]
        %v5940 = vld [vmem:[#allocation2 + $0x41c] sm:$0xff]
        %v5941 = vld [vmem:[#allocation2 + $0x424] sm:$0xff]
        %v5942 = vld [vmem:[#allocation2 + $0x42c] sm:$0xff]
        %v5943 = vld [vmem:[#allocation2 + $0x434] sm:$0xf]
        %v5944 = vld [vmem:[#allocation2 + $0x438] sm:$0xff]
        %v5945 = vld [vmem:[#allocation2 + $0x440] sm:$0xff]
        %v5946 = vld [vmem:[#allocation2 + $0x448] sm:$0xff]
        %v5947 = vld [vmem:[#allocation2 + $0x450] sm:$0xff]
        %v5948 = vld [vmem:[#allocation2 + $0x458] sm:$0xf]
        %v5949 = vld [vmem:[#allocation2 + $0x45c] sm:$0xff]
        %v5950 = vld [vmem:[#allocation2 + $0x464] sm:$0xff]
        %v5951 = vld [vmem:[#allocation2 + $0x46c] sm:$0xff]
        %v5952 = vld [vmem:[#allocation2 + $0x474] sm:$0xff]
        %v5953 = vld [vmem:[#allocation2 + $0x47c] sm:$0xf]
        %v5954 = vld [vmem:[#allocation2 + $0x480] sm:$0xff]
        %v5955 = vld [vmem:[#allocation2 + $0x488] sm:$0xff]
        %v5956 = vld [vmem:[#allocation2 + $0x490] sm:$0xff]
        %v5957 = vld [vmem:[#allocation2 + $0x498] sm:$0xff]
        %v5958 = vld [vmem:[#allocation2 + $0x4a0] sm:$0xf]
        %v5959 = vld [vmem:[#allocation2 + $0x4a4] sm:$0xff]
        %v5960 = vld [vmem:[#allocation2 + $0x4ac] sm:$0xff]
        %v5961 = vld [vmem:[#allocation2 + $0x4b4] sm:$0xff]
        %v5962 = vld [vmem:[#allocation2 + $0x4bc] sm:$0xff]
        %v5963 = vld [vmem:[#allocation2 + $0x4c4] sm:$0xf]
        %v5964 = vld [vmem:[#allocation2 + $0x4c8] sm:$0xff]
        %v5965 = vld [vmem:[#allocation2 + $0x4d0] sm:$0xff]
        %v5966 = vld [vmem:[#allocation2 + $0x4d8] sm:$0xff]
        %v5967 = vld [vmem:[#allocation2 + $0x4e0] sm:$0xff]
        %v5968 = vld [vmem:[#allocation2 + $0x4e8] sm:$0xf]
        %v5969 = vld [vmem:[#allocation2 + $0x4ec] sm:$0xff]
        %v5970 = vld [vmem:[#allocation2 + $0x4f4] sm:$0xff]
        %v5971 = vld [vmem:[#allocation2 + $0x4fc] sm:$0xff]
        %v5972 = vld [vmem:[#allocation2 + $0x504] sm:$0xff]
        %v5973 = vld [vmem:[#allocation2 + $0x50c] sm:$0xf]
        %v5974 = vld [vmem:[#allocation2 + $0x510] sm:$0xff]
        %v5975 = vld [vmem:[#allocation2 + $0x518] sm:$0xff]
        %v5976 = vld [vmem:[#allocation2 + $0x520] sm:$0xff]
        %v5977 = vld [vmem:[#allocation2 + $0x528] sm:$0xff]
        %v5978 = vld [vmem:[#allocation2 + $0x530] sm:$0xf]
        %v5979 = vld [vmem:[#allocation2 + $0x534] sm:$0xff]
        %v5980 = vld [vmem:[#allocation2 + $0x53c] sm:$0xff]
        %v5981 = vld [vmem:[#allocation2 + $0x544] sm:$0xff]
        %v5982 = vld [vmem:[#allocation2 + $0x54c] sm:$0xff]
        %v5983 = vld [vmem:[#allocation2 + $0x554] sm:$0xf]
        %v5984 = vld [vmem:[#allocation2 + $0x558] sm:$0xff]
        %v5985 = vld [vmem:[#allocation2 + $0x560] sm:$0xff]
        %v5986 = vld [vmem:[#allocation2 + $0x568] sm:$0xff]
        %v5987 = vld [vmem:[#allocation2 + $0x570] sm:$0xff]
        %v5988 = vld [vmem:[#allocation2 + $0x578] sm:$0xf]
        %v5989 = vld [vmem:[#allocation2 + $0x57c] sm:$0xff]
        %v5990 = vld [vmem:[#allocation2 + $0x584] sm:$0xff]
        %v5991 = vld [vmem:[#allocation2 + $0x58c] sm:$0xff]
        %v5992 = vld [vmem:[#allocation2 + $0x594] sm:$0xff]
        %v5993 = vld [vmem:[#allocation2 + $0x59c] sm:$0xf]
        %v5994 = vld [vmem:[#allocation2 + $0x5a0] sm:$0xff]
        %v5995 = vld [vmem:[#allocation2 + $0x5a8] sm:$0xff]
        %v5996 = vld [vmem:[#allocation2 + $0x5b0] sm:$0xff]
        %v5997 = vld [vmem:[#allocation2 + $0x5b8] sm:$0xff]
        %v5998 = vld [vmem:[#allocation2 + $0x5c0] sm:$0xf]
        %v5999 = vld [vmem:[#allocation2 + $0x5c4] sm:$0xff]
        %v6000 = vld [vmem:[#allocation2 + $0x5cc] sm:$0xff]
        %v6001 = vld [vmem:[#allocation2 + $0x5d4] sm:$0xff]
        %v6002 = vld [vmem:[#allocation2 + $0x5dc] sm:$0xff]
        %v6003 = vld [vmem:[#allocation2 + $0x5e4] sm:$0xf]
        %v6004 = vld [vmem:[#allocation2 + $0x5e8] sm:$0xff]
        %v6005 = vld [vmem:[#allocation2 + $0x5f0] sm:$0xff]
        %v6006 = vld [vmem:[#allocation2 + $0x5f8] sm:$0xff]
        %v6007 = vld [vmem:[#allocation2 + $0x600] sm:$0xff]
        %v6008 = vld [vmem:[#allocation2 + $0x608] sm:$0xf]
        %v6009 = vld [vmem:[#allocation2 + $0x60c] sm:$0xff]
        %v6010 = vld [vmem:[#allocation2 + $0x614] sm:$0xff]
        %v6011 = vld [vmem:[#allocation2 + $0x61c] sm:$0xff]
        %v6012 = vld [vmem:[#allocation2 + $0x624] sm:$0xff]
        %v6013 = vld [vmem:[#allocation2 + $0x62c] sm:$0xf]
        %v6014 = vld [vmem:[#allocation2 + $0x630] sm:$0xff]
        %v6015 = vld [vmem:[#allocation2 + $0x638] sm:$0xff]
        %v6016 = vld [vmem:[#allocation2 + $0x640] sm:$0xff]
        %v6017 = vld [vmem:[#allocation2 + $0x648] sm:$0xff]
        %v6018 = vld [vmem:[#allocation2 + $0x650] sm:$0xf]
        %v6019 = vld [vmem:[#allocation2 + $0x654] sm:$0xff]
        %v6020 = vld [vmem:[#allocation2 + $0x65c] sm:$0xff]
        %v6021 = vld [vmem:[#allocation2 + $0x664] sm:$0xff]
        %v6022 = vld [vmem:[#allocation2 + $0x66c] sm:$0xff]
        %v6023 = vld [vmem:[#allocation2 + $0x674] sm:$0xf]
        %v6024 = vld [vmem:[#allocation2 + $0x678] sm:$0xff]
        %v6025 = vld [vmem:[#allocation2 + $0x680] sm:$0xff]
        %v6026 = vld [vmem:[#allocation2 + $0x688] sm:$0xff]
        %v6027 = vld [vmem:[#allocation2 + $0x690] sm:$0xff]
        %v6028 = vld [vmem:[#allocation2 + $0x698] sm:$0xf]
        %v6029 = vld [vmem:[#allocation2 + $0x69c] sm:$0xff]
        %v6030 = vld [vmem:[#allocation2 + $0x6a4] sm:$0xff]
        %v6031 = vld [vmem:[#allocation2 + $0x6ac] sm:$0xff]
        %v6032 = vld [vmem:[#allocation2 + $0x6b4] sm:$0xff]
        %v6033 = vld [vmem:[#allocation2 + $0x6bc] sm:$0xf]
        %v6034 = vld [vmem:[#allocation2 + $0x6c0] sm:$0xff]
        %v6035 = vld [vmem:[#allocation2 + $0x6c8] sm:$0xff]
        %v6036 = vld [vmem:[#allocation2 + $0x6d0] sm:$0xff]
        %v6037 = vld [vmem:[#allocation2 + $0x6d8] sm:$0xff]
        %v6038 = vld [vmem:[#allocation2 + $0x6e0] sm:$0xf]
        %v6039 = vld [vmem:[#allocation2 + $0x6e4] sm:$0xff]
        %v6040 = vld [vmem:[#allocation2 + $0x6ec] sm:$0xff]
        %v6041 = vld [vmem:[#allocation2 + $0x6f4] sm:$0xff]
        %v6042 = vld [vmem:[#allocation2 + $0x6fc] sm:$0xff]
        %v6043 = vld [vmem:[#allocation2 + $0x704] sm:$0xf]
        %v6044 = vld [vmem:[#allocation2 + $0x708] sm:$0xff]
        %v6045 = vld [vmem:[#allocation2 + $0x710] sm:$0xff]
        %v6046 = vld [vmem:[#allocation2 + $0x718] sm:$0xff]
        %v6047 = vld [vmem:[#allocation2 + $0x720] sm:$0xff]
        %v6048 = vld [vmem:[#allocation2 + $0x728] sm:$0xf]
        %v6049 = vld [vmem:[#allocation2 + $0x72c] sm:$0xff]
        %v6050 = vld [vmem:[#allocation2 + $0x734] sm:$0xff]
        %v6051 = vld [vmem:[#allocation2 + $0x73c] sm:$0xff]
        %v6052 = vld [vmem:[#allocation2 + $0x744] sm:$0xff]
        %v6053 = vld [vmem:[#allocation2 + $0x74c] sm:$0xf]
        %v6054 = vld [vmem:[#allocation2 + $0x750] sm:$0xff]
        %v6055 = vld [vmem:[#allocation2 + $0x758] sm:$0xff]
        %v6056 = vld [vmem:[#allocation2 + $0x760] sm:$0xff]
        %v6057 = vld [vmem:[#allocation2 + $0x768] sm:$0xff]
        %v6058 = vld [vmem:[#allocation2 + $0x770] sm:$0xf]
        %v6059 = vld [vmem:[#allocation2 + $0x774] sm:$0xff]
        %v6060 = vld [vmem:[#allocation2 + $0x77c] sm:$0xff]
        %v6061 = vld [vmem:[#allocation2 + $0x784] sm:$0xff]
        %v6062 = vld [vmem:[#allocation2 + $0x78c] sm:$0xff]
        %v6063 = vld [vmem:[#allocation2 + $0x794] sm:$0xf]
        %v6064 = vld [vmem:[#allocation2 + $0x798] sm:$0xff]
        %v6065 = vld [vmem:[#allocation2 + $0x7a0] sm:$0xff]
        %v6066 = vld [vmem:[#allocation2 + $0x7a8] sm:$0xff]
        %v6067 = vld [vmem:[#allocation2 + $0x7b0] sm:$0xff]
        %v6068 = vld [vmem:[#allocation2 + $0x7b8] sm:$0xf]
        %v6069 = vld [vmem:[#allocation2 + $0x7bc] sm:$0xff]
        %v6070 = vld [vmem:[#allocation2 + $0x7c4] sm:$0xff]
        %v6071 = vld [vmem:[#allocation2 + $0x7cc] sm:$0xff]
        %v6072 = vld [vmem:[#allocation2 + $0x7d4] sm:$0xff]
        %v6073 = vld [vmem:[#allocation2 + $0x7dc] sm:$0xf]
        %v6074 = vld [vmem:[#allocation2 + $0x7e0] sm:$0xff]
        %v6075 = vld [vmem:[#allocation2 + $0x7e8] sm:$0xff]
        %v6076 = vld [vmem:[#allocation2 + $0x7f0] sm:$0xff]
        %v6077 = vld [vmem:[#allocation2 + $0x7f8] sm:$0xff]
        %v6078 = vld [vmem:[#allocation2 + $0x800] sm:$0xf]
        %v6079 = vld [vmem:[#allocation2 + $0x804] sm:$0xff]
        %v6080 = vld [vmem:[#allocation2 + $0x80c] sm:$0xff]
        %v6081 = vld [vmem:[#allocation2 + $0x814] sm:$0xff]
        %v6082 = vld [vmem:[#allocation2 + $0x81c] sm:$0xff]
        %v6083 = vld [vmem:[#allocation2 + $0x824] sm:$0xf]
        %v6084 = vld [vmem:[#allocation2 + $0x828] sm:$0xff]
        %v6085 = vld [vmem:[#allocation2 + $0x830] sm:$0xff]
        %v6086 = vld [vmem:[#allocation2 + $0x838] sm:$0xff]
        %v6087 = vld [vmem:[#allocation2 + $0x840] sm:$0xff]
        %v6088 = vld [vmem:[#allocation2 + $0x848] sm:$0xf]
        %v6089 = vld [vmem:[#allocation2 + $0x84c] sm:$0xff]
        %v6090 = vld [vmem:[#allocation2 + $0x854] sm:$0xff]
        %v6091 = vld [vmem:[#allocation2 + $0x85c] sm:$0xff]
        %v6092 = vld [vmem:[#allocation2 + $0x864] sm:$0xff]
        %v6093 = vld [vmem:[#allocation2 + $0x86c] sm:$0xf]
        %v6094 = vld [vmem:[#allocation2 + $0x870] sm:$0xff]
        %v6095 = vld [vmem:[#allocation2 + $0x878] sm:$0xff]
        %v6096 = vld [vmem:[#allocation2 + $0x880] sm:$0xff]
        %v6097 = vld [vmem:[#allocation2 + $0x888] sm:$0xff]
        %v6098 = vld [vmem:[#allocation2 + $0x890] sm:$0xf]
        %v6099 = vld [vmem:[#allocation2 + $0x894] sm:$0xff]
        %v6100 = vld [vmem:[#allocation2 + $0x89c] sm:$0xff]
        %v6101 = vld [vmem:[#allocation2 + $0x8a4] sm:$0xff]
        %v6102 = vld [vmem:[#allocation2 + $0x8ac] sm:$0xff]
        %v6103 = vld [vmem:[#allocation2 + $0x8b4] sm:$0xf]
        %v6104 = vld [vmem:[#allocation2 + $0x8b8] sm:$0xff]
        %v6105 = vld [vmem:[#allocation2 + $0x8c0] sm:$0xff]
        %v6106 = vld [vmem:[#allocation2 + $0x8c8] sm:$0xff]
        %v6107 = vld [vmem:[#allocation2 + $0x8d0] sm:$0xff]
        %v6108 = vld [vmem:[#allocation2 + $0x8d8] sm:$0xf]
        %v6109 = vld [vmem:[#allocation2 + $0x8dc] sm:$0xff]
        %v6110 = vld [vmem:[#allocation2 + $0x8e4] sm:$0xff]
        %v6111 = vld [vmem:[#allocation2 + $0x8ec] sm:$0xff]
        %v6112 = vld [vmem:[#allocation2 + $0x8f4] sm:$0xff]
        %v6113 = vld [vmem:[#allocation2 + $0x8fc] sm:$0xf]
        %v6114 = vld [vmem:[%s5] sm:$0xf]
        %v6115 = vld [vmem:[%s5 + $0x4] sm:$0xf]
        %v6116 = vld [vmem:[%s5 + $0x8] sm:$0xf]
        %v6117 = vld [vmem:[%s5 + $0xc] sm:$0xf]
        %v6118 = vld [vmem:[%s5 + $0x10] sm:$0xf]
        %v6119 = vld [vmem:[%s5 + $0x14] sm:$0xf]
        %v6120 = vld [vmem:[%s5 + $0x18] sm:$0xf]
        %v6121 = vld [vmem:[%s5 + $0x1c] sm:$0xf]
        %v6122 = vld [vmem:[%s5 + $0x20] sm:$0xf]
        %v6123 = vld [vmem:[%s5 + $0x24] sm:$0xf]
        %v6124 = vld [vmem:[%s5 + $0x28] sm:$0xf]
        %v6125 = vld [vmem:[%s5 + $0x2c] sm:$0xf]
        %v6126 = vld [vmem:[%s5 + $0x30] sm:$0xf]
        %v6127 = vld [vmem:[%s5 + $0x34] sm:$0xf]
        %v6128 = vld [vmem:[%s5 + $0x38] sm:$0xf]
        %v6129 = vld [vmem:[%s5 + $0x3c] sm:$0xf]
        %v6130 = vld [vmem:[%s5 + $0x40] sm:$0xf]
        %v6131 = vld [vmem:[%s5 + $0x44] sm:$0xf]
        %v6132 = vld [vmem:[%s5 + $0x48] sm:$0xf]
        %v6133 = vld [vmem:[%s5 + $0x4c] sm:$0xf]
        %v6134 = vld [vmem:[%s5 + $0x50] sm:$0xf]
        %v6135 = vld [vmem:[%s5 + $0x54] sm:$0xf]
        %v6136 = vld [vmem:[%s5 + $0x58] sm:$0xf]
        %v6137 = vld [vmem:[%s5 + $0x5c] sm:$0xf]
        %v6138 = vld [vmem:[%s5 + $0x60] sm:$0xf]
        %v6139 = vld [vmem:[%s5 + $0x64] sm:$0xf]
        %v6140 = vld [vmem:[%s5 + $0x68] sm:$0xf]
        %v6141 = vld [vmem:[%s5 + $0x6c] sm:$0xf]
        %v6142 = vld [vmem:[%s5 + $0x70] sm:$0xf]
        %v6143 = vld [vmem:[%s5 + $0x74] sm:$0xf]
        %v6144 = vld [vmem:[%s5 + $0x78] sm:$0xf]
        %v6145 = vld [vmem:[%s5 + $0x7c] sm:$0xf]
        %v6146 = vld [vmem:[%s5 + $0x80] sm:$0xf]
        %v6147 = vld [vmem:[%s5 + $0x84] sm:$0xf]
        %v6148 = vld [vmem:[%s5 + $0x88] sm:$0xf]
        %v6149 = vld [vmem:[%s5 + $0x8c] sm:$0xf]
        %v6150 = vld [vmem:[%s5 + $0x90] sm:$0xf]
        %v6151 = vld [vmem:[%s5 + $0x94] sm:$0xf]
        %v6152 = vld [vmem:[%s5 + $0x98] sm:$0xf]
        %v6153 = vld [vmem:[%s5 + $0x9c] sm:$0xf]
        %v6154 = vld [vmem:[%s5 + $0xa0] sm:$0xf]
        %v6155 = vld [vmem:[%s5 + $0xa4] sm:$0xf]
        %v6156 = vld [vmem:[%s5 + $0xa8] sm:$0xf]
        %v6157 = vld [vmem:[%s5 + $0xac] sm:$0xf]
        %v6158 = vld [vmem:[%s5 + $0xb0] sm:$0xf]
        %v6159 = vld [vmem:[%s5 + $0xb4] sm:$0xf]
        %v6160 = vld [vmem:[%s5 + $0xb8] sm:$0xf]
        %v6161 = vld [vmem:[%s5 + $0xbc] sm:$0xf]
        %v6162 = vld [vmem:[%s5 + $0xc0] sm:$0xf]
        %v6163 = vld [vmem:[%s5 + $0xc4] sm:$0xf]
        %v6164 = vld [vmem:[%s5 + $0xc8] sm:$0xf]
        %v6165 = vld [vmem:[%s5 + $0xcc] sm:$0xf]
        %v6166 = vld [vmem:[%s5 + $0xd0] sm:$0xf]
        %v6167 = vld [vmem:[%s5 + $0xd4] sm:$0xf]
        %v6168 = vld [vmem:[%s5 + $0xd8] sm:$0xf]
        %v6169 = vld [vmem:[%s5 + $0xdc] sm:$0xf]
        %v6170 = vld [vmem:[%s5 + $0xe0] sm:$0xf]
        %v6171 = vld [vmem:[%s5 + $0xe4] sm:$0xf]
        %v6172 = vld [vmem:[%s5 + $0xe8] sm:$0xf]
        %v6173 = vld [vmem:[%s5 + $0xec] sm:$0xf]
        %v6174 = vld [vmem:[%s5 + $0xf0] sm:$0xf]
        %v6175 = vld [vmem:[%s5 + $0xf4] sm:$0xf]
        %v6176 = vld [vmem:[%s5 + $0xf8] sm:$0xf]
        %v6177 = vld [vmem:[%s5 + $0xfc] sm:$0xf]
        %v6178 = vld [vmem:[%s5 + $0x100] sm:$0xf]
        %v6179 = vld [vmem:[%s5 + $0x104] sm:$0xf]
        %v6180 = vld [vmem:[%s5 + $0x108] sm:$0xf]
        %v6181 = vld [vmem:[%s5 + $0x10c] sm:$0xf]
        %v6182 = vld [vmem:[%s5 + $0x110] sm:$0xf]
        %v6183 = vld [vmem:[%s5 + $0x114] sm:$0xf]
        %v6184 = vld [vmem:[%s5 + $0x118] sm:$0xf]
        %v6185 = vld [vmem:[%s5 + $0x11c] sm:$0xf]
        %v6186 = vld [vmem:[%s5 + $0x120] sm:$0xf]
        %v6187 = vld [vmem:[%s5 + $0x124] sm:$0xf]
        %v6188 = vld [vmem:[%s5 + $0x128] sm:$0xf]
        %v6189 = vld [vmem:[%s5 + $0x12c] sm:$0xf]
        %v6190 = vld [vmem:[%s5 + $0x130] sm:$0xf]
        %v6191 = vld [vmem:[%s5 + $0x134] sm:$0xf]
        %v6192 = vld [vmem:[%s5 + $0x138] sm:$0xf]
        %v6193 = vld [vmem:[%s5 + $0x13c] sm:$0xf]
        %v6194 = vld [vmem:[%s5 + $0x140] sm:$0xf]
        %v6195 = vld [vmem:[%s5 + $0x144] sm:$0xf]
        %v6196 = vld [vmem:[%s5 + $0x148] sm:$0xf]
        %v6197 = vld [vmem:[%s5 + $0x14c] sm:$0xf]
        %v6198 = vld [vmem:[%s5 + $0x150] sm:$0xf]
        %v6199 = vld [vmem:[%s5 + $0x154] sm:$0xf]
        %v6200 = vld [vmem:[%s5 + $0x158] sm:$0xf]
        %v6201 = vld [vmem:[%s5 + $0x15c] sm:$0xf]
        %v6202 = vld [vmem:[%s5 + $0x160] sm:$0xf]
        %v6203 = vld [vmem:[%s5 + $0x164] sm:$0xf]
        %v6204 = vld [vmem:[%s5 + $0x168] sm:$0xf]
        %v6205 = vld [vmem:[%s5 + $0x16c] sm:$0xf]
        %v6206 = vld [vmem:[%s5 + $0x170] sm:$0xf]
        %v6207 = vld [vmem:[%s5 + $0x174] sm:$0xf]
        %v6208 = vld [vmem:[%s5 + $0x178] sm:$0xf]
        %v6209 = vld [vmem:[%s5 + $0x17c] sm:$0xf]
        %v6210 = vld [vmem:[%s5 + $0x180] sm:$0xf]
        %v6211 = vld [vmem:[%s5 + $0x184] sm:$0xf]
        %v6212 = vld [vmem:[%s5 + $0x188] sm:$0xf]
        %v6213 = vld [vmem:[%s5 + $0x18c] sm:$0xf]
        %v6214 = vld [vmem:[%s5 + $0x190] sm:$0xf]
        %v6215 = vld [vmem:[%s5 + $0x194] sm:$0xf]
        %v6216 = vld [vmem:[%s5 + $0x198] sm:$0xf]
        %v6217 = vld [vmem:[%s5 + $0x19c] sm:$0xf]
        %v6218 = vld [vmem:[%s5 + $0x1a0] sm:$0xf]
        %v6219 = vld [vmem:[%s5 + $0x1a4] sm:$0xf]
        %v6220 = vld [vmem:[%s5 + $0x1a8] sm:$0xf]
        %v6221 = vld [vmem:[%s5 + $0x1ac] sm:$0xf]
        %v6222 = vld [vmem:[%s5 + $0x1b0] sm:$0xf]
        %v6223 = vld [vmem:[%s5 + $0x1b4] sm:$0xf]
        %v6224 = vld [vmem:[%s5 + $0x1b8] sm:$0xf]
        %v6225 = vld [vmem:[%s5 + $0x1bc] sm:$0xf]
        %v6226 = vld [vmem:[%s5 + $0x1c0] sm:$0xf]
        %v6227 = vld [vmem:[%s5 + $0x1c4] sm:$0xf]
        %v6228 = vld [vmem:[%s5 + $0x1c8] sm:$0xf]
        %v6229 = vld [vmem:[%s5 + $0x1cc] sm:$0xf]
        %v6230 = vld [vmem:[%s5 + $0x1d0] sm:$0xf]
        %v6231 = vld [vmem:[%s5 + $0x1d4] sm:$0xf]
        %v6232 = vld [vmem:[%s5 + $0x1d8] sm:$0xf]
        %v6233 = vld [vmem:[%s5 + $0x1dc] sm:$0xf]
        %v6234 = vld [vmem:[%s5 + $0x1e0] sm:$0xf]
        %v6235 = vld [vmem:[%s5 + $0x1e4] sm:$0xf]
        %v6236 = vld [vmem:[%s5 + $0x1e8] sm:$0xf]
        %v6237 = vld [vmem:[%s5 + $0x1ec] sm:$0xf]
        %v6238 = vld [vmem:[%s5 + $0x1f0] sm:$0xf]
        %v6239 = vld [vmem:[%s5 + $0x1f4] sm:$0xf]
        %v6240 = vld [vmem:[%s5 + $0x1f8] sm:$0xf]
        %v6241 = vld [vmem:[%s5 + $0x1fc] sm:$0xf]
        %v6242 = vld [vmem:[%s5 + $0x200] sm:$0xf]
        %v6243 = vld [vmem:[%s5 + $0x204] sm:$0xf]
        %v6244 = vld [vmem:[%s5 + $0x208] sm:$0xf]
        %v6245 = vld [vmem:[%s5 + $0x20c] sm:$0xf]
        %v6246 = vld [vmem:[%s5 + $0x210] sm:$0xf]
        %v6247 = vld [vmem:[%s5 + $0x214] sm:$0xf]
        %v6248 = vld [vmem:[%s5 + $0x218] sm:$0xf]
        %v6249 = vld [vmem:[%s5 + $0x21c] sm:$0xf]
        %v6250 = vld [vmem:[%s5 + $0x220] sm:$0xf]
        %v6251 = vld [vmem:[%s5 + $0x224] sm:$0xf]
        %v6252 = vld [vmem:[%s5 + $0x228] sm:$0xf]
        %v6253 = vld [vmem:[%s5 + $0x22c] sm:$0xf]
        %v6254 = vld [vmem:[%s5 + $0x230] sm:$0xf]
        %v6255 = vld [vmem:[%s5 + $0x234] sm:$0xf]
        %v6256 = vld [vmem:[%s5 + $0x238] sm:$0xf]
        %v6257 = vld [vmem:[%s5 + $0x23c] sm:$0xf]
        %v6578 = vunpack.c.l.b16 %v5794
        %v6579 = vunpack.c.h.b16 %v5794
        %v6580 = vunpack.c.l.b16 %v5795
        %v6581 = vunpack.c.h.b16 %v5795
        %v6582 = vunpack.c.l.b16 %v5796
        %v6583 = vunpack.c.h.b16 %v5796
        %v6584 = vunpack.c.l.b16 %v5797
        %v6585 = vunpack.c.h.b16 %v5797
        %v6586 = vunpack.c.l.b16 %v5798
        %v6587 = vunpack.c.l.b16 %v5799
        %v6588 = vunpack.c.h.b16 %v5799
        %v6589 = vunpack.c.l.b16 %v5800
        %v6590 = vunpack.c.h.b16 %v5800
        %v6591 = vunpack.c.l.b16 %v5801
        %v6592 = vunpack.c.h.b16 %v5801
        %v6593 = vunpack.c.l.b16 %v5802
        %v6594 = vunpack.c.h.b16 %v5802
        %v6595 = vunpack.c.l.b16 %v5803
        %v6596 = vunpack.c.l.b16 %v5804
        %v6597 = vunpack.c.h.b16 %v5804
        %v6598 = vunpack.c.l.b16 %v5805
        %v6599 = vunpack.c.h.b16 %v5805
        %v6600 = vunpack.c.l.b16 %v5806
        %v6601 = vunpack.c.h.b16 %v5806
        %v6602 = vunpack.c.l.b16 %v5807
        %v6603 = vunpack.c.h.b16 %v5807
        %v6604 = vunpack.c.l.b16 %v5808
        %v6605 = vunpack.c.l.b16 %v5809
        %v6606 = vunpack.c.h.b16 %v5809
        %v6607 = vunpack.c.l.b16 %v5810
        %v6608 = vunpack.c.h.b16 %v5810
        %v6609 = vunpack.c.l.b16 %v5811
        %v6610 = vunpack.c.h.b16 %v5811
        %v6611 = vunpack.c.l.b16 %v5812
        %v6612 = vunpack.c.h.b16 %v5812
        %v6613 = vunpack.c.l.b16 %v5813
        %v6614 = vunpack.c.l.b16 %v5814
        %v6615 = vunpack.c.h.b16 %v5814
        %v6616 = vunpack.c.l.b16 %v5815
        %v6617 = vunpack.c.h.b16 %v5815
        %v6618 = vunpack.c.l.b16 %v5816
        %v6619 = vunpack.c.h.b16 %v5816
        %v6620 = vunpack.c.l.b16 %v5817
        %v6621 = vunpack.c.h.b16 %v5817
        %v6622 = vunpack.c.l.b16 %v5818
        %v6623 = vunpack.c.l.b16 %v5819
        %v6624 = vunpack.c.h.b16 %v5819
        %v6625 = vunpack.c.l.b16 %v5820
        %v6626 = vunpack.c.h.b16 %v5820
        %v6627 = vunpack.c.l.b16 %v5821
        %v6628 = vunpack.c.h.b16 %v5821
        %v6629 = vunpack.c.l.b16 %v5822
        %v6630 = vunpack.c.h.b16 %v5822
        %v6631 = vunpack.c.l.b16 %v5823
        %v6632 = vunpack.c.l.b16 %v5824
        %v6633 = vunpack.c.h.b16 %v5824
        %v6634 = vunpack.c.l.b16 %v5825
        %v6635 = vunpack.c.h.b16 %v5825
        %v6636 = vunpack.c.l.b16 %v5826
        %v6637 = vunpack.c.h.b16 %v5826
        %v6638 = vunpack.c.l.b16 %v5827
        %v6639 = vunpack.c.h.b16 %v5827
        %v6640 = vunpack.c.l.b16 %v5828
        %v6641 = vunpack.c.l.b16 %v5829
        %v6642 = vunpack.c.h.b16 %v5829
        %v6643 = vunpack.c.l.b16 %v5830
        %v6644 = vunpack.c.h.b16 %v5830
        %v6645 = vunpack.c.l.b16 %v5831
        %v6646 = vunpack.c.h.b16 %v5831
        %v6647 = vunpack.c.l.b16 %v5832
        %v6648 = vunpack.c.h.b16 %v5832
        %v6649 = vunpack.c.l.b16 %v5833
        %v6650 = vunpack.c.l.b16 %v5834
        %v6651 = vunpack.c.h.b16 %v5834
        %v6652 = vunpack.c.l.b16 %v5835
        %v6653 = vunpack.c.h.b16 %v5835
        %v6654 = vunpack.c.l.b16 %v5836
        %v6655 = vunpack.c.h.b16 %v5836
        %v6656 = vunpack.c.l.b16 %v5837
        %v6657 = vunpack.c.h.b16 %v5837
        %v6658 = vunpack.c.l.b16 %v5838
        %v6659 = vunpack.c.l.b16 %v5839
        %v6660 = vunpack.c.h.b16 %v5839
        %v6661 = vunpack.c.l.b16 %v5840
        %v6662 = vunpack.c.h.b16 %v5840
        %v6663 = vunpack.c.l.b16 %v5841
        %v6664 = vunpack.c.h.b16 %v5841
        %v6665 = vunpack.c.l.b16 %v5842
        %v6666 = vunpack.c.h.b16 %v5842
        %v6667 = vunpack.c.l.b16 %v5843
        %v6668 = vunpack.c.l.b16 %v5844
        %v6669 = vunpack.c.h.b16 %v5844
        %v6670 = vunpack.c.l.b16 %v5845
        %v6671 = vunpack.c.h.b16 %v5845
        %v6672 = vunpack.c.l.b16 %v5846
        %v6673 = vunpack.c.h.b16 %v5846
        %v6674 = vunpack.c.l.b16 %v5847
        %v6675 = vunpack.c.h.b16 %v5847
        %v6676 = vunpack.c.l.b16 %v5848
        %v6677 = vunpack.c.l.b16 %v5849
        %v6678 = vunpack.c.h.b16 %v5849
        %v6679 = vunpack.c.l.b16 %v5850
        %v6680 = vunpack.c.h.b16 %v5850
        %v6681 = vunpack.c.l.b16 %v5851
        %v6682 = vunpack.c.h.b16 %v5851
        %v6683 = vunpack.c.l.b16 %v5852
        %v6684 = vunpack.c.h.b16 %v5852
        %v6685 = vunpack.c.l.b16 %v5853
        %v6686 = vunpack.c.l.b16 %v5854
        %v6687 = vunpack.c.h.b16 %v5854
        %v6688 = vunpack.c.l.b16 %v5855
        %v6689 = vunpack.c.h.b16 %v5855
        %v6690 = vunpack.c.l.b16 %v5856
        %v6691 = vunpack.c.h.b16 %v5856
        %v6692 = vunpack.c.l.b16 %v5857
        %v6693 = vunpack.c.h.b16 %v5857
        %v6694 = vunpack.c.l.b16 %v5858
        %v6695 = vunpack.c.l.b16 %v5859
        %v6696 = vunpack.c.h.b16 %v5859
        %v6697 = vunpack.c.l.b16 %v5860
        %v6698 = vunpack.c.h.b16 %v5860
        %v6699 = vunpack.c.l.b16 %v5861
        %v6700 = vunpack.c.h.b16 %v5861
        %v6701 = vunpack.c.l.b16 %v5862
        %v6702 = vunpack.c.h.b16 %v5862
        %v6703 = vunpack.c.l.b16 %v5863
        %v6704 = vunpack.c.l.b16 %v5864
        %v6705 = vunpack.c.h.b16 %v5864
        %v6706 = vunpack.c.l.b16 %v5865
        %v6707 = vunpack.c.h.b16 %v5865
        %v6708 = vunpack.c.l.b16 %v5866
        %v6709 = vunpack.c.h.b16 %v5866
        %v6710 = vunpack.c.l.b16 %v5867
        %v6711 = vunpack.c.h.b16 %v5867
        %v6712 = vunpack.c.l.b16 %v5868
        %v6713 = vunpack.c.l.b16 %v5869
        %v6714 = vunpack.c.h.b16 %v5869
        %v6715 = vunpack.c.l.b16 %v5870
        %v6716 = vunpack.c.h.b16 %v5870
        %v6717 = vunpack.c.l.b16 %v5871
        %v6718 = vunpack.c.h.b16 %v5871
        %v6719 = vunpack.c.l.b16 %v5872
        %v6720 = vunpack.c.h.b16 %v5872
        %v6721 = vunpack.c.l.b16 %v5873
        %v6722 = vunpack.c.l.b16 %v5874
        %v6723 = vunpack.c.h.b16 %v5874
        %v6724 = vunpack.c.l.b16 %v5875
        %v6725 = vunpack.c.h.b16 %v5875
        %v6726 = vunpack.c.l.b16 %v5876
        %v6727 = vunpack.c.h.b16 %v5876
        %v6728 = vunpack.c.l.b16 %v5877
        %v6729 = vunpack.c.h.b16 %v5877
        %v6730 = vunpack.c.l.b16 %v5878
        %v6731 = vunpack.c.l.b16 %v5879
        %v6732 = vunpack.c.h.b16 %v5879
        %v6733 = vunpack.c.l.b16 %v5880
        %v6734 = vunpack.c.h.b16 %v5880
        %v6735 = vunpack.c.l.b16 %v5881
        %v6736 = vunpack.c.h.b16 %v5881
        %v6737 = vunpack.c.l.b16 %v5882
        %v6738 = vunpack.c.h.b16 %v5882
        %v6739 = vunpack.c.l.b16 %v5883
        %v6740 = vunpack.c.l.b16 %v5884
        %v6741 = vunpack.c.h.b16 %v5884
        %v6742 = vunpack.c.l.b16 %v5885
        %v6743 = vunpack.c.h.b16 %v5885
        %v6744 = vunpack.c.l.b16 %v5886
        %v6745 = vunpack.c.h.b16 %v5886
        %v6746 = vunpack.c.l.b16 %v5887
        %v6747 = vunpack.c.h.b16 %v5887
        %v6748 = vunpack.c.l.b16 %v5888
        %v6749 = vunpack.c.l.b16 %v5889
        %v6750 = vunpack.c.h.b16 %v5889
        %v6751 = vunpack.c.l.b16 %v5890
        %v6752 = vunpack.c.h.b16 %v5890
        %v6753 = vunpack.c.l.b16 %v5891
        %v6754 = vunpack.c.h.b16 %v5891
        %v6755 = vunpack.c.l.b16 %v5892
        %v6756 = vunpack.c.h.b16 %v5892
        %v6757 = vunpack.c.l.b16 %v5893
        %v6758 = vunpack.c.l.b16 %v5894
        %v6759 = vunpack.c.h.b16 %v5894
        %v6760 = vunpack.c.l.b16 %v5895
        %v6761 = vunpack.c.h.b16 %v5895
        %v6762 = vunpack.c.l.b16 %v5896
        %v6763 = vunpack.c.h.b16 %v5896
        %v6764 = vunpack.c.l.b16 %v5897
        %v6765 = vunpack.c.h.b16 %v5897
        %v6766 = vunpack.c.l.b16 %v5898
        %v6767 = vunpack.c.l.b16 %v5899
        %v6768 = vunpack.c.h.b16 %v5899
        %v6769 = vunpack.c.l.b16 %v5900
        %v6770 = vunpack.c.h.b16 %v5900
        %v6771 = vunpack.c.l.b16 %v5901
        %v6772 = vunpack.c.h.b16 %v5901
        %v6773 = vunpack.c.l.b16 %v5902
        %v6774 = vunpack.c.h.b16 %v5902
        %v6775 = vunpack.c.l.b16 %v5903
        %v6776 = vunpack.c.l.b16 %v5904
        %v6777 = vunpack.c.h.b16 %v5904
        %v6778 = vunpack.c.l.b16 %v5905
        %v6779 = vunpack.c.h.b16 %v5905
        %v6780 = vunpack.c.l.b16 %v5906
        %v6781 = vunpack.c.h.b16 %v5906
        %v6782 = vunpack.c.l.b16 %v5907
        %v6783 = vunpack.c.h.b16 %v5907
        %v6784 = vunpack.c.l.b16 %v5908
        %v6785 = vunpack.c.l.b16 %v5909
        %v6786 = vunpack.c.h.b16 %v5909
        %v6787 = vunpack.c.l.b16 %v5910
        %v6788 = vunpack.c.h.b16 %v5910
        %v6789 = vunpack.c.l.b16 %v5911
        %v6790 = vunpack.c.h.b16 %v5911
        %v6791 = vunpack.c.l.b16 %v5912
        %v6792 = vunpack.c.h.b16 %v5912
        %v6793 = vunpack.c.l.b16 %v5913
        %v6794 = vunpack.c.l.b16 %v5914
        %v6795 = vunpack.c.h.b16 %v5914
        %v6796 = vunpack.c.l.b16 %v5915
        %v6797 = vunpack.c.h.b16 %v5915
        %v6798 = vunpack.c.l.b16 %v5916
        %v6799 = vunpack.c.h.b16 %v5916
        %v6800 = vunpack.c.l.b16 %v5917
        %v6801 = vunpack.c.h.b16 %v5917
        %v6802 = vunpack.c.l.b16 %v5918
        %v6803 = vunpack.c.l.b16 %v5919
        %v6804 = vunpack.c.h.b16 %v5919
        %v6805 = vunpack.c.l.b16 %v5920
        %v6806 = vunpack.c.h.b16 %v5920
        %v6807 = vunpack.c.l.b16 %v5921
        %v6808 = vunpack.c.h.b16 %v5921
        %v6809 = vunpack.c.l.b16 %v5922
        %v6810 = vunpack.c.h.b16 %v5922
        %v6811 = vunpack.c.l.b16 %v5923
        %v6812 = vunpack.c.l.b16 %v5924
        %v6813 = vunpack.c.h.b16 %v5924
        %v6814 = vunpack.c.l.b16 %v5925
        %v6815 = vunpack.c.h.b16 %v5925
        %v6816 = vunpack.c.l.b16 %v5926
        %v6817 = vunpack.c.h.b16 %v5926
        %v6818 = vunpack.c.l.b16 %v5927
        %v6819 = vunpack.c.h.b16 %v5927
        %v6820 = vunpack.c.l.b16 %v5928
        %v6821 = vunpack.c.l.b16 %v5929
        %v6822 = vunpack.c.h.b16 %v5929
        %v6823 = vunpack.c.l.b16 %v5930
        %v6824 = vunpack.c.h.b16 %v5930
        %v6825 = vunpack.c.l.b16 %v5931
        %v6826 = vunpack.c.h.b16 %v5931
        %v6827 = vunpack.c.l.b16 %v5932
        %v6828 = vunpack.c.h.b16 %v5932
        %v6829 = vunpack.c.l.b16 %v5933
        %v6830 = vunpack.c.l.b16 %v5934
        %v6831 = vunpack.c.h.b16 %v5934
        %v6832 = vunpack.c.l.b16 %v5935
        %v6833 = vunpack.c.h.b16 %v5935
        %v6834 = vunpack.c.l.b16 %v5936
        %v6835 = vunpack.c.h.b16 %v5936
        %v6836 = vunpack.c.l.b16 %v5937
        %v6837 = vunpack.c.h.b16 %v5937
        %v6838 = vunpack.c.l.b16 %v5938
        %v6839 = vunpack.c.l.b16 %v5939
        %v6840 = vunpack.c.h.b16 %v5939
        %v6841 = vunpack.c.l.b16 %v5940
        %v6842 = vunpack.c.h.b16 %v5940
        %v6843 = vunpack.c.l.b16 %v5941
        %v6844 = vunpack.c.h.b16 %v5941
        %v6845 = vunpack.c.l.b16 %v5942
        %v6846 = vunpack.c.h.b16 %v5942
        %v6847 = vunpack.c.l.b16 %v5943
        %v6848 = vunpack.c.l.b16 %v5944
        %v6849 = vunpack.c.h.b16 %v5944
        %v6850 = vunpack.c.l.b16 %v5945
        %v6851 = vunpack.c.h.b16 %v5945
        %v6852 = vunpack.c.l.b16 %v5946
        %v6853 = vunpack.c.h.b16 %v5946
        %v6854 = vunpack.c.l.b16 %v5947
        %v6855 = vunpack.c.h.b16 %v5947
        %v6856 = vunpack.c.l.b16 %v5948
        %v6857 = vunpack.c.l.b16 %v5949
        %v6858 = vunpack.c.h.b16 %v5949
        %v6859 = vunpack.c.l.b16 %v5950
        %v6860 = vunpack.c.h.b16 %v5950
        %v6861 = vunpack.c.l.b16 %v5951
        %v6862 = vunpack.c.h.b16 %v5951
        %v6863 = vunpack.c.l.b16 %v5952
        %v6864 = vunpack.c.h.b16 %v5952
        %v6865 = vunpack.c.l.b16 %v5953
        %v6866 = vunpack.c.l.b16 %v5954
        %v6867 = vunpack.c.h.b16 %v5954
        %v6868 = vunpack.c.l.b16 %v5955
        %v6869 = vunpack.c.h.b16 %v5955
        %v6870 = vunpack.c.l.b16 %v5956
        %v6871 = vunpack.c.h.b16 %v5956
        %v6872 = vunpack.c.l.b16 %v5957
        %v6873 = vunpack.c.h.b16 %v5957
        %v6874 = vunpack.c.l.b16 %v5958
        %v6875 = vunpack.c.l.b16 %v5959
        %v6876 = vunpack.c.h.b16 %v5959
        %v6877 = vunpack.c.l.b16 %v5960
        %v6878 = vunpack.c.h.b16 %v5960
        %v6879 = vunpack.c.l.b16 %v5961
        %v6880 = vunpack.c.h.b16 %v5961
        %v6881 = vunpack.c.l.b16 %v5962
        %v6882 = vunpack.c.h.b16 %v5962
        %v6883 = vunpack.c.l.b16 %v5963
        %v6884 = vunpack.c.l.b16 %v5964
        %v6885 = vunpack.c.h.b16 %v5964
        %v6886 = vunpack.c.l.b16 %v5965
        %v6887 = vunpack.c.h.b16 %v5965
        %v6888 = vunpack.c.l.b16 %v5966
        %v6889 = vunpack.c.h.b16 %v5966
        %v6890 = vunpack.c.l.b16 %v5967
        %v6891 = vunpack.c.h.b16 %v5967
        %v6892 = vunpack.c.l.b16 %v5968
        %v6893 = vunpack.c.l.b16 %v5969
        %v6894 = vunpack.c.h.b16 %v5969
        %v6895 = vunpack.c.l.b16 %v5970
        %v6896 = vunpack.c.h.b16 %v5970
        %v6897 = vunpack.c.l.b16 %v5971
        %v6898 = vunpack.c.h.b16 %v5971
        %v6899 = vunpack.c.l.b16 %v5972
        %v6900 = vunpack.c.h.b16 %v5972
        %v6901 = vunpack.c.l.b16 %v5973
        %v6902 = vunpack.c.l.b16 %v5974
        %v6903 = vunpack.c.h.b16 %v5974
        %v6904 = vunpack.c.l.b16 %v5975
        %v6905 = vunpack.c.h.b16 %v5975
        %v6906 = vunpack.c.l.b16 %v5976
        %v6907 = vunpack.c.h.b16 %v5976
        %v6908 = vunpack.c.l.b16 %v5977
        %v6909 = vunpack.c.h.b16 %v5977
        %v6910 = vunpack.c.l.b16 %v5978
        %v6911 = vunpack.c.l.b16 %v5979
        %v6912 = vunpack.c.h.b16 %v5979
        %v6913 = vunpack.c.l.b16 %v5980
        %v6914 = vunpack.c.h.b16 %v5980
        %v6915 = vunpack.c.l.b16 %v5981
        %v6916 = vunpack.c.h.b16 %v5981
        %v6917 = vunpack.c.l.b16 %v5982
        %v6918 = vunpack.c.h.b16 %v5982
        %v6919 = vunpack.c.l.b16 %v5983
        %v6920 = vunpack.c.l.b16 %v5984
        %v6921 = vunpack.c.h.b16 %v5984
        %v6922 = vunpack.c.l.b16 %v5985
        %v6923 = vunpack.c.h.b16 %v5985
        %v6924 = vunpack.c.l.b16 %v5986
        %v6925 = vunpack.c.h.b16 %v5986
        %v6926 = vunpack.c.l.b16 %v5987
        %v6927 = vunpack.c.h.b16 %v5987
        %v6928 = vunpack.c.l.b16 %v5988
        %v6929 = vunpack.c.l.b16 %v5989
        %v6930 = vunpack.c.h.b16 %v5989
        %v6931 = vunpack.c.l.b16 %v5990
        %v6932 = vunpack.c.h.b16 %v5990
        %v6933 = vunpack.c.l.b16 %v5991
        %v6934 = vunpack.c.h.b16 %v5991
        %v6935 = vunpack.c.l.b16 %v5992
        %v6936 = vunpack.c.h.b16 %v5992
        %v6937 = vunpack.c.l.b16 %v5993
        %v6938 = vunpack.c.l.b16 %v5994
        %v6939 = vunpack.c.h.b16 %v5994
        %v6940 = vunpack.c.l.b16 %v5995
        %v6941 = vunpack.c.h.b16 %v5995
        %v6942 = vunpack.c.l.b16 %v5996
        %v6943 = vunpack.c.h.b16 %v5996
        %v6944 = vunpack.c.l.b16 %v5997
        %v6945 = vunpack.c.h.b16 %v5997
        %v6946 = vunpack.c.l.b16 %v5998
        %v6947 = vunpack.c.l.b16 %v5999
        %v6948 = vunpack.c.h.b16 %v5999
        %v6949 = vunpack.c.l.b16 %v6000
        %v6950 = vunpack.c.h.b16 %v6000
        %v6951 = vunpack.c.l.b16 %v6001
        %v6952 = vunpack.c.h.b16 %v6001
        %v6953 = vunpack.c.l.b16 %v6002
        %v6954 = vunpack.c.h.b16 %v6002
        %v6955 = vunpack.c.l.b16 %v6003
        %v6956 = vunpack.c.l.b16 %v6004
        %v6957 = vunpack.c.h.b16 %v6004
        %v6958 = vunpack.c.l.b16 %v6005
        %v6959 = vunpack.c.h.b16 %v6005
        %v6960 = vunpack.c.l.b16 %v6006
        %v6961 = vunpack.c.h.b16 %v6006
        %v6962 = vunpack.c.l.b16 %v6007
        %v6963 = vunpack.c.h.b16 %v6007
        %v6964 = vunpack.c.l.b16 %v6008
        %v6965 = vunpack.c.l.b16 %v6009
        %v6966 = vunpack.c.h.b16 %v6009
        %v6967 = vunpack.c.l.b16 %v6010
        %v6968 = vunpack.c.h.b16 %v6010
        %v6969 = vunpack.c.l.b16 %v6011
        %v6970 = vunpack.c.h.b16 %v6011
        %v6971 = vunpack.c.l.b16 %v6012
        %v6972 = vunpack.c.h.b16 %v6012
        %v6973 = vunpack.c.l.b16 %v6013
        %v6974 = vunpack.c.l.b16 %v6014
        %v6975 = vunpack.c.h.b16 %v6014
        %v6976 = vunpack.c.l.b16 %v6015
        %v6977 = vunpack.c.h.b16 %v6015
        %v6978 = vunpack.c.l.b16 %v6016
        %v6979 = vunpack.c.h.b16 %v6016
        %v6980 = vunpack.c.l.b16 %v6017
        %v6981 = vunpack.c.h.b16 %v6017
        %v6982 = vunpack.c.l.b16 %v6018
        %v6983 = vunpack.c.l.b16 %v6019
        %v6984 = vunpack.c.h.b16 %v6019
        %v6985 = vunpack.c.l.b16 %v6020
        %v6986 = vunpack.c.h.b16 %v6020
        %v6987 = vunpack.c.l.b16 %v6021
        %v6988 = vunpack.c.h.b16 %v6021
        %v6989 = vunpack.c.l.b16 %v6022
        %v6990 = vunpack.c.h.b16 %v6022
        %v6991 = vunpack.c.l.b16 %v6023
        %v6992 = vunpack.c.l.b16 %v6024
        %v6993 = vunpack.c.h.b16 %v6024
        %v6994 = vunpack.c.l.b16 %v6025
        %v6995 = vunpack.c.h.b16 %v6025
        %v6996 = vunpack.c.l.b16 %v6026
        %v6997 = vunpack.c.h.b16 %v6026
        %v6998 = vunpack.c.l.b16 %v6027
        %v6999 = vunpack.c.h.b16 %v6027
        %v7000 = vunpack.c.l.b16 %v6028
        %v7001 = vunpack.c.l.b16 %v6029
        %v7002 = vunpack.c.h.b16 %v6029
        %v7003 = vunpack.c.l.b16 %v6030
        %v7004 = vunpack.c.h.b16 %v6030
        %v7005 = vunpack.c.l.b16 %v6031
        %v7006 = vunpack.c.h.b16 %v6031
        %v7007 = vunpack.c.l.b16 %v6032
        %v7008 = vunpack.c.h.b16 %v6032
        %v7009 = vunpack.c.l.b16 %v6033
        %v7010 = vunpack.c.l.b16 %v6034
        %v7011 = vunpack.c.h.b16 %v6034
        %v7012 = vunpack.c.l.b16 %v6035
        %v7013 = vunpack.c.h.b16 %v6035
        %v7014 = vunpack.c.l.b16 %v6036
        %v7015 = vunpack.c.h.b16 %v6036
        %v7016 = vunpack.c.l.b16 %v6037
        %v7017 = vunpack.c.h.b16 %v6037
        %v7018 = vunpack.c.l.b16 %v6038
        %v7019 = vunpack.c.l.b16 %v6039
        %v7020 = vunpack.c.h.b16 %v6039
        %v7021 = vunpack.c.l.b16 %v6040
        %v7022 = vunpack.c.h.b16 %v6040
        %v7023 = vunpack.c.l.b16 %v6041
        %v7024 = vunpack.c.h.b16 %v6041
        %v7025 = vunpack.c.l.b16 %v6042
        %v7026 = vunpack.c.h.b16 %v6042
        %v7027 = vunpack.c.l.b16 %v6043
        %v7028 = vunpack.c.l.b16 %v6044
        %v7029 = vunpack.c.h.b16 %v6044
        %v7030 = vunpack.c.l.b16 %v6045
        %v7031 = vunpack.c.h.b16 %v6045
        %v7032 = vunpack.c.l.b16 %v6046
        %v7033 = vunpack.c.h.b16 %v6046
        %v7034 = vunpack.c.l.b16 %v6047
        %v7035 = vunpack.c.h.b16 %v6047
        %v7036 = vunpack.c.l.b16 %v6048
        %v7037 = vunpack.c.l.b16 %v6049
        %v7038 = vunpack.c.h.b16 %v6049
        %v7039 = vunpack.c.l.b16 %v6050
        %v7040 = vunpack.c.h.b16 %v6050
        %v7041 = vunpack.c.l.b16 %v6051
        %v7042 = vunpack.c.h.b16 %v6051
        %v7043 = vunpack.c.l.b16 %v6052
        %v7044 = vunpack.c.h.b16 %v6052
        %v7045 = vunpack.c.l.b16 %v6053
        %v7046 = vunpack.c.l.b16 %v6054
        %v7047 = vunpack.c.h.b16 %v6054
        %v7048 = vunpack.c.l.b16 %v6055
        %v7049 = vunpack.c.h.b16 %v6055
        %v7050 = vunpack.c.l.b16 %v6056
        %v7051 = vunpack.c.h.b16 %v6056
        %v7052 = vunpack.c.l.b16 %v6057
        %v7053 = vunpack.c.h.b16 %v6057
        %v7054 = vunpack.c.l.b16 %v6058
        %v7055 = vunpack.c.l.b16 %v6059
        %v7056 = vunpack.c.h.b16 %v6059
        %v7057 = vunpack.c.l.b16 %v6060
        %v7058 = vunpack.c.h.b16 %v6060
        %v7059 = vunpack.c.l.b16 %v6061
        %v7060 = vunpack.c.h.b16 %v6061
        %v7061 = vunpack.c.l.b16 %v6062
        %v7062 = vunpack.c.h.b16 %v6062
        %v7063 = vunpack.c.l.b16 %v6063
        %v7064 = vunpack.c.l.b16 %v6064
        %v7065 = vunpack.c.h.b16 %v6064
        %v7066 = vunpack.c.l.b16 %v6065
        %v7067 = vunpack.c.h.b16 %v6065
        %v7068 = vunpack.c.l.b16 %v6066
        %v7069 = vunpack.c.h.b16 %v6066
        %v7070 = vunpack.c.l.b16 %v6067
        %v7071 = vunpack.c.h.b16 %v6067
        %v7072 = vunpack.c.l.b16 %v6068
        %v7073 = vunpack.c.l.b16 %v6069
        %v7074 = vunpack.c.h.b16 %v6069
        %v7075 = vunpack.c.l.b16 %v6070
        %v7076 = vunpack.c.h.b16 %v6070
        %v7077 = vunpack.c.l.b16 %v6071
        %v7078 = vunpack.c.h.b16 %v6071
        %v7079 = vunpack.c.l.b16 %v6072
        %v7080 = vunpack.c.h.b16 %v6072
        %v7081 = vunpack.c.l.b16 %v6073
        %v7082 = vunpack.c.l.b16 %v6074
        %v7083 = vunpack.c.h.b16 %v6074
        %v7084 = vunpack.c.l.b16 %v6075
        %v7085 = vunpack.c.h.b16 %v6075
        %v7086 = vunpack.c.l.b16 %v6076
        %v7087 = vunpack.c.h.b16 %v6076
        %v7088 = vunpack.c.l.b16 %v6077
        %v7089 = vunpack.c.h.b16 %v6077
        %v7090 = vunpack.c.l.b16 %v6078
        %v7091 = vunpack.c.l.b16 %v6079
        %v7092 = vunpack.c.h.b16 %v6079
        %v7093 = vunpack.c.l.b16 %v6080
        %v7094 = vunpack.c.h.b16 %v6080
        %v7095 = vunpack.c.l.b16 %v6081
        %v7096 = vunpack.c.h.b16 %v6081
        %v7097 = vunpack.c.l.b16 %v6082
        %v7098 = vunpack.c.h.b16 %v6082
        %v7099 = vunpack.c.l.b16 %v6083
        %v7100 = vunpack.c.l.b16 %v6084
        %v7101 = vunpack.c.h.b16 %v6084
        %v7102 = vunpack.c.l.b16 %v6085
        %v7103 = vunpack.c.h.b16 %v6085
        %v7104 = vunpack.c.l.b16 %v6086
        %v7105 = vunpack.c.h.b16 %v6086
        %v7106 = vunpack.c.l.b16 %v6087
        %v7107 = vunpack.c.h.b16 %v6087
        %v7108 = vunpack.c.l.b16 %v6088
        %v7109 = vunpack.c.l.b16 %v6089
        %v7110 = vunpack.c.h.b16 %v6089
        %v7111 = vunpack.c.l.b16 %v6090
        %v7112 = vunpack.c.h.b16 %v6090
        %v7113 = vunpack.c.l.b16 %v6091
        %v7114 = vunpack.c.h.b16 %v6091
        %v7115 = vunpack.c.l.b16 %v6092
        %v7116 = vunpack.c.h.b16 %v6092
        %v7117 = vunpack.c.l.b16 %v6093
        %v7118 = vunpack.c.l.b16 %v6094
        %v7119 = vunpack.c.h.b16 %v6094
        %v7120 = vunpack.c.l.b16 %v6095
        %v7121 = vunpack.c.h.b16 %v6095
        %v7122 = vunpack.c.l.b16 %v6096
        %v7123 = vunpack.c.h.b16 %v6096
        %v7124 = vunpack.c.l.b16 %v6097
        %v7125 = vunpack.c.h.b16 %v6097
        %v7126 = vunpack.c.l.b16 %v6098
        %v7127 = vunpack.c.l.b16 %v6099
        %v7128 = vunpack.c.h.b16 %v6099
        %v7129 = vunpack.c.l.b16 %v6100
        %v7130 = vunpack.c.h.b16 %v6100
        %v7131 = vunpack.c.l.b16 %v6101
        %v7132 = vunpack.c.h.b16 %v6101
        %v7133 = vunpack.c.l.b16 %v6102
        %v7134 = vunpack.c.h.b16 %v6102
        %v7135 = vunpack.c.l.b16 %v6103
        %v7136 = vunpack.c.l.b16 %v6104
        %v7137 = vunpack.c.h.b16 %v6104
        %v7138 = vunpack.c.l.b16 %v6105
        %v7139 = vunpack.c.h.b16 %v6105
        %v7140 = vunpack.c.l.b16 %v6106
        %v7141 = vunpack.c.h.b16 %v6106
        %v7142 = vunpack.c.l.b16 %v6107
        %v7143 = vunpack.c.h.b16 %v6107
        %v7144 = vunpack.c.l.b16 %v6108
        %v7145 = vunpack.c.l.b16 %v6109
        %v7146 = vunpack.c.h.b16 %v6109
        %v7147 = vunpack.c.l.b16 %v6110
        %v7148 = vunpack.c.h.b16 %v6110
        %v7149 = vunpack.c.l.b16 %v6111
        %v7150 = vunpack.c.h.b16 %v6111
        %v7151 = vunpack.c.l.b16 %v6112
        %v7152 = vunpack.c.h.b16 %v6112
        %v7153 = vunpack.c.l.b16 %v6113
        %v7154 = vpack.c.b16 %v6587, %v6578
        %v7155 = vpack.c.b16 %v6588, %v6579
        %v7156 = vpack.c.b16 %v6589, %v6580
        %v7157 = vpack.c.b16 %v6590, %v6581
        %v7158 = vpack.c.b16 %v6591, %v6582
        %v7159 = vpack.c.b16 %v6592, %v6583
        %v7160 = vpack.c.b16 %v6593, %v6584
        %v7161 = vpack.c.b16 %v6594, %v6585
        %v7162 = vpack.c.b16 %v6595, %v6586
        %v7163 = vpack.c.b16 %v6605, %v6596
        %v7164 = vpack.c.b16 %v6606, %v6597
        %v7165 = vpack.c.b16 %v6607, %v6598
        %v7166 = vpack.c.b16 %v6608, %v6599
        %v7167 = vpack.c.b16 %v6609, %v6600
        %v7168 = vpack.c.b16 %v6610, %v6601
        %v7169 = vpack.c.b16 %v6611, %v6602
        %v7170 = vpack.c.b16 %v6612, %v6603
        %v7171 = vpack.c.b16 %v6613, %v6604
        %v7172 = vpack.c.b16 %v6623, %v6614
        %v7173 = vpack.c.b16 %v6624, %v6615
        %v7174 = vpack.c.b16 %v6625, %v6616
        %v7175 = vpack.c.b16 %v6626, %v6617
        %v7176 = vpack.c.b16 %v6627, %v6618
        %v7177 = vpack.c.b16 %v6628, %v6619
        %v7178 = vpack.c.b16 %v6629, %v6620
        %v7179 = vpack.c.b16 %v6630, %v6621
        %v7180 = vpack.c.b16 %v6631, %v6622
        %v7181 = vpack.c.b16 %v6641, %v6632
        %v7182 = vpack.c.b16 %v6642, %v6633
        %v7183 = vpack.c.b16 %v6643, %v6634
        %v7184 = vpack.c.b16 %v6644, %v6635
        %v7185 = vpack.c.b16 %v6645, %v6636
        %v7186 = vpack.c.b16 %v6646, %v6637
        %v7187 = vpack.c.b16 %v6647, %v6638
        %v7188 = vpack.c.b16 %v6648, %v6639
        %v7189 = vpack.c.b16 %v6649, %v6640
        %v7190 = vpack.c.b16 %v6659, %v6650
        %v7191 = vpack.c.b16 %v6660, %v6651
        %v7192 = vpack.c.b16 %v6661, %v6652
        %v7193 = vpack.c.b16 %v6662, %v6653
        %v7194 = vpack.c.b16 %v6663, %v6654
        %v7195 = vpack.c.b16 %v6664, %v6655
        %v7196 = vpack.c.b16 %v6665, %v6656
        %v7197 = vpack.c.b16 %v6666, %v6657
        %v7198 = vpack.c.b16 %v6667, %v6658
        %v7199 = vpack.c.b16 %v6677, %v6668
        %v7200 = vpack.c.b16 %v6678, %v6669
        %v7201 = vpack.c.b16 %v6679, %v6670
        %v7202 = vpack.c.b16 %v6680, %v6671
        %v7203 = vpack.c.b16 %v6681, %v6672
        %v7204 = vpack.c.b16 %v6682, %v6673
        %v7205 = vpack.c.b16 %v6683, %v6674
        %v7206 = vpack.c.b16 %v6684, %v6675
        %v7207 = vpack.c.b16 %v6685, %v6676
        %v7208 = vpack.c.b16 %v6695, %v6686
        %v7209 = vpack.c.b16 %v6696, %v6687
        %v7210 = vpack.c.b16 %v6697, %v6688
        %v7211 = vpack.c.b16 %v6698, %v6689
        %v7212 = vpack.c.b16 %v6699, %v6690
        %v7213 = vpack.c.b16 %v6700, %v6691
        %v7214 = vpack.c.b16 %v6701, %v6692
        %v7215 = vpack.c.b16 %v6702, %v6693
        %v7216 = vpack.c.b16 %v6703, %v6694
        %v7217 = vpack.c.b16 %v6713, %v6704
        %v7218 = vpack.c.b16 %v6714, %v6705
        %v7219 = vpack.c.b16 %v6715, %v6706
        %v7220 = vpack.c.b16 %v6716, %v6707
        %v7221 = vpack.c.b16 %v6717, %v6708
        %v7222 = vpack.c.b16 %v6718, %v6709
        %v7223 = vpack.c.b16 %v6719, %v6710
        %v7224 = vpack.c.b16 %v6720, %v6711
        %v7225 = vpack.c.b16 %v6721, %v6712
        %v7226 = vpack.c.b16 %v6731, %v6722
        %v7227 = vpack.c.b16 %v6732, %v6723
        %v7228 = vpack.c.b16 %v6733, %v6724
        %v7229 = vpack.c.b16 %v6734, %v6725
        %v7230 = vpack.c.b16 %v6735, %v6726
        %v7231 = vpack.c.b16 %v6736, %v6727
        %v7232 = vpack.c.b16 %v6737, %v6728
        %v7233 = vpack.c.b16 %v6738, %v6729
        %v7234 = vpack.c.b16 %v6739, %v6730
        %v7235 = vpack.c.b16 %v6749, %v6740
        %v7236 = vpack.c.b16 %v6750, %v6741
        %v7237 = vpack.c.b16 %v6751, %v6742
        %v7238 = vpack.c.b16 %v6752, %v6743
        %v7239 = vpack.c.b16 %v6753, %v6744
        %v7240 = vpack.c.b16 %v6754, %v6745
        %v7241 = vpack.c.b16 %v6755, %v6746
        %v7242 = vpack.c.b16 %v6756, %v6747
        %v7243 = vpack.c.b16 %v6757, %v6748
        %v7244 = vpack.c.b16 %v6767, %v6758
        %v7245 = vpack.c.b16 %v6768, %v6759
        %v7246 = vpack.c.b16 %v6769, %v6760
        %v7247 = vpack.c.b16 %v6770, %v6761
        %v7248 = vpack.c.b16 %v6771, %v6762
        %v7249 = vpack.c.b16 %v6772, %v6763
        %v7250 = vpack.c.b16 %v6773, %v6764
        %v7251 = vpack.c.b16 %v6774, %v6765
        %v7252 = vpack.c.b16 %v6775, %v6766
        %v7253 = vpack.c.b16 %v6785, %v6776
        %v7254 = vpack.c.b16 %v6786, %v6777
        %v7255 = vpack.c.b16 %v6787, %v6778
        %v7256 = vpack.c.b16 %v6788, %v6779
        %v7257 = vpack.c.b16 %v6789, %v6780
        %v7258 = vpack.c.b16 %v6790, %v6781
        %v7259 = vpack.c.b16 %v6791, %v6782
        %v7260 = vpack.c.b16 %v6792, %v6783
        %v7261 = vpack.c.b16 %v6793, %v6784
        %v7262 = vpack.c.b16 %v6803, %v6794
        %v7263 = vpack.c.b16 %v6804, %v6795
        %v7264 = vpack.c.b16 %v6805, %v6796
        %v7265 = vpack.c.b16 %v6806, %v6797
        %v7266 = vpack.c.b16 %v6807, %v6798
        %v7267 = vpack.c.b16 %v6808, %v6799
        %v7268 = vpack.c.b16 %v6809, %v6800
        %v7269 = vpack.c.b16 %v6810, %v6801
        %v7270 = vpack.c.b16 %v6811, %v6802
        %v7271 = vpack.c.b16 %v6821, %v6812
        %v7272 = vpack.c.b16 %v6822, %v6813
        %v7273 = vpack.c.b16 %v6823, %v6814
        %v7274 = vpack.c.b16 %v6824, %v6815
        %v7275 = vpack.c.b16 %v6825, %v6816
        %v7276 = vpack.c.b16 %v6826, %v6817
        %v7277 = vpack.c.b16 %v6827, %v6818
        %v7278 = vpack.c.b16 %v6828, %v6819
        %v7279 = vpack.c.b16 %v6829, %v6820
        %v7280 = vpack.c.b16 %v6839, %v6830
        %v7281 = vpack.c.b16 %v6840, %v6831
        %v7282 = vpack.c.b16 %v6841, %v6832
        %v7283 = vpack.c.b16 %v6842, %v6833
        %v7284 = vpack.c.b16 %v6843, %v6834
        %v7285 = vpack.c.b16 %v6844, %v6835
        %v7286 = vpack.c.b16 %v6845, %v6836
        %v7287 = vpack.c.b16 %v6846, %v6837
        %v7288 = vpack.c.b16 %v6847, %v6838
        %v7289 = vpack.c.b16 %v6857, %v6848
        %v7290 = vpack.c.b16 %v6858, %v6849
        %v7291 = vpack.c.b16 %v6859, %v6850
        %v7292 = vpack.c.b16 %v6860, %v6851
        %v7293 = vpack.c.b16 %v6861, %v6852
        %v7294 = vpack.c.b16 %v6862, %v6853
        %v7295 = vpack.c.b16 %v6863, %v6854
        %v7296 = vpack.c.b16 %v6864, %v6855
        %v7297 = vpack.c.b16 %v6865, %v6856
        %v7298 = vpack.c.b16 %v6875, %v6866
        %v7299 = vpack.c.b16 %v6876, %v6867
        %v7300 = vpack.c.b16 %v6877, %v6868
        %v7301 = vpack.c.b16 %v6878, %v6869
        %v7302 = vpack.c.b16 %v6879, %v6870
        %v7303 = vpack.c.b16 %v6880, %v6871
        %v7304 = vpack.c.b16 %v6881, %v6872
        %v7305 = vpack.c.b16 %v6882, %v6873
        %v7306 = vpack.c.b16 %v6883, %v6874
        %v7307 = vpack.c.b16 %v6893, %v6884
        %v7308 = vpack.c.b16 %v6894, %v6885
        %v7309 = vpack.c.b16 %v6895, %v6886
        %v7310 = vpack.c.b16 %v6896, %v6887
        %v7311 = vpack.c.b16 %v6897, %v6888
        %v7312 = vpack.c.b16 %v6898, %v6889
        %v7313 = vpack.c.b16 %v6899, %v6890
        %v7314 = vpack.c.b16 %v6900, %v6891
        %v7315 = vpack.c.b16 %v6901, %v6892
        %v7316 = vpack.c.b16 %v6911, %v6902
        %v7317 = vpack.c.b16 %v6912, %v6903
        %v7318 = vpack.c.b16 %v6913, %v6904
        %v7319 = vpack.c.b16 %v6914, %v6905
        %v7320 = vpack.c.b16 %v6915, %v6906
        %v7321 = vpack.c.b16 %v6916, %v6907
        %v7322 = vpack.c.b16 %v6917, %v6908
        %v7323 = vpack.c.b16 %v6918, %v6909
        %v7324 = vpack.c.b16 %v6919, %v6910
        %v7325 = vpack.c.b16 %v6929, %v6920
        %v7326 = vpack.c.b16 %v6930, %v6921
        %v7327 = vpack.c.b16 %v6931, %v6922
        %v7328 = vpack.c.b16 %v6932, %v6923
        %v7329 = vpack.c.b16 %v6933, %v6924
        %v7330 = vpack.c.b16 %v6934, %v6925
        %v7331 = vpack.c.b16 %v6935, %v6926
        %v7332 = vpack.c.b16 %v6936, %v6927
        %v7333 = vpack.c.b16 %v6937, %v6928
        %v7334 = vpack.c.b16 %v6947, %v6938
        %v7335 = vpack.c.b16 %v6948, %v6939
        %v7336 = vpack.c.b16 %v6949, %v6940
        %v7337 = vpack.c.b16 %v6950, %v6941
        %v7338 = vpack.c.b16 %v6951, %v6942
        %v7339 = vpack.c.b16 %v6952, %v6943
        %v7340 = vpack.c.b16 %v6953, %v6944
        %v7341 = vpack.c.b16 %v6954, %v6945
        %v7342 = vpack.c.b16 %v6955, %v6946
        %v7343 = vpack.c.b16 %v6965, %v6956
        %v7344 = vpack.c.b16 %v6966, %v6957
        %v7345 = vpack.c.b16 %v6967, %v6958
        %v7346 = vpack.c.b16 %v6968, %v6959
        %v7347 = vpack.c.b16 %v6969, %v6960
        %v7348 = vpack.c.b16 %v6970, %v6961
        %v7349 = vpack.c.b16 %v6971, %v6962
        %v7350 = vpack.c.b16 %v6972, %v6963
        %v7351 = vpack.c.b16 %v6973, %v6964
        %v7352 = vpack.c.b16 %v6983, %v6974
        %v7353 = vpack.c.b16 %v6984, %v6975
        %v7354 = vpack.c.b16 %v6985, %v6976
        %v7355 = vpack.c.b16 %v6986, %v6977
        %v7356 = vpack.c.b16 %v6987, %v6978
        %v7357 = vpack.c.b16 %v6988, %v6979
        %v7358 = vpack.c.b16 %v6989, %v6980
        %v7359 = vpack.c.b16 %v6990, %v6981
        %v7360 = vpack.c.b16 %v6991, %v6982
        %v7361 = vpack.c.b16 %v7001, %v6992
        %v7362 = vpack.c.b16 %v7002, %v6993
        %v7363 = vpack.c.b16 %v7003, %v6994
        %v7364 = vpack.c.b16 %v7004, %v6995
        %v7365 = vpack.c.b16 %v7005, %v6996
        %v7366 = vpack.c.b16 %v7006, %v6997
        %v7367 = vpack.c.b16 %v7007, %v6998
        %v7368 = vpack.c.b16 %v7008, %v6999
        %v7369 = vpack.c.b16 %v7009, %v7000
        %v7370 = vpack.c.b16 %v7019, %v7010
        %v7371 = vpack.c.b16 %v7020, %v7011
        %v7372 = vpack.c.b16 %v7021, %v7012
        %v7373 = vpack.c.b16 %v7022, %v7013
        %v7374 = vpack.c.b16 %v7023, %v7014
        %v7375 = vpack.c.b16 %v7024, %v7015
        %v7376 = vpack.c.b16 %v7025, %v7016
        %v7377 = vpack.c.b16 %v7026, %v7017
        %v7378 = vpack.c.b16 %v7027, %v7018
        %v7379 = vpack.c.b16 %v7037, %v7028
        %v7380 = vpack.c.b16 %v7038, %v7029
        %v7381 = vpack.c.b16 %v7039, %v7030
        %v7382 = vpack.c.b16 %v7040, %v7031
        %v7383 = vpack.c.b16 %v7041, %v7032
        %v7384 = vpack.c.b16 %v7042, %v7033
        %v7385 = vpack.c.b16 %v7043, %v7034
        %v7386 = vpack.c.b16 %v7044, %v7035
        %v7387 = vpack.c.b16 %v7045, %v7036
        %v7388 = vpack.c.b16 %v7055, %v7046
        %v7389 = vpack.c.b16 %v7056, %v7047
        %v7390 = vpack.c.b16 %v7057, %v7048
        %v7391 = vpack.c.b16 %v7058, %v7049
        %v7392 = vpack.c.b16 %v7059, %v7050
        %v7393 = vpack.c.b16 %v7060, %v7051
        %v7394 = vpack.c.b16 %v7061, %v7052
        %v7395 = vpack.c.b16 %v7062, %v7053
        %v7396 = vpack.c.b16 %v7063, %v7054
        %v7397 = vpack.c.b16 %v7073, %v7064
        %v7398 = vpack.c.b16 %v7074, %v7065
        %v7399 = vpack.c.b16 %v7075, %v7066
        %v7400 = vpack.c.b16 %v7076, %v7067
        %v7401 = vpack.c.b16 %v7077, %v7068
        %v7402 = vpack.c.b16 %v7078, %v7069
        %v7403 = vpack.c.b16 %v7079, %v7070
        %v7404 = vpack.c.b16 %v7080, %v7071
        %v7405 = vpack.c.b16 %v7081, %v7072
        %v7406 = vpack.c.b16 %v7091, %v7082
        %v7407 = vpack.c.b16 %v7092, %v7083
        %v7408 = vpack.c.b16 %v7093, %v7084
        %v7409 = vpack.c.b16 %v7094, %v7085
        %v7410 = vpack.c.b16 %v7095, %v7086
        %v7411 = vpack.c.b16 %v7096, %v7087
        %v7412 = vpack.c.b16 %v7097, %v7088
        %v7413 = vpack.c.b16 %v7098, %v7089
        %v7414 = vpack.c.b16 %v7099, %v7090
        %v7415 = vpack.c.b16 %v7109, %v7100
        %v7416 = vpack.c.b16 %v7110, %v7101
        %v7417 = vpack.c.b16 %v7111, %v7102
        %v7418 = vpack.c.b16 %v7112, %v7103
        %v7419 = vpack.c.b16 %v7113, %v7104
        %v7420 = vpack.c.b16 %v7114, %v7105
        %v7421 = vpack.c.b16 %v7115, %v7106
        %v7422 = vpack.c.b16 %v7116, %v7107
        %v7423 = vpack.c.b16 %v7117, %v7108
        %v7424 = vpack.c.b16 %v7127, %v7118
        %v7425 = vpack.c.b16 %v7128, %v7119
        %v7426 = vpack.c.b16 %v7129, %v7120
        %v7427 = vpack.c.b16 %v7130, %v7121
        %v7428 = vpack.c.b16 %v7131, %v7122
        %v7429 = vpack.c.b16 %v7132, %v7123
        %v7430 = vpack.c.b16 %v7133, %v7124
        %v7431 = vpack.c.b16 %v7134, %v7125
        %v7432 = vpack.c.b16 %v7135, %v7126
        %v7433 = vpack.c.b16 %v7145, %v7136
        %v7434 = vpack.c.b16 %v7146, %v7137
        %v7435 = vpack.c.b16 %v7147, %v7138
        %v7436 = vpack.c.b16 %v7148, %v7139
        %v7437 = vpack.c.b16 %v7149, %v7140
        %v7438 = vpack.c.b16 %v7150, %v7141
        %v7439 = vpack.c.b16 %v7151, %v7142
        %v7440 = vpack.c.b16 %v7152, %v7143
        %v7441 = vpack.c.b16 %v7153, %v7144
        %v7874 = vunpack.c.l.b16 %v6114
        %v7875 = vunpack.c.l.b16 %v6115
        %v7876 = vunpack.c.l.b16 %v6116
        %v7877 = vunpack.c.l.b16 %v6117
        %v7878 = vunpack.c.l.b16 %v6118
        %v7879 = vunpack.c.l.b16 %v6119
        %v7880 = vunpack.c.l.b16 %v6120
        %v7881 = vunpack.c.l.b16 %v6121
        %v7882 = vunpack.c.l.b16 %v6122
        %v7883 = vunpack.c.l.b16 %v6123
        %v7884 = vunpack.c.l.b16 %v6124
        %v7885 = vunpack.c.l.b16 %v6125
        %v7886 = vunpack.c.l.b16 %v6126
        %v7887 = vunpack.c.l.b16 %v6127
        %v7888 = vunpack.c.l.b16 %v6128
        %v7889 = vunpack.c.l.b16 %v6129
        %v7890 = vunpack.c.l.b16 %v6130
        %v7891 = vunpack.c.l.b16 %v6131
        %v7892 = vunpack.c.l.b16 %v6132
        %v7893 = vunpack.c.l.b16 %v6133
        %v7894 = vunpack.c.l.b16 %v6134
        %v7895 = vunpack.c.l.b16 %v6135
        %v7896 = vunpack.c.l.b16 %v6136
        %v7897 = vunpack.c.l.b16 %v6137
        %v7898 = vunpack.c.l.b16 %v6138
        %v7899 = vunpack.c.l.b16 %v6139
        %v7900 = vunpack.c.l.b16 %v6140
        %v7901 = vunpack.c.l.b16 %v6141
        %v7902 = vunpack.c.l.b16 %v6142
        %v7903 = vunpack.c.l.b16 %v6143
        %v7904 = vunpack.c.l.b16 %v6144
        %v7905 = vunpack.c.l.b16 %v6145
        %v7906 = vunpack.c.l.b16 %v6146
        %v7907 = vunpack.c.l.b16 %v6147
        %v7908 = vunpack.c.l.b16 %v6148
        %v7909 = vunpack.c.l.b16 %v6149
        %v7910 = vunpack.c.l.b16 %v6150
        %v7911 = vunpack.c.l.b16 %v6151
        %v7912 = vunpack.c.l.b16 %v6152
        %v7913 = vunpack.c.l.b16 %v6153
        %v7914 = vunpack.c.l.b16 %v6154
        %v7915 = vunpack.c.l.b16 %v6155
        %v7916 = vunpack.c.l.b16 %v6156
        %v7917 = vunpack.c.l.b16 %v6157
        %v7918 = vunpack.c.l.b16 %v6158
        %v7919 = vunpack.c.l.b16 %v6159
        %v7920 = vunpack.c.l.b16 %v6160
        %v7921 = vunpack.c.l.b16 %v6161
        %v7922 = vunpack.c.l.b16 %v6162
        %v7923 = vunpack.c.l.b16 %v6163
        %v7924 = vunpack.c.l.b16 %v6164
        %v7925 = vunpack.c.l.b16 %v6165
        %v7926 = vunpack.c.l.b16 %v6166
        %v7927 = vunpack.c.l.b16 %v6167
        %v7928 = vunpack.c.l.b16 %v6168
        %v7929 = vunpack.c.l.b16 %v6169
        %v7930 = vunpack.c.l.b16 %v6170
        %v7931 = vunpack.c.l.b16 %v6171
        %v7932 = vunpack.c.l.b16 %v6172
        %v7933 = vunpack.c.l.b16 %v6173
        %v7934 = vunpack.c.l.b16 %v6174
        %v7935 = vunpack.c.l.b16 %v6175
        %v7936 = vunpack.c.l.b16 %v6176
        %v7937 = vunpack.c.l.b16 %v6177
        %v7938 = vunpack.c.l.b16 %v6178
        %v7939 = vunpack.c.l.b16 %v6179
        %v7940 = vunpack.c.l.b16 %v6180
        %v7941 = vunpack.c.l.b16 %v6181
        %v7942 = vunpack.c.l.b16 %v6182
        %v7943 = vunpack.c.l.b16 %v6183
        %v7944 = vunpack.c.l.b16 %v6184
        %v7945 = vunpack.c.l.b16 %v6185
        %v7946 = vunpack.c.l.b16 %v6186
        %v7947 = vunpack.c.l.b16 %v6187
        %v7948 = vunpack.c.l.b16 %v6188
        %v7949 = vunpack.c.l.b16 %v6189
        %v7950 = vunpack.c.l.b16 %v6190
        %v7951 = vunpack.c.l.b16 %v6191
        %v7952 = vunpack.c.l.b16 %v6192
        %v7953 = vunpack.c.l.b16 %v6193
        %v7954 = vunpack.c.l.b16 %v6194
        %v7955 = vunpack.c.l.b16 %v6195
        %v7956 = vunpack.c.l.b16 %v6196
        %v7957 = vunpack.c.l.b16 %v6197
        %v7958 = vunpack.c.l.b16 %v6198
        %v7959 = vunpack.c.l.b16 %v6199
        %v7960 = vunpack.c.l.b16 %v6200
        %v7961 = vunpack.c.l.b16 %v6201
        %v7962 = vunpack.c.l.b16 %v6202
        %v7963 = vunpack.c.l.b16 %v6203
        %v7964 = vunpack.c.l.b16 %v6204
        %v7965 = vunpack.c.l.b16 %v6205
        %v7966 = vunpack.c.l.b16 %v6206
        %v7967 = vunpack.c.l.b16 %v6207
        %v7968 = vunpack.c.l.b16 %v6208
        %v7969 = vunpack.c.l.b16 %v6209
        %v7970 = vunpack.c.l.b16 %v6210
        %v7971 = vunpack.c.l.b16 %v6211
        %v7972 = vunpack.c.l.b16 %v6212
        %v7973 = vunpack.c.l.b16 %v6213
        %v7974 = vunpack.c.l.b16 %v6214
        %v7975 = vunpack.c.l.b16 %v6215
        %v7976 = vunpack.c.l.b16 %v6216
        %v7977 = vunpack.c.l.b16 %v6217
        %v7978 = vunpack.c.l.b16 %v6218
        %v7979 = vunpack.c.l.b16 %v6219
        %v7980 = vunpack.c.l.b16 %v6220
        %v7981 = vunpack.c.l.b16 %v6221
        %v7982 = vunpack.c.l.b16 %v6222
        %v7983 = vunpack.c.l.b16 %v6223
        %v7984 = vunpack.c.l.b16 %v6224
        %v7985 = vunpack.c.l.b16 %v6225
        %v7986 = vunpack.c.l.b16 %v6226
        %v7987 = vunpack.c.l.b16 %v6227
        %v7988 = vunpack.c.l.b16 %v6228
        %v7989 = vunpack.c.l.b16 %v6229
        %v7990 = vunpack.c.l.b16 %v6230
        %v7991 = vunpack.c.l.b16 %v6231
        %v7992 = vunpack.c.l.b16 %v6232
        %v7993 = vunpack.c.l.b16 %v6233
        %v7994 = vunpack.c.l.b16 %v6234
        %v7995 = vunpack.c.l.b16 %v6235
        %v7996 = vunpack.c.l.b16 %v6236
        %v7997 = vunpack.c.l.b16 %v6237
        %v7998 = vunpack.c.l.b16 %v6238
        %v7999 = vunpack.c.l.b16 %v6239
        %v8000 = vunpack.c.l.b16 %v6240
        %v8001 = vunpack.c.l.b16 %v6241
        %v8002 = vunpack.c.l.b16 %v6242
        %v8003 = vunpack.c.l.b16 %v6243
        %v8004 = vunpack.c.l.b16 %v6244
        %v8005 = vunpack.c.l.b16 %v6245
        %v8006 = vunpack.c.l.b16 %v6246
        %v8007 = vunpack.c.l.b16 %v6247
        %v8008 = vunpack.c.l.b16 %v6248
        %v8009 = vunpack.c.l.b16 %v6249
        %v8010 = vunpack.c.l.b16 %v6250
        %v8011 = vunpack.c.l.b16 %v6251
        %v8012 = vunpack.c.l.b16 %v6252
        %v8013 = vunpack.c.l.b16 %v6253
        %v8014 = vunpack.c.l.b16 %v6254
        %v8015 = vunpack.c.l.b16 %v6255
        %v8016 = vunpack.c.l.b16 %v6256
        %v8017 = vunpack.c.l.b16 %v6257
        %v8018 = vpack.c.b16 %v7875, %v7874
        %v8019 = vpack.c.b16 %v7877, %v7876
        %v8020 = vpack.c.b16 %v7879, %v7878
        %v8021 = vpack.c.b16 %v7881, %v7880
        %v8022 = vpack.c.b16 %v7883, %v7882
        %v8023 = vpack.c.b16 %v7885, %v7884
        %v8024 = vpack.c.b16 %v7887, %v7886
        %v8025 = vpack.c.b16 %v7889, %v7888
        %v8026 = vpack.c.b16 %v7891, %v7890
        %v8027 = vpack.c.b16 %v7893, %v7892
        %v8028 = vpack.c.b16 %v7895, %v7894
        %v8029 = vpack.c.b16 %v7897, %v7896
        %v8030 = vpack.c.b16 %v7899, %v7898
        %v8031 = vpack.c.b16 %v7901, %v7900
        %v8032 = vpack.c.b16 %v7903, %v7902
        %v8033 = vpack.c.b16 %v7905, %v7904
        %v8034 = vpack.c.b16 %v7907, %v7906
        %v8035 = vpack.c.b16 %v7909, %v7908
        %v8036 = vpack.c.b16 %v7911, %v7910
        %v8037 = vpack.c.b16 %v7913, %v7912
        %v8038 = vpack.c.b16 %v7915, %v7914
        %v8039 = vpack.c.b16 %v7917, %v7916
        %v8040 = vpack.c.b16 %v7919, %v7918
        %v8041 = vpack.c.b16 %v7921, %v7920
        %v8042 = vpack.c.b16 %v7923, %v7922
        %v8043 = vpack.c.b16 %v7925, %v7924
        %v8044 = vpack.c.b16 %v7927, %v7926
        %v8045 = vpack.c.b16 %v7929, %v7928
        %v8046 = vpack.c.b16 %v7931, %v7930
        %v8047 = vpack.c.b16 %v7933, %v7932
        %v8048 = vpack.c.b16 %v7935, %v7934
        %v8049 = vpack.c.b16 %v7937, %v7936
        %v8050 = vpack.c.b16 %v7939, %v7938
        %v8051 = vpack.c.b16 %v7941, %v7940
        %v8052 = vpack.c.b16 %v7943, %v7942
        %v8053 = vpack.c.b16 %v7945, %v7944
        %v8054 = vpack.c.b16 %v7947, %v7946
        %v8055 = vpack.c.b16 %v7949, %v7948
        %v8056 = vpack.c.b16 %v7951, %v7950
        %v8057 = vpack.c.b16 %v7953, %v7952
        %v8058 = vpack.c.b16 %v7955, %v7954
        %v8059 = vpack.c.b16 %v7957, %v7956
        %v8060 = vpack.c.b16 %v7959, %v7958
        %v8061 = vpack.c.b16 %v7961, %v7960
        %v8062 = vpack.c.b16 %v7963, %v7962
        %v8063 = vpack.c.b16 %v7965, %v7964
        %v8064 = vpack.c.b16 %v7967, %v7966
        %v8065 = vpack.c.b16 %v7969, %v7968
        %v8066 = vpack.c.b16 %v7971, %v7970
        %v8067 = vpack.c.b16 %v7973, %v7972
        %v8068 = vpack.c.b16 %v7975, %v7974
        %v8069 = vpack.c.b16 %v7977, %v7976
        %v8070 = vpack.c.b16 %v7979, %v7978
        %v8071 = vpack.c.b16 %v7981, %v7980
        %v8072 = vpack.c.b16 %v7983, %v7982
        %v8073 = vpack.c.b16 %v7985, %v7984
        %v8074 = vpack.c.b16 %v7987, %v7986
        %v8075 = vpack.c.b16 %v7989, %v7988
        %v8076 = vpack.c.b16 %v7991, %v7990
        %v8077 = vpack.c.b16 %v7993, %v7992
        %v8078 = vpack.c.b16 %v7995, %v7994
        %v8079 = vpack.c.b16 %v7997, %v7996
        %v8080 = vpack.c.b16 %v7999, %v7998
        %v8081 = vpack.c.b16 %v8001, %v8000
        %v8082 = vpack.c.b16 %v8003, %v8002
        %v8083 = vpack.c.b16 %v8005, %v8004
        %v8084 = vpack.c.b16 %v8007, %v8006
        %v8085 = vpack.c.b16 %v8009, %v8008
        %v8086 = vpack.c.b16 %v8011, %v8010
        %v8087 = vpack.c.b16 %v8013, %v8012
        %v8088 = vpack.c.b16 %v8015, %v8014
        %v8089 = vpack.c.b16 %v8017, %v8016
        %8162 = vmatpush.bf16.msra.mxu0 %v8025
        %8163 = vmatpush.bf16.msra.mxu0 %v8024
        %8164 = vmatpush.bf16.msra.mxu0 %v8023
        %8165 = vmatpush.bf16.msra.mxu0 %v8022
        %8166 = vmatpush.bf16.msra.mxu0 %v8021
        %8167 = vmatpush.bf16.msra.mxu0 %v8020
        %8168 = vmatpush.bf16.msra.mxu0 %v8019
        %8169 = vmatpush.bf16.msra.mxu0 %v8018
        %8170 = vmatmul.bf16.gmra.mxu0 %v7154
        %v8171 = vpop.f32.mrf.mxu0
        %v8172 = vadd.f32 0.0, %v8171
        %v8173 = vpop.f32.mrf.mxu0
        %v8174 = vadd.f32 0.0, %v8173
        %8175 = vmatmul.bf16.gmra.mxu0 %v7163
        %v8176 = vpop.f32.mrf.mxu0
        %v8177 = vadd.f32 0.0, %v8176
        %v8178 = vpop.f32.mrf.mxu0
        %v8179 = vadd.f32 0.0, %v8178
        %8180 = vmatmul.bf16.gmra.mxu0 %v7172
        %v8181 = vpop.f32.mrf.mxu0
        %v8182 = vadd.f32 0.0, %v8181
        %v8183 = vpop.f32.mrf.mxu0
        %v8184 = vadd.f32 0.0, %v8183
        %8185 = vmatmul.bf16.gmra.mxu0 %v7181
        %v8186 = vpop.f32.mrf.mxu0
        %v8187 = vadd.f32 0.0, %v8186
        %v8188 = vpop.f32.mrf.mxu0
        %v8189 = vadd.f32 0.0, %v8188
        %8190 = vmatmul.bf16.gmra.mxu0 %v7190
        %v8191 = vpop.f32.mrf.mxu0
        %v8192 = vadd.f32 0.0, %v8191
        %v8193 = vpop.f32.mrf.mxu0
        %v8194 = vadd.f32 0.0, %v8193
        %8195 = vmatmul.bf16.gmra.mxu0 %v7199
        %v8196 = vpop.f32.mrf.mxu0
        %v8197 = vadd.f32 0.0, %v8196
        %v8198 = vpop.f32.mrf.mxu0
        %v8199 = vadd.f32 0.0, %v8198
        %8200 = vmatmul.bf16.gmra.mxu0 %v7208
        %v8201 = vpop.f32.mrf.mxu0
        %v8202 = vadd.f32 0.0, %v8201
        %v8203 = vpop.f32.mrf.mxu0
        %v8204 = vadd.f32 0.0, %v8203
        %8205 = vmatmul.bf16.gmra.mxu0 %v7217
        %v8206 = vpop.f32.mrf.mxu0
        %v8207 = vadd.f32 0.0, %v8206
        %v8208 = vpop.f32.mrf.mxu0
        %v8209 = vadd.f32 0.0, %v8208
        %8210 = vmatmul.bf16.gmra.mxu0 %v7226
        %v8211 = vpop.f32.mrf.mxu0
        %v8212 = vadd.f32 0.0, %v8211
        %v8213 = vpop.f32.mrf.mxu0
        %v8214 = vadd.f32 0.0, %v8213
        %8215 = vmatmul.bf16.gmra.mxu0 %v7235
        %v8216 = vpop.f32.mrf.mxu0
        %v8217 = vadd.f32 0.0, %v8216
        %v8218 = vpop.f32.mrf.mxu0
        %v8219 = vadd.f32 0.0, %v8218
        %8220 = vmatmul.bf16.gmra.mxu0 %v7244
        %v8221 = vpop.f32.mrf.mxu0
        %v8222 = vadd.f32 0.0, %v8221
        %v8223 = vpop.f32.mrf.mxu0
        %v8224 = vadd.f32 0.0, %v8223
        %8225 = vmatmul.bf16.gmra.mxu0 %v7253
        %v8226 = vpop.f32.mrf.mxu0
        %v8227 = vadd.f32 0.0, %v8226
        %v8228 = vpop.f32.mrf.mxu0
        %v8229 = vadd.f32 0.0, %v8228
        %8230 = vmatmul.bf16.gmra.mxu0 %v7262
        %v8231 = vpop.f32.mrf.mxu0
        %v8232 = vadd.f32 0.0, %v8231
        %v8233 = vpop.f32.mrf.mxu0
        %v8234 = vadd.f32 0.0, %v8233
        %8235 = vmatmul.bf16.gmra.mxu0 %v7271
        %v8236 = vpop.f32.mrf.mxu0
        %v8237 = vadd.f32 0.0, %v8236
        %v8238 = vpop.f32.mrf.mxu0
        %v8239 = vadd.f32 0.0, %v8238
        %8240 = vmatmul.bf16.gmra.mxu0 %v7280
        %v8241 = vpop.f32.mrf.mxu0
        %v8242 = vadd.f32 0.0, %v8241
        %v8243 = vpop.f32.mrf.mxu0
        %v8244 = vadd.f32 0.0, %v8243
        %8245 = vmatmul.bf16.gmra.mxu0 %v7289
        %v8246 = vpop.f32.mrf.mxu0
        %v8247 = vadd.f32 0.0, %v8246
        %v8248 = vpop.f32.mrf.mxu0
        %v8249 = vadd.f32 0.0, %v8248
        %8250 = vmatmul.bf16.gmra.mxu0 %v7298
        %v8251 = vpop.f32.mrf.mxu0
        %v8252 = vadd.f32 0.0, %v8251
        %v8253 = vpop.f32.mrf.mxu0
        %v8254 = vadd.f32 0.0, %v8253
        %8255 = vmatmul.bf16.gmra.mxu0 %v7307
        %v8256 = vpop.f32.mrf.mxu0
        %v8257 = vadd.f32 0.0, %v8256
        %v8258 = vpop.f32.mrf.mxu0
        %v8259 = vadd.f32 0.0, %v8258
        %8260 = vmatmul.bf16.gmra.mxu0 %v7316
        %v8261 = vpop.f32.mrf.mxu0
        %v8262 = vadd.f32 0.0, %v8261
        %v8263 = vpop.f32.mrf.mxu0
        %v8264 = vadd.f32 0.0, %v8263
        %8265 = vmatmul.bf16.gmra.mxu0 %v7325
        %v8266 = vpop.f32.mrf.mxu0
        %v8267 = vadd.f32 0.0, %v8266
        %v8268 = vpop.f32.mrf.mxu0
        %v8269 = vadd.f32 0.0, %v8268
        %8270 = vmatmul.bf16.gmra.mxu0 %v7334
        %v8271 = vpop.f32.mrf.mxu0
        %v8272 = vadd.f32 0.0, %v8271
        %v8273 = vpop.f32.mrf.mxu0
        %v8274 = vadd.f32 0.0, %v8273
        %8275 = vmatmul.bf16.gmra.mxu0 %v7343
        %v8276 = vpop.f32.mrf.mxu0
        %v8277 = vadd.f32 0.0, %v8276
        %v8278 = vpop.f32.mrf.mxu0
        %v8279 = vadd.f32 0.0, %v8278
        %8280 = vmatmul.bf16.gmra.mxu0 %v7352
        %v8281 = vpop.f32.mrf.mxu0
        %v8282 = vadd.f32 0.0, %v8281
        %v8283 = vpop.f32.mrf.mxu0
        %v8284 = vadd.f32 0.0, %v8283
        %8285 = vmatmul.bf16.gmra.mxu0 %v7361
        %v8286 = vpop.f32.mrf.mxu0
        %v8287 = vadd.f32 0.0, %v8286
        %v8288 = vpop.f32.mrf.mxu0
        %v8289 = vadd.f32 0.0, %v8288
        %8290 = vmatmul.bf16.gmra.mxu0 %v7370
        %v8291 = vpop.f32.mrf.mxu0
        %v8292 = vadd.f32 0.0, %v8291
        %v8293 = vpop.f32.mrf.mxu0
        %v8294 = vadd.f32 0.0, %v8293
        %8295 = vmatmul.bf16.gmra.mxu0 %v7379
        %v8296 = vpop.f32.mrf.mxu0
        %v8297 = vadd.f32 0.0, %v8296
        %v8298 = vpop.f32.mrf.mxu0
        %v8299 = vadd.f32 0.0, %v8298
        %8300 = vmatmul.bf16.gmra.mxu0 %v7388
        %v8301 = vpop.f32.mrf.mxu0
        %v8302 = vadd.f32 0.0, %v8301
        %v8303 = vpop.f32.mrf.mxu0
        %v8304 = vadd.f32 0.0, %v8303
        %8305 = vmatmul.bf16.gmra.mxu0 %v7397
        %v8306 = vpop.f32.mrf.mxu0
        %v8307 = vadd.f32 0.0, %v8306
        %v8308 = vpop.f32.mrf.mxu0
        %v8309 = vadd.f32 0.0, %v8308
        %8310 = vmatmul.bf16.gmra.mxu0 %v7406
        %v8311 = vpop.f32.mrf.mxu0
        %v8312 = vadd.f32 0.0, %v8311
        %v8313 = vpop.f32.mrf.mxu0
        %v8314 = vadd.f32 0.0, %v8313
        %8315 = vmatmul.bf16.gmra.mxu0 %v7415
        %v8316 = vpop.f32.mrf.mxu0
        %v8317 = vadd.f32 0.0, %v8316
        %v8318 = vpop.f32.mrf.mxu0
        %v8319 = vadd.f32 0.0, %v8318
        %8320 = vmatmul.bf16.gmra.mxu0 %v7424
        %v8321 = vpop.f32.mrf.mxu0
        %v8322 = vadd.f32 0.0, %v8321
        %v8323 = vpop.f32.mrf.mxu0
        %v8324 = vadd.f32 0.0, %v8323
        %8325 = vmatmul.bf16.gmra.mxu0 %v7433
        %v8326 = vpop.f32.mrf.mxu0
        %v8327 = vadd.f32 0.0, %v8326
        %v8328 = vpop.f32.mrf.mxu0
        %v8329 = vadd.f32 0.0, %v8328
        %8330 = vdwg.mxu0
        %8331 = vmatpush.bf16.msra.mxu0 %v8033
        %8332 = vmatpush.bf16.msra.mxu0 %v8032
        %8333 = vmatpush.bf16.msra.mxu0 %v8031
        %8334 = vmatpush.bf16.msra.mxu0 %v8030
        %8335 = vmatpush.bf16.msra.mxu0 %v8029
        %8336 = vmatpush.bf16.msra.mxu0 %v8028
        %8337 = vmatpush.bf16.msra.mxu0 %v8027
        %8338 = vmatpush.bf16.msra.mxu0 %v8026
        %8339 = vmatmul.bf16.gmra.mxu0 %v7155
        %v8340 = vpop.f32.mrf.mxu0
        %v8341 = vadd.f32 %v8172, %v8340
        %v8342 = vpop.f32.mrf.mxu0
        %v8343 = vadd.f32 %v8174, %v8342
        %8344 = vmatmul.bf16.gmra.mxu0 %v7164
        %v8345 = vpop.f32.mrf.mxu0
        %v8346 = vadd.f32 %v8177, %v8345
        %v8347 = vpop.f32.mrf.mxu0
        %v8348 = vadd.f32 %v8179, %v8347
        %8349 = vmatmul.bf16.gmra.mxu0 %v7173
        %v8350 = vpop.f32.mrf.mxu0
        %v8351 = vadd.f32 %v8182, %v8350
        %v8352 = vpop.f32.mrf.mxu0
        %v8353 = vadd.f32 %v8184, %v8352
        %8354 = vmatmul.bf16.gmra.mxu0 %v7182
        %v8355 = vpop.f32.mrf.mxu0
        %v8356 = vadd.f32 %v8187, %v8355
        %v8357 = vpop.f32.mrf.mxu0
        %v8358 = vadd.f32 %v8189, %v8357
        %8359 = vmatmul.bf16.gmra.mxu0 %v7191
        %v8360 = vpop.f32.mrf.mxu0
        %v8361 = vadd.f32 %v8192, %v8360
        %v8362 = vpop.f32.mrf.mxu0
        %v8363 = vadd.f32 %v8194, %v8362
        %8364 = vmatmul.bf16.gmra.mxu0 %v7200
        %v8365 = vpop.f32.mrf.mxu0
        %v8366 = vadd.f32 %v8197, %v8365
        %v8367 = vpop.f32.mrf.mxu0
        %v8368 = vadd.f32 %v8199, %v8367
        %8369 = vmatmul.bf16.gmra.mxu0 %v7209
        %v8370 = vpop.f32.mrf.mxu0
        %v8371 = vadd.f32 %v8202, %v8370
        %v8372 = vpop.f32.mrf.mxu0
        %v8373 = vadd.f32 %v8204, %v8372
        %8374 = vmatmul.bf16.gmra.mxu0 %v7218
        %v8375 = vpop.f32.mrf.mxu0
        %v8376 = vadd.f32 %v8207, %v8375
        %v8377 = vpop.f32.mrf.mxu0
        %v8378 = vadd.f32 %v8209, %v8377
        %8379 = vmatmul.bf16.gmra.mxu0 %v7227
        %v8380 = vpop.f32.mrf.mxu0
        %v8381 = vadd.f32 %v8212, %v8380
        %v8382 = vpop.f32.mrf.mxu0
        %v8383 = vadd.f32 %v8214, %v8382
        %8384 = vmatmul.bf16.gmra.mxu0 %v7236
        %v8385 = vpop.f32.mrf.mxu0
        %v8386 = vadd.f32 %v8217, %v8385
        %v8387 = vpop.f32.mrf.mxu0
        %v8388 = vadd.f32 %v8219, %v8387
        %8389 = vmatmul.bf16.gmra.mxu0 %v7245
        %v8390 = vpop.f32.mrf.mxu0
        %v8391 = vadd.f32 %v8222, %v8390
        %v8392 = vpop.f32.mrf.mxu0
        %v8393 = vadd.f32 %v8224, %v8392
        %8394 = vmatmul.bf16.gmra.mxu0 %v7254
        %v8395 = vpop.f32.mrf.mxu0
        %v8396 = vadd.f32 %v8227, %v8395
        %v8397 = vpop.f32.mrf.mxu0
        %v8398 = vadd.f32 %v8229, %v8397
        %8399 = vmatmul.bf16.gmra.mxu0 %v7263
        %v8400 = vpop.f32.mrf.mxu0
        %v8401 = vadd.f32 %v8232, %v8400
        %v8402 = vpop.f32.mrf.mxu0
        %v8403 = vadd.f32 %v8234, %v8402
        %8404 = vmatmul.bf16.gmra.mxu0 %v7272
        %v8405 = vpop.f32.mrf.mxu0
        %v8406 = vadd.f32 %v8237, %v8405
        %v8407 = vpop.f32.mrf.mxu0
        %v8408 = vadd.f32 %v8239, %v8407
        %8409 = vmatmul.bf16.gmra.mxu0 %v7281
        %v8410 = vpop.f32.mrf.mxu0
        %v8411 = vadd.f32 %v8242, %v8410
        %v8412 = vpop.f32.mrf.mxu0
        %v8413 = vadd.f32 %v8244, %v8412
        %8414 = vmatmul.bf16.gmra.mxu0 %v7290
        %v8415 = vpop.f32.mrf.mxu0
        %v8416 = vadd.f32 %v8247, %v8415
        %v8417 = vpop.f32.mrf.mxu0
        %v8418 = vadd.f32 %v8249, %v8417
        %8419 = vmatmul.bf16.gmra.mxu0 %v7299
        %v8420 = vpop.f32.mrf.mxu0
        %v8421 = vadd.f32 %v8252, %v8420
        %v8422 = vpop.f32.mrf.mxu0
        %v8423 = vadd.f32 %v8254, %v8422
        %8424 = vmatmul.bf16.gmra.mxu0 %v7308
        %v8425 = vpop.f32.mrf.mxu0
        %v8426 = vadd.f32 %v8257, %v8425
        %v8427 = vpop.f32.mrf.mxu0
        %v8428 = vadd.f32 %v8259, %v8427
        %8429 = vmatmul.bf16.gmra.mxu0 %v7317
        %v8430 = vpop.f32.mrf.mxu0
        %v8431 = vadd.f32 %v8262, %v8430
        %v8432 = vpop.f32.mrf.mxu0
        %v8433 = vadd.f32 %v8264, %v8432
        %8434 = vmatmul.bf16.gmra.mxu0 %v7326
        %v8435 = vpop.f32.mrf.mxu0
        %v8436 = vadd.f32 %v8267, %v8435
        %v8437 = vpop.f32.mrf.mxu0
        %v8438 = vadd.f32 %v8269, %v8437
        %8439 = vmatmul.bf16.gmra.mxu0 %v7335
        %v8440 = vpop.f32.mrf.mxu0
        %v8441 = vadd.f32 %v8272, %v8440
        %v8442 = vpop.f32.mrf.mxu0
        %v8443 = vadd.f32 %v8274, %v8442
        %8444 = vmatmul.bf16.gmra.mxu0 %v7344
        %v8445 = vpop.f32.mrf.mxu0
        %v8446 = vadd.f32 %v8277, %v8445
        %v8447 = vpop.f32.mrf.mxu0
        %v8448 = vadd.f32 %v8279, %v8447
        %8449 = vmatmul.bf16.gmra.mxu0 %v7353
        %v8450 = vpop.f32.mrf.mxu0
        %v8451 = vadd.f32 %v8282, %v8450
        %v8452 = vpop.f32.mrf.mxu0
        %v8453 = vadd.f32 %v8284, %v8452
        %8454 = vmatmul.bf16.gmra.mxu0 %v7362
        %v8455 = vpop.f32.mrf.mxu0
        %v8456 = vadd.f32 %v8287, %v8455
        %v8457 = vpop.f32.mrf.mxu0
        %v8458 = vadd.f32 %v8289, %v8457
        %8459 = vmatmul.bf16.gmra.mxu0 %v7371
        %v8460 = vpop.f32.mrf.mxu0
        %v8461 = vadd.f32 %v8292, %v8460
        %v8462 = vpop.f32.mrf.mxu0
        %v8463 = vadd.f32 %v8294, %v8462
        %8464 = vmatmul.bf16.gmra.mxu0 %v7380
        %v8465 = vpop.f32.mrf.mxu0
        %v8466 = vadd.f32 %v8297, %v8465
        %v8467 = vpop.f32.mrf.mxu0
        %v8468 = vadd.f32 %v8299, %v8467
        %8469 = vmatmul.bf16.gmra.mxu0 %v7389
        %v8470 = vpop.f32.mrf.mxu0
        %v8471 = vadd.f32 %v8302, %v8470
        %v8472 = vpop.f32.mrf.mxu0
        %v8473 = vadd.f32 %v8304, %v8472
        %8474 = vmatmul.bf16.gmra.mxu0 %v7398
        %v8475 = vpop.f32.mrf.mxu0
        %v8476 = vadd.f32 %v8307, %v8475
        %v8477 = vpop.f32.mrf.mxu0
        %v8478 = vadd.f32 %v8309, %v8477
        %8479 = vmatmul.bf16.gmra.mxu0 %v7407
        %v8480 = vpop.f32.mrf.mxu0
        %v8481 = vadd.f32 %v8312, %v8480
        %v8482 = vpop.f32.mrf.mxu0
        %v8483 = vadd.f32 %v8314, %v8482
        %8484 = vmatmul.bf16.gmra.mxu0 %v7416
        %v8485 = vpop.f32.mrf.mxu0
        %v8486 = vadd.f32 %v8317, %v8485
        %v8487 = vpop.f32.mrf.mxu0
        %v8488 = vadd.f32 %v8319, %v8487
        %8489 = vmatmul.bf16.gmra.mxu0 %v7425
        %v8490 = vpop.f32.mrf.mxu0
        %v8491 = vadd.f32 %v8322, %v8490
        %v8492 = vpop.f32.mrf.mxu0
        %v8493 = vadd.f32 %v8324, %v8492
        %8494 = vmatmul.bf16.gmra.mxu0 %v7434
        %v8495 = vpop.f32.mrf.mxu0
        %v8496 = vadd.f32 %v8327, %v8495
        %v8497 = vpop.f32.mrf.mxu0
        %v8498 = vadd.f32 %v8329, %v8497
        %8499 = vdwg.mxu0
        %8500 = vmatpush.bf16.msra.mxu0 %v8041
        %8501 = vmatpush.bf16.msra.mxu0 %v8040
        %8502 = vmatpush.bf16.msra.mxu0 %v8039
        %8503 = vmatpush.bf16.msra.mxu0 %v8038
        %8504 = vmatpush.bf16.msra.mxu0 %v8037
        %8505 = vmatpush.bf16.msra.mxu0 %v8036
        %8506 = vmatpush.bf16.msra.mxu0 %v8035
        %8507 = vmatpush.bf16.msra.mxu0 %v8034
        %8508 = vmatmul.bf16.gmra.mxu0 %v7156
        %v8509 = vpop.f32.mrf.mxu0
        %v8510 = vadd.f32 %v8341, %v8509
        %v8511 = vpop.f32.mrf.mxu0
        %v8512 = vadd.f32 %v8343, %v8511
        %8513 = vmatmul.bf16.gmra.mxu0 %v7165
        %v8514 = vpop.f32.mrf.mxu0
        %v8515 = vadd.f32 %v8346, %v8514
        %v8516 = vpop.f32.mrf.mxu0
        %v8517 = vadd.f32 %v8348, %v8516
        %8518 = vmatmul.bf16.gmra.mxu0 %v7174
        %v8519 = vpop.f32.mrf.mxu0
        %v8520 = vadd.f32 %v8351, %v8519
        %v8521 = vpop.f32.mrf.mxu0
        %v8522 = vadd.f32 %v8353, %v8521
        %8523 = vmatmul.bf16.gmra.mxu0 %v7183
        %v8524 = vpop.f32.mrf.mxu0
        %v8525 = vadd.f32 %v8356, %v8524
        %v8526 = vpop.f32.mrf.mxu0
        %v8527 = vadd.f32 %v8358, %v8526
        %8528 = vmatmul.bf16.gmra.mxu0 %v7192
        %v8529 = vpop.f32.mrf.mxu0
        %v8530 = vadd.f32 %v8361, %v8529
        %v8531 = vpop.f32.mrf.mxu0
        %v8532 = vadd.f32 %v8363, %v8531
        %8533 = vmatmul.bf16.gmra.mxu0 %v7201
        %v8534 = vpop.f32.mrf.mxu0
        %v8535 = vadd.f32 %v8366, %v8534
        %v8536 = vpop.f32.mrf.mxu0
        %v8537 = vadd.f32 %v8368, %v8536
        %8538 = vmatmul.bf16.gmra.mxu0 %v7210
        %v8539 = vpop.f32.mrf.mxu0
        %v8540 = vadd.f32 %v8371, %v8539
        %v8541 = vpop.f32.mrf.mxu0
        %v8542 = vadd.f32 %v8373, %v8541
        %8543 = vmatmul.bf16.gmra.mxu0 %v7219
        %v8544 = vpop.f32.mrf.mxu0
        %v8545 = vadd.f32 %v8376, %v8544
        %v8546 = vpop.f32.mrf.mxu0
        %v8547 = vadd.f32 %v8378, %v8546
        %8548 = vmatmul.bf16.gmra.mxu0 %v7228
        %v8549 = vpop.f32.mrf.mxu0
        %v8550 = vadd.f32 %v8381, %v8549
        %v8551 = vpop.f32.mrf.mxu0
        %v8552 = vadd.f32 %v8383, %v8551
        %8553 = vmatmul.bf16.gmra.mxu0 %v7237
        %v8554 = vpop.f32.mrf.mxu0
        %v8555 = vadd.f32 %v8386, %v8554
        %v8556 = vpop.f32.mrf.mxu0
        %v8557 = vadd.f32 %v8388, %v8556
        %8558 = vmatmul.bf16.gmra.mxu0 %v7246
        %v8559 = vpop.f32.mrf.mxu0
        %v8560 = vadd.f32 %v8391, %v8559
        %v8561 = vpop.f32.mrf.mxu0
        %v8562 = vadd.f32 %v8393, %v8561
        %8563 = vmatmul.bf16.gmra.mxu0 %v7255
        %v8564 = vpop.f32.mrf.mxu0
        %v8565 = vadd.f32 %v8396, %v8564
        %v8566 = vpop.f32.mrf.mxu0
        %v8567 = vadd.f32 %v8398, %v8566
        %8568 = vmatmul.bf16.gmra.mxu0 %v7264
        %v8569 = vpop.f32.mrf.mxu0
        %v8570 = vadd.f32 %v8401, %v8569
        %v8571 = vpop.f32.mrf.mxu0
        %v8572 = vadd.f32 %v8403, %v8571
        %8573 = vmatmul.bf16.gmra.mxu0 %v7273
        %v8574 = vpop.f32.mrf.mxu0
        %v8575 = vadd.f32 %v8406, %v8574
        %v8576 = vpop.f32.mrf.mxu0
        %v8577 = vadd.f32 %v8408, %v8576
        %8578 = vmatmul.bf16.gmra.mxu0 %v7282
        %v8579 = vpop.f32.mrf.mxu0
        %v8580 = vadd.f32 %v8411, %v8579
        %v8581 = vpop.f32.mrf.mxu0
        %v8582 = vadd.f32 %v8413, %v8581
        %8583 = vmatmul.bf16.gmra.mxu0 %v7291
        %v8584 = vpop.f32.mrf.mxu0
        %v8585 = vadd.f32 %v8416, %v8584
        %v8586 = vpop.f32.mrf.mxu0
        %v8587 = vadd.f32 %v8418, %v8586
        %8588 = vmatmul.bf16.gmra.mxu0 %v7300
        %v8589 = vpop.f32.mrf.mxu0
        %v8590 = vadd.f32 %v8421, %v8589
        %v8591 = vpop.f32.mrf.mxu0
        %v8592 = vadd.f32 %v8423, %v8591
        %8593 = vmatmul.bf16.gmra.mxu0 %v7309
        %v8594 = vpop.f32.mrf.mxu0
        %v8595 = vadd.f32 %v8426, %v8594
        %v8596 = vpop.f32.mrf.mxu0
        %v8597 = vadd.f32 %v8428, %v8596
        %8598 = vmatmul.bf16.gmra.mxu0 %v7318
        %v8599 = vpop.f32.mrf.mxu0
        %v8600 = vadd.f32 %v8431, %v8599
        %v8601 = vpop.f32.mrf.mxu0
        %v8602 = vadd.f32 %v8433, %v8601
        %8603 = vmatmul.bf16.gmra.mxu0 %v7327
        %v8604 = vpop.f32.mrf.mxu0
        %v8605 = vadd.f32 %v8436, %v8604
        %v8606 = vpop.f32.mrf.mxu0
        %v8607 = vadd.f32 %v8438, %v8606
        %8608 = vmatmul.bf16.gmra.mxu0 %v7336
        %v8609 = vpop.f32.mrf.mxu0
        %v8610 = vadd.f32 %v8441, %v8609
        %v8611 = vpop.f32.mrf.mxu0
        %v8612 = vadd.f32 %v8443, %v8611
        %8613 = vmatmul.bf16.gmra.mxu0 %v7345
        %v8614 = vpop.f32.mrf.mxu0
        %v8615 = vadd.f32 %v8446, %v8614
        %v8616 = vpop.f32.mrf.mxu0
        %v8617 = vadd.f32 %v8448, %v8616
        %8618 = vmatmul.bf16.gmra.mxu0 %v7354
        %v8619 = vpop.f32.mrf.mxu0
        %v8620 = vadd.f32 %v8451, %v8619
        %v8621 = vpop.f32.mrf.mxu0
        %v8622 = vadd.f32 %v8453, %v8621
        %8623 = vmatmul.bf16.gmra.mxu0 %v7363
        %v8624 = vpop.f32.mrf.mxu0
        %v8625 = vadd.f32 %v8456, %v8624
        %v8626 = vpop.f32.mrf.mxu0
        %v8627 = vadd.f32 %v8458, %v8626
        %8628 = vmatmul.bf16.gmra.mxu0 %v7372
        %v8629 = vpop.f32.mrf.mxu0
        %v8630 = vadd.f32 %v8461, %v8629
        %v8631 = vpop.f32.mrf.mxu0
        %v8632 = vadd.f32 %v8463, %v8631
        %8633 = vmatmul.bf16.gmra.mxu0 %v7381
        %v8634 = vpop.f32.mrf.mxu0
        %v8635 = vadd.f32 %v8466, %v8634
        %v8636 = vpop.f32.mrf.mxu0
        %v8637 = vadd.f32 %v8468, %v8636
        %8638 = vmatmul.bf16.gmra.mxu0 %v7390
        %v8639 = vpop.f32.mrf.mxu0
        %v8640 = vadd.f32 %v8471, %v8639
        %v8641 = vpop.f32.mrf.mxu0
        %v8642 = vadd.f32 %v8473, %v8641
        %8643 = vmatmul.bf16.gmra.mxu0 %v7399
        %v8644 = vpop.f32.mrf.mxu0
        %v8645 = vadd.f32 %v8476, %v8644
        %v8646 = vpop.f32.mrf.mxu0
        %v8647 = vadd.f32 %v8478, %v8646
        %8648 = vmatmul.bf16.gmra.mxu0 %v7408
        %v8649 = vpop.f32.mrf.mxu0
        %v8650 = vadd.f32 %v8481, %v8649
        %v8651 = vpop.f32.mrf.mxu0
        %v8652 = vadd.f32 %v8483, %v8651
        %8653 = vmatmul.bf16.gmra.mxu0 %v7417
        %v8654 = vpop.f32.mrf.mxu0
        %v8655 = vadd.f32 %v8486, %v8654
        %v8656 = vpop.f32.mrf.mxu0
        %v8657 = vadd.f32 %v8488, %v8656
        %8658 = vmatmul.bf16.gmra.mxu0 %v7426
        %v8659 = vpop.f32.mrf.mxu0
        %v8660 = vadd.f32 %v8491, %v8659
        %v8661 = vpop.f32.mrf.mxu0
        %v8662 = vadd.f32 %v8493, %v8661
        %8663 = vmatmul.bf16.gmra.mxu0 %v7435
        %v8664 = vpop.f32.mrf.mxu0
        %v8665 = vadd.f32 %v8496, %v8664
        %v8666 = vpop.f32.mrf.mxu0
        %v8667 = vadd.f32 %v8498, %v8666
        %8668 = vdwg.mxu0
        %8669 = vmatpush.bf16.msra.mxu0 %v8049
        %8670 = vmatpush.bf16.msra.mxu0 %v8048
        %8671 = vmatpush.bf16.msra.mxu0 %v8047
        %8672 = vmatpush.bf16.msra.mxu0 %v8046
        %8673 = vmatpush.bf16.msra.mxu0 %v8045
        %8674 = vmatpush.bf16.msra.mxu0 %v8044
        %8675 = vmatpush.bf16.msra.mxu0 %v8043
        %8676 = vmatpush.bf16.msra.mxu0 %v8042
        %8677 = vmatmul.bf16.gmra.mxu0 %v7157
        %v8678 = vpop.f32.mrf.mxu0
        %v8679 = vadd.f32 %v8510, %v8678
        %v8680 = vpop.f32.mrf.mxu0
        %v8681 = vadd.f32 %v8512, %v8680
        %8682 = vmatmul.bf16.gmra.mxu0 %v7166
        %v8683 = vpop.f32.mrf.mxu0
        %v8684 = vadd.f32 %v8515, %v8683
        %v8685 = vpop.f32.mrf.mxu0
        %v8686 = vadd.f32 %v8517, %v8685
        %8687 = vmatmul.bf16.gmra.mxu0 %v7175
        %v8688 = vpop.f32.mrf.mxu0
        %v8689 = vadd.f32 %v8520, %v8688
        %v8690 = vpop.f32.mrf.mxu0
        %v8691 = vadd.f32 %v8522, %v8690
        %8692 = vmatmul.bf16.gmra.mxu0 %v7184
        %v8693 = vpop.f32.mrf.mxu0
        %v8694 = vadd.f32 %v8525, %v8693
        %v8695 = vpop.f32.mrf.mxu0
        %v8696 = vadd.f32 %v8527, %v8695
        %8697 = vmatmul.bf16.gmra.mxu0 %v7193
        %v8698 = vpop.f32.mrf.mxu0
        %v8699 = vadd.f32 %v8530, %v8698
        %v8700 = vpop.f32.mrf.mxu0
        %v8701 = vadd.f32 %v8532, %v8700
        %8702 = vmatmul.bf16.gmra.mxu0 %v7202
        %v8703 = vpop.f32.mrf.mxu0
        %v8704 = vadd.f32 %v8535, %v8703
        %v8705 = vpop.f32.mrf.mxu0
        %v8706 = vadd.f32 %v8537, %v8705
        %8707 = vmatmul.bf16.gmra.mxu0 %v7211
        %v8708 = vpop.f32.mrf.mxu0
        %v8709 = vadd.f32 %v8540, %v8708
        %v8710 = vpop.f32.mrf.mxu0
        %v8711 = vadd.f32 %v8542, %v8710
        %8712 = vmatmul.bf16.gmra.mxu0 %v7220
        %v8713 = vpop.f32.mrf.mxu0
        %v8714 = vadd.f32 %v8545, %v8713
        %v8715 = vpop.f32.mrf.mxu0
        %v8716 = vadd.f32 %v8547, %v8715
        %8717 = vmatmul.bf16.gmra.mxu0 %v7229
        %v8718 = vpop.f32.mrf.mxu0
        %v8719 = vadd.f32 %v8550, %v8718
        %v8720 = vpop.f32.mrf.mxu0
        %v8721 = vadd.f32 %v8552, %v8720
        %8722 = vmatmul.bf16.gmra.mxu0 %v7238
        %v8723 = vpop.f32.mrf.mxu0
        %v8724 = vadd.f32 %v8555, %v8723
        %v8725 = vpop.f32.mrf.mxu0
        %v8726 = vadd.f32 %v8557, %v8725
        %8727 = vmatmul.bf16.gmra.mxu0 %v7247
        %v8728 = vpop.f32.mrf.mxu0
        %v8729 = vadd.f32 %v8560, %v8728
        %v8730 = vpop.f32.mrf.mxu0
        %v8731 = vadd.f32 %v8562, %v8730
        %8732 = vmatmul.bf16.gmra.mxu0 %v7256
        %v8733 = vpop.f32.mrf.mxu0
        %v8734 = vadd.f32 %v8565, %v8733
        %v8735 = vpop.f32.mrf.mxu0
        %v8736 = vadd.f32 %v8567, %v8735
        %8737 = vmatmul.bf16.gmra.mxu0 %v7265
        %v8738 = vpop.f32.mrf.mxu0
        %v8739 = vadd.f32 %v8570, %v8738
        %v8740 = vpop.f32.mrf.mxu0
        %v8741 = vadd.f32 %v8572, %v8740
        %8742 = vmatmul.bf16.gmra.mxu0 %v7274
        %v8743 = vpop.f32.mrf.mxu0
        %v8744 = vadd.f32 %v8575, %v8743
        %v8745 = vpop.f32.mrf.mxu0
        %v8746 = vadd.f32 %v8577, %v8745
        %8747 = vmatmul.bf16.gmra.mxu0 %v7283
        %v8748 = vpop.f32.mrf.mxu0
        %v8749 = vadd.f32 %v8580, %v8748
        %v8750 = vpop.f32.mrf.mxu0
        %v8751 = vadd.f32 %v8582, %v8750
        %8752 = vmatmul.bf16.gmra.mxu0 %v7292
        %v8753 = vpop.f32.mrf.mxu0
        %v8754 = vadd.f32 %v8585, %v8753
        %v8755 = vpop.f32.mrf.mxu0
        %v8756 = vadd.f32 %v8587, %v8755
        %8757 = vmatmul.bf16.gmra.mxu0 %v7301
        %v8758 = vpop.f32.mrf.mxu0
        %v8759 = vadd.f32 %v8590, %v8758
        %v8760 = vpop.f32.mrf.mxu0
        %v8761 = vadd.f32 %v8592, %v8760
        %8762 = vmatmul.bf16.gmra.mxu0 %v7310
        %v8763 = vpop.f32.mrf.mxu0
        %v8764 = vadd.f32 %v8595, %v8763
        %v8765 = vpop.f32.mrf.mxu0
        %v8766 = vadd.f32 %v8597, %v8765
        %8767 = vmatmul.bf16.gmra.mxu0 %v7319
        %v8768 = vpop.f32.mrf.mxu0
        %v8769 = vadd.f32 %v8600, %v8768
        %v8770 = vpop.f32.mrf.mxu0
        %v8771 = vadd.f32 %v8602, %v8770
        %8772 = vmatmul.bf16.gmra.mxu0 %v7328
        %v8773 = vpop.f32.mrf.mxu0
        %v8774 = vadd.f32 %v8605, %v8773
        %v8775 = vpop.f32.mrf.mxu0
        %v8776 = vadd.f32 %v8607, %v8775
        %8777 = vmatmul.bf16.gmra.mxu0 %v7337
        %v8778 = vpop.f32.mrf.mxu0
        %v8779 = vadd.f32 %v8610, %v8778
        %v8780 = vpop.f32.mrf.mxu0
        %v8781 = vadd.f32 %v8612, %v8780
        %8782 = vmatmul.bf16.gmra.mxu0 %v7346
        %v8783 = vpop.f32.mrf.mxu0
        %v8784 = vadd.f32 %v8615, %v8783
        %v8785 = vpop.f32.mrf.mxu0
        %v8786 = vadd.f32 %v8617, %v8785
        %8787 = vmatmul.bf16.gmra.mxu0 %v7355
        %v8788 = vpop.f32.mrf.mxu0
        %v8789 = vadd.f32 %v8620, %v8788
        %v8790 = vpop.f32.mrf.mxu0
        %v8791 = vadd.f32 %v8622, %v8790
        %8792 = vmatmul.bf16.gmra.mxu0 %v7364
        %v8793 = vpop.f32.mrf.mxu0
        %v8794 = vadd.f32 %v8625, %v8793
        %v8795 = vpop.f32.mrf.mxu0
        %v8796 = vadd.f32 %v8627, %v8795
        %8797 = vmatmul.bf16.gmra.mxu0 %v7373
        %v8798 = vpop.f32.mrf.mxu0
        %v8799 = vadd.f32 %v8630, %v8798
        %v8800 = vpop.f32.mrf.mxu0
        %v8801 = vadd.f32 %v8632, %v8800
        %8802 = vmatmul.bf16.gmra.mxu0 %v7382
        %v8803 = vpop.f32.mrf.mxu0
        %v8804 = vadd.f32 %v8635, %v8803
        %v8805 = vpop.f32.mrf.mxu0
        %v8806 = vadd.f32 %v8637, %v8805
        %8807 = vmatmul.bf16.gmra.mxu0 %v7391
        %v8808 = vpop.f32.mrf.mxu0
        %v8809 = vadd.f32 %v8640, %v8808
        %v8810 = vpop.f32.mrf.mxu0
        %v8811 = vadd.f32 %v8642, %v8810
        %8812 = vmatmul.bf16.gmra.mxu0 %v7400
        %v8813 = vpop.f32.mrf.mxu0
        %v8814 = vadd.f32 %v8645, %v8813
        %v8815 = vpop.f32.mrf.mxu0
        %v8816 = vadd.f32 %v8647, %v8815
        %8817 = vmatmul.bf16.gmra.mxu0 %v7409
        %v8818 = vpop.f32.mrf.mxu0
        %v8819 = vadd.f32 %v8650, %v8818
        %v8820 = vpop.f32.mrf.mxu0
        %v8821 = vadd.f32 %v8652, %v8820
        %8822 = vmatmul.bf16.gmra.mxu0 %v7418
        %v8823 = vpop.f32.mrf.mxu0
        %v8824 = vadd.f32 %v8655, %v8823
        %v8825 = vpop.f32.mrf.mxu0
        %v8826 = vadd.f32 %v8657, %v8825
        %8827 = vmatmul.bf16.gmra.mxu0 %v7427
        %v8828 = vpop.f32.mrf.mxu0
        %v8829 = vadd.f32 %v8660, %v8828
        %v8830 = vpop.f32.mrf.mxu0
        %v8831 = vadd.f32 %v8662, %v8830
        %8832 = vmatmul.bf16.gmra.mxu0 %v7436
        %v8833 = vpop.f32.mrf.mxu0
        %v8834 = vadd.f32 %v8665, %v8833
        %v8835 = vpop.f32.mrf.mxu0
        %v8836 = vadd.f32 %v8667, %v8835
        %8837 = vdwg.mxu0
        %8838 = vmatpush.bf16.msra.mxu0 %v8057
        %8839 = vmatpush.bf16.msra.mxu0 %v8056
        %8840 = vmatpush.bf16.msra.mxu0 %v8055
        %8841 = vmatpush.bf16.msra.mxu0 %v8054
        %8842 = vmatpush.bf16.msra.mxu0 %v8053
        %8843 = vmatpush.bf16.msra.mxu0 %v8052
        %8844 = vmatpush.bf16.msra.mxu0 %v8051
        %8845 = vmatpush.bf16.msra.mxu0 %v8050
        %8846 = vmatmul.bf16.gmra.mxu0 %v7158
        %v8847 = vpop.f32.mrf.mxu0
        %v8848 = vadd.f32 %v8679, %v8847
        %v8849 = vpop.f32.mrf.mxu0
        %v8850 = vadd.f32 %v8681, %v8849
        %8851 = vmatmul.bf16.gmra.mxu0 %v7167
        %v8852 = vpop.f32.mrf.mxu0
        %v8853 = vadd.f32 %v8684, %v8852
        %v8854 = vpop.f32.mrf.mxu0
        %v8855 = vadd.f32 %v8686, %v8854
        %8856 = vmatmul.bf16.gmra.mxu0 %v7176
        %v8857 = vpop.f32.mrf.mxu0
        %v8858 = vadd.f32 %v8689, %v8857
        %v8859 = vpop.f32.mrf.mxu0
        %v8860 = vadd.f32 %v8691, %v8859
        %8861 = vmatmul.bf16.gmra.mxu0 %v7185
        %v8862 = vpop.f32.mrf.mxu0
        %v8863 = vadd.f32 %v8694, %v8862
        %v8864 = vpop.f32.mrf.mxu0
        %v8865 = vadd.f32 %v8696, %v8864
        %8866 = vmatmul.bf16.gmra.mxu0 %v7194
        %v8867 = vpop.f32.mrf.mxu0
        %v8868 = vadd.f32 %v8699, %v8867
        %v8869 = vpop.f32.mrf.mxu0
        %v8870 = vadd.f32 %v8701, %v8869
        %8871 = vmatmul.bf16.gmra.mxu0 %v7203
        %v8872 = vpop.f32.mrf.mxu0
        %v8873 = vadd.f32 %v8704, %v8872
        %v8874 = vpop.f32.mrf.mxu0
        %v8875 = vadd.f32 %v8706, %v8874
        %8876 = vmatmul.bf16.gmra.mxu0 %v7212
        %v8877 = vpop.f32.mrf.mxu0
        %v8878 = vadd.f32 %v8709, %v8877
        %v8879 = vpop.f32.mrf.mxu0
        %v8880 = vadd.f32 %v8711, %v8879
        %8881 = vmatmul.bf16.gmra.mxu0 %v7221
        %v8882 = vpop.f32.mrf.mxu0
        %v8883 = vadd.f32 %v8714, %v8882
        %v8884 = vpop.f32.mrf.mxu0
        %v8885 = vadd.f32 %v8716, %v8884
        %8886 = vmatmul.bf16.gmra.mxu0 %v7230
        %v8887 = vpop.f32.mrf.mxu0
        %v8888 = vadd.f32 %v8719, %v8887
        %v8889 = vpop.f32.mrf.mxu0
        %v8890 = vadd.f32 %v8721, %v8889
        %8891 = vmatmul.bf16.gmra.mxu0 %v7239
        %v8892 = vpop.f32.mrf.mxu0
        %v8893 = vadd.f32 %v8724, %v8892
        %v8894 = vpop.f32.mrf.mxu0
        %v8895 = vadd.f32 %v8726, %v8894
        %8896 = vmatmul.bf16.gmra.mxu0 %v7248
        %v8897 = vpop.f32.mrf.mxu0
        %v8898 = vadd.f32 %v8729, %v8897
        %v8899 = vpop.f32.mrf.mxu0
        %v8900 = vadd.f32 %v8731, %v8899
        %8901 = vmatmul.bf16.gmra.mxu0 %v7257
        %v8902 = vpop.f32.mrf.mxu0
        %v8903 = vadd.f32 %v8734, %v8902
        %v8904 = vpop.f32.mrf.mxu0
        %v8905 = vadd.f32 %v8736, %v8904
        %8906 = vmatmul.bf16.gmra.mxu0 %v7266
        %v8907 = vpop.f32.mrf.mxu0
        %v8908 = vadd.f32 %v8739, %v8907
        %v8909 = vpop.f32.mrf.mxu0
        %v8910 = vadd.f32 %v8741, %v8909
        %8911 = vmatmul.bf16.gmra.mxu0 %v7275
        %v8912 = vpop.f32.mrf.mxu0
        %v8913 = vadd.f32 %v8744, %v8912
        %v8914 = vpop.f32.mrf.mxu0
        %v8915 = vadd.f32 %v8746, %v8914
        %8916 = vmatmul.bf16.gmra.mxu0 %v7284
        %v8917 = vpop.f32.mrf.mxu0
        %v8918 = vadd.f32 %v8749, %v8917
        %v8919 = vpop.f32.mrf.mxu0
        %v8920 = vadd.f32 %v8751, %v8919
        %8921 = vmatmul.bf16.gmra.mxu0 %v7293
        %v8922 = vpop.f32.mrf.mxu0
        %v8923 = vadd.f32 %v8754, %v8922
        %v8924 = vpop.f32.mrf.mxu0
        %v8925 = vadd.f32 %v8756, %v8924
        %8926 = vmatmul.bf16.gmra.mxu0 %v7302
        %v8927 = vpop.f32.mrf.mxu0
        %v8928 = vadd.f32 %v8759, %v8927
        %v8929 = vpop.f32.mrf.mxu0
        %v8930 = vadd.f32 %v8761, %v8929
        %8931 = vmatmul.bf16.gmra.mxu0 %v7311
        %v8932 = vpop.f32.mrf.mxu0
        %v8933 = vadd.f32 %v8764, %v8932
        %v8934 = vpop.f32.mrf.mxu0
        %v8935 = vadd.f32 %v8766, %v8934
        %8936 = vmatmul.bf16.gmra.mxu0 %v7320
        %v8937 = vpop.f32.mrf.mxu0
        %v8938 = vadd.f32 %v8769, %v8937
        %v8939 = vpop.f32.mrf.mxu0
        %v8940 = vadd.f32 %v8771, %v8939
        %8941 = vmatmul.bf16.gmra.mxu0 %v7329
        %v8942 = vpop.f32.mrf.mxu0
        %v8943 = vadd.f32 %v8774, %v8942
        %v8944 = vpop.f32.mrf.mxu0
        %v8945 = vadd.f32 %v8776, %v8944
        %8946 = vmatmul.bf16.gmra.mxu0 %v7338
        %v8947 = vpop.f32.mrf.mxu0
        %v8948 = vadd.f32 %v8779, %v8947
        %v8949 = vpop.f32.mrf.mxu0
        %v8950 = vadd.f32 %v8781, %v8949
        %8951 = vmatmul.bf16.gmra.mxu0 %v7347
        %v8952 = vpop.f32.mrf.mxu0
        %v8953 = vadd.f32 %v8784, %v8952
        %v8954 = vpop.f32.mrf.mxu0
        %v8955 = vadd.f32 %v8786, %v8954
        %8956 = vmatmul.bf16.gmra.mxu0 %v7356
        %v8957 = vpop.f32.mrf.mxu0
        %v8958 = vadd.f32 %v8789, %v8957
        %v8959 = vpop.f32.mrf.mxu0
        %v8960 = vadd.f32 %v8791, %v8959
        %8961 = vmatmul.bf16.gmra.mxu0 %v7365
        %v8962 = vpop.f32.mrf.mxu0
        %v8963 = vadd.f32 %v8794, %v8962
        %v8964 = vpop.f32.mrf.mxu0
        %v8965 = vadd.f32 %v8796, %v8964
        %8966 = vmatmul.bf16.gmra.mxu0 %v7374
        %v8967 = vpop.f32.mrf.mxu0
        %v8968 = vadd.f32 %v8799, %v8967
        %v8969 = vpop.f32.mrf.mxu0
        %v8970 = vadd.f32 %v8801, %v8969
        %8971 = vmatmul.bf16.gmra.mxu0 %v7383
        %v8972 = vpop.f32.mrf.mxu0
        %v8973 = vadd.f32 %v8804, %v8972
        %v8974 = vpop.f32.mrf.mxu0
        %v8975 = vadd.f32 %v8806, %v8974
        %8976 = vmatmul.bf16.gmra.mxu0 %v7392
        %v8977 = vpop.f32.mrf.mxu0
        %v8978 = vadd.f32 %v8809, %v8977
        %v8979 = vpop.f32.mrf.mxu0
        %v8980 = vadd.f32 %v8811, %v8979
        %8981 = vmatmul.bf16.gmra.mxu0 %v7401
        %v8982 = vpop.f32.mrf.mxu0
        %v8983 = vadd.f32 %v8814, %v8982
        %v8984 = vpop.f32.mrf.mxu0
        %v8985 = vadd.f32 %v8816, %v8984
        %8986 = vmatmul.bf16.gmra.mxu0 %v7410
        %v8987 = vpop.f32.mrf.mxu0
        %v8988 = vadd.f32 %v8819, %v8987
        %v8989 = vpop.f32.mrf.mxu0
        %v8990 = vadd.f32 %v8821, %v8989
        %8991 = vmatmul.bf16.gmra.mxu0 %v7419
        %v8992 = vpop.f32.mrf.mxu0
        %v8993 = vadd.f32 %v8824, %v8992
        %v8994 = vpop.f32.mrf.mxu0
        %v8995 = vadd.f32 %v8826, %v8994
        %8996 = vmatmul.bf16.gmra.mxu0 %v7428
        %v8997 = vpop.f32.mrf.mxu0
        %v8998 = vadd.f32 %v8829, %v8997
        %v8999 = vpop.f32.mrf.mxu0
        %v9000 = vadd.f32 %v8831, %v8999
        %9001 = vmatmul.bf16.gmra.mxu0 %v7437
        %v9002 = vpop.f32.mrf.mxu0
        %v9003 = vadd.f32 %v8834, %v9002
        %v9004 = vpop.f32.mrf.mxu0
        %v9005 = vadd.f32 %v8836, %v9004
        %9006 = vdwg.mxu0
        %9007 = vmatpush.bf16.msra.mxu0 %v8065
        %9008 = vmatpush.bf16.msra.mxu0 %v8064
        %9009 = vmatpush.bf16.msra.mxu0 %v8063
        %9010 = vmatpush.bf16.msra.mxu0 %v8062
        %9011 = vmatpush.bf16.msra.mxu0 %v8061
        %9012 = vmatpush.bf16.msra.mxu0 %v8060
        %9013 = vmatpush.bf16.msra.mxu0 %v8059
        %9014 = vmatpush.bf16.msra.mxu0 %v8058
        %9015 = vmatmul.bf16.gmra.mxu0 %v7159
        %v9016 = vpop.f32.mrf.mxu0
        %v9017 = vadd.f32 %v8848, %v9016
        %v9018 = vpop.f32.mrf.mxu0
        %v9019 = vadd.f32 %v8850, %v9018
        %9020 = vmatmul.bf16.gmra.mxu0 %v7168
        %v9021 = vpop.f32.mrf.mxu0
        %v9022 = vadd.f32 %v8853, %v9021
        %v9023 = vpop.f32.mrf.mxu0
        %v9024 = vadd.f32 %v8855, %v9023
        %9025 = vmatmul.bf16.gmra.mxu0 %v7177
        %v9026 = vpop.f32.mrf.mxu0
        %v9027 = vadd.f32 %v8858, %v9026
        %v9028 = vpop.f32.mrf.mxu0
        %v9029 = vadd.f32 %v8860, %v9028
        %9030 = vmatmul.bf16.gmra.mxu0 %v7186
        %v9031 = vpop.f32.mrf.mxu0
        %v9032 = vadd.f32 %v8863, %v9031
        %v9033 = vpop.f32.mrf.mxu0
        %v9034 = vadd.f32 %v8865, %v9033
        %9035 = vmatmul.bf16.gmra.mxu0 %v7195
        %v9036 = vpop.f32.mrf.mxu0
        %v9037 = vadd.f32 %v8868, %v9036
        %v9038 = vpop.f32.mrf.mxu0
        %v9039 = vadd.f32 %v8870, %v9038
        %9040 = vmatmul.bf16.gmra.mxu0 %v7204
        %v9041 = vpop.f32.mrf.mxu0
        %v9042 = vadd.f32 %v8873, %v9041
        %v9043 = vpop.f32.mrf.mxu0
        %v9044 = vadd.f32 %v8875, %v9043
        %9045 = vmatmul.bf16.gmra.mxu0 %v7213
        %v9046 = vpop.f32.mrf.mxu0
        %v9047 = vadd.f32 %v8878, %v9046
        %v9048 = vpop.f32.mrf.mxu0
        %v9049 = vadd.f32 %v8880, %v9048
        %9050 = vmatmul.bf16.gmra.mxu0 %v7222
        %v9051 = vpop.f32.mrf.mxu0
        %v9052 = vadd.f32 %v8883, %v9051
        %v9053 = vpop.f32.mrf.mxu0
        %v9054 = vadd.f32 %v8885, %v9053
        %9055 = vmatmul.bf16.gmra.mxu0 %v7231
        %v9056 = vpop.f32.mrf.mxu0
        %v9057 = vadd.f32 %v8888, %v9056
        %v9058 = vpop.f32.mrf.mxu0
        %v9059 = vadd.f32 %v8890, %v9058
        %9060 = vmatmul.bf16.gmra.mxu0 %v7240
        %v9061 = vpop.f32.mrf.mxu0
        %v9062 = vadd.f32 %v8893, %v9061
        %v9063 = vpop.f32.mrf.mxu0
        %v9064 = vadd.f32 %v8895, %v9063
        %9065 = vmatmul.bf16.gmra.mxu0 %v7249
        %v9066 = vpop.f32.mrf.mxu0
        %v9067 = vadd.f32 %v8898, %v9066
        %v9068 = vpop.f32.mrf.mxu0
        %v9069 = vadd.f32 %v8900, %v9068
        %9070 = vmatmul.bf16.gmra.mxu0 %v7258
        %v9071 = vpop.f32.mrf.mxu0
        %v9072 = vadd.f32 %v8903, %v9071
        %v9073 = vpop.f32.mrf.mxu0
        %v9074 = vadd.f32 %v8905, %v9073
        %9075 = vmatmul.bf16.gmra.mxu0 %v7267
        %v9076 = vpop.f32.mrf.mxu0
        %v9077 = vadd.f32 %v8908, %v9076
        %v9078 = vpop.f32.mrf.mxu0
        %v9079 = vadd.f32 %v8910, %v9078
        %9080 = vmatmul.bf16.gmra.mxu0 %v7276
        %v9081 = vpop.f32.mrf.mxu0
        %v9082 = vadd.f32 %v8913, %v9081
        %v9083 = vpop.f32.mrf.mxu0
        %v9084 = vadd.f32 %v8915, %v9083
        %9085 = vmatmul.bf16.gmra.mxu0 %v7285
        %v9086 = vpop.f32.mrf.mxu0
        %v9087 = vadd.f32 %v8918, %v9086
        %v9088 = vpop.f32.mrf.mxu0
        %v9089 = vadd.f32 %v8920, %v9088
        %9090 = vmatmul.bf16.gmra.mxu0 %v7294
        %v9091 = vpop.f32.mrf.mxu0
        %v9092 = vadd.f32 %v8923, %v9091
        %v9093 = vpop.f32.mrf.mxu0
        %v9094 = vadd.f32 %v8925, %v9093
        %9095 = vmatmul.bf16.gmra.mxu0 %v7303
        %v9096 = vpop.f32.mrf.mxu0
        %v9097 = vadd.f32 %v8928, %v9096
        %v9098 = vpop.f32.mrf.mxu0
        %v9099 = vadd.f32 %v8930, %v9098
        %9100 = vmatmul.bf16.gmra.mxu0 %v7312
        %v9101 = vpop.f32.mrf.mxu0
        %v9102 = vadd.f32 %v8933, %v9101
        %v9103 = vpop.f32.mrf.mxu0
        %v9104 = vadd.f32 %v8935, %v9103
        %9105 = vmatmul.bf16.gmra.mxu0 %v7321
        %v9106 = vpop.f32.mrf.mxu0
        %v9107 = vadd.f32 %v8938, %v9106
        %v9108 = vpop.f32.mrf.mxu0
        %v9109 = vadd.f32 %v8940, %v9108
        %9110 = vmatmul.bf16.gmra.mxu0 %v7330
        %v9111 = vpop.f32.mrf.mxu0
        %v9112 = vadd.f32 %v8943, %v9111
        %v9113 = vpop.f32.mrf.mxu0
        %v9114 = vadd.f32 %v8945, %v9113
        %9115 = vmatmul.bf16.gmra.mxu0 %v7339
        %v9116 = vpop.f32.mrf.mxu0
        %v9117 = vadd.f32 %v8948, %v9116
        %v9118 = vpop.f32.mrf.mxu0
        %v9119 = vadd.f32 %v8950, %v9118
        %9120 = vmatmul.bf16.gmra.mxu0 %v7348
        %v9121 = vpop.f32.mrf.mxu0
        %v9122 = vadd.f32 %v8953, %v9121
        %v9123 = vpop.f32.mrf.mxu0
        %v9124 = vadd.f32 %v8955, %v9123
        %9125 = vmatmul.bf16.gmra.mxu0 %v7357
        %v9126 = vpop.f32.mrf.mxu0
        %v9127 = vadd.f32 %v8958, %v9126
        %v9128 = vpop.f32.mrf.mxu0
        %v9129 = vadd.f32 %v8960, %v9128
        %9130 = vmatmul.bf16.gmra.mxu0 %v7366
        %v9131 = vpop.f32.mrf.mxu0
        %v9132 = vadd.f32 %v8963, %v9131
        %v9133 = vpop.f32.mrf.mxu0
        %v9134 = vadd.f32 %v8965, %v9133
        %9135 = vmatmul.bf16.gmra.mxu0 %v7375
        %v9136 = vpop.f32.mrf.mxu0
        %v9137 = vadd.f32 %v8968, %v9136
        %v9138 = vpop.f32.mrf.mxu0
        %v9139 = vadd.f32 %v8970, %v9138
        %9140 = vmatmul.bf16.gmra.mxu0 %v7384
        %v9141 = vpop.f32.mrf.mxu0
        %v9142 = vadd.f32 %v8973, %v9141
        %v9143 = vpop.f32.mrf.mxu0
        %v9144 = vadd.f32 %v8975, %v9143
        %9145 = vmatmul.bf16.gmra.mxu0 %v7393
        %v9146 = vpop.f32.mrf.mxu0
        %v9147 = vadd.f32 %v8978, %v9146
        %v9148 = vpop.f32.mrf.mxu0
        %v9149 = vadd.f32 %v8980, %v9148
        %9150 = vmatmul.bf16.gmra.mxu0 %v7402
        %v9151 = vpop.f32.mrf.mxu0
        %v9152 = vadd.f32 %v8983, %v9151
        %v9153 = vpop.f32.mrf.mxu0
        %v9154 = vadd.f32 %v8985, %v9153
        %9155 = vmatmul.bf16.gmra.mxu0 %v7411
        %v9156 = vpop.f32.mrf.mxu0
        %v9157 = vadd.f32 %v8988, %v9156
        %v9158 = vpop.f32.mrf.mxu0
        %v9159 = vadd.f32 %v8990, %v9158
        %9160 = vmatmul.bf16.gmra.mxu0 %v7420
        %v9161 = vpop.f32.mrf.mxu0
        %v9162 = vadd.f32 %v8993, %v9161
        %v9163 = vpop.f32.mrf.mxu0
        %v9164 = vadd.f32 %v8995, %v9163
        %9165 = vmatmul.bf16.gmra.mxu0 %v7429
        %v9166 = vpop.f32.mrf.mxu0
        %v9167 = vadd.f32 %v8998, %v9166
        %v9168 = vpop.f32.mrf.mxu0
        %v9169 = vadd.f32 %v9000, %v9168
        %9170 = vmatmul.bf16.gmra.mxu0 %v7438
        %v9171 = vpop.f32.mrf.mxu0
        %v9172 = vadd.f32 %v9003, %v9171
        %v9173 = vpop.f32.mrf.mxu0
        %v9174 = vadd.f32 %v9005, %v9173
        %9175 = vdwg.mxu0
        %9176 = vmatpush.bf16.msra.mxu0 %v8073
        %9177 = vmatpush.bf16.msra.mxu0 %v8072
        %9178 = vmatpush.bf16.msra.mxu0 %v8071
        %9179 = vmatpush.bf16.msra.mxu0 %v8070
        %9180 = vmatpush.bf16.msra.mxu0 %v8069
        %9181 = vmatpush.bf16.msra.mxu0 %v8068
        %9182 = vmatpush.bf16.msra.mxu0 %v8067
        %9183 = vmatpush.bf16.msra.mxu0 %v8066
        %9184 = vmatmul.bf16.gmra.mxu0 %v7160
        %v9185 = vpop.f32.mrf.mxu0
        %v9186 = vadd.f32 %v9017, %v9185
        %v9187 = vpop.f32.mrf.mxu0
        %v9188 = vadd.f32 %v9019, %v9187
        %9189 = vmatmul.bf16.gmra.mxu0 %v7169
        %v9190 = vpop.f32.mrf.mxu0
        %v9191 = vadd.f32 %v9022, %v9190
        %v9192 = vpop.f32.mrf.mxu0
        %v9193 = vadd.f32 %v9024, %v9192
        %9194 = vmatmul.bf16.gmra.mxu0 %v7178
        %v9195 = vpop.f32.mrf.mxu0
        %v9196 = vadd.f32 %v9027, %v9195
        %v9197 = vpop.f32.mrf.mxu0
        %v9198 = vadd.f32 %v9029, %v9197
        %9199 = vmatmul.bf16.gmra.mxu0 %v7187
        %v9200 = vpop.f32.mrf.mxu0
        %v9201 = vadd.f32 %v9032, %v9200
        %v9202 = vpop.f32.mrf.mxu0
        %v9203 = vadd.f32 %v9034, %v9202
        %9204 = vmatmul.bf16.gmra.mxu0 %v7196
        %v9205 = vpop.f32.mrf.mxu0
        %v9206 = vadd.f32 %v9037, %v9205
        %v9207 = vpop.f32.mrf.mxu0
        %v9208 = vadd.f32 %v9039, %v9207
        %9209 = vmatmul.bf16.gmra.mxu0 %v7205
        %v9210 = vpop.f32.mrf.mxu0
        %v9211 = vadd.f32 %v9042, %v9210
        %v9212 = vpop.f32.mrf.mxu0
        %v9213 = vadd.f32 %v9044, %v9212
        %9214 = vmatmul.bf16.gmra.mxu0 %v7214
        %v9215 = vpop.f32.mrf.mxu0
        %v9216 = vadd.f32 %v9047, %v9215
        %v9217 = vpop.f32.mrf.mxu0
        %v9218 = vadd.f32 %v9049, %v9217
        %9219 = vmatmul.bf16.gmra.mxu0 %v7223
        %v9220 = vpop.f32.mrf.mxu0
        %v9221 = vadd.f32 %v9052, %v9220
        %v9222 = vpop.f32.mrf.mxu0
        %v9223 = vadd.f32 %v9054, %v9222
        %9224 = vmatmul.bf16.gmra.mxu0 %v7232
        %v9225 = vpop.f32.mrf.mxu0
        %v9226 = vadd.f32 %v9057, %v9225
        %v9227 = vpop.f32.mrf.mxu0
        %v9228 = vadd.f32 %v9059, %v9227
        %9229 = vmatmul.bf16.gmra.mxu0 %v7241
        %v9230 = vpop.f32.mrf.mxu0
        %v9231 = vadd.f32 %v9062, %v9230
        %v9232 = vpop.f32.mrf.mxu0
        %v9233 = vadd.f32 %v9064, %v9232
        %9234 = vmatmul.bf16.gmra.mxu0 %v7250
        %v9235 = vpop.f32.mrf.mxu0
        %v9236 = vadd.f32 %v9067, %v9235
        %v9237 = vpop.f32.mrf.mxu0
        %v9238 = vadd.f32 %v9069, %v9237
        %9239 = vmatmul.bf16.gmra.mxu0 %v7259
        %v9240 = vpop.f32.mrf.mxu0
        %v9241 = vadd.f32 %v9072, %v9240
        %v9242 = vpop.f32.mrf.mxu0
        %v9243 = vadd.f32 %v9074, %v9242
        %9244 = vmatmul.bf16.gmra.mxu0 %v7268
        %v9245 = vpop.f32.mrf.mxu0
        %v9246 = vadd.f32 %v9077, %v9245
        %v9247 = vpop.f32.mrf.mxu0
        %v9248 = vadd.f32 %v9079, %v9247
        %9249 = vmatmul.bf16.gmra.mxu0 %v7277
        %v9250 = vpop.f32.mrf.mxu0
        %v9251 = vadd.f32 %v9082, %v9250
        %v9252 = vpop.f32.mrf.mxu0
        %v9253 = vadd.f32 %v9084, %v9252
        %9254 = vmatmul.bf16.gmra.mxu0 %v7286
        %v9255 = vpop.f32.mrf.mxu0
        %v9256 = vadd.f32 %v9087, %v9255
        %v9257 = vpop.f32.mrf.mxu0
        %v9258 = vadd.f32 %v9089, %v9257
        %9259 = vmatmul.bf16.gmra.mxu0 %v7295
        %v9260 = vpop.f32.mrf.mxu0
        %v9261 = vadd.f32 %v9092, %v9260
        %v9262 = vpop.f32.mrf.mxu0
        %v9263 = vadd.f32 %v9094, %v9262
        %9264 = vmatmul.bf16.gmra.mxu0 %v7304
        %v9265 = vpop.f32.mrf.mxu0
        %v9266 = vadd.f32 %v9097, %v9265
        %v9267 = vpop.f32.mrf.mxu0
        %v9268 = vadd.f32 %v9099, %v9267
        %9269 = vmatmul.bf16.gmra.mxu0 %v7313
        %v9270 = vpop.f32.mrf.mxu0
        %v9271 = vadd.f32 %v9102, %v9270
        %v9272 = vpop.f32.mrf.mxu0
        %v9273 = vadd.f32 %v9104, %v9272
        %9274 = vmatmul.bf16.gmra.mxu0 %v7322
        %v9275 = vpop.f32.mrf.mxu0
        %v9276 = vadd.f32 %v9107, %v9275
        %v9277 = vpop.f32.mrf.mxu0
        %v9278 = vadd.f32 %v9109, %v9277
        %9279 = vmatmul.bf16.gmra.mxu0 %v7331
        %v9280 = vpop.f32.mrf.mxu0
        %v9281 = vadd.f32 %v9112, %v9280
        %v9282 = vpop.f32.mrf.mxu0
        %v9283 = vadd.f32 %v9114, %v9282
        %9284 = vmatmul.bf16.gmra.mxu0 %v7340
        %v9285 = vpop.f32.mrf.mxu0
        %v9286 = vadd.f32 %v9117, %v9285
        %v9287 = vpop.f32.mrf.mxu0
        %v9288 = vadd.f32 %v9119, %v9287
        %9289 = vmatmul.bf16.gmra.mxu0 %v7349
        %v9290 = vpop.f32.mrf.mxu0
        %v9291 = vadd.f32 %v9122, %v9290
        %v9292 = vpop.f32.mrf.mxu0
        %v9293 = vadd.f32 %v9124, %v9292
        %9294 = vmatmul.bf16.gmra.mxu0 %v7358
        %v9295 = vpop.f32.mrf.mxu0
        %v9296 = vadd.f32 %v9127, %v9295
        %v9297 = vpop.f32.mrf.mxu0
        %v9298 = vadd.f32 %v9129, %v9297
        %9299 = vmatmul.bf16.gmra.mxu0 %v7367
        %v9300 = vpop.f32.mrf.mxu0
        %v9301 = vadd.f32 %v9132, %v9300
        %v9302 = vpop.f32.mrf.mxu0
        %v9303 = vadd.f32 %v9134, %v9302
        %9304 = vmatmul.bf16.gmra.mxu0 %v7376
        %v9305 = vpop.f32.mrf.mxu0
        %v9306 = vadd.f32 %v9137, %v9305
        %v9307 = vpop.f32.mrf.mxu0
        %v9308 = vadd.f32 %v9139, %v9307
        %9309 = vmatmul.bf16.gmra.mxu0 %v7385
        %v9310 = vpop.f32.mrf.mxu0
        %v9311 = vadd.f32 %v9142, %v9310
        %v9312 = vpop.f32.mrf.mxu0
        %v9313 = vadd.f32 %v9144, %v9312
        %9314 = vmatmul.bf16.gmra.mxu0 %v7394
        %v9315 = vpop.f32.mrf.mxu0
        %v9316 = vadd.f32 %v9147, %v9315
        %v9317 = vpop.f32.mrf.mxu0
        %v9318 = vadd.f32 %v9149, %v9317
        %9319 = vmatmul.bf16.gmra.mxu0 %v7403
        %v9320 = vpop.f32.mrf.mxu0
        %v9321 = vadd.f32 %v9152, %v9320
        %v9322 = vpop.f32.mrf.mxu0
        %v9323 = vadd.f32 %v9154, %v9322
        %9324 = vmatmul.bf16.gmra.mxu0 %v7412
        %v9325 = vpop.f32.mrf.mxu0
        %v9326 = vadd.f32 %v9157, %v9325
        %v9327 = vpop.f32.mrf.mxu0
        %v9328 = vadd.f32 %v9159, %v9327
        %9329 = vmatmul.bf16.gmra.mxu0 %v7421
        %v9330 = vpop.f32.mrf.mxu0
        %v9331 = vadd.f32 %v9162, %v9330
        %v9332 = vpop.f32.mrf.mxu0
        %v9333 = vadd.f32 %v9164, %v9332
        %9334 = vmatmul.bf16.gmra.mxu0 %v7430
        %v9335 = vpop.f32.mrf.mxu0
        %v9336 = vadd.f32 %v9167, %v9335
        %v9337 = vpop.f32.mrf.mxu0
        %v9338 = vadd.f32 %v9169, %v9337
        %9339 = vmatmul.bf16.gmra.mxu0 %v7439
        %v9340 = vpop.f32.mrf.mxu0
        %v9341 = vadd.f32 %v9172, %v9340
        %v9342 = vpop.f32.mrf.mxu0
        %v9343 = vadd.f32 %v9174, %v9342
        %9344 = vdwg.mxu0
        %9345 = vmatpush.bf16.msra.mxu0 %v8081
        %9346 = vmatpush.bf16.msra.mxu0 %v8080
        %9347 = vmatpush.bf16.msra.mxu0 %v8079
        %9348 = vmatpush.bf16.msra.mxu0 %v8078
        %9349 = vmatpush.bf16.msra.mxu0 %v8077
        %9350 = vmatpush.bf16.msra.mxu0 %v8076
        %9351 = vmatpush.bf16.msra.mxu0 %v8075
        %9352 = vmatpush.bf16.msra.mxu0 %v8074
        %9353 = vmatmul.bf16.gmra.mxu0 %v7161
        %v9354 = vpop.f32.mrf.mxu0
        %v9355 = vadd.f32 %v9186, %v9354
        %v9356 = vpop.f32.mrf.mxu0
        %v9357 = vadd.f32 %v9188, %v9356
        %9358 = vmatmul.bf16.gmra.mxu0 %v7170
        %v9359 = vpop.f32.mrf.mxu0
        %v9360 = vadd.f32 %v9191, %v9359
        %v9361 = vpop.f32.mrf.mxu0
        %v9362 = vadd.f32 %v9193, %v9361
        %9363 = vmatmul.bf16.gmra.mxu0 %v7179
        %v9364 = vpop.f32.mrf.mxu0
        %v9365 = vadd.f32 %v9196, %v9364
        %v9366 = vpop.f32.mrf.mxu0
        %v9367 = vadd.f32 %v9198, %v9366
        %9368 = vmatmul.bf16.gmra.mxu0 %v7188
        %v9369 = vpop.f32.mrf.mxu0
        %v9370 = vadd.f32 %v9201, %v9369
        %v9371 = vpop.f32.mrf.mxu0
        %v9372 = vadd.f32 %v9203, %v9371
        %9373 = vmatmul.bf16.gmra.mxu0 %v7197
        %v9374 = vpop.f32.mrf.mxu0
        %v9375 = vadd.f32 %v9206, %v9374
        %v9376 = vpop.f32.mrf.mxu0
        %v9377 = vadd.f32 %v9208, %v9376
        %9378 = vmatmul.bf16.gmra.mxu0 %v7206
        %v9379 = vpop.f32.mrf.mxu0
        %v9380 = vadd.f32 %v9211, %v9379
        %v9381 = vpop.f32.mrf.mxu0
        %v9382 = vadd.f32 %v9213, %v9381
        %9383 = vmatmul.bf16.gmra.mxu0 %v7215
        %v9384 = vpop.f32.mrf.mxu0
        %v9385 = vadd.f32 %v9216, %v9384
        %v9386 = vpop.f32.mrf.mxu0
        %v9387 = vadd.f32 %v9218, %v9386
        %9388 = vmatmul.bf16.gmra.mxu0 %v7224
        %v9389 = vpop.f32.mrf.mxu0
        %v9390 = vadd.f32 %v9221, %v9389
        %v9391 = vpop.f32.mrf.mxu0
        %v9392 = vadd.f32 %v9223, %v9391
        %9393 = vmatmul.bf16.gmra.mxu0 %v7233
        %v9394 = vpop.f32.mrf.mxu0
        %v9395 = vadd.f32 %v9226, %v9394
        %v9396 = vpop.f32.mrf.mxu0
        %v9397 = vadd.f32 %v9228, %v9396
        %9398 = vmatmul.bf16.gmra.mxu0 %v7242
        %v9399 = vpop.f32.mrf.mxu0
        %v9400 = vadd.f32 %v9231, %v9399
        %v9401 = vpop.f32.mrf.mxu0
        %v9402 = vadd.f32 %v9233, %v9401
        %9403 = vmatmul.bf16.gmra.mxu0 %v7251
        %v9404 = vpop.f32.mrf.mxu0
        %v9405 = vadd.f32 %v9236, %v9404
        %v9406 = vpop.f32.mrf.mxu0
        %v9407 = vadd.f32 %v9238, %v9406
        %9408 = vmatmul.bf16.gmra.mxu0 %v7260
        %v9409 = vpop.f32.mrf.mxu0
        %v9410 = vadd.f32 %v9241, %v9409
        %v9411 = vpop.f32.mrf.mxu0
        %v9412 = vadd.f32 %v9243, %v9411
        %9413 = vmatmul.bf16.gmra.mxu0 %v7269
        %v9414 = vpop.f32.mrf.mxu0
        %v9415 = vadd.f32 %v9246, %v9414
        %v9416 = vpop.f32.mrf.mxu0
        %v9417 = vadd.f32 %v9248, %v9416
        %9418 = vmatmul.bf16.gmra.mxu0 %v7278
        %v9419 = vpop.f32.mrf.mxu0
        %v9420 = vadd.f32 %v9251, %v9419
        %v9421 = vpop.f32.mrf.mxu0
        %v9422 = vadd.f32 %v9253, %v9421
        %9423 = vmatmul.bf16.gmra.mxu0 %v7287
        %v9424 = vpop.f32.mrf.mxu0
        %v9425 = vadd.f32 %v9256, %v9424
        %v9426 = vpop.f32.mrf.mxu0
        %v9427 = vadd.f32 %v9258, %v9426
        %9428 = vmatmul.bf16.gmra.mxu0 %v7296
        %v9429 = vpop.f32.mrf.mxu0
        %v9430 = vadd.f32 %v9261, %v9429
        %v9431 = vpop.f32.mrf.mxu0
        %v9432 = vadd.f32 %v9263, %v9431
        %9433 = vmatmul.bf16.gmra.mxu0 %v7305
        %v9434 = vpop.f32.mrf.mxu0
        %v9435 = vadd.f32 %v9266, %v9434
        %v9436 = vpop.f32.mrf.mxu0
        %v9437 = vadd.f32 %v9268, %v9436
        %9438 = vmatmul.bf16.gmra.mxu0 %v7314
        %v9439 = vpop.f32.mrf.mxu0
        %v9440 = vadd.f32 %v9271, %v9439
        %v9441 = vpop.f32.mrf.mxu0
        %v9442 = vadd.f32 %v9273, %v9441
        %9443 = vmatmul.bf16.gmra.mxu0 %v7323
        %v9444 = vpop.f32.mrf.mxu0
        %v9445 = vadd.f32 %v9276, %v9444
        %v9446 = vpop.f32.mrf.mxu0
        %v9447 = vadd.f32 %v9278, %v9446
        %9448 = vmatmul.bf16.gmra.mxu0 %v7332
        %v9449 = vpop.f32.mrf.mxu0
        %v9450 = vadd.f32 %v9281, %v9449
        %v9451 = vpop.f32.mrf.mxu0
        %v9452 = vadd.f32 %v9283, %v9451
        %9453 = vmatmul.bf16.gmra.mxu0 %v7341
        %v9454 = vpop.f32.mrf.mxu0
        %v9455 = vadd.f32 %v9286, %v9454
        %v9456 = vpop.f32.mrf.mxu0
        %v9457 = vadd.f32 %v9288, %v9456
        %9458 = vmatmul.bf16.gmra.mxu0 %v7350
        %v9459 = vpop.f32.mrf.mxu0
        %v9460 = vadd.f32 %v9291, %v9459
        %v9461 = vpop.f32.mrf.mxu0
        %v9462 = vadd.f32 %v9293, %v9461
        %9463 = vmatmul.bf16.gmra.mxu0 %v7359
        %v9464 = vpop.f32.mrf.mxu0
        %v9465 = vadd.f32 %v9296, %v9464
        %v9466 = vpop.f32.mrf.mxu0
        %v9467 = vadd.f32 %v9298, %v9466
        %9468 = vmatmul.bf16.gmra.mxu0 %v7368
        %v9469 = vpop.f32.mrf.mxu0
        %v9470 = vadd.f32 %v9301, %v9469
        %v9471 = vpop.f32.mrf.mxu0
        %v9472 = vadd.f32 %v9303, %v9471
        %9473 = vmatmul.bf16.gmra.mxu0 %v7377
        %v9474 = vpop.f32.mrf.mxu0
        %v9475 = vadd.f32 %v9306, %v9474
        %v9476 = vpop.f32.mrf.mxu0
        %v9477 = vadd.f32 %v9308, %v9476
        %9478 = vmatmul.bf16.gmra.mxu0 %v7386
        %v9479 = vpop.f32.mrf.mxu0
        %v9480 = vadd.f32 %v9311, %v9479
        %v9481 = vpop.f32.mrf.mxu0
        %v9482 = vadd.f32 %v9313, %v9481
        %9483 = vmatmul.bf16.gmra.mxu0 %v7395
        %v9484 = vpop.f32.mrf.mxu0
        %v9485 = vadd.f32 %v9316, %v9484
        %v9486 = vpop.f32.mrf.mxu0
        %v9487 = vadd.f32 %v9318, %v9486
        %9488 = vmatmul.bf16.gmra.mxu0 %v7404
        %v9489 = vpop.f32.mrf.mxu0
        %v9490 = vadd.f32 %v9321, %v9489
        %v9491 = vpop.f32.mrf.mxu0
        %v9492 = vadd.f32 %v9323, %v9491
        %9493 = vmatmul.bf16.gmra.mxu0 %v7413
        %v9494 = vpop.f32.mrf.mxu0
        %v9495 = vadd.f32 %v9326, %v9494
        %v9496 = vpop.f32.mrf.mxu0
        %v9497 = vadd.f32 %v9328, %v9496
        %9498 = vmatmul.bf16.gmra.mxu0 %v7422
        %v9499 = vpop.f32.mrf.mxu0
        %v9500 = vadd.f32 %v9331, %v9499
        %v9501 = vpop.f32.mrf.mxu0
        %v9502 = vadd.f32 %v9333, %v9501
        %9503 = vmatmul.bf16.gmra.mxu0 %v7431
        %v9504 = vpop.f32.mrf.mxu0
        %v9505 = vadd.f32 %v9336, %v9504
        %v9506 = vpop.f32.mrf.mxu0
        %v9507 = vadd.f32 %v9338, %v9506
        %9508 = vmatmul.bf16.gmra.mxu0 %v7440
        %v9509 = vpop.f32.mrf.mxu0
        %v9510 = vadd.f32 %v9341, %v9509
        %v9511 = vpop.f32.mrf.mxu0
        %v9512 = vadd.f32 %v9343, %v9511
        %9513 = vdwg.mxu0
        %9514 = vmatpush.bf16.msra.mxu0 %v8089
        %9515 = vmatpush.bf16.msra.mxu0 %v8088
        %9516 = vmatpush.bf16.msra.mxu0 %v8087
        %9517 = vmatpush.bf16.msra.mxu0 %v8086
        %9518 = vmatpush.bf16.msra.mxu0 %v8085
        %9519 = vmatpush.bf16.msra.mxu0 %v8084
        %9520 = vmatpush.bf16.msra.mxu0 %v8083
        %9521 = vmatpush.bf16.msra.mxu0 %v8082
        %9522 = vmatmul.bf16.gmra.mxu0 %v7162
        %v9523 = vpop.f32.mrf.mxu0
        %v9524 = vadd.f32 %v9355, %v9523
        %v9525 = vpop.f32.mrf.mxu0
        %v9526 = vadd.f32 %v9357, %v9525
        %9527 = vmatmul.bf16.gmra.mxu0 %v7171
        %v9528 = vpop.f32.mrf.mxu0
        %v9529 = vadd.f32 %v9360, %v9528
        %v9530 = vpop.f32.mrf.mxu0
        %v9531 = vadd.f32 %v9362, %v9530
        %9532 = vmatmul.bf16.gmra.mxu0 %v7180
        %v9533 = vpop.f32.mrf.mxu0
        %v9534 = vadd.f32 %v9365, %v9533
        %v9535 = vpop.f32.mrf.mxu0
        %v9536 = vadd.f32 %v9367, %v9535
        %9537 = vmatmul.bf16.gmra.mxu0 %v7189
        %v9538 = vpop.f32.mrf.mxu0
        %v9539 = vadd.f32 %v9370, %v9538
        %v9540 = vpop.f32.mrf.mxu0
        %v9541 = vadd.f32 %v9372, %v9540
        %9542 = vmatmul.bf16.gmra.mxu0 %v7198
        %v9543 = vpop.f32.mrf.mxu0
        %v9544 = vadd.f32 %v9375, %v9543
        %v9545 = vpop.f32.mrf.mxu0
        %v9546 = vadd.f32 %v9377, %v9545
        %9547 = vmatmul.bf16.gmra.mxu0 %v7207
        %v9548 = vpop.f32.mrf.mxu0
        %v9549 = vadd.f32 %v9380, %v9548
        %v9550 = vpop.f32.mrf.mxu0
        %v9551 = vadd.f32 %v9382, %v9550
        %9552 = vmatmul.bf16.gmra.mxu0 %v7216
        %v9553 = vpop.f32.mrf.mxu0
        %v9554 = vadd.f32 %v9385, %v9553
        %v9555 = vpop.f32.mrf.mxu0
        %v9556 = vadd.f32 %v9387, %v9555
        %9557 = vmatmul.bf16.gmra.mxu0 %v7225
        %v9558 = vpop.f32.mrf.mxu0
        %v9559 = vadd.f32 %v9390, %v9558
        %v9560 = vpop.f32.mrf.mxu0
        %v9561 = vadd.f32 %v9392, %v9560
        %9562 = vmatmul.bf16.gmra.mxu0 %v7234
        %v9563 = vpop.f32.mrf.mxu0
        %v9564 = vadd.f32 %v9395, %v9563
        %v9565 = vpop.f32.mrf.mxu0
        %v9566 = vadd.f32 %v9397, %v9565
        %9567 = vmatmul.bf16.gmra.mxu0 %v7243
        %v9568 = vpop.f32.mrf.mxu0
        %v9569 = vadd.f32 %v9400, %v9568
        %v9570 = vpop.f32.mrf.mxu0
        %v9571 = vadd.f32 %v9402, %v9570
        %9572 = vmatmul.bf16.gmra.mxu0 %v7252
        %v9573 = vpop.f32.mrf.mxu0
        %v9574 = vadd.f32 %v9405, %v9573
        %v9575 = vpop.f32.mrf.mxu0
        %v9576 = vadd.f32 %v9407, %v9575
        %9577 = vmatmul.bf16.gmra.mxu0 %v7261
        %v9578 = vpop.f32.mrf.mxu0
        %v9579 = vadd.f32 %v9410, %v9578
        %v9580 = vpop.f32.mrf.mxu0
        %v9581 = vadd.f32 %v9412, %v9580
        %9582 = vmatmul.bf16.gmra.mxu0 %v7270
        %v9583 = vpop.f32.mrf.mxu0
        %v9584 = vadd.f32 %v9415, %v9583
        %v9585 = vpop.f32.mrf.mxu0
        %v9586 = vadd.f32 %v9417, %v9585
        %9587 = vmatmul.bf16.gmra.mxu0 %v7279
        %v9588 = vpop.f32.mrf.mxu0
        %v9589 = vadd.f32 %v9420, %v9588
        %v9590 = vpop.f32.mrf.mxu0
        %v9591 = vadd.f32 %v9422, %v9590
        %9592 = vmatmul.bf16.gmra.mxu0 %v7288
        %v9593 = vpop.f32.mrf.mxu0
        %v9594 = vadd.f32 %v9425, %v9593
        %v9595 = vpop.f32.mrf.mxu0
        %v9596 = vadd.f32 %v9427, %v9595
        %9597 = vmatmul.bf16.gmra.mxu0 %v7297
        %v9598 = vpop.f32.mrf.mxu0
        %v9599 = vadd.f32 %v9430, %v9598
        %v9600 = vpop.f32.mrf.mxu0
        %v9601 = vadd.f32 %v9432, %v9600
        %9602 = vmatmul.bf16.gmra.mxu0 %v7306
        %v9603 = vpop.f32.mrf.mxu0
        %v9604 = vadd.f32 %v9435, %v9603
        %v9605 = vpop.f32.mrf.mxu0
        %v9606 = vadd.f32 %v9437, %v9605
        %9607 = vmatmul.bf16.gmra.mxu0 %v7315
        %v9608 = vpop.f32.mrf.mxu0
        %v9609 = vadd.f32 %v9440, %v9608
        %v9610 = vpop.f32.mrf.mxu0
        %v9611 = vadd.f32 %v9442, %v9610
        %9612 = vmatmul.bf16.gmra.mxu0 %v7324
        %v9613 = vpop.f32.mrf.mxu0
        %v9614 = vadd.f32 %v9445, %v9613
        %v9615 = vpop.f32.mrf.mxu0
        %v9616 = vadd.f32 %v9447, %v9615
        %9617 = vmatmul.bf16.gmra.mxu0 %v7333
        %v9618 = vpop.f32.mrf.mxu0
        %v9619 = vadd.f32 %v9450, %v9618
        %v9620 = vpop.f32.mrf.mxu0
        %v9621 = vadd.f32 %v9452, %v9620
        %9622 = vmatmul.bf16.gmra.mxu0 %v7342
        %v9623 = vpop.f32.mrf.mxu0
        %v9624 = vadd.f32 %v9455, %v9623
        %v9625 = vpop.f32.mrf.mxu0
        %v9626 = vadd.f32 %v9457, %v9625
        %9627 = vmatmul.bf16.gmra.mxu0 %v7351
        %v9628 = vpop.f32.mrf.mxu0
        %v9629 = vadd.f32 %v9460, %v9628
        %v9630 = vpop.f32.mrf.mxu0
        %v9631 = vadd.f32 %v9462, %v9630
        %9632 = vmatmul.bf16.gmra.mxu0 %v7360
        %v9633 = vpop.f32.mrf.mxu0
        %v9634 = vadd.f32 %v9465, %v9633
        %v9635 = vpop.f32.mrf.mxu0
        %v9636 = vadd.f32 %v9467, %v9635
        %9637 = vmatmul.bf16.gmra.mxu0 %v7369
        %v9638 = vpop.f32.mrf.mxu0
        %v9639 = vadd.f32 %v9470, %v9638
        %v9640 = vpop.f32.mrf.mxu0
        %v9641 = vadd.f32 %v9472, %v9640
        %9642 = vmatmul.bf16.gmra.mxu0 %v7378
        %v9643 = vpop.f32.mrf.mxu0
        %v9644 = vadd.f32 %v9475, %v9643
        %v9645 = vpop.f32.mrf.mxu0
        %v9646 = vadd.f32 %v9477, %v9645
        %9647 = vmatmul.bf16.gmra.mxu0 %v7387
        %v9648 = vpop.f32.mrf.mxu0
        %v9649 = vadd.f32 %v9480, %v9648
        %v9650 = vpop.f32.mrf.mxu0
        %v9651 = vadd.f32 %v9482, %v9650
        %9652 = vmatmul.bf16.gmra.mxu0 %v7396
        %v9653 = vpop.f32.mrf.mxu0
        %v9654 = vadd.f32 %v9485, %v9653
        %v9655 = vpop.f32.mrf.mxu0
        %v9656 = vadd.f32 %v9487, %v9655
        %9657 = vmatmul.bf16.gmra.mxu0 %v7405
        %v9658 = vpop.f32.mrf.mxu0
        %v9659 = vadd.f32 %v9490, %v9658
        %v9660 = vpop.f32.mrf.mxu0
        %v9661 = vadd.f32 %v9492, %v9660
        %9662 = vmatmul.bf16.gmra.mxu0 %v7414
        %v9663 = vpop.f32.mrf.mxu0
        %v9664 = vadd.f32 %v9495, %v9663
        %v9665 = vpop.f32.mrf.mxu0
        %v9666 = vadd.f32 %v9497, %v9665
        %9667 = vmatmul.bf16.gmra.mxu0 %v7423
        %v9668 = vpop.f32.mrf.mxu0
        %v9669 = vadd.f32 %v9500, %v9668
        %v9670 = vpop.f32.mrf.mxu0
        %v9671 = vadd.f32 %v9502, %v9670
        %9672 = vmatmul.bf16.gmra.mxu0 %v7432
        %v9673 = vpop.f32.mrf.mxu0
        %v9674 = vadd.f32 %v9505, %v9673
        %v9675 = vpop.f32.mrf.mxu0
        %v9676 = vadd.f32 %v9507, %v9675
        %9677 = vmatmul.bf16.gmra.mxu0 %v7441
        %v9678 = vpop.f32.mrf.mxu0
        %v9679 = vadd.f32 %v9510, %v9678
        %v9680 = vpop.f32.mrf.mxu0
        %v9681 = vadd.f32 %v9512, %v9680
        %9682 = vdwg.mxu0
        %v9683 = vld [vmem:[%s6] sm:$0x1]
        %v9684 = vperm.slane %v9683, 0
        %v9685 = vmul.f32 %v9524, %v9684
        %v9686 = vmul.f32 %v9526, %v9684
        %v9687 = vmul.f32 %v9529, %v9684
        %v9688 = vmul.f32 %v9531, %v9684
        %v9689 = vmul.f32 %v9534, %v9684
        %v9690 = vmul.f32 %v9536, %v9684
        %v9691 = vmul.f32 %v9539, %v9684
        %v9692 = vmul.f32 %v9541, %v9684
        %v9693 = vmul.f32 %v9544, %v9684
        %v9694 = vmul.f32 %v9546, %v9684
        %v9695 = vmul.f32 %v9549, %v9684
        %v9696 = vmul.f32 %v9551, %v9684
        %v9697 = vmul.f32 %v9554, %v9684
        %v9698 = vmul.f32 %v9556, %v9684
        %v9699 = vmul.f32 %v9559, %v9684
        %v9700 = vmul.f32 %v9561, %v9684
        %v9701 = vmul.f32 %v9564, %v9684
        %v9702 = vmul.f32 %v9566, %v9684
        %v9703 = vmul.f32 %v9569, %v9684
        %v9704 = vmul.f32 %v9571, %v9684
        %v9705 = vmul.f32 %v9574, %v9684
        %v9706 = vmul.f32 %v9576, %v9684
        %v9707 = vmul.f32 %v9579, %v9684
        %v9708 = vmul.f32 %v9581, %v9684
        %v9709 = vmul.f32 %v9584, %v9684
        %v9710 = vmul.f32 %v9586, %v9684
        %v9711 = vmul.f32 %v9589, %v9684
        %v9712 = vmul.f32 %v9591, %v9684
        %v9713 = vmul.f32 %v9594, %v9684
        %v9714 = vmul.f32 %v9596, %v9684
        %v9715 = vmul.f32 %v9599, %v9684
        %v9716 = vmul.f32 %v9601, %v9684
        %v9717 = vmul.f32 %v9604, %v9684
        %v9718 = vmul.f32 %v9606, %v9684
        %v9719 = vmul.f32 %v9609, %v9684
        %v9720 = vmul.f32 %v9611, %v9684
        %v9721 = vmul.f32 %v9614, %v9684
        %v9722 = vmul.f32 %v9616, %v9684
        %v9723 = vmul.f32 %v9619, %v9684
        %v9724 = vmul.f32 %v9621, %v9684
        %v9725 = vmul.f32 %v9624, %v9684
        %v9726 = vmul.f32 %v9626, %v9684
        %v9727 = vmul.f32 %v9629, %v9684
        %v9728 = vmul.f32 %v9631, %v9684
        %v9729 = vmul.f32 %v9634, %v9684
        %v9730 = vmul.f32 %v9636, %v9684
        %v9731 = vmul.f32 %v9639, %v9684
        %v9732 = vmul.f32 %v9641, %v9684
        %v9733 = vmul.f32 %v9644, %v9684
        %v9734 = vmul.f32 %v9646, %v9684
        %v9735 = vmul.f32 %v9649, %v9684
        %v9736 = vmul.f32 %v9651, %v9684
        %v9737 = vmul.f32 %v9654, %v9684
        %v9738 = vmul.f32 %v9656, %v9684
        %v9739 = vmul.f32 %v9659, %v9684
        %v9740 = vmul.f32 %v9661, %v9684
        %v9741 = vmul.f32 %v9664, %v9684
        %v9742 = vmul.f32 %v9666, %v9684
        %v9743 = vmul.f32 %v9669, %v9684
        %v9744 = vmul.f32 %v9671, %v9684
        %v9745 = vmul.f32 %v9674, %v9684
        %v9746 = vmul.f32 %v9676, %v9684
        %v9747 = vmul.f32 %v9679, %v9684
        %v9748 = vmul.f32 %v9681, %v9684
        %v9749 = vld [vmem:[%s6 + $0x1] sm:$0x1]
        %v9750 = vperm.slane %v9749, 0
        %v9751 = vadd.f32 %v9685, %v9750
        %v9752 = vadd.f32 %v9686, %v9750
        %v9753 = vadd.f32 %v9687, %v9750
        %v9754 = vadd.f32 %v9688, %v9750
        %v9755 = vadd.f32 %v9689, %v9750
        %v9756 = vadd.f32 %v9690, %v9750
        %v9757 = vadd.f32 %v9691, %v9750
        %v9758 = vadd.f32 %v9692, %v9750
        %v9759 = vadd.f32 %v9693, %v9750
        %v9760 = vadd.f32 %v9694, %v9750
        %v9761 = vadd.f32 %v9695, %v9750
        %v9762 = vadd.f32 %v9696, %v9750
        %v9763 = vadd.f32 %v9697, %v9750
        %v9764 = vadd.f32 %v9698, %v9750
        %v9765 = vadd.f32 %v9699, %v9750
        %v9766 = vadd.f32 %v9700, %v9750
        %v9767 = vadd.f32 %v9701, %v9750
        %v9768 = vadd.f32 %v9702, %v9750
        %v9769 = vadd.f32 %v9703, %v9750
        %v9770 = vadd.f32 %v9704, %v9750
        %v9771 = vadd.f32 %v9705, %v9750
        %v9772 = vadd.f32 %v9706, %v9750
        %v9773 = vadd.f32 %v9707, %v9750
        %v9774 = vadd.f32 %v9708, %v9750
        %v9775 = vadd.f32 %v9709, %v9750
        %v9776 = vadd.f32 %v9710, %v9750
        %v9777 = vadd.f32 %v9711, %v9750
        %v9778 = vadd.f32 %v9712, %v9750
        %v9779 = vadd.f32 %v9713, %v9750
        %v9780 = vadd.f32 %v9714, %v9750
        %v9781 = vadd.f32 %v9715, %v9750
        %v9782 = vadd.f32 %v9716, %v9750
        %v9783 = vadd.f32 %v9717, %v9750
        %v9784 = vadd.f32 %v9718, %v9750
        %v9785 = vadd.f32 %v9719, %v9750
        %v9786 = vadd.f32 %v9720, %v9750
        %v9787 = vadd.f32 %v9721, %v9750
        %v9788 = vadd.f32 %v9722, %v9750
        %v9789 = vadd.f32 %v9723, %v9750
        %v9790 = vadd.f32 %v9724, %v9750
        %v9791 = vadd.f32 %v9725, %v9750
        %v9792 = vadd.f32 %v9726, %v9750
        %v9793 = vadd.f32 %v9727, %v9750
        %v9794 = vadd.f32 %v9728, %v9750
        %v9795 = vadd.f32 %v9729, %v9750
        %v9796 = vadd.f32 %v9730, %v9750
        %v9797 = vadd.f32 %v9731, %v9750
        %v9798 = vadd.f32 %v9732, %v9750
        %v9799 = vadd.f32 %v9733, %v9750
        %v9800 = vadd.f32 %v9734, %v9750
        %v9801 = vadd.f32 %v9735, %v9750
        %v9802 = vadd.f32 %v9736, %v9750
        %v9803 = vadd.f32 %v9737, %v9750
        %v9804 = vadd.f32 %v9738, %v9750
        %v9805 = vadd.f32 %v9739, %v9750
        %v9806 = vadd.f32 %v9740, %v9750
        %v9807 = vadd.f32 %v9741, %v9750
        %v9808 = vadd.f32 %v9742, %v9750
        %v9809 = vadd.f32 %v9743, %v9750
        %v9810 = vadd.f32 %v9744, %v9750
        %v9811 = vadd.f32 %v9745, %v9750
        %v9812 = vadd.f32 %v9746, %v9750
        %v9813 = vadd.f32 %v9747, %v9750
        %v9814 = vadd.f32 %v9748, %v9750
        %v9815 = vmax.f32 %v9751, 0.0
        %v9816 = vmax.f32 %v9752, 0.0
        %v9817 = vmax.f32 %v9753, 0.0
        %v9818 = vmax.f32 %v9754, 0.0
        %v9819 = vmax.f32 %v9755, 0.0
        %v9820 = vmax.f32 %v9756, 0.0
        %v9821 = vmax.f32 %v9757, 0.0
        %v9822 = vmax.f32 %v9758, 0.0
        %v9823 = vmax.f32 %v9759, 0.0
        %v9824 = vmax.f32 %v9760, 0.0
        %v9825 = vmax.f32 %v9761, 0.0
        %v9826 = vmax.f32 %v9762, 0.0
        %v9827 = vmax.f32 %v9763, 0.0
        %v9828 = vmax.f32 %v9764, 0.0
        %v9829 = vmax.f32 %v9765, 0.0
        %v9830 = vmax.f32 %v9766, 0.0
        %v9831 = vmax.f32 %v9767, 0.0
        %v9832 = vmax.f32 %v9768, 0.0
        %v9833 = vmax.f32 %v9769, 0.0
        %v9834 = vmax.f32 %v9770, 0.0
        %v9835 = vmax.f32 %v9771, 0.0
        %v9836 = vmax.f32 %v9772, 0.0
        %v9837 = vmax.f32 %v9773, 0.0
        %v9838 = vmax.f32 %v9774, 0.0
        %v9839 = vmax.f32 %v9775, 0.0
        %v9840 = vmax.f32 %v9776, 0.0
        %v9841 = vmax.f32 %v9777, 0.0
        %v9842 = vmax.f32 %v9778, 0.0
        %v9843 = vmax.f32 %v9779, 0.0
        %v9844 = vmax.f32 %v9780, 0.0
        %v9845 = vmax.f32 %v9781, 0.0
        %v9846 = vmax.f32 %v9782, 0.0
        %v9847 = vmax.f32 %v9783, 0.0
        %v9848 = vmax.f32 %v9784, 0.0
        %v9849 = vmax.f32 %v9785, 0.0
        %v9850 = vmax.f32 %v9786, 0.0
        %v9851 = vmax.f32 %v9787, 0.0
        %v9852 = vmax.f32 %v9788, 0.0
        %v9853 = vmax.f32 %v9789, 0.0
        %v9854 = vmax.f32 %v9790, 0.0
        %v9855 = vmax.f32 %v9791, 0.0
        %v9856 = vmax.f32 %v9792, 0.0
        %v9857 = vmax.f32 %v9793, 0.0
        %v9858 = vmax.f32 %v9794, 0.0
        %v9859 = vmax.f32 %v9795, 0.0
        %v9860 = vmax.f32 %v9796, 0.0
        %v9861 = vmax.f32 %v9797, 0.0
        %v9862 = vmax.f32 %v9798, 0.0
        %v9863 = vmax.f32 %v9799, 0.0
        %v9864 = vmax.f32 %v9800, 0.0
        %v9865 = vmax.f32 %v9801, 0.0
        %v9866 = vmax.f32 %v9802, 0.0
        %v9867 = vmax.f32 %v9803, 0.0
        %v9868 = vmax.f32 %v9804, 0.0
        %v9869 = vmax.f32 %v9805, 0.0
        %v9870 = vmax.f32 %v9806, 0.0
        %v9871 = vmax.f32 %v9807, 0.0
        %v9872 = vmax.f32 %v9808, 0.0
        %v9873 = vmax.f32 %v9809, 0.0
        %v9874 = vmax.f32 %v9810, 0.0
        %v9875 = vmax.f32 %v9811, 0.0
        %v9876 = vmax.f32 %v9812, 0.0
        %v9877 = vmax.f32 %v9813, 0.0
        %v9878 = vmax.f32 %v9814, 0.0
        %v9879 = vpack.c.bf16 %v9816, %v9815
        %v9880 = vpack.c.bf16 %v9818, %v9817
        %v9881 = vpack.c.bf16 %v9820, %v9819
        %v9882 = vpack.c.bf16 %v9822, %v9821
        %v9883 = vpack.c.bf16 %v9824, %v9823
        %v9884 = vpack.c.bf16 %v9826, %v9825
        %v9885 = vpack.c.bf16 %v9828, %v9827
        %v9886 = vpack.c.bf16 %v9830, %v9829
        %v9887 = vpack.c.bf16 %v9832, %v9831
        %v9888 = vpack.c.bf16 %v9834, %v9833
        %v9889 = vpack.c.bf16 %v9836, %v9835
        %v9890 = vpack.c.bf16 %v9838, %v9837
        %v9891 = vpack.c.bf16 %v9840, %v9839
        %v9892 = vpack.c.bf16 %v9842, %v9841
        %v9893 = vpack.c.bf16 %v9844, %v9843
        %v9894 = vpack.c.bf16 %v9846, %v9845
        %v9895 = vpack.c.bf16 %v9848, %v9847
        %v9896 = vpack.c.bf16 %v9850, %v9849
        %v9897 = vpack.c.bf16 %v9852, %v9851
        %v9898 = vpack.c.bf16 %v9854, %v9853
        %v9899 = vpack.c.bf16 %v9856, %v9855
        %v9900 = vpack.c.bf16 %v9858, %v9857
        %v9901 = vpack.c.bf16 %v9860, %v9859
        %v9902 = vpack.c.bf16 %v9862, %v9861
        %v9903 = vpack.c.bf16 %v9864, %v9863
        %v9904 = vpack.c.bf16 %v9866, %v9865
        %v9905 = vpack.c.bf16 %v9868, %v9867
        %v9906 = vpack.c.bf16 %v9870, %v9869
        %v9907 = vpack.c.bf16 %v9872, %v9871
        %v9908 = vpack.c.bf16 %v9874, %v9873
        %v9909 = vpack.c.bf16 %v9876, %v9875
        %v9910 = vpack.c.bf16 %v9878, %v9877
        %v9911 = vld [vmem:[%s7] sm:$0xf]
        %v9912 = vld [vmem:[%s7 + $0x4] sm:$0xf]
        %v9913 = vld [vmem:[%s7 + $0x8] sm:$0xf]
        %v9914 = vld [vmem:[%s7 + $0xc] sm:$0xf]
        %v9915 = vld [vmem:[%s7 + $0x10] sm:$0xf]
        %v9916 = vld [vmem:[%s7 + $0x14] sm:$0xf]
        %v9917 = vld [vmem:[%s7 + $0x18] sm:$0xf]
        %v9918 = vld [vmem:[%s7 + $0x1c] sm:$0xf]
        %v9919 = vld [vmem:[%s7 + $0x20] sm:$0xf]
        %v9920 = vld [vmem:[%s7 + $0x24] sm:$0xf]
        %v9921 = vld [vmem:[%s7 + $0x28] sm:$0xf]
        %v9922 = vld [vmem:[%s7 + $0x2c] sm:$0xf]
        %v9923 = vld [vmem:[%s7 + $0x30] sm:$0xf]
        %v9924 = vld [vmem:[%s7 + $0x34] sm:$0xf]
        %v9925 = vld [vmem:[%s7 + $0x38] sm:$0xf]
        %v9926 = vld [vmem:[%s7 + $0x3c] sm:$0xf]
        %v9943 = vunpack.c.l.b16 %v9911
        %v9944 = vunpack.c.l.b16 %v9912
        %v9945 = vunpack.c.l.b16 %v9913
        %v9946 = vunpack.c.l.b16 %v9914
        %v9947 = vunpack.c.l.b16 %v9915
        %v9948 = vunpack.c.l.b16 %v9916
        %v9949 = vunpack.c.l.b16 %v9917
        %v9950 = vunpack.c.l.b16 %v9918
        %v9951 = vunpack.c.l.b16 %v9919
        %v9952 = vunpack.c.l.b16 %v9920
        %v9953 = vunpack.c.l.b16 %v9921
        %v9954 = vunpack.c.l.b16 %v9922
        %v9955 = vunpack.c.l.b16 %v9923
        %v9956 = vunpack.c.l.b16 %v9924
        %v9957 = vunpack.c.l.b16 %v9925
        %v9958 = vunpack.c.l.b16 %v9926
        %v9959 = vpack.c.b16 %v9944, %v9943
        %v9960 = vpack.c.b16 %v9946, %v9945
        %v9961 = vpack.c.b16 %v9948, %v9947
        %v9962 = vpack.c.b16 %v9950, %v9949
        %v9963 = vpack.c.b16 %v9952, %v9951
        %v9964 = vpack.c.b16 %v9954, %v9953
        %v9965 = vpack.c.b16 %v9956, %v9955
        %v9966 = vpack.c.b16 %v9958, %v9957
        %9975 = vmatpush.bf16.msra.mxu0 %v9966
        %9976 = vmatpush.bf16.msra.mxu0 %v9965
        %9977 = vmatpush.bf16.msra.mxu0 %v9964
        %9978 = vmatpush.bf16.msra.mxu0 %v9963
        %9979 = vmatpush.bf16.msra.mxu0 %v9962
        %9980 = vmatpush.bf16.msra.mxu0 %v9961
        %9981 = vmatpush.bf16.msra.mxu0 %v9960
        %9982 = vmatpush.bf16.msra.mxu0 %v9959
        %9983 = vmatmul.bf16.gmra.mxu0 %v9879
        %v9984 = vpop.f32.mrf.mxu0
        %v9985 = vadd.f32 0.0, %v9984
        %v9986 = vpop.f32.mrf.mxu0
        %v9987 = vadd.f32 0.0, %v9986
        %9988 = vmatmul.bf16.gmra.mxu0 %v9880
        %v9989 = vpop.f32.mrf.mxu0
        %v9990 = vadd.f32 0.0, %v9989
        %v9991 = vpop.f32.mrf.mxu0
        %v9992 = vadd.f32 0.0, %v9991
        %9993 = vmatmul.bf16.gmra.mxu0 %v9881
        %v9994 = vpop.f32.mrf.mxu0
        %v9995 = vadd.f32 0.0, %v9994
        %v9996 = vpop.f32.mrf.mxu0
        %v9997 = vadd.f32 0.0, %v9996
        %9998 = vmatmul.bf16.gmra.mxu0 %v9882
        %v9999 = vpop.f32.mrf.mxu0
        %v10000 = vadd.f32 0.0, %v9999
        %v10001 = vpop.f32.mrf.mxu0
        %v10002 = vadd.f32 0.0, %v10001
        %10003 = vmatmul.bf16.gmra.mxu0 %v9883
        %v10004 = vpop.f32.mrf.mxu0
        %v10005 = vadd.f32 0.0, %v10004
        %v10006 = vpop.f32.mrf.mxu0
        %v10007 = vadd.f32 0.0, %v10006
        %10008 = vmatmul.bf16.gmra.mxu0 %v9884
        %v10009 = vpop.f32.mrf.mxu0
        %v10010 = vadd.f32 0.0, %v10009
        %v10011 = vpop.f32.mrf.mxu0
        %v10012 = vadd.f32 0.0, %v10011
        %10013 = vmatmul.bf16.gmra.mxu0 %v9885
        %v10014 = vpop.f32.mrf.mxu0
        %v10015 = vadd.f32 0.0, %v10014
        %v10016 = vpop.f32.mrf.mxu0
        %v10017 = vadd.f32 0.0, %v10016
        %10018 = vmatmul.bf16.gmra.mxu0 %v9886
        %v10019 = vpop.f32.mrf.mxu0
        %v10020 = vadd.f32 0.0, %v10019
        %v10021 = vpop.f32.mrf.mxu0
        %v10022 = vadd.f32 0.0, %v10021
        %10023 = vmatmul.bf16.gmra.mxu0 %v9887
        %v10024 = vpop.f32.mrf.mxu0
        %v10025 = vadd.f32 0.0, %v10024
        %v10026 = vpop.f32.mrf.mxu0
        %v10027 = vadd.f32 0.0, %v10026
        %10028 = vmatmul.bf16.gmra.mxu0 %v9888
        %v10029 = vpop.f32.mrf.mxu0
        %v10030 = vadd.f32 0.0, %v10029
        %v10031 = vpop.f32.mrf.mxu0
        %v10032 = vadd.f32 0.0, %v10031
        %10033 = vmatmul.bf16.gmra.mxu0 %v9889
        %v10034 = vpop.f32.mrf.mxu0
        %v10035 = vadd.f32 0.0, %v10034
        %v10036 = vpop.f32.mrf.mxu0
        %v10037 = vadd.f32 0.0, %v10036
        %10038 = vmatmul.bf16.gmra.mxu0 %v9890
        %v10039 = vpop.f32.mrf.mxu0
        %v10040 = vadd.f32 0.0, %v10039
        %v10041 = vpop.f32.mrf.mxu0
        %v10042 = vadd.f32 0.0, %v10041
        %10043 = vmatmul.bf16.gmra.mxu0 %v9891
        %v10044 = vpop.f32.mrf.mxu0
        %v10045 = vadd.f32 0.0, %v10044
        %v10046 = vpop.f32.mrf.mxu0
        %v10047 = vadd.f32 0.0, %v10046
        %10048 = vmatmul.bf16.gmra.mxu0 %v9892
        %v10049 = vpop.f32.mrf.mxu0
        %v10050 = vadd.f32 0.0, %v10049
        %v10051 = vpop.f32.mrf.mxu0
        %v10052 = vadd.f32 0.0, %v10051
        %10053 = vmatmul.bf16.gmra.mxu0 %v9893
        %v10054 = vpop.f32.mrf.mxu0
        %v10055 = vadd.f32 0.0, %v10054
        %v10056 = vpop.f32.mrf.mxu0
        %v10057 = vadd.f32 0.0, %v10056
        %10058 = vmatmul.bf16.gmra.mxu0 %v9894
        %v10059 = vpop.f32.mrf.mxu0
        %v10060 = vadd.f32 0.0, %v10059
        %v10061 = vpop.f32.mrf.mxu0
        %v10062 = vadd.f32 0.0, %v10061
        %10063 = vmatmul.bf16.gmra.mxu0 %v9895
        %v10064 = vpop.f32.mrf.mxu0
        %v10065 = vadd.f32 0.0, %v10064
        %v10066 = vpop.f32.mrf.mxu0
        %v10067 = vadd.f32 0.0, %v10066
        %10068 = vmatmul.bf16.gmra.mxu0 %v9896
        %v10069 = vpop.f32.mrf.mxu0
        %v10070 = vadd.f32 0.0, %v10069
        %v10071 = vpop.f32.mrf.mxu0
        %v10072 = vadd.f32 0.0, %v10071
        %10073 = vmatmul.bf16.gmra.mxu0 %v9897
        %v10074 = vpop.f32.mrf.mxu0
        %v10075 = vadd.f32 0.0, %v10074
        %v10076 = vpop.f32.mrf.mxu0
        %v10077 = vadd.f32 0.0, %v10076
        %10078 = vmatmul.bf16.gmra.mxu0 %v9898
        %v10079 = vpop.f32.mrf.mxu0
        %v10080 = vadd.f32 0.0, %v10079
        %v10081 = vpop.f32.mrf.mxu0
        %v10082 = vadd.f32 0.0, %v10081
        %10083 = vmatmul.bf16.gmra.mxu0 %v9899
        %v10084 = vpop.f32.mrf.mxu0
        %v10085 = vadd.f32 0.0, %v10084
        %v10086 = vpop.f32.mrf.mxu0
        %v10087 = vadd.f32 0.0, %v10086
        %10088 = vmatmul.bf16.gmra.mxu0 %v9900
        %v10089 = vpop.f32.mrf.mxu0
        %v10090 = vadd.f32 0.0, %v10089
        %v10091 = vpop.f32.mrf.mxu0
        %v10092 = vadd.f32 0.0, %v10091
        %10093 = vmatmul.bf16.gmra.mxu0 %v9901
        %v10094 = vpop.f32.mrf.mxu0
        %v10095 = vadd.f32 0.0, %v10094
        %v10096 = vpop.f32.mrf.mxu0
        %v10097 = vadd.f32 0.0, %v10096
        %10098 = vmatmul.bf16.gmra.mxu0 %v9902
        %v10099 = vpop.f32.mrf.mxu0
        %v10100 = vadd.f32 0.0, %v10099
        %v10101 = vpop.f32.mrf.mxu0
        %v10102 = vadd.f32 0.0, %v10101
        %10103 = vmatmul.bf16.gmra.mxu0 %v9903
        %v10104 = vpop.f32.mrf.mxu0
        %v10105 = vadd.f32 0.0, %v10104
        %v10106 = vpop.f32.mrf.mxu0
        %v10107 = vadd.f32 0.0, %v10106
        %10108 = vmatmul.bf16.gmra.mxu0 %v9904
        %v10109 = vpop.f32.mrf.mxu0
        %v10110 = vadd.f32 0.0, %v10109
        %v10111 = vpop.f32.mrf.mxu0
        %v10112 = vadd.f32 0.0, %v10111
        %10113 = vmatmul.bf16.gmra.mxu0 %v9905
        %v10114 = vpop.f32.mrf.mxu0
        %v10115 = vadd.f32 0.0, %v10114
        %v10116 = vpop.f32.mrf.mxu0
        %v10117 = vadd.f32 0.0, %v10116
        %10118 = vmatmul.bf16.gmra.mxu0 %v9906
        %v10119 = vpop.f32.mrf.mxu0
        %v10120 = vadd.f32 0.0, %v10119
        %v10121 = vpop.f32.mrf.mxu0
        %v10122 = vadd.f32 0.0, %v10121
        %10123 = vmatmul.bf16.gmra.mxu0 %v9907
        %v10124 = vpop.f32.mrf.mxu0
        %v10125 = vadd.f32 0.0, %v10124
        %v10126 = vpop.f32.mrf.mxu0
        %v10127 = vadd.f32 0.0, %v10126
        %10128 = vmatmul.bf16.gmra.mxu0 %v9908
        %v10129 = vpop.f32.mrf.mxu0
        %v10130 = vadd.f32 0.0, %v10129
        %v10131 = vpop.f32.mrf.mxu0
        %v10132 = vadd.f32 0.0, %v10131
        %10133 = vmatmul.bf16.gmra.mxu0 %v9909
        %v10134 = vpop.f32.mrf.mxu0
        %v10135 = vadd.f32 0.0, %v10134
        %v10136 = vpop.f32.mrf.mxu0
        %v10137 = vadd.f32 0.0, %v10136
        %10138 = vmatmul.bf16.gmra.mxu0 %v9910
        %v10139 = vpop.f32.mrf.mxu0
        %v10140 = vadd.f32 0.0, %v10139
        %v10141 = vpop.f32.mrf.mxu0
        %v10142 = vadd.f32 0.0, %v10141
        %10143 = vdwg.mxu0
        %v10144 = vld [vmem:[%s8] sm:$0x1]
        %v10145 = vperm.slane %v10144, 0
        %v10146 = vmul.f32 %v9985, %v10145
        %v10147 = vmul.f32 %v9987, %v10145
        %v10148 = vmul.f32 %v9990, %v10145
        %v10149 = vmul.f32 %v9992, %v10145
        %v10150 = vmul.f32 %v9995, %v10145
        %v10151 = vmul.f32 %v9997, %v10145
        %v10152 = vmul.f32 %v10000, %v10145
        %v10153 = vmul.f32 %v10002, %v10145
        %v10154 = vmul.f32 %v10005, %v10145
        %v10155 = vmul.f32 %v10007, %v10145
        %v10156 = vmul.f32 %v10010, %v10145
        %v10157 = vmul.f32 %v10012, %v10145
        %v10158 = vmul.f32 %v10015, %v10145
        %v10159 = vmul.f32 %v10017, %v10145
        %v10160 = vmul.f32 %v10020, %v10145
        %v10161 = vmul.f32 %v10022, %v10145
        %v10162 = vmul.f32 %v10025, %v10145
        %v10163 = vmul.f32 %v10027, %v10145
        %v10164 = vmul.f32 %v10030, %v10145
        %v10165 = vmul.f32 %v10032, %v10145
        %v10166 = vmul.f32 %v10035, %v10145
        %v10167 = vmul.f32 %v10037, %v10145
        %v10168 = vmul.f32 %v10040, %v10145
        %v10169 = vmul.f32 %v10042, %v10145
        %v10170 = vmul.f32 %v10045, %v10145
        %v10171 = vmul.f32 %v10047, %v10145
        %v10172 = vmul.f32 %v10050, %v10145
        %v10173 = vmul.f32 %v10052, %v10145
        %v10174 = vmul.f32 %v10055, %v10145
        %v10175 = vmul.f32 %v10057, %v10145
        %v10176 = vmul.f32 %v10060, %v10145
        %v10177 = vmul.f32 %v10062, %v10145
        %v10178 = vmul.f32 %v10065, %v10145
        %v10179 = vmul.f32 %v10067, %v10145
        %v10180 = vmul.f32 %v10070, %v10145
        %v10181 = vmul.f32 %v10072, %v10145
        %v10182 = vmul.f32 %v10075, %v10145
        %v10183 = vmul.f32 %v10077, %v10145
        %v10184 = vmul.f32 %v10080, %v10145
        %v10185 = vmul.f32 %v10082, %v10145
        %v10186 = vmul.f32 %v10085, %v10145
        %v10187 = vmul.f32 %v10087, %v10145
        %v10188 = vmul.f32 %v10090, %v10145
        %v10189 = vmul.f32 %v10092, %v10145
        %v10190 = vmul.f32 %v10095, %v10145
        %v10191 = vmul.f32 %v10097, %v10145
        %v10192 = vmul.f32 %v10100, %v10145
        %v10193 = vmul.f32 %v10102, %v10145
        %v10194 = vmul.f32 %v10105, %v10145
        %v10195 = vmul.f32 %v10107, %v10145
        %v10196 = vmul.f32 %v10110, %v10145
        %v10197 = vmul.f32 %v10112, %v10145
        %v10198 = vmul.f32 %v10115, %v10145
        %v10199 = vmul.f32 %v10117, %v10145
        %v10200 = vmul.f32 %v10120, %v10145
        %v10201 = vmul.f32 %v10122, %v10145
        %v10202 = vmul.f32 %v10125, %v10145
        %v10203 = vmul.f32 %v10127, %v10145
        %v10204 = vmul.f32 %v10130, %v10145
        %v10205 = vmul.f32 %v10132, %v10145
        %v10206 = vmul.f32 %v10135, %v10145
        %v10207 = vmul.f32 %v10137, %v10145
        %v10208 = vmul.f32 %v10140, %v10145
        %v10209 = vmul.f32 %v10142, %v10145
        %v10210 = vld [vmem:[%s8 + $0x1] sm:$0x1]
        %v10211 = vperm.slane %v10210, 0
        %v10212 = vadd.f32 %v10146, %v10211
        %v10213 = vadd.f32 %v10147, %v10211
        %v10214 = vadd.f32 %v10148, %v10211
        %v10215 = vadd.f32 %v10149, %v10211
        %v10216 = vadd.f32 %v10150, %v10211
        %v10217 = vadd.f32 %v10151, %v10211
        %v10218 = vadd.f32 %v10152, %v10211
        %v10219 = vadd.f32 %v10153, %v10211
        %v10220 = vadd.f32 %v10154, %v10211
        %v10221 = vadd.f32 %v10155, %v10211
        %v10222 = vadd.f32 %v10156, %v10211
        %v10223 = vadd.f32 %v10157, %v10211
        %v10224 = vadd.f32 %v10158, %v10211
        %v10225 = vadd.f32 %v10159, %v10211
        %v10226 = vadd.f32 %v10160, %v10211
        %v10227 = vadd.f32 %v10161, %v10211
        %v10228 = vadd.f32 %v10162, %v10211
        %v10229 = vadd.f32 %v10163, %v10211
        %v10230 = vadd.f32 %v10164, %v10211
        %v10231 = vadd.f32 %v10165, %v10211
        %v10232 = vadd.f32 %v10166, %v10211
        %v10233 = vadd.f32 %v10167, %v10211
        %v10234 = vadd.f32 %v10168, %v10211
        %v10235 = vadd.f32 %v10169, %v10211
        %v10236 = vadd.f32 %v10170, %v10211
        %v10237 = vadd.f32 %v10171, %v10211
        %v10238 = vadd.f32 %v10172, %v10211
        %v10239 = vadd.f32 %v10173, %v10211
        %v10240 = vadd.f32 %v10174, %v10211
        %v10241 = vadd.f32 %v10175, %v10211
        %v10242 = vadd.f32 %v10176, %v10211
        %v10243 = vadd.f32 %v10177, %v10211
        %v10244 = vadd.f32 %v10178, %v10211
        %v10245 = vadd.f32 %v10179, %v10211
        %v10246 = vadd.f32 %v10180, %v10211
        %v10247 = vadd.f32 %v10181, %v10211
        %v10248 = vadd.f32 %v10182, %v10211
        %v10249 = vadd.f32 %v10183, %v10211
        %v10250 = vadd.f32 %v10184, %v10211
        %v10251 = vadd.f32 %v10185, %v10211
        %v10252 = vadd.f32 %v10186, %v10211
        %v10253 = vadd.f32 %v10187, %v10211
        %v10254 = vadd.f32 %v10188, %v10211
        %v10255 = vadd.f32 %v10189, %v10211
        %v10256 = vadd.f32 %v10190, %v10211
        %v10257 = vadd.f32 %v10191, %v10211
        %v10258 = vadd.f32 %v10192, %v10211
        %v10259 = vadd.f32 %v10193, %v10211
        %v10260 = vadd.f32 %v10194, %v10211
        %v10261 = vadd.f32 %v10195, %v10211
        %v10262 = vadd.f32 %v10196, %v10211
        %v10263 = vadd.f32 %v10197, %v10211
        %v10264 = vadd.f32 %v10198, %v10211
        %v10265 = vadd.f32 %v10199, %v10211
        %v10266 = vadd.f32 %v10200, %v10211
        %v10267 = vadd.f32 %v10201, %v10211
        %v10268 = vadd.f32 %v10202, %v10211
        %v10269 = vadd.f32 %v10203, %v10211
        %v10270 = vadd.f32 %v10204, %v10211
        %v10271 = vadd.f32 %v10205, %v10211
        %v10272 = vadd.f32 %v10206, %v10211
        %v10273 = vadd.f32 %v10207, %v10211
        %v10274 = vadd.f32 %v10208, %v10211
        %v10275 = vadd.f32 %v10209, %v10211
        %v10276 = vadd.f32 %v10212, %v978
        %v10277 = vadd.f32 %v10213, %v979
        %v10278 = vadd.f32 %v10214, %v980
        %v10279 = vadd.f32 %v10215, %v981
        %v10280 = vadd.f32 %v10216, %v982
        %v10281 = vadd.f32 %v10217, %v983
        %v10282 = vadd.f32 %v10218, %v984
        %v10283 = vadd.f32 %v10219, %v985
        %v10284 = vadd.f32 %v10220, %v986
        %v10285 = vadd.f32 %v10221, %v987
        %v10286 = vadd.f32 %v10222, %v988
        %v10287 = vadd.f32 %v10223, %v989
        %v10288 = vadd.f32 %v10224, %v990
        %v10289 = vadd.f32 %v10225, %v991
        %v10290 = vadd.f32 %v10226, %v992
        %v10291 = vadd.f32 %v10227, %v993
        %v10292 = vadd.f32 %v10228, %v994
        %v10293 = vadd.f32 %v10229, %v995
        %v10294 = vadd.f32 %v10230, %v996
        %v10295 = vadd.f32 %v10231, %v997
        %v10296 = vadd.f32 %v10232, %v998
        %v10297 = vadd.f32 %v10233, %v999
        %v10298 = vadd.f32 %v10234, %v1000
        %v10299 = vadd.f32 %v10235, %v1001
        %v10300 = vadd.f32 %v10236, %v1002
        %v10301 = vadd.f32 %v10237, %v1003
        %v10302 = vadd.f32 %v10238, %v1004
        %v10303 = vadd.f32 %v10239, %v1005
        %v10304 = vadd.f32 %v10240, %v1006
        %v10305 = vadd.f32 %v10241, %v1007
        %v10306 = vadd.f32 %v10242, %v1008
        %v10307 = vadd.f32 %v10243, %v1009
        %v10308 = vadd.f32 %v10244, %v1010
        %v10309 = vadd.f32 %v10245, %v1011
        %v10310 = vadd.f32 %v10246, %v1012
        %v10311 = vadd.f32 %v10247, %v1013
        %v10312 = vadd.f32 %v10248, %v1014
        %v10313 = vadd.f32 %v10249, %v1015
        %v10314 = vadd.f32 %v10250, %v1016
        %v10315 = vadd.f32 %v10251, %v1017
        %v10316 = vadd.f32 %v10252, %v1018
        %v10317 = vadd.f32 %v10253, %v1019
        %v10318 = vadd.f32 %v10254, %v1020
        %v10319 = vadd.f32 %v10255, %v1021
        %v10320 = vadd.f32 %v10256, %v1022
        %v10321 = vadd.f32 %v10257, %v1023
        %v10322 = vadd.f32 %v10258, %v1024
        %v10323 = vadd.f32 %v10259, %v1025
        %v10324 = vadd.f32 %v10260, %v1026
        %v10325 = vadd.f32 %v10261, %v1027
        %v10326 = vadd.f32 %v10262, %v1028
        %v10327 = vadd.f32 %v10263, %v1029
        %v10328 = vadd.f32 %v10264, %v1030
        %v10329 = vadd.f32 %v10265, %v1031
        %v10330 = vadd.f32 %v10266, %v1032
        %v10331 = vadd.f32 %v10267, %v1033
        %v10332 = vadd.f32 %v10268, %v1034
        %v10333 = vadd.f32 %v10269, %v1035
        %v10334 = vadd.f32 %v10270, %v1036
        %v10335 = vadd.f32 %v10271, %v1037
        %v10336 = vadd.f32 %v10272, %v1038
        %v10337 = vadd.f32 %v10273, %v1039
        %v10338 = vadd.f32 %v10274, %v1040
        %v10339 = vadd.f32 %v10275, %v1041
        %v10340 = vmax.f32 %v10276, 0.0
        %v10341 = vmax.f32 %v10277, 0.0
        %v10342 = vmax.f32 %v10278, 0.0
        %v10343 = vmax.f32 %v10279, 0.0
        %v10344 = vmax.f32 %v10280, 0.0
        %v10345 = vmax.f32 %v10281, 0.0
        %v10346 = vmax.f32 %v10282, 0.0
        %v10347 = vmax.f32 %v10283, 0.0
        %v10348 = vmax.f32 %v10284, 0.0
        %v10349 = vmax.f32 %v10285, 0.0
        %v10350 = vmax.f32 %v10286, 0.0
        %v10351 = vmax.f32 %v10287, 0.0
        %v10352 = vmax.f32 %v10288, 0.0
        %v10353 = vmax.f32 %v10289, 0.0
        %v10354 = vmax.f32 %v10290, 0.0
        %v10355 = vmax.f32 %v10291, 0.0
        %v10356 = vmax.f32 %v10292, 0.0
        %v10357 = vmax.f32 %v10293, 0.0
        %v10358 = vmax.f32 %v10294, 0.0
        %v10359 = vmax.f32 %v10295, 0.0
        %v10360 = vmax.f32 %v10296, 0.0
        %v10361 = vmax.f32 %v10297, 0.0
        %v10362 = vmax.f32 %v10298, 0.0
        %v10363 = vmax.f32 %v10299, 0.0
        %v10364 = vmax.f32 %v10300, 0.0
        %v10365 = vmax.f32 %v10301, 0.0
        %v10366 = vmax.f32 %v10302, 0.0
        %v10367 = vmax.f32 %v10303, 0.0
        %v10368 = vmax.f32 %v10304, 0.0
        %v10369 = vmax.f32 %v10305, 0.0
        %v10370 = vmax.f32 %v10306, 0.0
        %v10371 = vmax.f32 %v10307, 0.0
        %v10372 = vmax.f32 %v10308, 0.0
        %v10373 = vmax.f32 %v10309, 0.0
        %v10374 = vmax.f32 %v10310, 0.0
        %v10375 = vmax.f32 %v10311, 0.0
        %v10376 = vmax.f32 %v10312, 0.0
        %v10377 = vmax.f32 %v10313, 0.0
        %v10378 = vmax.f32 %v10314, 0.0
        %v10379 = vmax.f32 %v10315, 0.0
        %v10380 = vmax.f32 %v10316, 0.0
        %v10381 = vmax.f32 %v10317, 0.0
        %v10382 = vmax.f32 %v10318, 0.0
        %v10383 = vmax.f32 %v10319, 0.0
        %v10384 = vmax.f32 %v10320, 0.0
        %v10385 = vmax.f32 %v10321, 0.0
        %v10386 = vmax.f32 %v10322, 0.0
        %v10387 = vmax.f32 %v10323, 0.0
        %v10388 = vmax.f32 %v10324, 0.0
        %v10389 = vmax.f32 %v10325, 0.0
        %v10390 = vmax.f32 %v10326, 0.0
        %v10391 = vmax.f32 %v10327, 0.0
        %v10392 = vmax.f32 %v10328, 0.0
        %v10393 = vmax.f32 %v10329, 0.0
        %v10394 = vmax.f32 %v10330, 0.0
        %v10395 = vmax.f32 %v10331, 0.0
        %v10396 = vmax.f32 %v10332, 0.0
        %v10397 = vmax.f32 %v10333, 0.0
        %v10398 = vmax.f32 %v10334, 0.0
        %v10399 = vmax.f32 %v10335, 0.0
        %v10400 = vmax.f32 %v10336, 0.0
        %v10401 = vmax.f32 %v10337, 0.0
        %v10402 = vmax.f32 %v10338, 0.0
        %v10403 = vmax.f32 %v10339, 0.0
        %v10404 = vmax.f32 %v10340, 1e-06
        %v10405 = vmax.f32 %v10341, 1e-06
        %v10406 = vmax.f32 %v10342, 1e-06
        %v10407 = vmax.f32 %v10343, 1e-06
        %v10408 = vmax.f32 %v10344, 1e-06
        %v10409 = vmax.f32 %v10345, 1e-06
        %v10410 = vmax.f32 %v10346, 1e-06
        %v10411 = vmax.f32 %v10347, 1e-06
        %v10412 = vmax.f32 %v10348, 1e-06
        %v10413 = vmax.f32 %v10349, 1e-06
        %v10414 = vmax.f32 %v10350, 1e-06
        %v10415 = vmax.f32 %v10351, 1e-06
        %v10416 = vmax.f32 %v10352, 1e-06
        %v10417 = vmax.f32 %v10353, 1e-06
        %v10418 = vmax.f32 %v10354, 1e-06
        %v10419 = vmax.f32 %v10355, 1e-06
        %v10420 = vmax.f32 %v10356, 1e-06
        %v10421 = vmax.f32 %v10357, 1e-06
        %v10422 = vmax.f32 %v10358, 1e-06
        %v10423 = vmax.f32 %v10359, 1e-06
        %v10424 = vmax.f32 %v10360, 1e-06
        %v10425 = vmax.f32 %v10361, 1e-06
        %v10426 = vmax.f32 %v10362, 1e-06
        %v10427 = vmax.f32 %v10363, 1e-06
        %v10428 = vmax.f32 %v10364, 1e-06
        %v10429 = vmax.f32 %v10365, 1e-06
        %v10430 = vmax.f32 %v10366, 1e-06
        %v10431 = vmax.f32 %v10367, 1e-06
        %v10432 = vmax.f32 %v10368, 1e-06
        %v10433 = vmax.f32 %v10369, 1e-06
        %v10434 = vmax.f32 %v10370, 1e-06
        %v10435 = vmax.f32 %v10371, 1e-06
        %v10436 = vmax.f32 %v10372, 1e-06
        %v10437 = vmax.f32 %v10373, 1e-06
        %v10438 = vmax.f32 %v10374, 1e-06
        %v10439 = vmax.f32 %v10375, 1e-06
        %v10440 = vmax.f32 %v10376, 1e-06
        %v10441 = vmax.f32 %v10377, 1e-06
        %v10442 = vmax.f32 %v10378, 1e-06
        %v10443 = vmax.f32 %v10379, 1e-06
        %v10444 = vmax.f32 %v10380, 1e-06
        %v10445 = vmax.f32 %v10381, 1e-06
        %v10446 = vmax.f32 %v10382, 1e-06
        %v10447 = vmax.f32 %v10383, 1e-06
        %v10448 = vmax.f32 %v10384, 1e-06
        %v10449 = vmax.f32 %v10385, 1e-06
        %v10450 = vmax.f32 %v10386, 1e-06
        %v10451 = vmax.f32 %v10387, 1e-06
        %v10452 = vmax.f32 %v10388, 1e-06
        %v10453 = vmax.f32 %v10389, 1e-06
        %v10454 = vmax.f32 %v10390, 1e-06
        %v10455 = vmax.f32 %v10391, 1e-06
        %v10456 = vmax.f32 %v10392, 1e-06
        %v10457 = vmax.f32 %v10393, 1e-06
        %v10458 = vmax.f32 %v10394, 1e-06
        %v10459 = vmax.f32 %v10395, 1e-06
        %v10460 = vmax.f32 %v10396, 1e-06
        %v10461 = vmax.f32 %v10397, 1e-06
        %v10462 = vmax.f32 %v10398, 1e-06
        %v10463 = vmax.f32 %v10399, 1e-06
        %v10464 = vmax.f32 %v10400, 1e-06
        %v10465 = vmax.f32 %v10401, 1e-06
        %v10466 = vmax.f32 %v10402, 1e-06
        %v10467 = vmax.f32 %v10403, 1e-06
        %v10468 = vmul.f32 %v10404, %v10404
        %v10469 = vmul.f32 %v10405, %v10405
        %v10470 = vmul.f32 %v10406, %v10406
        %v10471 = vmul.f32 %v10407, %v10407
        %v10472 = vmul.f32 %v10408, %v10408
        %v10473 = vmul.f32 %v10409, %v10409
        %v10474 = vmul.f32 %v10410, %v10410
        %v10475 = vmul.f32 %v10411, %v10411
        %v10476 = vmul.f32 %v10412, %v10412
        %v10477 = vmul.f32 %v10413, %v10413
        %v10478 = vmul.f32 %v10414, %v10414
        %v10479 = vmul.f32 %v10415, %v10415
        %v10480 = vmul.f32 %v10416, %v10416
        %v10481 = vmul.f32 %v10417, %v10417
        %v10482 = vmul.f32 %v10418, %v10418
        %v10483 = vmul.f32 %v10419, %v10419
        %v10484 = vmul.f32 %v10420, %v10420
        %v10485 = vmul.f32 %v10421, %v10421
        %v10486 = vmul.f32 %v10422, %v10422
        %v10487 = vmul.f32 %v10423, %v10423
        %v10488 = vmul.f32 %v10424, %v10424
        %v10489 = vmul.f32 %v10425, %v10425
        %v10490 = vmul.f32 %v10426, %v10426
        %v10491 = vmul.f32 %v10427, %v10427
        %v10492 = vmul.f32 %v10428, %v10428
        %v10493 = vmul.f32 %v10429, %v10429
        %v10494 = vmul.f32 %v10430, %v10430
        %v10495 = vmul.f32 %v10431, %v10431
        %v10496 = vmul.f32 %v10432, %v10432
        %v10497 = vmul.f32 %v10433, %v10433
        %v10498 = vmul.f32 %v10434, %v10434
        %v10499 = vmul.f32 %v10435, %v10435
        %v10500 = vmul.f32 %v10436, %v10436
        %v10501 = vmul.f32 %v10437, %v10437
        %v10502 = vmul.f32 %v10438, %v10438
        %v10503 = vmul.f32 %v10439, %v10439
        %v10504 = vmul.f32 %v10440, %v10440
        %v10505 = vmul.f32 %v10441, %v10441
        %v10506 = vmul.f32 %v10442, %v10442
        %v10507 = vmul.f32 %v10443, %v10443
        %v10508 = vmul.f32 %v10444, %v10444
        %v10509 = vmul.f32 %v10445, %v10445
        %v10510 = vmul.f32 %v10446, %v10446
        %v10511 = vmul.f32 %v10447, %v10447
        %v10512 = vmul.f32 %v10448, %v10448
        %v10513 = vmul.f32 %v10449, %v10449
        %v10514 = vmul.f32 %v10450, %v10450
        %v10515 = vmul.f32 %v10451, %v10451
        %v10516 = vmul.f32 %v10452, %v10452
        %v10517 = vmul.f32 %v10453, %v10453
        %v10518 = vmul.f32 %v10454, %v10454
        %v10519 = vmul.f32 %v10455, %v10455
        %v10520 = vmul.f32 %v10456, %v10456
        %v10521 = vmul.f32 %v10457, %v10457
        %v10522 = vmul.f32 %v10458, %v10458
        %v10523 = vmul.f32 %v10459, %v10459
        %v10524 = vmul.f32 %v10460, %v10460
        %v10525 = vmul.f32 %v10461, %v10461
        %v10526 = vmul.f32 %v10462, %v10462
        %v10527 = vmul.f32 %v10463, %v10463
        %v10528 = vmul.f32 %v10464, %v10464
        %v10529 = vmul.f32 %v10465, %v10465
        %v10530 = vmul.f32 %v10466, %v10466
        %v10531 = vmul.f32 %v10467, %v10467
        %v10532 = vmul.f32 %v10468, %v10404
        %v10533 = vmul.f32 %v10469, %v10405
        %v10534 = vmul.f32 %v10470, %v10406
        %v10535 = vmul.f32 %v10471, %v10407
        %v10536 = vmul.f32 %v10472, %v10408
        %v10537 = vmul.f32 %v10473, %v10409
        %v10538 = vmul.f32 %v10474, %v10410
        %v10539 = vmul.f32 %v10475, %v10411
        %v10540 = vmul.f32 %v10476, %v10412
        %v10541 = vmul.f32 %v10477, %v10413
        %v10542 = vmul.f32 %v10478, %v10414
        %v10543 = vmul.f32 %v10479, %v10415
        %v10544 = vmul.f32 %v10480, %v10416
        %v10545 = vmul.f32 %v10481, %v10417
        %v10546 = vmul.f32 %v10482, %v10418
        %v10547 = vmul.f32 %v10483, %v10419
        %v10548 = vmul.f32 %v10484, %v10420
        %v10549 = vmul.f32 %v10485, %v10421
        %v10550 = vmul.f32 %v10486, %v10422
        %v10551 = vmul.f32 %v10487, %v10423
        %v10552 = vmul.f32 %v10488, %v10424
        %v10553 = vmul.f32 %v10489, %v10425
        %v10554 = vmul.f32 %v10490, %v10426
        %v10555 = vmul.f32 %v10491, %v10427
        %v10556 = vmul.f32 %v10492, %v10428
        %v10557 = vmul.f32 %v10493, %v10429
        %v10558 = vmul.f32 %v10494, %v10430
        %v10559 = vmul.f32 %v10495, %v10431
        %v10560 = vmul.f32 %v10496, %v10432
        %v10561 = vmul.f32 %v10497, %v10433
        %v10562 = vmul.f32 %v10498, %v10434
        %v10563 = vmul.f32 %v10499, %v10435
        %v10564 = vmul.f32 %v10500, %v10436
        %v10565 = vmul.f32 %v10501, %v10437
        %v10566 = vmul.f32 %v10502, %v10438
        %v10567 = vmul.f32 %v10503, %v10439
        %v10568 = vmul.f32 %v10504, %v10440
        %v10569 = vmul.f32 %v10505, %v10441
        %v10570 = vmul.f32 %v10506, %v10442
        %v10571 = vmul.f32 %v10507, %v10443
        %v10572 = vmul.f32 %v10508, %v10444
        %v10573 = vmul.f32 %v10509, %v10445
        %v10574 = vmul.f32 %v10510, %v10446
        %v10575 = vmul.f32 %v10511, %v10447
        %v10576 = vmul.f32 %v10512, %v10448
        %v10577 = vmul.f32 %v10513, %v10449
        %v10578 = vmul.f32 %v10514, %v10450
        %v10579 = vmul.f32 %v10515, %v10451
        %v10580 = vmul.f32 %v10516, %v10452
        %v10581 = vmul.f32 %v10517, %v10453
        %v10582 = vmul.f32 %v10518, %v10454
        %v10583 = vmul.f32 %v10519, %v10455
        %v10584 = vmul.f32 %v10520, %v10456
        %v10585 = vmul.f32 %v10521, %v10457
        %v10586 = vmul.f32 %v10522, %v10458
        %v10587 = vmul.f32 %v10523, %v10459
        %v10588 = vmul.f32 %v10524, %v10460
        %v10589 = vmul.f32 %v10525, %v10461
        %v10590 = vmul.f32 %v10526, %v10462
        %v10591 = vmul.f32 %v10527, %v10463
        %v10592 = vmul.f32 %v10528, %v10464
        %v10593 = vmul.f32 %v10529, %v10465
        %v10594 = vmul.f32 %v10530, %v10466
        %v10595 = vmul.f32 %v10531, %v10467
        %v10596 = vadd.f32 %v10532, %v10533
        %v10597 = vadd.f32 %v10596, %v10534
        %v10598 = vadd.f32 %v10597, %v10535
        %v10599 = vadd.f32 %v10598, %v10536
        %v10600 = vadd.f32 %v10599, %v10537
        %v10601 = vadd.f32 %v10600, %v10538
        %v10602 = vadd.f32 %v10601, %v10539
        %v10603 = vadd.f32 %v10602, %v10540
        %v10604 = vadd.f32 %v10603, %v10541
        %v10605 = vadd.f32 %v10604, %v10542
        %v10606 = vadd.f32 %v10605, %v10543
        %v10607 = vadd.f32 %v10606, %v10544
        %v10608 = vadd.f32 %v10607, %v10545
        %v10609 = vadd.f32 %v10608, %v10546
        %v10610 = vadd.f32 %v10609, %v10547
        %v10611 = vadd.f32 %v10610, %v10548
        %v10612 = vadd.f32 %v10611, %v10549
        %v10613 = vadd.f32 %v10612, %v10550
        %v10614 = vadd.f32 %v10613, %v10551
        %v10615 = vadd.f32 %v10614, %v10552
        %v10616 = vadd.f32 %v10615, %v10553
        %v10617 = vadd.f32 %v10616, %v10554
        %v10618 = vadd.f32 %v10617, %v10555
        %v10619 = vadd.f32 %v10618, %v10556
        %v10620 = vadd.f32 %v10619, %v10557
        %v10621 = vadd.f32 %v10620, %v10558
        %v10622 = vadd.f32 %v10621, %v10559
        %v10623 = vadd.f32 %v10622, %v10560
        %v10624 = vadd.f32 %v10623, %v10561
        %v10625 = vadd.f32 %v10624, %v10562
        %v10626 = vadd.f32 %v10625, %v10563
        %v10627 = vadd.f32 %v10626, %v10564
        %v10628 = vadd.f32 %v10627, %v10565
        %v10629 = vadd.f32 %v10628, %v10566
        %v10630 = vadd.f32 %v10629, %v10567
        %v10631 = vadd.f32 %v10630, %v10568
        %v10632 = vadd.f32 %v10631, %v10569
        %v10633 = vadd.f32 %v10632, %v10570
        %v10634 = vadd.f32 %v10633, %v10571
        %v10635 = vadd.f32 %v10634, %v10572
        %v10636 = vadd.f32 %v10635, %v10573
        %v10637 = vadd.f32 %v10636, %v10574
        %v10638 = vadd.f32 %v10637, %v10575
        %v10639 = vadd.f32 %v10638, %v10576
        %v10640 = vadd.f32 %v10639, %v10577
        %v10641 = vadd.f32 %v10640, %v10578
        %v10642 = vadd.f32 %v10641, %v10579
        %v10643 = vadd.f32 %v10642, %v10580
        %v10644 = vadd.f32 %v10643, %v10581
        %v10645 = vadd.f32 %v10644, %v10582
        %v10646 = vadd.f32 %v10645, %v10583
        %v10647 = vadd.f32 %v10646, %v10584
        %v10648 = vadd.f32 %v10647, %v10585
        %v10649 = vadd.f32 %v10648, %v10586
        %v10650 = vadd.f32 %v10649, %v10587
        %v10651 = vadd.f32 %v10650, %v10588
        %v10652 = vadd.f32 %v10651, %v10589
        %v10653 = vadd.f32 %v10652, %v10590
        %v10654 = vadd.f32 %v10653, %v10591
        %v10655 = vadd.f32 %v10654, %v10592
        %v10656 = vadd.f32 %v10655, %v10593
        %v10657 = vadd.f32 %v10656, %v10594
        %v10658 = vadd.f32 %v10657, %v10595
        %v10659 = vrot.slane %v10658, 4
        %v10660 = vadd.f32 %v10658, %v10659
        %v10661 = vrot.slane %v10660, 2
        %v10662 = vadd.f32 %v10660, %v10661
        %v10663 = vrot.slane %v10662, 1
        %v10664 = vadd.f32 %v10662, %v10663
        %v10665 = vrcp.pop 512.0
        %v10666 = vmul.f32 512.0, %v10665
        %v10667 = vsub.f32 1.0, %v10666
        %v10668 = vmul.f32 %v10665, %v10667
        %v10669 = vadd.f32 %v10665, %v10668
        %vm10670 = vweird.f32 %v10665
        %v10671 = vsel %vm10670, %v10665, %v10669
        %v10672 = vmul.f32 %v10664, %v10671
        %v10673 = vlog2.pop %v10672
        %v10674 = vmul.f32 %v10673, 0.6931472
        %v10675 = vmul.f32 %v10674, 0.33333334
        %v10676 = vmul.f32 %v10675, 1.442695
        %v10677 = vpow.pop %v10676
        %v10678 = vld [vmem:[%s9] sm:$0x1]
        %v10679 = vmul.f32 %v10677, %v10678
        %v10680 = vld [vmem:[%s9 + $0x1] sm:$0x1]
        %v10681 = vadd.f32 %v10679, %v10680
        %10682 = vst [vmem:[%s351] sm:$0x1] %v10681
        %s10683 = sand.u32 %s247, 1
        %s10684 = scalar_lea.sflag [#allocation4], %s10683
        %s10685 = sand.u32 %s247, 1
        %s10686 = scalar_lea.vmem [#allocation3], %s10685
        // Predicated region
        $region61: #{fastreid_forward.1} parent=59 // pred_check
          %p10687 = pneg %p257
        $region62: #{fastreid_forward.1} parent=59 // pred_check_branch
          %10689 = sbr.rel (%p10687) target = $region64
        $region63: #{fastreid_forward.1} parent=59 // pred_region
          %10691 = vsyncadd %s10684, 0
          %s10692 = scalar_lea.hbm %s10, %s24
          %s10694 = sshll.u32 %s10686, 4
          %s10695 = int_to_ptr.vmem [resolvable:$true] %s10694
          %s10696 = sshll.u32 %s10692, 4
          %s10697 = int_to_ptr.hbm [resolvable:$true] %s10696
          %10699 = dma.vmem_to_hbm [thread:$0]  %s10695, 16, %s10697, %s10684
        $region64: #{fastreid_forward.1} parent=59 // pred_fallthru
          _
      $region60: #{fastreid_forward.1} parent=5 // pred_fallthru
        _
      %p10700 = scmp.le.s32.totalorder 2, %s19
      // Predicated region
      $region65: #{fastreid_forward.1} parent=5 // pred_check
        %p10701 = pneg %p10700
      $region66: #{fastreid_forward.1} parent=5 // pred_check_branch
        %10703 = sbr.rel (%p10701) target = $region68
      $region67: #{fastreid_forward.1} parent=5 // pred_region
        %s10704 = ssub.s32 %s19, 2
        // Predicated region
        $region69: #{fastreid_forward.1} parent=67 // pred_check
          %p10705 = pneg %p263
        $region70: #{fastreid_forward.1} parent=67 // pred_check_branch
          %10707 = sbr.rel (%p10705) target = $region72
        $region71: #{fastreid_forward.1} parent=67 // pred_region
          %s10708 = sand.u32 %s248, 1
          %s10709 = scalar_lea.sflag [#allocation4], %s10708
          %s10710 = sand.u32 %s248, 1
          %s10711 = scalar_lea.vmem [#allocation3], %s10710
          %10713 = dma.done %s10709, 16
        $region72: #{fastreid_forward.1} parent=67 // pred_fallthru
          _
      $region68: #{fastreid_forward.1} parent=5 // pred_fallthru
        _
    $region6: #{fastreid_forward.1} parent=1 // loop_footer
      %s23 = sadd.s32 1, %s19
    $region7: #{fastreid_forward.1} parent=1 // loop_footer_branch
      %18 = sbr.rel target = $region3
    $region8: #{fastreid_forward.1} parent=1 // loop_exit
      _
    %10714 = vsyncpa [#allocation4], 1
    %s10715 = scalar_lea.sflag [#allocation4], 1
    %10716 = vsyncpa %s10715, 1

</llo_original>
